<compile_context>
chip_gen: v7x
topology: tpu7x:2x2x1
jax: 0.10.0
libtpu: 0.0.40
codegen_flags: <defaults>
</compile_context>

<pallas_src>
import jax
import jax.numpy as jnp
from jax import lax
from jax.experimental import pallas as pl
from jax.experimental.pallas import tpu as pltpu

EMB_VOCAB = 3000
EMB_DIM = 300
HID = 256
G = 3 * HID          # 768 gate width
FC_HID = 1000
FC_PAD = 1024        # 1000 -> 1024 (clean 8x128 tiles)
OUT_PAD = 128        # final output padded to a full lane group; sliced to 1 in JAX

# bf16 MXU operands on real TPUs; f32 elsewhere (CPU / interpret execution does
# not support BF16 x BF16 = F32 dots).
_ON_TPU = jax.default_backend() == "tpu"
MXU_DT = jnp.bfloat16 if _ON_TPU else jnp.float32
GI_DT = jnp.bfloat16          # storage dtype of the precomputed input gates


# ----------------------------- fused Pallas kernel -----------------------------

def encoder_kernel(gi_ref, len_ref, whh_ref, bhhn_ref,
                   w1a_ref, w1b_ref, b1_ref, w2_ref, b2_ref, w3_ref, b3_ref,
                   o_ref):
    """Fused: masked GRU over BOTH (stacked) sequences + fc1/ReLU/fc2/ReLU/fc3.

    gi_ref  : (T, 2*BB, G) bf16  precomputed input gates; rows = [x1 tile ; x2 tile];
              the r/z thirds already include b_hh.
    len_ref : (2*BB, 1) int32
    whh_ref : (HID, G) MXU dtype   bhhn_ref : (1, HID) f32 (n-third of b_hh)
    w1a/w1b : (HID, FC_PAD)  top/bottom halves of the fc1 weight (avoids concat)
    w2      : (FC_PAD, FC_PAD)   w3 : (FC_PAD, OUT_PAD)   b* : f32 row vectors
    o_ref   : (BB, OUT_PAD) f32  (column 0 is the real output)
    """
    T = gi_ref.shape[0]
    rows = gi_ref.shape[1]          # 2 * BB
    BB = rows // 2

    whh = whh_ref[...]              # hoisted: loaded once
    bhh_n = bhhn_ref[...]
    lens = len_ref[...]

    def fast_sigmoid(x):
        # sigmoid(x) == 0.5*tanh(0.5*x) + 0.5  : one EUP op instead of exp+recip
        return 0.5 * jnp.tanh(0.5 * x) + 0.5

    def step(t, h):
        gi = gi_ref[t].astype(jnp.float32)                       # (2BB, G)
        gh = jnp.dot(h.astype(whh.dtype), whh,                   # single MXU call/step
                     preferred_element_type=jnp.float32)
        r = fast_sigmoid(gi[:, :HID] + gh[:, :HID])
        z = fast_sigmoid(gi[:, HID:2 * HID] + gh[:, HID:2 * HID])
        n = jnp.tanh(gi[:, 2 * HID:] + r * (gh[:, 2 * HID:] + bhh_n))
        h_new = n + z * (h - n)                                  # == (1-z)*n + z*h
        # pack_padded_sequence semantics: rows past their length keep the old hidden.
        return jnp.where(t < lens, h_new, h)

    h = lax.fori_loop(0, T, step, jnp.zeros((rows, HID), jnp.float32),
                      unroll=True)

    h1 = h[:BB]                      # hidden of sequence 1
    h2 = h[BB:]                      # hidden of sequence 2
    dt = w1a_ref.dtype

    # fc1 on the concat [h1 | h2] expressed as two half-weight matmuls.
    a1 = (jnp.dot(h1.astype(dt), w1a_ref[...], preferred_element_type=jnp.float32)
          + jnp.dot(h2.astype(dt), w1b_ref[...], preferred_element_type=jnp.float32)
          + b1_ref[...])
    a1 = jnp.maximum(a1, 0.0)
    a2 = jnp.dot(a1.astype(dt), w2_ref[...], preferred_element_type=jnp.float32) + b2_ref[...]
    a2 = jnp.maximum(a2, 0.0)
    o_ref[...] = (jnp.dot(a2.astype(dt), w3_ref[...], preferred_element_type=jnp.float32)
                  + b3_ref[...])


# ------------------------------- wrapper ---------------------------------

def encoder_forward(params, x1, x2, x1_len, x2_len):
    B, T = x1.shape

    # Per-sequence batch tile (multiple of 8, <= 128); the kernel works on 2*BB rows.
    BB = 128 if B > 128 else ((B + 7) // 8) * 8
    nb = -(-B // BB)
    B_pad = nb * BB
    pad_rows = B_pad - B
    if pad_rows:
        x1 = jnp.pad(x1, ((0, pad_rows), (0, 0)))
        x2 = jnp.pad(x2, ((0, pad_rows), (0, 0)))
        x1_len = jnp.pad(x1_len, (0, pad_rows))      # length 0 -> hidden stays 0
        x2_len = jnp.pad(x2_len, (0, pad_rows))

    emb = params["embedding"].astype(MXU_DT)
    wih = params["gru_wih"].astype(MXU_DT)
    bih = params["gru_bih"]                           # (1, G) f32
    bhh = params["gru_bhh"]                           # (1, G) f32
    # Fold the r/z thirds of b_hh into the precomputed gates (they sit outside
    # the r-multiply); only the n-third stays inside the kernel.
    gi_bias = bih.at[:, :2 * HID].add(bhh[:, :2 * HID])
    bhh_n = bhh[:, 2 * HID:]                          # (1, HID)

    # One gather + one big MXU matmul for BOTH sequences, time-major output.
    x_all = jnp.concatenate([x1, x2], axis=0)         # (2*B_pad, T)
    e = jnp.take(emb, x_all, axis=0)                  # (2*B_pad, T, 300)
    gi = jnp.einsum("btd,dg->tbg", e, wih,
                    preferred_element_type=jnp.float32) + gi_bias
    gi = gi.astype(GI_DT)                             # (T, 2*B_pad, G) bf16 storage

    lens = jnp.concatenate([x1_len, x2_len], axis=0).astype(jnp.int32).reshape(2 * B_pad, 1)

    if nb > 1:
        # Interleave so each batch block holds [x1 block j ; x2 block j].
        gi = (gi.reshape(T, 2, nb, BB, G).transpose(0, 2, 1, 3, 4)
                .reshape(T, 2 * B_pad, G))
        lens = (lens.reshape(2, nb, BB, 1).transpose(1, 0, 2, 3)
                    .reshape(2 * B_pad, 1))

    whh = params["gru_whh"].astype(MXU_DT)            # (256, 768)

    # Pad MLP weights to MXU/lane-friendly shapes; zero padding keeps the math exact.
    w1p = jnp.pad(params["w1"], ((0, 0), (0, FC_PAD - FC_HID))).astype(MXU_DT)   # (512, 1024)
    w1a, w1b = w1p[:HID], w1p[HID:]
    b1 = jnp.pad(params["b1"], ((0, 0), (0, FC_PAD - FC_HID)))
    w2 = jnp.pad(params["w2"], ((0, FC_PAD - FC_HID), (0, FC_PAD - FC_HID))).astype(MXU_DT)
    b2 = jnp.pad(params["b2"], ((0, 0), (0, FC_PAD - FC_HID)))
    w3 = jnp.pad(params["w3"], ((0, FC_PAD - FC_HID), (0, OUT_PAD - 1))).astype(MXU_DT)
    b3 = jnp.pad(params["b3"], ((0, 0), (0, OUT_PAD - 1)))

    rows = 2 * BB
    grid = (nb,)

    out = pl.pallas_call(
        encoder_kernel,
        out_shape=jax.ShapeDtypeStruct((B_pad, OUT_PAD), jnp.float32),
        grid=grid,
        in_specs=[
            pl.BlockSpec((T, rows, G), lambda b: (0, b, 0)),      # gi (both seqs stacked)
            pl.BlockSpec((rows, 1), lambda b: (b, 0)),            # lens
            pl.BlockSpec((HID, G), lambda b: (0, 0)),             # whh
            pl.BlockSpec((1, HID), lambda b: (0, 0)),             # bhh (n-third)
            pl.BlockSpec((HID, FC_PAD), lambda b: (0, 0)),        # w1a
            pl.BlockSpec((HID, FC_PAD), lambda b: (0, 0)),        # w1b
            pl.BlockSpec((1, FC_PAD), lambda b: (0, 0)),          # b1
            pl.BlockSpec((FC_PAD, FC_PAD), lambda b: (0, 0)),     # w2
            pl.BlockSpec((1, FC_PAD), lambda b: (0, 0)),          # b2
            pl.BlockSpec((FC_PAD, OUT_PAD), lambda b: (0, 0)),    # w3
            pl.BlockSpec((1, OUT_PAD), lambda b: (0, 0)),         # b3
        ],
        out_specs=pl.BlockSpec((BB, OUT_PAD), lambda b: (b, 0)),
        compiler_params=pltpu.CompilerParams(
            dimension_semantics=("parallel",),        # shards batch blocks on v7x megacore
            vmem_limit_bytes=40 * 1024 * 1024),       # covers BB=128 on v5e's 16 MiB default
    )(gi, lens, whh, bhh_n, w1a, w1b, b1, w2, b2, w3, b3)

    return out[:B, :1]                                # (B, 1)


# --------------------------- deterministic params --------------------------

def init_params(key):
    ks = jax.random.split(key, 11)
    s = 1.0 / jnp.sqrt(HID)
    return {
        "embedding": jax.random.normal(ks[0], (EMB_VOCAB, EMB_DIM), jnp.float32),
        "gru_wih": jax.random.uniform(ks[1], (EMB_DIM, G), jnp.float32, -s, s),
        "gru_whh": jax.random.uniform(ks[2], (HID, G), jnp.float32, -s, s),
        "gru_bih": jax.random.uniform(ks[3], (1, G), jnp.float32, -s, s),
        "gru_bhh": jax.random.uniform(ks[4], (1, G), jnp.float32, -s, s),
        "w1": jax.random.uniform(ks[5], (2 * HID, FC_HID), jnp.float32, -0.04, 0.04),
        "b1": jax.random.uniform(ks[6], (1, FC_HID), jnp.float32, -0.04, 0.04),
        "w2": jax.random.uniform(ks[7], (FC_HID, FC_HID), jnp.float32, -0.03, 0.03),
        "b2": jax.random.uniform(ks[8], (1, FC_HID), jnp.float32, -0.03, 0.03),
        "w3": jax.random.uniform(ks[9], (FC_HID, 1), jnp.float32, -0.03, 0.03),
        "b3": jax.random.uniform(ks[10], (1, 1), jnp.float32, -0.03, 0.03),
    }


# ------------------------------ pure-JAX ref -------------------------------
# Independent implementation of the PyTorch forward (standard GRU equations,
# no bias folding, explicit concat), mirroring only the MXU operand dtype and
# the bf16 gi storage so the comparison is meaningful on TPU.

def _encoder_ref(params, x1, x2, x1_len, x2_len):
    emb = params["embedding"].astype(MXU_DT)
    wih = params["gru_wih"].astype(MXU_DT)
    whh = params["gru_whh"].astype(MXU_DT)

    def run_gru(x, lens):
        e = jnp.take(emb, x, axis=0)                                     # (B, T, 300)
        gi_all = (jnp.einsum("btd,dg->btg", e, wih,
                             preferred_element_type=jnp.float32)
                  + params["gru_bih"]).astype(GI_DT)
        B, T, _ = gi_all.shape
        lens = lens.astype(jnp.int32).reshape(B, 1)
        h = jnp.zeros((B, HID), jnp.float32)
        for t in range(T):
            gi = gi_all[:, t, :].astype(jnp.float32)
            gh = jnp.dot(h.astype(MXU_DT), whh,
                         preferred_element_type=jnp.float32) + params["gru_bhh"]
            r = jax.nn.sigmoid(gi[:, :HID] + gh[:, :HID])
            z = jax.nn.sigmoid(gi[:, HID:2 * HID] + gh[:, HID:2 * HID])
            n = jnp.tanh(gi[:, 2 * HID:] + r * gh[:, 2 * HID:])
            h = jnp.where(t < lens, (1.0 - z) * n + z * h, h)
        return h

    h1 = run_gru(x1, x1_len)
    h2 = run_gru(x2, x2_len)
    cat = jnp.concatenate([h1, h2], axis=1)
    a1 = jnp.maximum(jnp.dot(cat.astype(MXU_DT), params["w1"].astype(MXU_DT),
                             preferred_element_type=jnp.float32) + params["b1"], 0.0)
    a2 = jnp.maximum(jnp.dot(a1.astype(MXU_DT), params["w2"].astype(MXU_DT),
                             preferred_element_type=jnp.float32) + params["b2"], 0.0)
    return jnp.dot(a2.astype(MXU_DT), params["w3"].astype(MXU_DT),
                   preferred_element_type=jnp.float32) + params["b3"]


# ---------------------------------- main -----------------------------------

if __name__ == "__main__":
    key = jax.random.PRNGKey(0)
    kp, k1, k2 = jax.random.split(key, 3)
    params = init_params(kp)

    B, T = 2, 8
    x1 = jax.random.randint(k1, (B, T), 0, EMB_VOCAB, dtype=jnp.int32)
    x2 = jax.random.randint(k2, (B, T), 0, EMB_VOCAB, dtype=jnp.int32)
    x1_len = jnp.array([8, 5], dtype=jnp.int32)
    x2_len = jnp.array([6, 3], dtype=jnp.int32)

    out = jax.jit(encoder_forward)(params, x1, x2, x1_len, x2_len)
    out = jax.block_until_ready(out)
    assert out.shape == (B, 1) and out.dtype == jnp.float32

    ref = _encoder_ref(params, x1, x2, x1_len, x2_len)
    assert jnp.allclose(out, ref, rtol=1e-2, atol=1e-2), (out, ref)

    print("KERNEL_OK")
</pallas_src>

<mosaic_0001>
module attributes {stable_mosaic.version = 11 : i64} {
  func.func @encoder_kernel(%arg0: i32, %arg1: memref<8x16x768xbf16, #tpu.memory_space<vmem>>, %arg2: memref<16x1xi32, #tpu.memory_space<vmem>>, %arg3: memref<256x768xf32, #tpu.memory_space<vmem>>, %arg4: memref<1x256xf32, #tpu.memory_space<vmem>>, %arg5: memref<256x1024xf32, #tpu.memory_space<vmem>>, %arg6: memref<256x1024xf32, #tpu.memory_space<vmem>>, %arg7: memref<1x1024xf32, #tpu.memory_space<vmem>>, %arg8: memref<1024x1024xf32, #tpu.memory_space<vmem>>, %arg9: memref<1x1024xf32, #tpu.memory_space<vmem>>, %arg10: memref<1024x128xf32, #tpu.memory_space<vmem>>, %arg11: memref<1x128xf32, #tpu.memory_space<vmem>>, %arg12: memref<8x128xf32, #tpu.memory_space<vmem>>) attributes {dimension_semantics = [#tpu.dimension_semantics<parallel>], iteration_bounds = array<i64: 1>, scalar_prefetch = 0 : i64, scratch_operands = 0 : i64, tpu.core_type = #tpu.core_type<tc>, window_params = [{transform_indices = @transform_0, window_bounds = array<i64: 8, 16, 768>}, {transform_indices = @transform_1, window_bounds = array<i64: 16, 1>}, {pipeline_mode = #tpu.pipeline_mode<synchronous>, transform_indices = @transform_2, window_bounds = array<i64: 256, 768>}, {pipeline_mode = #tpu.pipeline_mode<synchronous>, transform_indices = @transform_3, window_bounds = array<i64: 1, 256>}, {pipeline_mode = #tpu.pipeline_mode<synchronous>, transform_indices = @transform_4, window_bounds = array<i64: 256, 1024>}, {pipeline_mode = #tpu.pipeline_mode<synchronous>, transform_indices = @transform_5, window_bounds = array<i64: 256, 1024>}, {pipeline_mode = #tpu.pipeline_mode<synchronous>, transform_indices = @transform_6, window_bounds = array<i64: 1, 1024>}, {pipeline_mode = #tpu.pipeline_mode<synchronous>, transform_indices = @transform_7, window_bounds = array<i64: 1024, 1024>}, {pipeline_mode = #tpu.pipeline_mode<synchronous>, transform_indices = @transform_8, window_bounds = array<i64: 1, 1024>}, {pipeline_mode = #tpu.pipeline_mode<synchronous>, transform_indices = @transform_9, window_bounds = array<i64: 1024, 128>}, {pipeline_mode = #tpu.pipeline_mode<synchronous>, transform_indices = @transform_10, window_bounds = array<i64: 1, 128>}, {transform_indices = @transform_11, window_bounds = array<i64: 8, 128>}]} {
    %c0 = arith.constant 0 : index
    %c0_0 = arith.constant 0 : index
    %0 = vector.load %arg3[%c0, %c0_0] : memref<256x768xf32, #tpu.memory_space<vmem>>, vector<256x768xf32>
    %c0_1 = arith.constant 0 : index
    %c0_2 = arith.constant 0 : index
    %1 = vector.load %arg4[%c0_1, %c0_2] : memref<1x256xf32, #tpu.memory_space<vmem>>, vector<1x256xf32>
    %c0_3 = arith.constant 0 : index
    %c0_4 = arith.constant 0 : index
    %2 = vector.load %arg2[%c0_3, %c0_4] : memref<16x1xi32, #tpu.memory_space<vmem>>, vector<16x1xi32>
    %cst = arith.constant 0.000000e+00 : f32
    %3 = vector.broadcast %cst : f32 to vector<16x256xf32>
    %c0_i32 = arith.constant 0 : i32
    %4 = arith.index_cast %c0_i32 : i32 to index
    %c0_5 = arith.constant 0 : index
    %c0_6 = arith.constant 0 : index
    %5 = vector.load %arg1[%4, %c0_5, %c0_6] : memref<8x16x768xbf16, #tpu.memory_space<vmem>>, vector<1x16x768xbf16>
    %6 = vector.shape_cast %5 : vector<1x16x768xbf16> to vector<16x768xbf16>
    %7 = arith.extf %6 : vector<16x768xbf16> to vector<16x768xf32>
    %cst_7 = arith.constant dense<0.000000e+00> : vector<16x768xf32>
    %8 = tpu.matmul %3, %0, %cst_7 {dimension_numbers = #tpu.dot_dimension_numbers<[1], [0], [0], [1], [0, 0, 1, 1], [], []>} : vector<16x256xf32>, vector<256x768xf32>, vector<16x768xf32> -> vector<16x768xf32>
    %9 = vector.extract_strided_slice %7 {offsets = [0, 0], sizes = [16, 256], strides = [1, 1]} : vector<16x768xf32> to vector<16x256xf32>
    %10 = vector.extract_strided_slice %8 {offsets = [0, 0], sizes = [16, 256], strides = [1, 1]} : vector<16x768xf32> to vector<16x256xf32>
    %11 = arith.addf %9, %10 : vector<16x256xf32>
    %cst_8 = arith.constant 5.000000e-01 : f32
    %12 = vector.broadcast %cst_8 : f32 to vector<16x256xf32>
    %13 = arith.mulf %12, %11 : vector<16x256xf32>
    %14 = math.tanh %13 : vector<16x256xf32>
    %cst_9 = arith.constant 5.000000e-01 : f32
    %15 = vector.broadcast %cst_9 : f32 to vector<16x256xf32>
    %16 = arith.mulf %15, %14 : vector<16x256xf32>
    %cst_10 = arith.constant 5.000000e-01 : f32
    %17 = vector.broadcast %cst_10 : f32 to vector<16x256xf32>
    %18 = arith.addf %16, %17 : vector<16x256xf32>
    %19 = vector.extract_strided_slice %7 {offsets = [0, 256], sizes = [16, 256], strides = [1, 1]} : vector<16x768xf32> to vector<16x256xf32>
    %20 = vector.extract_strided_slice %8 {offsets = [0, 256], sizes = [16, 256], strides = [1, 1]} : vector<16x768xf32> to vector<16x256xf32>
    %21 = arith.addf %19, %20 : vector<16x256xf32>
    %cst_11 = arith.constant 5.000000e-01 : f32
    %22 = vector.broadcast %cst_11 : f32 to vector<16x256xf32>
    %23 = arith.mulf %22, %21 : vector<16x256xf32>
    %24 = math.tanh %23 : vector<16x256xf32>
    %cst_12 = arith.constant 5.000000e-01 : f32
    %25 = vector.broadcast %cst_12 : f32 to vector<16x256xf32>
    %26 = arith.mulf %25, %24 : vector<16x256xf32>
    %cst_13 = arith.constant 5.000000e-01 : f32
    %27 = vector.broadcast %cst_13 : f32 to vector<16x256xf32>
    %28 = arith.addf %26, %27 : vector<16x256xf32>
    %29 = vector.extract_strided_slice %7 {offsets = [0, 512], sizes = [16, 256], strides = [1, 1]} : vector<16x768xf32> to vector<16x256xf32>
    %30 = vector.extract_strided_slice %8 {offsets = [0, 512], sizes = [16, 256], strides = [1, 1]} : vector<16x768xf32> to vector<16x256xf32>
    %31 = vector.broadcast %1 : vector<1x256xf32> to vector<16x256xf32>
    %32 = arith.addf %30, %31 : vector<16x256xf32>
    %33 = arith.mulf %18, %32 : vector<16x256xf32>
    %34 = arith.addf %29, %33 : vector<16x256xf32>
    %35 = math.tanh %34 : vector<16x256xf32>
    %36 = arith.subf %3, %35 : vector<16x256xf32>
    %37 = arith.mulf %28, %36 : vector<16x256xf32>
    %38 = arith.addf %35, %37 : vector<16x256xf32>
    %39 = vector.broadcast %c0_i32 : i32 to vector<16x1xi32>
    %40 = arith.cmpi slt, %39, %2 : vector<16x1xi32>
    %41 = vector.shape_cast %40 : vector<16x1xi1> to vector<16x1xi1>
    %42 = vector.broadcast %41 : vector<16x1xi1> to vector<16x256xi1>
    %43 = arith.select %42, %38, %3 : vector<16x256xi1>, vector<16x256xf32>
    %c1_i32 = arith.constant 1 : i32
    %44 = arith.index_cast %c1_i32 : i32 to index
    %c0_14 = arith.constant 0 : index
    %c0_15 = arith.constant 0 : index
    %45 = vector.load %arg1[%44, %c0_14, %c0_15] : memref<8x16x768xbf16, #tpu.memory_space<vmem>>, vector<1x16x768xbf16>
    %46 = vector.shape_cast %45 : vector<1x16x768xbf16> to vector<16x768xbf16>
    %47 = arith.extf %46 : vector<16x768xbf16> to vector<16x768xf32>
    %cst_16 = arith.constant dense<0.000000e+00> : vector<16x768xf32>
    %48 = tpu.matmul %43, %0, %cst_16 {dimension_numbers = #tpu.dot_dimension_numbers<[1], [0], [0], [1], [0, 0, 1, 1], [], []>} : vector<16x256xf32>, vector<256x768xf32>, vector<16x768xf32> -> vector<16x768xf32>
    %49 = vector.extract_strided_slice %47 {offsets = [0, 0], sizes = [16, 256], strides = [1, 1]} : vector<16x768xf32> to vector<16x256xf32>
    %50 = vector.extract_strided_slice %48 {offsets = [0, 0], sizes = [16, 256], strides = [1, 1]} : vector<16x768xf32> to vector<16x256xf32>
    %51 = arith.addf %49, %50 : vector<16x256xf32>
    %cst_17 = arith.constant 5.000000e-01 : f32
    %52 = vector.broadcast %cst_17 : f32 to vector<16x256xf32>
    %53 = arith.mulf %52, %51 : vector<16x256xf32>
    %54 = math.tanh %53 : vector<16x256xf32>
    %cst_18 = arith.constant 5.000000e-01 : f32
    %55 = vector.broadcast %cst_18 : f32 to vector<16x256xf32>
    %56 = arith.mulf %55, %54 : vector<16x256xf32>
    %cst_19 = arith.constant 5.000000e-01 : f32
    %57 = vector.broadcast %cst_19 : f32 to vector<16x256xf32>
    %58 = arith.addf %56, %57 : vector<16x256xf32>
    %59 = vector.extract_strided_slice %47 {offsets = [0, 256], sizes = [16, 256], strides = [1, 1]} : vector<16x768xf32> to vector<16x256xf32>
    %60 = vector.extract_strided_slice %48 {offsets = [0, 256], sizes = [16, 256], strides = [1, 1]} : vector<16x768xf32> to vector<16x256xf32>
    %61 = arith.addf %59, %60 : vector<16x256xf32>
    %cst_20 = arith.constant 5.000000e-01 : f32
    %62 = vector.broadcast %cst_20 : f32 to vector<16x256xf32>
    %63 = arith.mulf %62, %61 : vector<16x256xf32>
    %64 = math.tanh %63 : vector<16x256xf32>
    %cst_21 = arith.constant 5.000000e-01 : f32
    %65 = vector.broadcast %cst_21 : f32 to vector<16x256xf32>
    %66 = arith.mulf %65, %64 : vector<16x256xf32>
    %cst_22 = arith.constant 5.000000e-01 : f32
    %67 = vector.broadcast %cst_22 : f32 to vector<16x256xf32>
    %68 = arith.addf %66, %67 : vector<16x256xf32>
    %69 = vector.extract_strided_slice %47 {offsets = [0, 512], sizes = [16, 256], strides = [1, 1]} : vector<16x768xf32> to vector<16x256xf32>
    %70 = vector.extract_strided_slice %48 {offsets = [0, 512], sizes = [16, 256], strides = [1, 1]} : vector<16x768xf32> to vector<16x256xf32>
    %71 = vector.broadcast %1 : vector<1x256xf32> to vector<16x256xf32>
    %72 = arith.addf %70, %71 : vector<16x256xf32>
    %73 = arith.mulf %58, %72 : vector<16x256xf32>
    %74 = arith.addf %69, %73 : vector<16x256xf32>
    %75 = math.tanh %74 : vector<16x256xf32>
    %76 = arith.subf %43, %75 : vector<16x256xf32>
    %77 = arith.mulf %68, %76 : vector<16x256xf32>
    %78 = arith.addf %75, %77 : vector<16x256xf32>
    %79 = vector.broadcast %c1_i32 : i32 to vector<16x1xi32>
    %80 = arith.cmpi slt, %79, %2 : vector<16x1xi32>
    %81 = vector.shape_cast %80 : vector<16x1xi1> to vector<16x1xi1>
    %82 = vector.broadcast %81 : vector<16x1xi1> to vector<16x256xi1>
    %83 = arith.select %82, %78, %43 : vector<16x256xi1>, vector<16x256xf32>
    %c2_i32 = arith.constant 2 : i32
    %84 = arith.index_cast %c2_i32 : i32 to index
    %c0_23 = arith.constant 0 : index
    %c0_24 = arith.constant 0 : index
    %85 = vector.load %arg1[%84, %c0_23, %c0_24] : memref<8x16x768xbf16, #tpu.memory_space<vmem>>, vector<1x16x768xbf16>
    %86 = vector.shape_cast %85 : vector<1x16x768xbf16> to vector<16x768xbf16>
    %87 = arith.extf %86 : vector<16x768xbf16> to vector<16x768xf32>
    %cst_25 = arith.constant dense<0.000000e+00> : vector<16x768xf32>
    %88 = tpu.matmul %83, %0, %cst_25 {dimension_numbers = #tpu.dot_dimension_numbers<[1], [0], [0], [1], [0, 0, 1, 1], [], []>} : vector<16x256xf32>, vector<256x768xf32>, vector<16x768xf32> -> vector<16x768xf32>
    %89 = vector.extract_strided_slice %87 {offsets = [0, 0], sizes = [16, 256], strides = [1, 1]} : vector<16x768xf32> to vector<16x256xf32>
    %90 = vector.extract_strided_slice %88 {offsets = [0, 0], sizes = [16, 256], strides = [1, 1]} : vector<16x768xf32> to vector<16x256xf32>
    %91 = arith.addf %89, %90 : vector<16x256xf32>
    %cst_26 = arith.constant 5.000000e-01 : f32
    %92 = vector.broadcast %cst_26 : f32 to vector<16x256xf32>
    %93 = arith.mulf %92, %91 : vector<16x256xf32>
    %94 = math.tanh %93 : vector<16x256xf32>
    %cst_27 = arith.constant 5.000000e-01 : f32
    %95 = vector.broadcast %cst_27 : f32 to vector<16x256xf32>
    %96 = arith.mulf %95, %94 : vector<16x256xf32>
    %cst_28 = arith.constant 5.000000e-01 : f32
    %97 = vector.broadcast %cst_28 : f32 to vector<16x256xf32>
    %98 = arith.addf %96, %97 : vector<16x256xf32>
    %99 = vector.extract_strided_slice %87 {offsets = [0, 256], sizes = [16, 256], strides = [1, 1]} : vector<16x768xf32> to vector<16x256xf32>
    %100 = vector.extract_strided_slice %88 {offsets = [0, 256], sizes = [16, 256], strides = [1, 1]} : vector<16x768xf32> to vector<16x256xf32>
    %101 = arith.addf %99, %100 : vector<16x256xf32>
    %cst_29 = arith.constant 5.000000e-01 : f32
    %102 = vector.broadcast %cst_29 : f32 to vector<16x256xf32>
    %103 = arith.mulf %102, %101 : vector<16x256xf32>
    %104 = math.tanh %103 : vector<16x256xf32>
    %cst_30 = arith.constant 5.000000e-01 : f32
    %105 = vector.broadcast %cst_30 : f32 to vector<16x256xf32>
    %106 = arith.mulf %105, %104 : vector<16x256xf32>
    %cst_31 = arith.constant 5.000000e-01 : f32
    %107 = vector.broadcast %cst_31 : f32 to vector<16x256xf32>
    %108 = arith.addf %106, %107 : vector<16x256xf32>
    %109 = vector.extract_strided_slice %87 {offsets = [0, 512], sizes = [16, 256], strides = [1, 1]} : vector<16x768xf32> to vector<16x256xf32>
    %110 = vector.extract_strided_slice %88 {offsets = [0, 512], sizes = [16, 256], strides = [1, 1]} : vector<16x768xf32> to vector<16x256xf32>
    %111 = vector.broadcast %1 : vector<1x256xf32> to vector<16x256xf32>
    %112 = arith.addf %110, %111 : vector<16x256xf32>
    %113 = arith.mulf %98, %112 : vector<16x256xf32>
    %114 = arith.addf %109, %113 : vector<16x256xf32>
    %115 = math.tanh %114 : vector<16x256xf32>
    %116 = arith.subf %83, %115 : vector<16x256xf32>
    %117 = arith.mulf %108, %116 : vector<16x256xf32>
    %118 = arith.addf %115, %117 : vector<16x256xf32>
    %119 = vector.broadcast %c2_i32 : i32 to vector<16x1xi32>
    %120 = arith.cmpi slt, %119, %2 : vector<16x1xi32>
    %121 = vector.shape_cast %120 : vector<16x1xi1> to vector<16x1xi1>
    %122 = vector.broadcast %121 : vector<16x1xi1> to vector<16x256xi1>
    %123 = arith.select %122, %118, %83 : vector<16x256xi1>, vector<16x256xf32>
    %c3_i32 = arith.constant 3 : i32
    %124 = arith.index_cast %c3_i32 : i32 to index
    %c0_32 = arith.constant 0 : index
    %c0_33 = arith.constant 0 : index
    %125 = vector.load %arg1[%124, %c0_32, %c0_33] : memref<8x16x768xbf16, #tpu.memory_space<vmem>>, vector<1x16x768xbf16>
    %126 = vector.shape_cast %125 : vector<1x16x768xbf16> to vector<16x768xbf16>
    %127 = arith.extf %126 : vector<16x768xbf16> to vector<16x768xf32>
    %cst_34 = arith.constant dense<0.000000e+00> : vector<16x768xf32>
    %128 = tpu.matmul %123, %0, %cst_34 {dimension_numbers = #tpu.dot_dimension_numbers<[1], [0], [0], [1], [0, 0, 1, 1], [], []>} : vector<16x256xf32>, vector<256x768xf32>, vector<16x768xf32> -> vector<16x768xf32>
    %129 = vector.extract_strided_slice %127 {offsets = [0, 0], sizes = [16, 256], strides = [1, 1]} : vector<16x768xf32> to vector<16x256xf32>
    %130 = vector.extract_strided_slice %128 {offsets = [0, 0], sizes = [16, 256], strides = [1, 1]} : vector<16x768xf32> to vector<16x256xf32>
    %131 = arith.addf %129, %130 : vector<16x256xf32>
    %cst_35 = arith.constant 5.000000e-01 : f32
    %132 = vector.broadcast %cst_35 : f32 to vector<16x256xf32>
    %133 = arith.mulf %132, %131 : vector<16x256xf32>
    %134 = math.tanh %133 : vector<16x256xf32>
    %cst_36 = arith.constant 5.000000e-01 : f32
    %135 = vector.broadcast %cst_36 : f32 to vector<16x256xf32>
    %136 = arith.mulf %135, %134 : vector<16x256xf32>
    %cst_37 = arith.constant 5.000000e-01 : f32
    %137 = vector.broadcast %cst_37 : f32 to vector<16x256xf32>
    %138 = arith.addf %136, %137 : vector<16x256xf32>
    %139 = vector.extract_strided_slice %127 {offsets = [0, 256], sizes = [16, 256], strides = [1, 1]} : vector<16x768xf32> to vector<16x256xf32>
    %140 = vector.extract_strided_slice %128 {offsets = [0, 256], sizes = [16, 256], strides = [1, 1]} : vector<16x768xf32> to vector<16x256xf32>
    %141 = arith.addf %139, %140 : vector<16x256xf32>
    %cst_38 = arith.constant 5.000000e-01 : f32
    %142 = vector.broadcast %cst_38 : f32 to vector<16x256xf32>
    %143 = arith.mulf %142, %141 : vector<16x256xf32>
    %144 = math.tanh %143 : vector<16x256xf32>
    %cst_39 = arith.constant 5.000000e-01 : f32
    %145 = vector.broadcast %cst_39 : f32 to vector<16x256xf32>
    %146 = arith.mulf %145, %144 : vector<16x256xf32>
    %cst_40 = arith.constant 5.000000e-01 : f32
    %147 = vector.broadcast %cst_40 : f32 to vector<16x256xf32>
    %148 = arith.addf %146, %147 : vector<16x256xf32>
    %149 = vector.extract_strided_slice %127 {offsets = [0, 512], sizes = [16, 256], strides = [1, 1]} : vector<16x768xf32> to vector<16x256xf32>
    %150 = vector.extract_strided_slice %128 {offsets = [0, 512], sizes = [16, 256], strides = [1, 1]} : vector<16x768xf32> to vector<16x256xf32>
    %151 = vector.broadcast %1 : vector<1x256xf32> to vector<16x256xf32>
    %152 = arith.addf %150, %151 : vector<16x256xf32>
    %153 = arith.mulf %138, %152 : vector<16x256xf32>
    %154 = arith.addf %149, %153 : vector<16x256xf32>
    %155 = math.tanh %154 : vector<16x256xf32>
    %156 = arith.subf %123, %155 : vector<16x256xf32>
    %157 = arith.mulf %148, %156 : vector<16x256xf32>
    %158 = arith.addf %155, %157 : vector<16x256xf32>
    %159 = vector.broadcast %c3_i32 : i32 to vector<16x1xi32>
    %160 = arith.cmpi slt, %159, %2 : vector<16x1xi32>
    %161 = vector.shape_cast %160 : vector<16x1xi1> to vector<16x1xi1>
    %162 = vector.broadcast %161 : vector<16x1xi1> to vector<16x256xi1>
    %163 = arith.select %162, %158, %123 : vector<16x256xi1>, vector<16x256xf32>
    %c4_i32 = arith.constant 4 : i32
    %164 = arith.index_cast %c4_i32 : i32 to index
    %c0_41 = arith.constant 0 : index
    %c0_42 = arith.constant 0 : index
    %165 = vector.load %arg1[%164, %c0_41, %c0_42] : memref<8x16x768xbf16, #tpu.memory_space<vmem>>, vector<1x16x768xbf16>
    %166 = vector.shape_cast %165 : vector<1x16x768xbf16> to vector<16x768xbf16>
    %167 = arith.extf %166 : vector<16x768xbf16> to vector<16x768xf32>
    %cst_43 = arith.constant dense<0.000000e+00> : vector<16x768xf32>
    %168 = tpu.matmul %163, %0, %cst_43 {dimension_numbers = #tpu.dot_dimension_numbers<[1], [0], [0], [1], [0, 0, 1, 1], [], []>} : vector<16x256xf32>, vector<256x768xf32>, vector<16x768xf32> -> vector<16x768xf32>
    %169 = vector.extract_strided_slice %167 {offsets = [0, 0], sizes = [16, 256], strides = [1, 1]} : vector<16x768xf32> to vector<16x256xf32>
    %170 = vector.extract_strided_slice %168 {offsets = [0, 0], sizes = [16, 256], strides = [1, 1]} : vector<16x768xf32> to vector<16x256xf32>
    %171 = arith.addf %169, %170 : vector<16x256xf32>
    %cst_44 = arith.constant 5.000000e-01 : f32
    %172 = vector.broadcast %cst_44 : f32 to vector<16x256xf32>
    %173 = arith.mulf %172, %171 : vector<16x256xf32>
    %174 = math.tanh %173 : vector<16x256xf32>
    %cst_45 = arith.constant 5.000000e-01 : f32
    %175 = vector.broadcast %cst_45 : f32 to vector<16x256xf32>
    %176 = arith.mulf %175, %174 : vector<16x256xf32>
    %cst_46 = arith.constant 5.000000e-01 : f32
    %177 = vector.broadcast %cst_46 : f32 to vector<16x256xf32>
    %178 = arith.addf %176, %177 : vector<16x256xf32>
    %179 = vector.extract_strided_slice %167 {offsets = [0, 256], sizes = [16, 256], strides = [1, 1]} : vector<16x768xf32> to vector<16x256xf32>
    %180 = vector.extract_strided_slice %168 {offsets = [0, 256], sizes = [16, 256], strides = [1, 1]} : vector<16x768xf32> to vector<16x256xf32>
    %181 = arith.addf %179, %180 : vector<16x256xf32>
    %cst_47 = arith.constant 5.000000e-01 : f32
    %182 = vector.broadcast %cst_47 : f32 to vector<16x256xf32>
    %183 = arith.mulf %182, %181 : vector<16x256xf32>
    %184 = math.tanh %183 : vector<16x256xf32>
    %cst_48 = arith.constant 5.000000e-01 : f32
    %185 = vector.broadcast %cst_48 : f32 to vector<16x256xf32>
    %186 = arith.mulf %185, %184 : vector<16x256xf32>
    %cst_49 = arith.constant 5.000000e-01 : f32
    %187 = vector.broadcast %cst_49 : f32 to vector<16x256xf32>
    %188 = arith.addf %186, %187 : vector<16x256xf32>
    %189 = vector.extract_strided_slice %167 {offsets = [0, 512], sizes = [16, 256], strides = [1, 1]} : vector<16x768xf32> to vector<16x256xf32>
    %190 = vector.extract_strided_slice %168 {offsets = [0, 512], sizes = [16, 256], strides = [1, 1]} : vector<16x768xf32> to vector<16x256xf32>
    %191 = vector.broadcast %1 : vector<1x256xf32> to vector<16x256xf32>
    %192 = arith.addf %190, %191 : vector<16x256xf32>
    %193 = arith.mulf %178, %192 : vector<16x256xf32>
    %194 = arith.addf %189, %193 : vector<16x256xf32>
    %195 = math.tanh %194 : vector<16x256xf32>
    %196 = arith.subf %163, %195 : vector<16x256xf32>
    %197 = arith.mulf %188, %196 : vector<16x256xf32>
    %198 = arith.addf %195, %197 : vector<16x256xf32>
    %199 = vector.broadcast %c4_i32 : i32 to vector<16x1xi32>
    %200 = arith.cmpi slt, %199, %2 : vector<16x1xi32>
    %201 = vector.shape_cast %200 : vector<16x1xi1> to vector<16x1xi1>
    %202 = vector.broadcast %201 : vector<16x1xi1> to vector<16x256xi1>
    %203 = arith.select %202, %198, %163 : vector<16x256xi1>, vector<16x256xf32>
    %c5_i32 = arith.constant 5 : i32
    %204 = arith.index_cast %c5_i32 : i32 to index
    %c0_50 = arith.constant 0 : index
    %c0_51 = arith.constant 0 : index
    %205 = vector.load %arg1[%204, %c0_50, %c0_51] : memref<8x16x768xbf16, #tpu.memory_space<vmem>>, vector<1x16x768xbf16>
    %206 = vector.shape_cast %205 : vector<1x16x768xbf16> to vector<16x768xbf16>
    %207 = arith.extf %206 : vector<16x768xbf16> to vector<16x768xf32>
    %cst_52 = arith.constant dense<0.000000e+00> : vector<16x768xf32>
    %208 = tpu.matmul %203, %0, %cst_52 {dimension_numbers = #tpu.dot_dimension_numbers<[1], [0], [0], [1], [0, 0, 1, 1], [], []>} : vector<16x256xf32>, vector<256x768xf32>, vector<16x768xf32> -> vector<16x768xf32>
    %209 = vector.extract_strided_slice %207 {offsets = [0, 0], sizes = [16, 256], strides = [1, 1]} : vector<16x768xf32> to vector<16x256xf32>
    %210 = vector.extract_strided_slice %208 {offsets = [0, 0], sizes = [16, 256], strides = [1, 1]} : vector<16x768xf32> to vector<16x256xf32>
    %211 = arith.addf %209, %210 : vector<16x256xf32>
    %cst_53 = arith.constant 5.000000e-01 : f32
    %212 = vector.broadcast %cst_53 : f32 to vector<16x256xf32>
    %213 = arith.mulf %212, %211 : vector<16x256xf32>
    %214 = math.tanh %213 : vector<16x256xf32>
    %cst_54 = arith.constant 5.000000e-01 : f32
    %215 = vector.broadcast %cst_54 : f32 to vector<16x256xf32>
    %216 = arith.mulf %215, %214 : vector<16x256xf32>
    %cst_55 = arith.constant 5.000000e-01 : f32
    %217 = vector.broadcast %cst_55 : f32 to vector<16x256xf32>
    %218 = arith.addf %216, %217 : vector<16x256xf32>
    %219 = vector.extract_strided_slice %207 {offsets = [0, 256], sizes = [16, 256], strides = [1, 1]} : vector<16x768xf32> to vector<16x256xf32>
    %220 = vector.extract_strided_slice %208 {offsets = [0, 256], sizes = [16, 256], strides = [1, 1]} : vector<16x768xf32> to vector<16x256xf32>
    %221 = arith.addf %219, %220 : vector<16x256xf32>
    %cst_56 = arith.constant 5.000000e-01 : f32
    %222 = vector.broadcast %cst_56 : f32 to vector<16x256xf32>
    %223 = arith.mulf %222, %221 : vector<16x256xf32>
    %224 = math.tanh %223 : vector<16x256xf32>
    %cst_57 = arith.constant 5.000000e-01 : f32
    %225 = vector.broadcast %cst_57 : f32 to vector<16x256xf32>
    %226 = arith.mulf %225, %224 : vector<16x256xf32>
    %cst_58 = arith.constant 5.000000e-01 : f32
    %227 = vector.broadcast %cst_58 : f32 to vector<16x256xf32>
    %228 = arith.addf %226, %227 : vector<16x256xf32>
    %229 = vector.extract_strided_slice %207 {offsets = [0, 512], sizes = [16, 256], strides = [1, 1]} : vector<16x768xf32> to vector<16x256xf32>
    %230 = vector.extract_strided_slice %208 {offsets = [0, 512], sizes = [16, 256], strides = [1, 1]} : vector<16x768xf32> to vector<16x256xf32>
    %231 = vector.broadcast %1 : vector<1x256xf32> to vector<16x256xf32>
    %232 = arith.addf %230, %231 : vector<16x256xf32>
    %233 = arith.mulf %218, %232 : vector<16x256xf32>
    %234 = arith.addf %229, %233 : vector<16x256xf32>
    %235 = math.tanh %234 : vector<16x256xf32>
    %236 = arith.subf %203, %235 : vector<16x256xf32>
    %237 = arith.mulf %228, %236 : vector<16x256xf32>
    %238 = arith.addf %235, %237 : vector<16x256xf32>
    %239 = vector.broadcast %c5_i32 : i32 to vector<16x1xi32>
    %240 = arith.cmpi slt, %239, %2 : vector<16x1xi32>
    %241 = vector.shape_cast %240 : vector<16x1xi1> to vector<16x1xi1>
    %242 = vector.broadcast %241 : vector<16x1xi1> to vector<16x256xi1>
    %243 = arith.select %242, %238, %203 : vector<16x256xi1>, vector<16x256xf32>
    %c6_i32 = arith.constant 6 : i32
    %244 = arith.index_cast %c6_i32 : i32 to index
    %c0_59 = arith.constant 0 : index
    %c0_60 = arith.constant 0 : index
    %245 = vector.load %arg1[%244, %c0_59, %c0_60] : memref<8x16x768xbf16, #tpu.memory_space<vmem>>, vector<1x16x768xbf16>
    %246 = vector.shape_cast %245 : vector<1x16x768xbf16> to vector<16x768xbf16>
    %247 = arith.extf %246 : vector<16x768xbf16> to vector<16x768xf32>
    %cst_61 = arith.constant dense<0.000000e+00> : vector<16x768xf32>
    %248 = tpu.matmul %243, %0, %cst_61 {dimension_numbers = #tpu.dot_dimension_numbers<[1], [0], [0], [1], [0, 0, 1, 1], [], []>} : vector<16x256xf32>, vector<256x768xf32>, vector<16x768xf32> -> vector<16x768xf32>
    %249 = vector.extract_strided_slice %247 {offsets = [0, 0], sizes = [16, 256], strides = [1, 1]} : vector<16x768xf32> to vector<16x256xf32>
    %250 = vector.extract_strided_slice %248 {offsets = [0, 0], sizes = [16, 256], strides = [1, 1]} : vector<16x768xf32> to vector<16x256xf32>
    %251 = arith.addf %249, %250 : vector<16x256xf32>
    %cst_62 = arith.constant 5.000000e-01 : f32
    %252 = vector.broadcast %cst_62 : f32 to vector<16x256xf32>
    %253 = arith.mulf %252, %251 : vector<16x256xf32>
    %254 = math.tanh %253 : vector<16x256xf32>
    %cst_63 = arith.constant 5.000000e-01 : f32
    %255 = vector.broadcast %cst_63 : f32 to vector<16x256xf32>
    %256 = arith.mulf %255, %254 : vector<16x256xf32>
    %cst_64 = arith.constant 5.000000e-01 : f32
    %257 = vector.broadcast %cst_64 : f32 to vector<16x256xf32>
    %258 = arith.addf %256, %257 : vector<16x256xf32>
    %259 = vector.extract_strided_slice %247 {offsets = [0, 256], sizes = [16, 256], strides = [1, 1]} : vector<16x768xf32> to vector<16x256xf32>
    %260 = vector.extract_strided_slice %248 {offsets = [0, 256], sizes = [16, 256], strides = [1, 1]} : vector<16x768xf32> to vector<16x256xf32>
    %261 = arith.addf %259, %260 : vector<16x256xf32>
    %cst_65 = arith.constant 5.000000e-01 : f32
    %262 = vector.broadcast %cst_65 : f32 to vector<16x256xf32>
    %263 = arith.mulf %262, %261 : vector<16x256xf32>
    %264 = math.tanh %263 : vector<16x256xf32>
    %cst_66 = arith.constant 5.000000e-01 : f32
    %265 = vector.broadcast %cst_66 : f32 to vector<16x256xf32>
    %266 = arith.mulf %265, %264 : vector<16x256xf32>
    %cst_67 = arith.constant 5.000000e-01 : f32
    %267 = vector.broadcast %cst_67 : f32 to vector<16x256xf32>
    %268 = arith.addf %266, %267 : vector<16x256xf32>
    %269 = vector.extract_strided_slice %247 {offsets = [0, 512], sizes = [16, 256], strides = [1, 1]} : vector<16x768xf32> to vector<16x256xf32>
    %270 = vector.extract_strided_slice %248 {offsets = [0, 512], sizes = [16, 256], strides = [1, 1]} : vector<16x768xf32> to vector<16x256xf32>
    %271 = vector.broadcast %1 : vector<1x256xf32> to vector<16x256xf32>
    %272 = arith.addf %270, %271 : vector<16x256xf32>
    %273 = arith.mulf %258, %272 : vector<16x256xf32>
    %274 = arith.addf %269, %273 : vector<16x256xf32>
    %275 = math.tanh %274 : vector<16x256xf32>
    %276 = arith.subf %243, %275 : vector<16x256xf32>
    %277 = arith.mulf %268, %276 : vector<16x256xf32>
    %278 = arith.addf %275, %277 : vector<16x256xf32>
    %279 = vector.broadcast %c6_i32 : i32 to vector<16x1xi32>
    %280 = arith.cmpi slt, %279, %2 : vector<16x1xi32>
    %281 = vector.shape_cast %280 : vector<16x1xi1> to vector<16x1xi1>
    %282 = vector.broadcast %281 : vector<16x1xi1> to vector<16x256xi1>
    %283 = arith.select %282, %278, %243 : vector<16x256xi1>, vector<16x256xf32>
    %c7_i32 = arith.constant 7 : i32
    %284 = arith.index_cast %c7_i32 : i32 to index
    %c0_68 = arith.constant 0 : index
    %c0_69 = arith.constant 0 : index
    %285 = vector.load %arg1[%284, %c0_68, %c0_69] : memref<8x16x768xbf16, #tpu.memory_space<vmem>>, vector<1x16x768xbf16>
    %286 = vector.shape_cast %285 : vector<1x16x768xbf16> to vector<16x768xbf16>
    %287 = arith.extf %286 : vector<16x768xbf16> to vector<16x768xf32>
    %cst_70 = arith.constant dense<0.000000e+00> : vector<16x768xf32>
    %288 = tpu.matmul %283, %0, %cst_70 {dimension_numbers = #tpu.dot_dimension_numbers<[1], [0], [0], [1], [0, 0, 1, 1], [], []>} : vector<16x256xf32>, vector<256x768xf32>, vector<16x768xf32> -> vector<16x768xf32>
    %289 = vector.extract_strided_slice %287 {offsets = [0, 0], sizes = [16, 256], strides = [1, 1]} : vector<16x768xf32> to vector<16x256xf32>
    %290 = vector.extract_strided_slice %288 {offsets = [0, 0], sizes = [16, 256], strides = [1, 1]} : vector<16x768xf32> to vector<16x256xf32>
    %291 = arith.addf %289, %290 : vector<16x256xf32>
    %cst_71 = arith.constant 5.000000e-01 : f32
    %292 = vector.broadcast %cst_71 : f32 to vector<16x256xf32>
    %293 = arith.mulf %292, %291 : vector<16x256xf32>
    %294 = math.tanh %293 : vector<16x256xf32>
    %cst_72 = arith.constant 5.000000e-01 : f32
    %295 = vector.broadcast %cst_72 : f32 to vector<16x256xf32>
    %296 = arith.mulf %295, %294 : vector<16x256xf32>
    %cst_73 = arith.constant 5.000000e-01 : f32
    %297 = vector.broadcast %cst_73 : f32 to vector<16x256xf32>
    %298 = arith.addf %296, %297 : vector<16x256xf32>
    %299 = vector.extract_strided_slice %287 {offsets = [0, 256], sizes = [16, 256], strides = [1, 1]} : vector<16x768xf32> to vector<16x256xf32>
    %300 = vector.extract_strided_slice %288 {offsets = [0, 256], sizes = [16, 256], strides = [1, 1]} : vector<16x768xf32> to vector<16x256xf32>
    %301 = arith.addf %299, %300 : vector<16x256xf32>
    %cst_74 = arith.constant 5.000000e-01 : f32
    %302 = vector.broadcast %cst_74 : f32 to vector<16x256xf32>
    %303 = arith.mulf %302, %301 : vector<16x256xf32>
    %304 = math.tanh %303 : vector<16x256xf32>
    %cst_75 = arith.constant 5.000000e-01 : f32
    %305 = vector.broadcast %cst_75 : f32 to vector<16x256xf32>
    %306 = arith.mulf %305, %304 : vector<16x256xf32>
    %cst_76 = arith.constant 5.000000e-01 : f32
    %307 = vector.broadcast %cst_76 : f32 to vector<16x256xf32>
    %308 = arith.addf %306, %307 : vector<16x256xf32>
    %309 = vector.extract_strided_slice %287 {offsets = [0, 512], sizes = [16, 256], strides = [1, 1]} : vector<16x768xf32> to vector<16x256xf32>
    %310 = vector.extract_strided_slice %288 {offsets = [0, 512], sizes = [16, 256], strides = [1, 1]} : vector<16x768xf32> to vector<16x256xf32>
    %311 = vector.broadcast %1 : vector<1x256xf32> to vector<16x256xf32>
    %312 = arith.addf %310, %311 : vector<16x256xf32>
    %313 = arith.mulf %298, %312 : vector<16x256xf32>
    %314 = arith.addf %309, %313 : vector<16x256xf32>
    %315 = math.tanh %314 : vector<16x256xf32>
    %316 = arith.subf %283, %315 : vector<16x256xf32>
    %317 = arith.mulf %308, %316 : vector<16x256xf32>
    %318 = arith.addf %315, %317 : vector<16x256xf32>
    %319 = vector.broadcast %c7_i32 : i32 to vector<16x1xi32>
    %320 = arith.cmpi slt, %319, %2 : vector<16x1xi32>
    %321 = vector.shape_cast %320 : vector<16x1xi1> to vector<16x1xi1>
    %322 = vector.broadcast %321 : vector<16x1xi1> to vector<16x256xi1>
    %323 = arith.select %322, %318, %283 : vector<16x256xi1>, vector<16x256xf32>
    %c8_i32 = arith.constant 8 : i32
    %324 = vector.extract_strided_slice %323 {offsets = [0, 0], sizes = [8, 256], strides = [1, 1]} : vector<16x256xf32> to vector<8x256xf32>
    %325 = vector.extract_strided_slice %323 {offsets = [8, 0], sizes = [8, 256], strides = [1, 1]} : vector<16x256xf32> to vector<8x256xf32>
    %c0_77 = arith.constant 0 : index
    %c0_78 = arith.constant 0 : index
    %326 = vector.load %arg5[%c0_77, %c0_78] : memref<256x1024xf32, #tpu.memory_space<vmem>>, vector<256x1024xf32>
    %cst_79 = arith.constant dense<0.000000e+00> : vector<8x1024xf32>
    %327 = tpu.matmul %324, %326, %cst_79 {dimension_numbers = #tpu.dot_dimension_numbers<[1], [0], [0], [1], [0, 0, 1, 1], [], []>} : vector<8x256xf32>, vector<256x1024xf32>, vector<8x1024xf32> -> vector<8x1024xf32>
    %c0_80 = arith.constant 0 : index
    %c0_81 = arith.constant 0 : index
    %328 = vector.load %arg6[%c0_80, %c0_81] : memref<256x1024xf32, #tpu.memory_space<vmem>>, vector<256x1024xf32>
    %cst_82 = arith.constant dense<0.000000e+00> : vector<8x1024xf32>
    %329 = tpu.matmul %325, %328, %cst_82 {dimension_numbers = #tpu.dot_dimension_numbers<[1], [0], [0], [1], [0, 0, 1, 1], [], []>} : vector<8x256xf32>, vector<256x1024xf32>, vector<8x1024xf32> -> vector<8x1024xf32>
    %330 = arith.addf %327, %329 : vector<8x1024xf32>
    %c0_83 = arith.constant 0 : index
    %c0_84 = arith.constant 0 : index
    %331 = vector.load %arg7[%c0_83, %c0_84] : memref<1x1024xf32, #tpu.memory_space<vmem>>, vector<1x1024xf32>
    %332 = vector.broadcast %331 : vector<1x1024xf32> to vector<8x1024xf32>
    %333 = arith.addf %330, %332 : vector<8x1024xf32>
    %cst_85 = arith.constant 0.000000e+00 : f32
    %334 = vector.broadcast %cst_85 : f32 to vector<8x1024xf32>
    %335 = arith.maximumf %333, %334 : vector<8x1024xf32>
    %c0_86 = arith.constant 0 : index
    %c0_87 = arith.constant 0 : index
    %336 = vector.load %arg8[%c0_86, %c0_87] : memref<1024x1024xf32, #tpu.memory_space<vmem>>, vector<1024x1024xf32>
    %cst_88 = arith.constant dense<0.000000e+00> : vector<8x1024xf32>
    %337 = tpu.matmul %335, %336, %cst_88 {dimension_numbers = #tpu.dot_dimension_numbers<[1], [0], [0], [1], [0, 0, 1, 1], [], []>} : vector<8x1024xf32>, vector<1024x1024xf32>, vector<8x1024xf32> -> vector<8x1024xf32>
    %c0_89 = arith.constant 0 : index
    %c0_90 = arith.constant 0 : index
    %338 = vector.load %arg9[%c0_89, %c0_90] : memref<1x1024xf32, #tpu.memory_space<vmem>>, vector<1x1024xf32>
    %339 = vector.broadcast %338 : vector<1x1024xf32> to vector<8x1024xf32>
    %340 = arith.addf %337, %339 : vector<8x1024xf32>
    %cst_91 = arith.constant 0.000000e+00 : f32
    %341 = vector.broadcast %cst_91 : f32 to vector<8x1024xf32>
    %342 = arith.maximumf %340, %341 : vector<8x1024xf32>
    %c0_92 = arith.constant 0 : index
    %c0_93 = arith.constant 0 : index
    %343 = vector.load %arg10[%c0_92, %c0_93] : memref<1024x128xf32, #tpu.memory_space<vmem>>, vector<1024x128xf32>
    %cst_94 = arith.constant dense<0.000000e+00> : vector<8x128xf32>
    %344 = tpu.matmul %342, %343, %cst_94 {dimension_numbers = #tpu.dot_dimension_numbers<[1], [0], [0], [1], [0, 0, 1, 1], [], []>} : vector<8x1024xf32>, vector<1024x128xf32>, vector<8x128xf32> -> vector<8x128xf32>
    %c0_95 = arith.constant 0 : index
    %c0_96 = arith.constant 0 : index
    %345 = vector.load %arg11[%c0_95, %c0_96] : memref<1x128xf32, #tpu.memory_space<vmem>>, vector<1x128xf32>
    %346 = vector.broadcast %345 : vector<1x128xf32> to vector<8x128xf32>
    %347 = arith.addf %344, %346 : vector<8x128xf32>
    %c0_97 = arith.constant 0 : index
    %c0_98 = arith.constant 0 : index
    %348 = vector.load %arg12[%c0_97, %c0_98] : memref<8x128xf32, #tpu.memory_space<vmem>>, vector<8x128xf32>
    tpu.vector_store %arg12[%c0_97, %c0_98], %347 {strides = array<i32>} : memref<8x128xf32, #tpu.memory_space<vmem>>, vector<8x128xf32>,
    return
  }
  func.func @transform_0(%arg0: i32) -> (i32, i32, i32) {
    %c0_i32 = arith.constant 0 : i32
    %c0_i32_0 = arith.constant 0 : i32
    %c0_i32_1 = arith.constant 0 : i32
    return %c0_i32, %arg0, %c0_i32_0 : i32, i32, i32
  }
  func.func @transform_1(%arg0: i32) -> (i32, i32) {
    %c0_i32 = arith.constant 0 : i32
    %c0_i32_0 = arith.constant 0 : i32
    return %arg0, %c0_i32 : i32, i32
  }
  func.func @transform_2(%arg0: i32) -> (i32, i32) {
    %c0_i32 = arith.constant 0 : i32
    %c0_i32_0 = arith.constant 0 : i32
    %c0_i32_1 = arith.constant 0 : i32
    return %c0_i32, %c0_i32_0 : i32, i32
  }
  func.func @transform_3(%arg0: i32) -> (i32, i32) {
    %c0_i32 = arith.constant 0 : i32
    %c0_i32_0 = arith.constant 0 : i32
    %c0_i32_1 = arith.constant 0 : i32
    return %c0_i32, %c0_i32_0 : i32, i32
  }
  func.func @transform_4(%arg0: i32) -> (i32, i32) {
    %c0_i32 = arith.constant 0 : i32
    %c0_i32_0 = arith.constant 0 : i32
    %c0_i32_1 = arith.constant 0 : i32
    return %c0_i32, %c0_i32_0 : i32, i32
  }
  func.func @transform_5(%arg0: i32) -> (i32, i32) {
    %c0_i32 = arith.constant 0 : i32
    %c0_i32_0 = arith.constant 0 : i32
    %c0_i32_1 = arith.constant 0 : i32
    return %c0_i32, %c0_i32_0 : i32, i32
  }
  func.func @transform_6(%arg0: i32) -> (i32, i32) {
    %c0_i32 = arith.constant 0 : i32
    %c0_i32_0 = arith.constant 0 : i32
    %c0_i32_1 = arith.constant 0 : i32
    return %c0_i32, %c0_i32_0 : i32, i32
  }
  func.func @transform_7(%arg0: i32) -> (i32, i32) {
    %c0_i32 = arith.constant 0 : i32
    %c0_i32_0 = arith.constant 0 : i32
    %c0_i32_1 = arith.constant 0 : i32
    return %c0_i32, %c0_i32_0 : i32, i32
  }
  func.func @transform_8(%arg0: i32) -> (i32, i32) {
    %c0_i32 = arith.constant 0 : i32
    %c0_i32_0 = arith.constant 0 : i32
    %c0_i32_1 = arith.constant 0 : i32
    return %c0_i32, %c0_i32_0 : i32, i32
  }
  func.func @transform_9(%arg0: i32) -> (i32, i32) {
    %c0_i32 = arith.constant 0 : i32
    %c0_i32_0 = arith.constant 0 : i32
    %c0_i32_1 = arith.constant 0 : i32
    return %c0_i32, %c0_i32_0 : i32, i32
  }
  func.func @transform_10(%arg0: i32) -> (i32, i32) {
    %c0_i32 = arith.constant 0 : i32
    %c0_i32_0 = arith.constant 0 : i32
    %c0_i32_1 = arith.constant 0 : i32
    return %c0_i32, %c0_i32_0 : i32, i32
  }
  func.func @transform_11(%arg0: i32) -> (i32, i32) {
    %c0_i32 = arith.constant 0 : i32
    %c0_i32_0 = arith.constant 0 : i32
    return %arg0, %c0_i32 : i32, i32
  }
}

</mosaic_0001>

<llo_original>
// kernel: encoder_forward.1
$region0: #{encoder_forward.1}
  #allocation0 [shape = 'u32[]', space=smem, size = 0x4, offset = 0x4, fixed_abs, tag = 'smem constant byte address 0x4 - core index']
  #allocation1 [shape = 'u32[144,128]{1,0:T(1,128)}', space=vmem, size = 0x12000, scoped, tag = 'internal scratch']
  %s0 = inlined_call_operand.vmem [shape: bf16[8,16,768], index: 0, kind: input, shape index: {}]
  %s1 = inlined_call_operand.vmem [shape: s32[16,1], index: 1, kind: input, shape index: {}]
  %s2 = inlined_call_operand.vmem [shape: f32[256,768], index: 2, kind: input, shape index: {}]
  %s3 = inlined_call_operand.vmem [shape: f32[1,256], index: 3, kind: input, shape index: {}]
  %s4 = inlined_call_operand.vmem [shape: f32[256,1024], index: 4, kind: input, shape index: {}]
  %s5 = inlined_call_operand.vmem [shape: f32[256,1024], index: 5, kind: input, shape index: {}]
  %s6 = inlined_call_operand.vmem [shape: f32[1,1024], index: 6, kind: input, shape index: {}]
  %s7 = inlined_call_operand.vmem [shape: f32[1024,1024], index: 7, kind: input, shape index: {}]
  %s8 = inlined_call_operand.vmem [shape: f32[1,1024], index: 8, kind: input, shape index: {}]
  %s9 = inlined_call_operand.vmem [shape: f32[1024,128], index: 9, kind: input, shape index: {}]
  %s10 = inlined_call_operand.vmem [shape: f32[1,128], index: 10, kind: input, shape index: {}]
  %s11 = inlined_call_operand.vmem [shape: f32[8,128], index: 11, kind: output, shape index: {}]
  %s12 = sld [smem:[#allocation0]]
  $region54: #{encoder_forward.1} parent=0
    _
  %s14 = ssub.s32 1, %s12
  %s15 = scalar_select 0, %s14, %s12
  // Predicated region
  $region2: #{encoder_forward.1} parent=0 // pred_check
    _
  $region3: #{encoder_forward.1} parent=0 // pred_check_branch
    %17 = sbr.rel (0) target = $region5
  $region4: #{encoder_forward.1} parent=0 // pred_region
    _
  $region5: #{encoder_forward.1} parent=0 // pred_fallthru
    _
  // Predicated region
  $region6: #{encoder_forward.1} parent=0 // pred_check
    _
  $region7: #{encoder_forward.1} parent=0 // pred_check_branch
    %19 = sbr.rel (0) target = $region9
  $region8: #{encoder_forward.1} parent=0 // pred_region
    _
  $region9: #{encoder_forward.1} parent=0 // pred_fallthru
    _
  // Predicated region
  $region10: #{encoder_forward.1} parent=0 // pred_check
    _
  $region11: #{encoder_forward.1} parent=0 // pred_check_branch
    %21 = sbr.rel (0) target = $region13
  $region12: #{encoder_forward.1} parent=0 // pred_region
    _
  $region13: #{encoder_forward.1} parent=0 // pred_fallthru
    _
  // Predicated region
  $region14: #{encoder_forward.1} parent=0 // pred_check
    _
  $region15: #{encoder_forward.1} parent=0 // pred_check_branch
    %23 = sbr.rel (0) target = $region17
  $region16: #{encoder_forward.1} parent=0 // pred_region
    _
  $region17: #{encoder_forward.1} parent=0 // pred_fallthru
    _
  // Predicated region
  $region18: #{encoder_forward.1} parent=0 // pred_check
    _
  $region19: #{encoder_forward.1} parent=0 // pred_check_branch
    %25 = sbr.rel (0) target = $region21
  $region20: #{encoder_forward.1} parent=0 // pred_region
    _
  $region21: #{encoder_forward.1} parent=0 // pred_fallthru
    _
  // Predicated region
  $region22: #{encoder_forward.1} parent=0 // pred_check
    _
  $region23: #{encoder_forward.1} parent=0 // pred_check_branch
    %27 = sbr.rel (0) target = $region25
  $region24: #{encoder_forward.1} parent=0 // pred_region
    _
  $region25: #{encoder_forward.1} parent=0 // pred_fallthru
    _
  // Predicated region
  $region26: #{encoder_forward.1} parent=0 // pred_check
    _
  $region27: #{encoder_forward.1} parent=0 // pred_check_branch
    %29 = sbr.rel (0) target = $region29
  $region28: #{encoder_forward.1} parent=0 // pred_region
    _
  $region29: #{encoder_forward.1} parent=0 // pred_fallthru
    _
  // Predicated region
  $region30: #{encoder_forward.1} parent=0 // pred_check
    _
  $region31: #{encoder_forward.1} parent=0 // pred_check_branch
    %31 = sbr.rel (0) target = $region33
  $region32: #{encoder_forward.1} parent=0 // pred_region
    _
  $region33: #{encoder_forward.1} parent=0 // pred_fallthru
    _
  // Predicated region
  $region34: #{encoder_forward.1} parent=0 // pred_check
    _
  $region35: #{encoder_forward.1} parent=0 // pred_check_branch
    %33 = sbr.rel (0) target = $region37
  $region36: #{encoder_forward.1} parent=0 // pred_region
    _
  $region37: #{encoder_forward.1} parent=0 // pred_fallthru
    _
  // Predicated region
  $region38: #{encoder_forward.1} parent=0 // pred_check
    _
  $region39: #{encoder_forward.1} parent=0 // pred_check_branch
    %35 = sbr.rel (0) target = $region41
  $region40: #{encoder_forward.1} parent=0 // pred_region
    _
  $region41: #{encoder_forward.1} parent=0 // pred_fallthru
    _
  // Predicated region
  $region42: #{encoder_forward.1} parent=0 // pred_check
    _
  $region43: #{encoder_forward.1} parent=0 // pred_check_branch
    %37 = sbr.rel (0) target = $region45
  $region44: #{encoder_forward.1} parent=0 // pred_region
    _
  $region45: #{encoder_forward.1} parent=0 // pred_fallthru
    _
  %v38 = vld [vmem:[%s2] sm:$0xff]
  %v39 = vld [vmem:[%s2 + $0x8] sm:$0xff]
  %v40 = vld [vmem:[%s2 + $0x10] sm:$0xff]
  %v41 = vld [vmem:[%s2 + $0x18] sm:$0xff]
  %v42 = vld [vmem:[%s2 + $0x20] sm:$0xff]
  %v43 = vld [vmem:[%s2 + $0x28] sm:$0xff]
  %v44 = vld [vmem:[%s2 + $0x30] sm:$0xff]
  %v45 = vld [vmem:[%s2 + $0x38] sm:$0xff]
  %v46 = vld [vmem:[%s2 + $0x40] sm:$0xff]
  %v47 = vld [vmem:[%s2 + $0x48] sm:$0xff]
  %v48 = vld [vmem:[%s2 + $0x50] sm:$0xff]
  %v49 = vld [vmem:[%s2 + $0x58] sm:$0xff]
  %v50 = vld [vmem:[%s2 + $0x60] sm:$0xff]
  %v51 = vld [vmem:[%s2 + $0x68] sm:$0xff]
  %v52 = vld [vmem:[%s2 + $0x70] sm:$0xff]
  %v53 = vld [vmem:[%s2 + $0x78] sm:$0xff]
  %v54 = vld [vmem:[%s2 + $0x80] sm:$0xff]
  %v55 = vld [vmem:[%s2 + $0x88] sm:$0xff]
  %v56 = vld [vmem:[%s2 + $0x90] sm:$0xff]
  %v57 = vld [vmem:[%s2 + $0x98] sm:$0xff]
  %v58 = vld [vmem:[%s2 + $0xa0] sm:$0xff]
  %v59 = vld [vmem:[%s2 + $0xa8] sm:$0xff]
  %v60 = vld [vmem:[%s2 + $0xb0] sm:$0xff]
  %v61 = vld [vmem:[%s2 + $0xb8] sm:$0xff]
  %v62 = vld [vmem:[%s2 + $0xc0] sm:$0xff]
  %v63 = vld [vmem:[%s2 + $0xc8] sm:$0xff]
  %v64 = vld [vmem:[%s2 + $0xd0] sm:$0xff]
  %v65 = vld [vmem:[%s2 + $0xd8] sm:$0xff]
  %v66 = vld [vmem:[%s2 + $0xe0] sm:$0xff]
  %v67 = vld [vmem:[%s2 + $0xe8] sm:$0xff]
  %v68 = vld [vmem:[%s2 + $0xf0] sm:$0xff]
  %v69 = vld [vmem:[%s2 + $0xf8] sm:$0xff]
  %v70 = vld [vmem:[%s2 + $0x100] sm:$0xff]
  %v71 = vld [vmem:[%s2 + $0x108] sm:$0xff]
  %v72 = vld [vmem:[%s2 + $0x110] sm:$0xff]
  %v73 = vld [vmem:[%s2 + $0x118] sm:$0xff]
  %v74 = vld [vmem:[%s2 + $0x120] sm:$0xff]
  %v75 = vld [vmem:[%s2 + $0x128] sm:$0xff]
  %v76 = vld [vmem:[%s2 + $0x130] sm:$0xff]
  %v77 = vld [vmem:[%s2 + $0x138] sm:$0xff]
  %v78 = vld [vmem:[%s2 + $0x140] sm:$0xff]
  %v79 = vld [vmem:[%s2 + $0x148] sm:$0xff]
  %v80 = vld [vmem:[%s2 + $0x150] sm:$0xff]
  %v81 = vld [vmem:[%s2 + $0x158] sm:$0xff]
  %v82 = vld [vmem:[%s2 + $0x160] sm:$0xff]
  %v83 = vld [vmem:[%s2 + $0x168] sm:$0xff]
  %v84 = vld [vmem:[%s2 + $0x170] sm:$0xff]
  %v85 = vld [vmem:[%s2 + $0x178] sm:$0xff]
  %v86 = vld [vmem:[%s2 + $0x180] sm:$0xff]
  %v87 = vld [vmem:[%s2 + $0x188] sm:$0xff]
  %v88 = vld [vmem:[%s2 + $0x190] sm:$0xff]
  %v89 = vld [vmem:[%s2 + $0x198] sm:$0xff]
  %v90 = vld [vmem:[%s2 + $0x1a0] sm:$0xff]
  %v91 = vld [vmem:[%s2 + $0x1a8] sm:$0xff]
  %v92 = vld [vmem:[%s2 + $0x1b0] sm:$0xff]
  %v93 = vld [vmem:[%s2 + $0x1b8] sm:$0xff]
  %v94 = vld [vmem:[%s2 + $0x1c0] sm:$0xff]
  %v95 = vld [vmem:[%s2 + $0x1c8] sm:$0xff]
  %v96 = vld [vmem:[%s2 + $0x1d0] sm:$0xff]
  %v97 = vld [vmem:[%s2 + $0x1d8] sm:$0xff]
  %v98 = vld [vmem:[%s2 + $0x1e0] sm:$0xff]
  %v99 = vld [vmem:[%s2 + $0x1e8] sm:$0xff]
  %v100 = vld [vmem:[%s2 + $0x1f0] sm:$0xff]
  %v101 = vld [vmem:[%s2 + $0x1f8] sm:$0xff]
  %v102 = vld [vmem:[%s2 + $0x200] sm:$0xff]
  %v103 = vld [vmem:[%s2 + $0x208] sm:$0xff]
  %v104 = vld [vmem:[%s2 + $0x210] sm:$0xff]
  %v105 = vld [vmem:[%s2 + $0x218] sm:$0xff]
  %v106 = vld [vmem:[%s2 + $0x220] sm:$0xff]
  %v107 = vld [vmem:[%s2 + $0x228] sm:$0xff]
  %v108 = vld [vmem:[%s2 + $0x230] sm:$0xff]
  %v109 = vld [vmem:[%s2 + $0x238] sm:$0xff]
  %v110 = vld [vmem:[%s2 + $0x240] sm:$0xff]
  %v111 = vld [vmem:[%s2 + $0x248] sm:$0xff]
  %v112 = vld [vmem:[%s2 + $0x250] sm:$0xff]
  %v113 = vld [vmem:[%s2 + $0x258] sm:$0xff]
  %v114 = vld [vmem:[%s2 + $0x260] sm:$0xff]
  %v115 = vld [vmem:[%s2 + $0x268] sm:$0xff]
  %v116 = vld [vmem:[%s2 + $0x270] sm:$0xff]
  %v117 = vld [vmem:[%s2 + $0x278] sm:$0xff]
  %v118 = vld [vmem:[%s2 + $0x280] sm:$0xff]
  %v119 = vld [vmem:[%s2 + $0x288] sm:$0xff]
  %v120 = vld [vmem:[%s2 + $0x290] sm:$0xff]
  %v121 = vld [vmem:[%s2 + $0x298] sm:$0xff]
  %v122 = vld [vmem:[%s2 + $0x2a0] sm:$0xff]
  %v123 = vld [vmem:[%s2 + $0x2a8] sm:$0xff]
  %v124 = vld [vmem:[%s2 + $0x2b0] sm:$0xff]
  %v125 = vld [vmem:[%s2 + $0x2b8] sm:$0xff]
  %v126 = vld [vmem:[%s2 + $0x2c0] sm:$0xff]
  %v127 = vld [vmem:[%s2 + $0x2c8] sm:$0xff]
  %v128 = vld [vmem:[%s2 + $0x2d0] sm:$0xff]
  %v129 = vld [vmem:[%s2 + $0x2d8] sm:$0xff]
  %v130 = vld [vmem:[%s2 + $0x2e0] sm:$0xff]
  %v131 = vld [vmem:[%s2 + $0x2e8] sm:$0xff]
  %v132 = vld [vmem:[%s2 + $0x2f0] sm:$0xff]
  %v133 = vld [vmem:[%s2 + $0x2f8] sm:$0xff]
  %v134 = vld [vmem:[%s2 + $0x300] sm:$0xff]
  %v135 = vld [vmem:[%s2 + $0x308] sm:$0xff]
  %v136 = vld [vmem:[%s2 + $0x310] sm:$0xff]
  %v137 = vld [vmem:[%s2 + $0x318] sm:$0xff]
  %v138 = vld [vmem:[%s2 + $0x320] sm:$0xff]
  %v139 = vld [vmem:[%s2 + $0x328] sm:$0xff]
  %v140 = vld [vmem:[%s2 + $0x330] sm:$0xff]
  %v141 = vld [vmem:[%s2 + $0x338] sm:$0xff]
  %v142 = vld [vmem:[%s2 + $0x340] sm:$0xff]
  %v143 = vld [vmem:[%s2 + $0x348] sm:$0xff]
  %v144 = vld [vmem:[%s2 + $0x350] sm:$0xff]
  %v145 = vld [vmem:[%s2 + $0x358] sm:$0xff]
  %v146 = vld [vmem:[%s2 + $0x360] sm:$0xff]
  %v147 = vld [vmem:[%s2 + $0x368] sm:$0xff]
  %v148 = vld [vmem:[%s2 + $0x370] sm:$0xff]
  %v149 = vld [vmem:[%s2 + $0x378] sm:$0xff]
  %v150 = vld [vmem:[%s2 + $0x380] sm:$0xff]
  %v151 = vld [vmem:[%s2 + $0x388] sm:$0xff]
  %v152 = vld [vmem:[%s2 + $0x390] sm:$0xff]
  %v153 = vld [vmem:[%s2 + $0x398] sm:$0xff]
  %v154 = vld [vmem:[%s2 + $0x3a0] sm:$0xff]
  %v155 = vld [vmem:[%s2 + $0x3a8] sm:$0xff]
  %v156 = vld [vmem:[%s2 + $0x3b0] sm:$0xff]
  %v157 = vld [vmem:[%s2 + $0x3b8] sm:$0xff]
  %v158 = vld [vmem:[%s2 + $0x3c0] sm:$0xff]
  %v159 = vld [vmem:[%s2 + $0x3c8] sm:$0xff]
  %v160 = vld [vmem:[%s2 + $0x3d0] sm:$0xff]
  %v161 = vld [vmem:[%s2 + $0x3d8] sm:$0xff]
  %v162 = vld [vmem:[%s2 + $0x3e0] sm:$0xff]
  %v163 = vld [vmem:[%s2 + $0x3e8] sm:$0xff]
  %v164 = vld [vmem:[%s2 + $0x3f0] sm:$0xff]
  %v165 = vld [vmem:[%s2 + $0x3f8] sm:$0xff]
  %v166 = vld [vmem:[%s2 + $0x400] sm:$0xff]
  %v167 = vld [vmem:[%s2 + $0x408] sm:$0xff]
  %v168 = vld [vmem:[%s2 + $0x410] sm:$0xff]
  %v169 = vld [vmem:[%s2 + $0x418] sm:$0xff]
  %v170 = vld [vmem:[%s2 + $0x420] sm:$0xff]
  %v171 = vld [vmem:[%s2 + $0x428] sm:$0xff]
  %v172 = vld [vmem:[%s2 + $0x430] sm:$0xff]
  %v173 = vld [vmem:[%s2 + $0x438] sm:$0xff]
  %v174 = vld [vmem:[%s2 + $0x440] sm:$0xff]
  %v175 = vld [vmem:[%s2 + $0x448] sm:$0xff]
  %v176 = vld [vmem:[%s2 + $0x450] sm:$0xff]
  %v177 = vld [vmem:[%s2 + $0x458] sm:$0xff]
  %v178 = vld [vmem:[%s2 + $0x460] sm:$0xff]
  %v179 = vld [vmem:[%s2 + $0x468] sm:$0xff]
  %v180 = vld [vmem:[%s2 + $0x470] sm:$0xff]
  %v181 = vld [vmem:[%s2 + $0x478] sm:$0xff]
  %v182 = vld [vmem:[%s2 + $0x480] sm:$0xff]
  %v183 = vld [vmem:[%s2 + $0x488] sm:$0xff]
  %v184 = vld [vmem:[%s2 + $0x490] sm:$0xff]
  %v185 = vld [vmem:[%s2 + $0x498] sm:$0xff]
  %v186 = vld [vmem:[%s2 + $0x4a0] sm:$0xff]
  %v187 = vld [vmem:[%s2 + $0x4a8] sm:$0xff]
  %v188 = vld [vmem:[%s2 + $0x4b0] sm:$0xff]
  %v189 = vld [vmem:[%s2 + $0x4b8] sm:$0xff]
  %v190 = vld [vmem:[%s2 + $0x4c0] sm:$0xff]
  %v191 = vld [vmem:[%s2 + $0x4c8] sm:$0xff]
  %v192 = vld [vmem:[%s2 + $0x4d0] sm:$0xff]
  %v193 = vld [vmem:[%s2 + $0x4d8] sm:$0xff]
  %v194 = vld [vmem:[%s2 + $0x4e0] sm:$0xff]
  %v195 = vld [vmem:[%s2 + $0x4e8] sm:$0xff]
  %v196 = vld [vmem:[%s2 + $0x4f0] sm:$0xff]
  %v197 = vld [vmem:[%s2 + $0x4f8] sm:$0xff]
  %v198 = vld [vmem:[%s2 + $0x500] sm:$0xff]
  %v199 = vld [vmem:[%s2 + $0x508] sm:$0xff]
  %v200 = vld [vmem:[%s2 + $0x510] sm:$0xff]
  %v201 = vld [vmem:[%s2 + $0x518] sm:$0xff]
  %v202 = vld [vmem:[%s2 + $0x520] sm:$0xff]
  %v203 = vld [vmem:[%s2 + $0x528] sm:$0xff]
  %v204 = vld [vmem:[%s2 + $0x530] sm:$0xff]
  %v205 = vld [vmem:[%s2 + $0x538] sm:$0xff]
  %v206 = vld [vmem:[%s2 + $0x540] sm:$0xff]
  %v207 = vld [vmem:[%s2 + $0x548] sm:$0xff]
  %v208 = vld [vmem:[%s2 + $0x550] sm:$0xff]
  %v209 = vld [vmem:[%s2 + $0x558] sm:$0xff]
  %v210 = vld [vmem:[%s2 + $0x560] sm:$0xff]
  %v211 = vld [vmem:[%s2 + $0x568] sm:$0xff]
  %v212 = vld [vmem:[%s2 + $0x570] sm:$0xff]
  %v213 = vld [vmem:[%s2 + $0x578] sm:$0xff]
  %v214 = vld [vmem:[%s2 + $0x580] sm:$0xff]
  %v215 = vld [vmem:[%s2 + $0x588] sm:$0xff]
  %v216 = vld [vmem:[%s2 + $0x590] sm:$0xff]
  %v217 = vld [vmem:[%s2 + $0x598] sm:$0xff]
  %v218 = vld [vmem:[%s2 + $0x5a0] sm:$0xff]
  %v219 = vld [vmem:[%s2 + $0x5a8] sm:$0xff]
  %v220 = vld [vmem:[%s2 + $0x5b0] sm:$0xff]
  %v221 = vld [vmem:[%s2 + $0x5b8] sm:$0xff]
  %v222 = vld [vmem:[%s2 + $0x5c0] sm:$0xff]
  %v223 = vld [vmem:[%s2 + $0x5c8] sm:$0xff]
  %v224 = vld [vmem:[%s2 + $0x5d0] sm:$0xff]
  %v225 = vld [vmem:[%s2 + $0x5d8] sm:$0xff]
  %v226 = vld [vmem:[%s2 + $0x5e0] sm:$0xff]
  %v227 = vld [vmem:[%s2 + $0x5e8] sm:$0xff]
  %v228 = vld [vmem:[%s2 + $0x5f0] sm:$0xff]
  %v229 = vld [vmem:[%s2 + $0x5f8] sm:$0xff]
  %v230 = vld [vmem:[%s3] sm:$0x3]
  %v231 = vld [vmem:[%s1] sm:$0xff]
  %v232 = vld [vmem:[%s1 + $0x8] sm:$0xff]
  %v233 = vld [vmem:[%s0] sm:$0xff]
  %v234 = vld [vmem:[%s0 + $0x8] sm:$0xff]
  %v235 = vld [vmem:[%s0 + $0x10] sm:$0xff]
  %v236 = vld [vmem:[%s0 + $0x18] sm:$0xff]
  %v237 = vld [vmem:[%s0 + $0x20] sm:$0xff]
  %v238 = vld [vmem:[%s0 + $0x28] sm:$0xff]
  %v239 = vunpack.c.l.bf16 %v233
  %v240 = vunpack.c.h.bf16 %v233
  %v241 = vunpack.c.l.bf16 %v234
  %v242 = vunpack.c.h.bf16 %v234
  %v243 = vunpack.c.l.bf16 %v235
  %v244 = vunpack.c.h.bf16 %v235
  %v245 = vunpack.c.l.bf16 %v236
  %v246 = vunpack.c.h.bf16 %v236
  %v247 = vunpack.c.l.bf16 %v237
  %v248 = vunpack.c.h.bf16 %v237
  %v249 = vunpack.c.l.bf16 %v238
  %v250 = vunpack.c.h.bf16 %v238
  %251 = vmatprep.subr.mxu0 %v39
  %252 = vmatpush1.msra.mxu0 %v38
  %253 = vmatprep.subr.mxu0 %v45
  %254 = vmatpush1.msra.mxu0 %v44
  %255 = vmatprep.subr.mxu0 %v51
  %256 = vmatpush1.msra.mxu0 %v50
  %257 = vmatprep.subr.mxu0 %v57
  %258 = vmatpush1.msra.mxu0 %v56
  %259 = vmatprep.subr.mxu0 %v63
  %260 = vmatpush1.msra.mxu0 %v62
  %261 = vmatprep.subr.mxu0 %v69
  %262 = vmatpush1.msra.mxu0 %v68
  %263 = vmatprep.subr.mxu0 %v75
  %264 = vmatpush1.msra.mxu0 %v74
  %265 = vmatprep.subr.mxu0 %v81
  %266 = vmatpush1.msra.mxu0 %v80
  %267 = vmatprep.subr.mxu0 %v87
  %268 = vmatpush1.msra.mxu0 %v86
  %269 = vmatprep.subr.mxu0 %v93
  %270 = vmatpush1.msra.mxu0 %v92
  %271 = vmatprep.subr.mxu0 %v99
  %272 = vmatpush1.msra.mxu0 %v98
  %273 = vmatprep.subr.mxu0 %v105
  %274 = vmatpush1.msra.mxu0 %v104
  %275 = vmatprep.subr.mxu0 %v111
  %276 = vmatpush1.msra.mxu0 %v110
  %277 = vmatprep.subr.mxu0 %v117
  %278 = vmatpush1.msra.mxu0 %v116
  %279 = vmatprep.subr.mxu0 %v123
  %280 = vmatpush1.msra.mxu0 %v122
  %281 = vmatprep.subr.mxu0 %v129
  %282 = vmatpush1.msra.mxu0 %v128
  %283 = vmatprep.subr.mxu0 %v135
  %284 = vmatpush1.msra.mxu0 %v134
  %285 = vmatprep.subr.mxu0 %v141
  %286 = vmatpush1.msra.mxu0 %v140
  %287 = vmatprep.subr.mxu0 %v147
  %288 = vmatpush1.msra.mxu0 %v146
  %289 = vmatprep.subr.mxu0 %v153
  %290 = vmatpush1.msra.mxu0 %v152
  %291 = vmatprep.subr.mxu0 %v159
  %292 = vmatpush1.msra.mxu0 %v158
  %293 = vmatprep.subr.mxu0 %v165
  %294 = vmatpush1.msra.mxu0 %v164
  %295 = vmatprep.subr.mxu0 %v171
  %296 = vmatpush1.msra.mxu0 %v170
  %297 = vmatprep.subr.mxu0 %v177
  %298 = vmatpush1.msra.mxu0 %v176
  %299 = vmatprep.subr.mxu0 %v183
  %300 = vmatpush1.msra.mxu0 %v182
  %301 = vmatprep.subr.mxu0 %v189
  %302 = vmatpush1.msra.mxu0 %v188
  %303 = vmatprep.subr.mxu0 %v195
  %304 = vmatpush1.msra.mxu0 %v194
  %305 = vmatprep.subr.mxu0 %v201
  %306 = vmatpush1.msra.mxu0 %v200
  %307 = vmatprep.subr.mxu0 %v207
  %308 = vmatpush1.msra.mxu0 %v206
  %309 = vmatprep.subr.mxu0 %v213
  %310 = vmatpush1.msra.mxu0 %v212
  %311 = vmatprep.subr.mxu0 %v219
  %312 = vmatpush1.msra.mxu0 %v218
  %313 = vmatprep.subr.mxu0 %v225
  %314 = vmatpush1.msra.mxu0 %v224
  %315 = vmatprep.mubr.f32.mxu0 0.0
  %316 = vmatmul.mubr.f32.gmra.mrb[0].mxu0 0.0
  %v317 = vpop.f32.mrb[0].mxu0
  %v318 = vadd.f32 0.0, %v317
  %v319 = vpop.f32.mrb[0].mxu0
  %v320 = vadd.f32 0.0, %v319
  %321 = vmatprep.mubr.f32.mxu0 0.0
  %322 = vmatmul.mubr.f32.gmra.mrb[0].mxu0 0.0
  %v323 = vpop.f32.mrb[0].mxu0
  %v324 = vadd.f32 0.0, %v323
  %v325 = vpop.f32.mrb[0].mxu0
  %v326 = vadd.f32 0.0, %v325
  %327 = vdwg.mxu0
  %328 = vmatprep.subr.mxu0 %v41
  %329 = vmatpush1.msra.mxu0 %v40
  %330 = vmatprep.subr.mxu0 %v47
  %331 = vmatpush1.msra.mxu0 %v46
  %332 = vmatprep.subr.mxu0 %v53
  %333 = vmatpush1.msra.mxu0 %v52
  %334 = vmatprep.subr.mxu0 %v59
  %335 = vmatpush1.msra.mxu0 %v58
  %336 = vmatprep.subr.mxu0 %v65
  %337 = vmatpush1.msra.mxu0 %v64
  %338 = vmatprep.subr.mxu0 %v71
  %339 = vmatpush1.msra.mxu0 %v70
  %340 = vmatprep.subr.mxu0 %v77
  %341 = vmatpush1.msra.mxu0 %v76
  %342 = vmatprep.subr.mxu0 %v83
  %343 = vmatpush1.msra.mxu0 %v82
  %344 = vmatprep.subr.mxu0 %v89
  %345 = vmatpush1.msra.mxu0 %v88
  %346 = vmatprep.subr.mxu0 %v95
  %347 = vmatpush1.msra.mxu0 %v94
  %348 = vmatprep.subr.mxu0 %v101
  %349 = vmatpush1.msra.mxu0 %v100
  %350 = vmatprep.subr.mxu0 %v107
  %351 = vmatpush1.msra.mxu0 %v106
  %352 = vmatprep.subr.mxu0 %v113
  %353 = vmatpush1.msra.mxu0 %v112
  %354 = vmatprep.subr.mxu0 %v119
  %355 = vmatpush1.msra.mxu0 %v118
  %356 = vmatprep.subr.mxu0 %v125
  %357 = vmatpush1.msra.mxu0 %v124
  %358 = vmatprep.subr.mxu0 %v131
  %359 = vmatpush1.msra.mxu0 %v130
  %360 = vmatprep.subr.mxu0 %v137
  %361 = vmatpush1.msra.mxu0 %v136
  %362 = vmatprep.subr.mxu0 %v143
  %363 = vmatpush1.msra.mxu0 %v142
  %364 = vmatprep.subr.mxu0 %v149
  %365 = vmatpush1.msra.mxu0 %v148
  %366 = vmatprep.subr.mxu0 %v155
  %367 = vmatpush1.msra.mxu0 %v154
  %368 = vmatprep.subr.mxu0 %v161
  %369 = vmatpush1.msra.mxu0 %v160
  %370 = vmatprep.subr.mxu0 %v167
  %371 = vmatpush1.msra.mxu0 %v166
  %372 = vmatprep.subr.mxu0 %v173
  %373 = vmatpush1.msra.mxu0 %v172
  %374 = vmatprep.subr.mxu0 %v179
  %375 = vmatpush1.msra.mxu0 %v178
  %376 = vmatprep.subr.mxu0 %v185
  %377 = vmatpush1.msra.mxu0 %v184
  %378 = vmatprep.subr.mxu0 %v191
  %379 = vmatpush1.msra.mxu0 %v190
  %380 = vmatprep.subr.mxu0 %v197
  %381 = vmatpush1.msra.mxu0 %v196
  %382 = vmatprep.subr.mxu0 %v203
  %383 = vmatpush1.msra.mxu0 %v202
  %384 = vmatprep.subr.mxu0 %v209
  %385 = vmatpush1.msra.mxu0 %v208
  %386 = vmatprep.subr.mxu0 %v215
  %387 = vmatpush1.msra.mxu0 %v214
  %388 = vmatprep.subr.mxu0 %v221
  %389 = vmatpush1.msra.mxu0 %v220
  %390 = vmatprep.subr.mxu0 %v227
  %391 = vmatpush1.msra.mxu0 %v226
  %392 = vmatprep.mubr.f32.mxu0 0.0
  %393 = vmatmul.mubr.f32.gmra.mrb[0].mxu0 0.0
  %v394 = vpop.f32.mrb[0].mxu0
  %v395 = vadd.f32 0.0, %v394
  %v396 = vpop.f32.mrb[0].mxu0
  %v397 = vadd.f32 0.0, %v396
  %398 = vmatprep.mubr.f32.mxu0 0.0
  %399 = vmatmul.mubr.f32.gmra.mrb[0].mxu0 0.0
  %v400 = vpop.f32.mrb[0].mxu0
  %v401 = vadd.f32 0.0, %v400
  %v402 = vpop.f32.mrb[0].mxu0
  %v403 = vadd.f32 0.0, %v402
  %404 = vdwg.mxu0
  %405 = vmatprep.subr.mxu0 %v43
  %406 = vmatpush1.msra.mxu0 %v42
  %407 = vmatprep.subr.mxu0 %v49
  %408 = vmatpush1.msra.mxu0 %v48
  %409 = vmatprep.subr.mxu0 %v55
  %410 = vmatpush1.msra.mxu0 %v54
  %411 = vmatprep.subr.mxu0 %v61
  %412 = vmatpush1.msra.mxu0 %v60
  %413 = vmatprep.subr.mxu0 %v67
  %414 = vmatpush1.msra.mxu0 %v66
  %415 = vmatprep.subr.mxu0 %v73
  %416 = vmatpush1.msra.mxu0 %v72
  %417 = vmatprep.subr.mxu0 %v79
  %418 = vmatpush1.msra.mxu0 %v78
  %419 = vmatprep.subr.mxu0 %v85
  %420 = vmatpush1.msra.mxu0 %v84
  %421 = vmatprep.subr.mxu0 %v91
  %422 = vmatpush1.msra.mxu0 %v90
  %423 = vmatprep.subr.mxu0 %v97
  %424 = vmatpush1.msra.mxu0 %v96
  %425 = vmatprep.subr.mxu0 %v103
  %426 = vmatpush1.msra.mxu0 %v102
  %427 = vmatprep.subr.mxu0 %v109
  %428 = vmatpush1.msra.mxu0 %v108
  %429 = vmatprep.subr.mxu0 %v115
  %430 = vmatpush1.msra.mxu0 %v114
  %431 = vmatprep.subr.mxu0 %v121
  %432 = vmatpush1.msra.mxu0 %v120
  %433 = vmatprep.subr.mxu0 %v127
  %434 = vmatpush1.msra.mxu0 %v126
  %435 = vmatprep.subr.mxu0 %v133
  %436 = vmatpush1.msra.mxu0 %v132
  %437 = vmatprep.subr.mxu0 %v139
  %438 = vmatpush1.msra.mxu0 %v138
  %439 = vmatprep.subr.mxu0 %v145
  %440 = vmatpush1.msra.mxu0 %v144
  %441 = vmatprep.subr.mxu0 %v151
  %442 = vmatpush1.msra.mxu0 %v150
  %443 = vmatprep.subr.mxu0 %v157
  %444 = vmatpush1.msra.mxu0 %v156
  %445 = vmatprep.subr.mxu0 %v163
  %446 = vmatpush1.msra.mxu0 %v162
  %447 = vmatprep.subr.mxu0 %v169
  %448 = vmatpush1.msra.mxu0 %v168
  %449 = vmatprep.subr.mxu0 %v175
  %450 = vmatpush1.msra.mxu0 %v174
  %451 = vmatprep.subr.mxu0 %v181
  %452 = vmatpush1.msra.mxu0 %v180
  %453 = vmatprep.subr.mxu0 %v187
  %454 = vmatpush1.msra.mxu0 %v186
  %455 = vmatprep.subr.mxu0 %v193
  %456 = vmatpush1.msra.mxu0 %v192
  %457 = vmatprep.subr.mxu0 %v199
  %458 = vmatpush1.msra.mxu0 %v198
  %459 = vmatprep.subr.mxu0 %v205
  %460 = vmatpush1.msra.mxu0 %v204
  %461 = vmatprep.subr.mxu0 %v211
  %462 = vmatpush1.msra.mxu0 %v210
  %463 = vmatprep.subr.mxu0 %v217
  %464 = vmatpush1.msra.mxu0 %v216
  %465 = vmatprep.subr.mxu0 %v223
  %466 = vmatpush1.msra.mxu0 %v222
  %467 = vmatprep.subr.mxu0 %v229
  %468 = vmatpush1.msra.mxu0 %v228
  %469 = vmatprep.mubr.f32.mxu0 0.0
  %470 = vmatmul.mubr.f32.gmra.mrb[0].mxu0 0.0
  %v471 = vpop.f32.mrb[0].mxu0
  %v472 = vadd.f32 0.0, %v471
  %v473 = vpop.f32.mrb[0].mxu0
  %v474 = vadd.f32 0.0, %v473
  %475 = vmatprep.mubr.f32.mxu0 0.0
  %476 = vmatmul.mubr.f32.gmra.mrb[0].mxu0 0.0
  %v477 = vpop.f32.mrb[0].mxu0
  %v478 = vadd.f32 0.0, %v477
  %v479 = vpop.f32.mrb[0].mxu0
  %v480 = vadd.f32 0.0, %v479
  %481 = vdwg.mxu0
  %v482 = vadd.f32 %v239, %v318
  %v483 = vadd.f32 %v240, %v320
  %v484 = vadd.f32 %v245, %v324
  %v485 = vadd.f32 %v246, %v326
  %v486 = vmul.f32 %v482, 0.5
  %v487 = vmul.f32 %v483, 0.5
  %v488 = vmul.f32 %v484, 0.5
  %v489 = vmul.f32 %v485, 0.5
  %v490 = vtanh.pop %v486
  %v491 = vtanh.pop %v487
  %v492 = vtanh.pop %v488
  %v493 = vtanh.pop %v489
  %v494 = vmul.f32 %v490, 0.5
  %v495 = vmul.f32 %v491, 0.5
  %v496 = vmul.f32 %v492, 0.5
  %v497 = vmul.f32 %v493, 0.5
  %v498 = vadd.f32 %v494, 0.5
  %v499 = vadd.f32 %v495, 0.5
  %v500 = vadd.f32 %v496, 0.5
  %v501 = vadd.f32 %v497, 0.5
  %v502 = vadd.f32 %v241, %v395
  %v503 = vadd.f32 %v242, %v397
  %v504 = vadd.f32 %v247, %v401
  %v505 = vadd.f32 %v248, %v403
  %v506 = vmul.f32 %v502, 0.5
  %v507 = vmul.f32 %v503, 0.5
  %v508 = vmul.f32 %v504, 0.5
  %v509 = vmul.f32 %v505, 0.5
  %v510 = vtanh.pop %v506
  %v511 = vtanh.pop %v507
  %v512 = vtanh.pop %v508
  %v513 = vtanh.pop %v509
  %v514 = vmul.f32 %v510, 0.5
  %v515 = vmul.f32 %v511, 0.5
  %v516 = vmul.f32 %v512, 0.5
  %v517 = vmul.f32 %v513, 0.5
  %v518 = vadd.f32 %v514, 0.5
  %v519 = vadd.f32 %v515, 0.5
  %v520 = vadd.f32 %v516, 0.5
  %v521 = vadd.f32 %v517, 0.5
  %v523 = vlaneseq
  %v524 = vshrl.u32 %v523, 7
  %v525 = vsub.s32 0, %v524
  %v526 = vrot.slane %v230, %v525
  %v527 = vlaneseq
  %v528 = vshrl.u32 %v527, 7
  %v529 = vsub.s32 1, %v528
  %v530 = vrot.slane %v230, %v529
  %v533 = vadd.f32 %v472, %v526
  %v534 = vadd.f32 %v474, %v530
  %v535 = vadd.f32 %v478, %v526
  %v536 = vadd.f32 %v480, %v530
  %v537 = vmul.f32 %v498, %v533
  %v538 = vmul.f32 %v499, %v534
  %v539 = vmul.f32 %v500, %v535
  %v540 = vmul.f32 %v501, %v536
  %v541 = vadd.f32 %v243, %v537
  %v542 = vadd.f32 %v244, %v538
  %v543 = vadd.f32 %v249, %v539
  %v544 = vadd.f32 %v250, %v540
  %v545 = vtanh.pop %v541
  %v546 = vtanh.pop %v542
  %v547 = vtanh.pop %v543
  %v548 = vtanh.pop %v544
  %v549 = vsub.f32 0.0, %v545
  %v550 = vsub.f32 0.0, %v546
  %v551 = vsub.f32 0.0, %v547
  %v552 = vsub.f32 0.0, %v548
  %v553 = vmul.f32 %v518, %v549
  %v554 = vmul.f32 %v519, %v550
  %v555 = vmul.f32 %v520, %v551
  %v556 = vmul.f32 %v521, %v552
  %v557 = vadd.f32 %v545, %v553
  %v558 = vadd.f32 %v546, %v554
  %v559 = vadd.f32 %v547, %v555
  %v560 = vadd.f32 %v548, %v556
  %vm561 = vcmp.gt.s32.totalorder %v231, 0
  %vm562 = vcmp.gt.s32.totalorder %v232, 0
  %v563 = vsel %vm561, 1, 0
  %v564 = vsel %vm562, 1, 0
  %565 = vset.pattern.permute.xlu0 0
  %566 = vperm.xlu0 %565, %v563
  %v567 = vpop.permute.xlu0 %566
  %568 = vset.pattern.permute.xlu0 0
  %569 = vperm.xlu0 %568, %v564
  %v570 = vpop.permute.xlu0 %569
  %vm571 = vcmp.eq.s32.totalorder %v567, 1
  %vm572 = vcmp.eq.s32.totalorder %v570, 1
  %v573 = vsel %vm571, %v557, 0.0
  %v574 = vsel %vm571, %v558, 0.0
  %v575 = vsel %vm572, %v559, 0.0
  %v576 = vsel %vm572, %v560, 0.0
  %s577 = scalar_lea.vmem %s0, 48
  %v578 = vld [vmem:[%s577] sm:$0xff]
  %v579 = vld [vmem:[%s577 + $0x8] sm:$0xff]
  %v580 = vld [vmem:[%s577 + $0x10] sm:$0xff]
  %v581 = vld [vmem:[%s577 + $0x18] sm:$0xff]
  %v582 = vld [vmem:[%s577 + $0x20] sm:$0xff]
  %v583 = vld [vmem:[%s577 + $0x28] sm:$0xff]
  %v584 = vunpack.c.l.bf16 %v578
  %v585 = vunpack.c.h.bf16 %v578
  %v586 = vunpack.c.l.bf16 %v579
  %v587 = vunpack.c.h.bf16 %v579
  %v588 = vunpack.c.l.bf16 %v580
  %v589 = vunpack.c.h.bf16 %v580
  %v590 = vunpack.c.l.bf16 %v581
  %v591 = vunpack.c.h.bf16 %v581
  %v592 = vunpack.c.l.bf16 %v582
  %v593 = vunpack.c.h.bf16 %v582
  %v594 = vunpack.c.l.bf16 %v583
  %v595 = vunpack.c.h.bf16 %v583
  %596 = vmatprep.subr.mxu0 %v39
  %597 = vmatpush1.msra.mxu0 %v38
  %598 = vmatprep.subr.mxu0 %v45
  %599 = vmatpush1.msra.mxu0 %v44
  %600 = vmatprep.subr.mxu0 %v51
  %601 = vmatpush1.msra.mxu0 %v50
  %602 = vmatprep.subr.mxu0 %v57
  %603 = vmatpush1.msra.mxu0 %v56
  %604 = vmatprep.subr.mxu0 %v63
  %605 = vmatpush1.msra.mxu0 %v62
  %606 = vmatprep.subr.mxu0 %v69
  %607 = vmatpush1.msra.mxu0 %v68
  %608 = vmatprep.subr.mxu0 %v75
  %609 = vmatpush1.msra.mxu0 %v74
  %610 = vmatprep.subr.mxu0 %v81
  %611 = vmatpush1.msra.mxu0 %v80
  %612 = vmatprep.subr.mxu0 %v87
  %613 = vmatpush1.msra.mxu0 %v86
  %614 = vmatprep.subr.mxu0 %v93
  %615 = vmatpush1.msra.mxu0 %v92
  %616 = vmatprep.subr.mxu0 %v99
  %617 = vmatpush1.msra.mxu0 %v98
  %618 = vmatprep.subr.mxu0 %v105
  %619 = vmatpush1.msra.mxu0 %v104
  %620 = vmatprep.subr.mxu0 %v111
  %621 = vmatpush1.msra.mxu0 %v110
  %622 = vmatprep.subr.mxu0 %v117
  %623 = vmatpush1.msra.mxu0 %v116
  %624 = vmatprep.subr.mxu0 %v123
  %625 = vmatpush1.msra.mxu0 %v122
  %626 = vmatprep.subr.mxu0 %v129
  %627 = vmatpush1.msra.mxu0 %v128
  %628 = vmatprep.subr.mxu0 %v135
  %629 = vmatpush1.msra.mxu0 %v134
  %630 = vmatprep.subr.mxu0 %v141
  %631 = vmatpush1.msra.mxu0 %v140
  %632 = vmatprep.subr.mxu0 %v147
  %633 = vmatpush1.msra.mxu0 %v146
  %634 = vmatprep.subr.mxu0 %v153
  %635 = vmatpush1.msra.mxu0 %v152
  %636 = vmatprep.subr.mxu0 %v159
  %637 = vmatpush1.msra.mxu0 %v158
  %638 = vmatprep.subr.mxu0 %v165
  %639 = vmatpush1.msra.mxu0 %v164
  %640 = vmatprep.subr.mxu0 %v171
  %641 = vmatpush1.msra.mxu0 %v170
  %642 = vmatprep.subr.mxu0 %v177
  %643 = vmatpush1.msra.mxu0 %v176
  %644 = vmatprep.subr.mxu0 %v183
  %645 = vmatpush1.msra.mxu0 %v182
  %646 = vmatprep.subr.mxu0 %v189
  %647 = vmatpush1.msra.mxu0 %v188
  %648 = vmatprep.subr.mxu0 %v195
  %649 = vmatpush1.msra.mxu0 %v194
  %650 = vmatprep.subr.mxu0 %v201
  %651 = vmatpush1.msra.mxu0 %v200
  %652 = vmatprep.subr.mxu0 %v207
  %653 = vmatpush1.msra.mxu0 %v206
  %654 = vmatprep.subr.mxu0 %v213
  %655 = vmatpush1.msra.mxu0 %v212
  %656 = vmatprep.subr.mxu0 %v219
  %657 = vmatpush1.msra.mxu0 %v218
  %658 = vmatprep.subr.mxu0 %v225
  %659 = vmatpush1.msra.mxu0 %v224
  %660 = vmatprep.mubr.f32.mxu0 %v574
  %661 = vmatmul.mubr.f32.gmra.mrb[0].mxu0 %v573
  %v662 = vpop.f32.mrb[0].mxu0
  %v663 = vadd.f32 0.0, %v662
  %v664 = vpop.f32.mrb[0].mxu0
  %v665 = vadd.f32 0.0, %v664
  %666 = vmatprep.mubr.f32.mxu0 %v576
  %667 = vmatmul.mubr.f32.gmra.mrb[0].mxu0 %v575
  %v668 = vpop.f32.mrb[0].mxu0
  %v669 = vadd.f32 0.0, %v668
  %v670 = vpop.f32.mrb[0].mxu0
  %v671 = vadd.f32 0.0, %v670
  %672 = vdwg.mxu0
  %673 = vmatprep.subr.mxu0 %v41
  %674 = vmatpush1.msra.mxu0 %v40
  %675 = vmatprep.subr.mxu0 %v47
  %676 = vmatpush1.msra.mxu0 %v46
  %677 = vmatprep.subr.mxu0 %v53
  %678 = vmatpush1.msra.mxu0 %v52
  %679 = vmatprep.subr.mxu0 %v59
  %680 = vmatpush1.msra.mxu0 %v58
  %681 = vmatprep.subr.mxu0 %v65
  %682 = vmatpush1.msra.mxu0 %v64
  %683 = vmatprep.subr.mxu0 %v71
  %684 = vmatpush1.msra.mxu0 %v70
  %685 = vmatprep.subr.mxu0 %v77
  %686 = vmatpush1.msra.mxu0 %v76
  %687 = vmatprep.subr.mxu0 %v83
  %688 = vmatpush1.msra.mxu0 %v82
  %689 = vmatprep.subr.mxu0 %v89
  %690 = vmatpush1.msra.mxu0 %v88
  %691 = vmatprep.subr.mxu0 %v95
  %692 = vmatpush1.msra.mxu0 %v94
  %693 = vmatprep.subr.mxu0 %v101
  %694 = vmatpush1.msra.mxu0 %v100
  %695 = vmatprep.subr.mxu0 %v107
  %696 = vmatpush1.msra.mxu0 %v106
  %697 = vmatprep.subr.mxu0 %v113
  %698 = vmatpush1.msra.mxu0 %v112
  %699 = vmatprep.subr.mxu0 %v119
  %700 = vmatpush1.msra.mxu0 %v118
  %701 = vmatprep.subr.mxu0 %v125
  %702 = vmatpush1.msra.mxu0 %v124
  %703 = vmatprep.subr.mxu0 %v131
  %704 = vmatpush1.msra.mxu0 %v130
  %705 = vmatprep.subr.mxu0 %v137
  %706 = vmatpush1.msra.mxu0 %v136
  %707 = vmatprep.subr.mxu0 %v143
  %708 = vmatpush1.msra.mxu0 %v142
  %709 = vmatprep.subr.mxu0 %v149
  %710 = vmatpush1.msra.mxu0 %v148
  %711 = vmatprep.subr.mxu0 %v155
  %712 = vmatpush1.msra.mxu0 %v154
  %713 = vmatprep.subr.mxu0 %v161
  %714 = vmatpush1.msra.mxu0 %v160
  %715 = vmatprep.subr.mxu0 %v167
  %716 = vmatpush1.msra.mxu0 %v166
  %717 = vmatprep.subr.mxu0 %v173
  %718 = vmatpush1.msra.mxu0 %v172
  %719 = vmatprep.subr.mxu0 %v179
  %720 = vmatpush1.msra.mxu0 %v178
  %721 = vmatprep.subr.mxu0 %v185
  %722 = vmatpush1.msra.mxu0 %v184
  %723 = vmatprep.subr.mxu0 %v191
  %724 = vmatpush1.msra.mxu0 %v190
  %725 = vmatprep.subr.mxu0 %v197
  %726 = vmatpush1.msra.mxu0 %v196
  %727 = vmatprep.subr.mxu0 %v203
  %728 = vmatpush1.msra.mxu0 %v202
  %729 = vmatprep.subr.mxu0 %v209
  %730 = vmatpush1.msra.mxu0 %v208
  %731 = vmatprep.subr.mxu0 %v215
  %732 = vmatpush1.msra.mxu0 %v214
  %733 = vmatprep.subr.mxu0 %v221
  %734 = vmatpush1.msra.mxu0 %v220
  %735 = vmatprep.subr.mxu0 %v227
  %736 = vmatpush1.msra.mxu0 %v226
  %737 = vmatprep.mubr.f32.mxu0 %v574
  %738 = vmatmul.mubr.f32.gmra.mrb[0].mxu0 %v573
  %v739 = vpop.f32.mrb[0].mxu0
  %v740 = vadd.f32 0.0, %v739
  %v741 = vpop.f32.mrb[0].mxu0
  %v742 = vadd.f32 0.0, %v741
  %743 = vmatprep.mubr.f32.mxu0 %v576
  %744 = vmatmul.mubr.f32.gmra.mrb[0].mxu0 %v575
  %v745 = vpop.f32.mrb[0].mxu0
  %v746 = vadd.f32 0.0, %v745
  %v747 = vpop.f32.mrb[0].mxu0
  %v748 = vadd.f32 0.0, %v747
  %749 = vdwg.mxu0
  %750 = vmatprep.subr.mxu0 %v43
  %751 = vmatpush1.msra.mxu0 %v42
  %752 = vmatprep.subr.mxu0 %v49
  %753 = vmatpush1.msra.mxu0 %v48
  %754 = vmatprep.subr.mxu0 %v55
  %755 = vmatpush1.msra.mxu0 %v54
  %756 = vmatprep.subr.mxu0 %v61
  %757 = vmatpush1.msra.mxu0 %v60
  %758 = vmatprep.subr.mxu0 %v67
  %759 = vmatpush1.msra.mxu0 %v66
  %760 = vmatprep.subr.mxu0 %v73
  %761 = vmatpush1.msra.mxu0 %v72
  %762 = vmatprep.subr.mxu0 %v79
  %763 = vmatpush1.msra.mxu0 %v78
  %764 = vmatprep.subr.mxu0 %v85
  %765 = vmatpush1.msra.mxu0 %v84
  %766 = vmatprep.subr.mxu0 %v91
  %767 = vmatpush1.msra.mxu0 %v90
  %768 = vmatprep.subr.mxu0 %v97
  %769 = vmatpush1.msra.mxu0 %v96
  %770 = vmatprep.subr.mxu0 %v103
  %771 = vmatpush1.msra.mxu0 %v102
  %772 = vmatprep.subr.mxu0 %v109
  %773 = vmatpush1.msra.mxu0 %v108
  %774 = vmatprep.subr.mxu0 %v115
  %775 = vmatpush1.msra.mxu0 %v114
  %776 = vmatprep.subr.mxu0 %v121
  %777 = vmatpush1.msra.mxu0 %v120
  %778 = vmatprep.subr.mxu0 %v127
  %779 = vmatpush1.msra.mxu0 %v126
  %780 = vmatprep.subr.mxu0 %v133
  %781 = vmatpush1.msra.mxu0 %v132
  %782 = vmatprep.subr.mxu0 %v139
  %783 = vmatpush1.msra.mxu0 %v138
  %784 = vmatprep.subr.mxu0 %v145
  %785 = vmatpush1.msra.mxu0 %v144
  %786 = vmatprep.subr.mxu0 %v151
  %787 = vmatpush1.msra.mxu0 %v150
  %788 = vmatprep.subr.mxu0 %v157
  %789 = vmatpush1.msra.mxu0 %v156
  %790 = vmatprep.subr.mxu0 %v163
  %791 = vmatpush1.msra.mxu0 %v162
  %792 = vmatprep.subr.mxu0 %v169
  %793 = vmatpush1.msra.mxu0 %v168
  %794 = vmatprep.subr.mxu0 %v175
  %795 = vmatpush1.msra.mxu0 %v174
  %796 = vmatprep.subr.mxu0 %v181
  %797 = vmatpush1.msra.mxu0 %v180
  %798 = vmatprep.subr.mxu0 %v187
  %799 = vmatpush1.msra.mxu0 %v186
  %800 = vmatprep.subr.mxu0 %v193
  %801 = vmatpush1.msra.mxu0 %v192
  %802 = vmatprep.subr.mxu0 %v199
  %803 = vmatpush1.msra.mxu0 %v198
  %804 = vmatprep.subr.mxu0 %v205
  %805 = vmatpush1.msra.mxu0 %v204
  %806 = vmatprep.subr.mxu0 %v211
  %807 = vmatpush1.msra.mxu0 %v210
  %808 = vmatprep.subr.mxu0 %v217
  %809 = vmatpush1.msra.mxu0 %v216
  %810 = vmatprep.subr.mxu0 %v223
  %811 = vmatpush1.msra.mxu0 %v222
  %812 = vmatprep.subr.mxu0 %v229
  %813 = vmatpush1.msra.mxu0 %v228
  %814 = vmatprep.mubr.f32.mxu0 %v574
  %815 = vmatmul.mubr.f32.gmra.mrb[0].mxu0 %v573
  %v816 = vpop.f32.mrb[0].mxu0
  %v817 = vadd.f32 0.0, %v816
  %v818 = vpop.f32.mrb[0].mxu0
  %v819 = vadd.f32 0.0, %v818
  %820 = vmatprep.mubr.f32.mxu0 %v576
  %821 = vmatmul.mubr.f32.gmra.mrb[0].mxu0 %v575
  %v822 = vpop.f32.mrb[0].mxu0
  %v823 = vadd.f32 0.0, %v822
  %v824 = vpop.f32.mrb[0].mxu0
  %v825 = vadd.f32 0.0, %v824
  %826 = vdwg.mxu0
  %v827 = vadd.f32 %v584, %v663
  %v828 = vadd.f32 %v585, %v665
  %v829 = vadd.f32 %v590, %v669
  %v830 = vadd.f32 %v591, %v671
  %v831 = vmul.f32 %v827, 0.5
  %v832 = vmul.f32 %v828, 0.5
  %v833 = vmul.f32 %v829, 0.5
  %v834 = vmul.f32 %v830, 0.5
  %v835 = vtanh.pop %v831
  %v836 = vtanh.pop %v832
  %v837 = vtanh.pop %v833
  %v838 = vtanh.pop %v834
  %v839 = vmul.f32 %v835, 0.5
  %v840 = vmul.f32 %v836, 0.5
  %v841 = vmul.f32 %v837, 0.5
  %v842 = vmul.f32 %v838, 0.5
  %v843 = vadd.f32 %v839, 0.5
  %v844 = vadd.f32 %v840, 0.5
  %v845 = vadd.f32 %v841, 0.5
  %v846 = vadd.f32 %v842, 0.5
  %v847 = vadd.f32 %v586, %v740
  %v848 = vadd.f32 %v587, %v742
  %v849 = vadd.f32 %v592, %v746
  %v850 = vadd.f32 %v593, %v748
  %v851 = vmul.f32 %v847, 0.5
  %v852 = vmul.f32 %v848, 0.5
  %v853 = vmul.f32 %v849, 0.5
  %v854 = vmul.f32 %v850, 0.5
  %v855 = vtanh.pop %v851
  %v856 = vtanh.pop %v852
  %v857 = vtanh.pop %v853
  %v858 = vtanh.pop %v854
  %v859 = vmul.f32 %v855, 0.5
  %v860 = vmul.f32 %v856, 0.5
  %v861 = vmul.f32 %v857, 0.5
  %v862 = vmul.f32 %v858, 0.5
  %v863 = vadd.f32 %v859, 0.5
  %v864 = vadd.f32 %v860, 0.5
  %v865 = vadd.f32 %v861, 0.5
  %v866 = vadd.f32 %v862, 0.5
  %v867 = vadd.f32 %v817, %v526
  %v868 = vadd.f32 %v819, %v530
  %v869 = vadd.f32 %v823, %v526
  %v870 = vadd.f32 %v825, %v530
  %v871 = vmul.f32 %v843, %v867
  %v872 = vmul.f32 %v844, %v868
  %v873 = vmul.f32 %v845, %v869
  %v874 = vmul.f32 %v846, %v870
  %v875 = vadd.f32 %v588, %v871
  %v876 = vadd.f32 %v589, %v872
  %v877 = vadd.f32 %v594, %v873
  %v878 = vadd.f32 %v595, %v874
  %v879 = vtanh.pop %v875
  %v880 = vtanh.pop %v876
  %v881 = vtanh.pop %v877
  %v882 = vtanh.pop %v878
  %v883 = vsub.f32 %v573, %v879
  %v884 = vsub.f32 %v574, %v880
  %v885 = vsub.f32 %v575, %v881
  %v886 = vsub.f32 %v576, %v882
  %v887 = vmul.f32 %v863, %v883
  %v888 = vmul.f32 %v864, %v884
  %v889 = vmul.f32 %v865, %v885
  %v890 = vmul.f32 %v866, %v886
  %v891 = vadd.f32 %v879, %v887
  %v892 = vadd.f32 %v880, %v888
  %v893 = vadd.f32 %v881, %v889
  %v894 = vadd.f32 %v882, %v890
  %vm895 = vcmp.gt.s32.totalorder %v231, 1
  %vm896 = vcmp.gt.s32.totalorder %v232, 1
  %v897 = vsel %vm895, 1, 0
  %v898 = vsel %vm896, 1, 0
  %899 = vset.pattern.permute.xlu0 0
  %900 = vperm.xlu0 %899, %v897
  %v901 = vpop.permute.xlu0 %900
  %902 = vset.pattern.permute.xlu0 0
  %903 = vperm.xlu0 %902, %v898
  %v904 = vpop.permute.xlu0 %903
  %vm905 = vcmp.eq.s32.totalorder %v901, 1
  %vm906 = vcmp.eq.s32.totalorder %v904, 1
  %v907 = vsel %vm905, %v891, %v573
  %v908 = vsel %vm905, %v892, %v574
  %v909 = vsel %vm906, %v893, %v575
  %v910 = vsel %vm906, %v894, %v576
  %s911 = scalar_lea.vmem %s0, 96
  %v912 = vld [vmem:[%s911] sm:$0xff]
  %v913 = vld [vmem:[%s911 + $0x8] sm:$0xff]
  %v914 = vld [vmem:[%s911 + $0x10] sm:$0xff]
  %v915 = vld [vmem:[%s911 + $0x18] sm:$0xff]
  %v916 = vld [vmem:[%s911 + $0x20] sm:$0xff]
  %v917 = vld [vmem:[%s911 + $0x28] sm:$0xff]
  %v918 = vunpack.c.l.bf16 %v912
  %v919 = vunpack.c.h.bf16 %v912
  %v920 = vunpack.c.l.bf16 %v913
  %v921 = vunpack.c.h.bf16 %v913
  %v922 = vunpack.c.l.bf16 %v914
  %v923 = vunpack.c.h.bf16 %v914
  %v924 = vunpack.c.l.bf16 %v915
  %v925 = vunpack.c.h.bf16 %v915
  %v926 = vunpack.c.l.bf16 %v916
  %v927 = vunpack.c.h.bf16 %v916
  %v928 = vunpack.c.l.bf16 %v917
  %v929 = vunpack.c.h.bf16 %v917
  %930 = vmatprep.subr.mxu0 %v39
  %931 = vmatpush1.msra.mxu0 %v38
  %932 = vmatprep.subr.mxu0 %v45
  %933 = vmatpush1.msra.mxu0 %v44
  %934 = vmatprep.subr.mxu0 %v51
  %935 = vmatpush1.msra.mxu0 %v50
  %936 = vmatprep.subr.mxu0 %v57
  %937 = vmatpush1.msra.mxu0 %v56
  %938 = vmatprep.subr.mxu0 %v63
  %939 = vmatpush1.msra.mxu0 %v62
  %940 = vmatprep.subr.mxu0 %v69
  %941 = vmatpush1.msra.mxu0 %v68
  %942 = vmatprep.subr.mxu0 %v75
  %943 = vmatpush1.msra.mxu0 %v74
  %944 = vmatprep.subr.mxu0 %v81
  %945 = vmatpush1.msra.mxu0 %v80
  %946 = vmatprep.subr.mxu0 %v87
  %947 = vmatpush1.msra.mxu0 %v86
  %948 = vmatprep.subr.mxu0 %v93
  %949 = vmatpush1.msra.mxu0 %v92
  %950 = vmatprep.subr.mxu0 %v99
  %951 = vmatpush1.msra.mxu0 %v98
  %952 = vmatprep.subr.mxu0 %v105
  %953 = vmatpush1.msra.mxu0 %v104
  %954 = vmatprep.subr.mxu0 %v111
  %955 = vmatpush1.msra.mxu0 %v110
  %956 = vmatprep.subr.mxu0 %v117
  %957 = vmatpush1.msra.mxu0 %v116
  %958 = vmatprep.subr.mxu0 %v123
  %959 = vmatpush1.msra.mxu0 %v122
  %960 = vmatprep.subr.mxu0 %v129
  %961 = vmatpush1.msra.mxu0 %v128
  %962 = vmatprep.subr.mxu0 %v135
  %963 = vmatpush1.msra.mxu0 %v134
  %964 = vmatprep.subr.mxu0 %v141
  %965 = vmatpush1.msra.mxu0 %v140
  %966 = vmatprep.subr.mxu0 %v147
  %967 = vmatpush1.msra.mxu0 %v146
  %968 = vmatprep.subr.mxu0 %v153
  %969 = vmatpush1.msra.mxu0 %v152
  %970 = vmatprep.subr.mxu0 %v159
  %971 = vmatpush1.msra.mxu0 %v158
  %972 = vmatprep.subr.mxu0 %v165
  %973 = vmatpush1.msra.mxu0 %v164
  %974 = vmatprep.subr.mxu0 %v171
  %975 = vmatpush1.msra.mxu0 %v170
  %976 = vmatprep.subr.mxu0 %v177
  %977 = vmatpush1.msra.mxu0 %v176
  %978 = vmatprep.subr.mxu0 %v183
  %979 = vmatpush1.msra.mxu0 %v182
  %980 = vmatprep.subr.mxu0 %v189
  %981 = vmatpush1.msra.mxu0 %v188
  %982 = vmatprep.subr.mxu0 %v195
  %983 = vmatpush1.msra.mxu0 %v194
  %984 = vmatprep.subr.mxu0 %v201
  %985 = vmatpush1.msra.mxu0 %v200
  %986 = vmatprep.subr.mxu0 %v207
  %987 = vmatpush1.msra.mxu0 %v206
  %988 = vmatprep.subr.mxu0 %v213
  %989 = vmatpush1.msra.mxu0 %v212
  %990 = vmatprep.subr.mxu0 %v219
  %991 = vmatpush1.msra.mxu0 %v218
  %992 = vmatprep.subr.mxu0 %v225
  %993 = vmatpush1.msra.mxu0 %v224
  %994 = vmatprep.mubr.f32.mxu0 %v908
  %995 = vmatmul.mubr.f32.gmra.mrb[0].mxu0 %v907
  %v996 = vpop.f32.mrb[0].mxu0
  %v997 = vadd.f32 0.0, %v996
  %v998 = vpop.f32.mrb[0].mxu0
  %v999 = vadd.f32 0.0, %v998
  %1000 = vmatprep.mubr.f32.mxu0 %v910
  %1001 = vmatmul.mubr.f32.gmra.mrb[0].mxu0 %v909
  %v1002 = vpop.f32.mrb[0].mxu0
  %v1003 = vadd.f32 0.0, %v1002
  %v1004 = vpop.f32.mrb[0].mxu0
  %v1005 = vadd.f32 0.0, %v1004
  %1006 = vdwg.mxu0
  %1007 = vmatprep.subr.mxu0 %v41
  %1008 = vmatpush1.msra.mxu0 %v40
  %1009 = vmatprep.subr.mxu0 %v47
  %1010 = vmatpush1.msra.mxu0 %v46
  %1011 = vmatprep.subr.mxu0 %v53
  %1012 = vmatpush1.msra.mxu0 %v52
  %1013 = vmatprep.subr.mxu0 %v59
  %1014 = vmatpush1.msra.mxu0 %v58
  %1015 = vmatprep.subr.mxu0 %v65
  %1016 = vmatpush1.msra.mxu0 %v64
  %1017 = vmatprep.subr.mxu0 %v71
  %1018 = vmatpush1.msra.mxu0 %v70
  %1019 = vmatprep.subr.mxu0 %v77
  %1020 = vmatpush1.msra.mxu0 %v76
  %1021 = vmatprep.subr.mxu0 %v83
  %1022 = vmatpush1.msra.mxu0 %v82
  %1023 = vmatprep.subr.mxu0 %v89
  %1024 = vmatpush1.msra.mxu0 %v88
  %1025 = vmatprep.subr.mxu0 %v95
  %1026 = vmatpush1.msra.mxu0 %v94
  %1027 = vmatprep.subr.mxu0 %v101
  %1028 = vmatpush1.msra.mxu0 %v100
  %1029 = vmatprep.subr.mxu0 %v107
  %1030 = vmatpush1.msra.mxu0 %v106
  %1031 = vmatprep.subr.mxu0 %v113
  %1032 = vmatpush1.msra.mxu0 %v112
  %1033 = vmatprep.subr.mxu0 %v119
  %1034 = vmatpush1.msra.mxu0 %v118
  %1035 = vmatprep.subr.mxu0 %v125
  %1036 = vmatpush1.msra.mxu0 %v124
  %1037 = vmatprep.subr.mxu0 %v131
  %1038 = vmatpush1.msra.mxu0 %v130
  %1039 = vmatprep.subr.mxu0 %v137
  %1040 = vmatpush1.msra.mxu0 %v136
  %1041 = vmatprep.subr.mxu0 %v143
  %1042 = vmatpush1.msra.mxu0 %v142
  %1043 = vmatprep.subr.mxu0 %v149
  %1044 = vmatpush1.msra.mxu0 %v148
  %1045 = vmatprep.subr.mxu0 %v155
  %1046 = vmatpush1.msra.mxu0 %v154
  %1047 = vmatprep.subr.mxu0 %v161
  %1048 = vmatpush1.msra.mxu0 %v160
  %1049 = vmatprep.subr.mxu0 %v167
  %1050 = vmatpush1.msra.mxu0 %v166
  %1051 = vmatprep.subr.mxu0 %v173
  %1052 = vmatpush1.msra.mxu0 %v172
  %1053 = vmatprep.subr.mxu0 %v179
  %1054 = vmatpush1.msra.mxu0 %v178
  %1055 = vmatprep.subr.mxu0 %v185
  %1056 = vmatpush1.msra.mxu0 %v184
  %1057 = vmatprep.subr.mxu0 %v191
  %1058 = vmatpush1.msra.mxu0 %v190
  %1059 = vmatprep.subr.mxu0 %v197
  %1060 = vmatpush1.msra.mxu0 %v196
  %1061 = vmatprep.subr.mxu0 %v203
  %1062 = vmatpush1.msra.mxu0 %v202
  %1063 = vmatprep.subr.mxu0 %v209
  %1064 = vmatpush1.msra.mxu0 %v208
  %1065 = vmatprep.subr.mxu0 %v215
  %1066 = vmatpush1.msra.mxu0 %v214
  %1067 = vmatprep.subr.mxu0 %v221
  %1068 = vmatpush1.msra.mxu0 %v220
  %1069 = vmatprep.subr.mxu0 %v227
  %1070 = vmatpush1.msra.mxu0 %v226
  %1071 = vmatprep.mubr.f32.mxu0 %v908
  %1072 = vmatmul.mubr.f32.gmra.mrb[0].mxu0 %v907
  %v1073 = vpop.f32.mrb[0].mxu0
  %v1074 = vadd.f32 0.0, %v1073
  %v1075 = vpop.f32.mrb[0].mxu0
  %v1076 = vadd.f32 0.0, %v1075
  %1077 = vmatprep.mubr.f32.mxu0 %v910
  %1078 = vmatmul.mubr.f32.gmra.mrb[0].mxu0 %v909
  %v1079 = vpop.f32.mrb[0].mxu0
  %v1080 = vadd.f32 0.0, %v1079
  %v1081 = vpop.f32.mrb[0].mxu0
  %v1082 = vadd.f32 0.0, %v1081
  %1083 = vdwg.mxu0
  %1084 = vmatprep.subr.mxu0 %v43
  %1085 = vmatpush1.msra.mxu0 %v42
  %1086 = vmatprep.subr.mxu0 %v49
  %1087 = vmatpush1.msra.mxu0 %v48
  %1088 = vmatprep.subr.mxu0 %v55
  %1089 = vmatpush1.msra.mxu0 %v54
  %1090 = vmatprep.subr.mxu0 %v61
  %1091 = vmatpush1.msra.mxu0 %v60
  %1092 = vmatprep.subr.mxu0 %v67
  %1093 = vmatpush1.msra.mxu0 %v66
  %1094 = vmatprep.subr.mxu0 %v73
  %1095 = vmatpush1.msra.mxu0 %v72
  %1096 = vmatprep.subr.mxu0 %v79
  %1097 = vmatpush1.msra.mxu0 %v78
  %1098 = vmatprep.subr.mxu0 %v85
  %1099 = vmatpush1.msra.mxu0 %v84
  %1100 = vmatprep.subr.mxu0 %v91
  %1101 = vmatpush1.msra.mxu0 %v90
  %1102 = vmatprep.subr.mxu0 %v97
  %1103 = vmatpush1.msra.mxu0 %v96
  %1104 = vmatprep.subr.mxu0 %v103
  %1105 = vmatpush1.msra.mxu0 %v102
  %1106 = vmatprep.subr.mxu0 %v109
  %1107 = vmatpush1.msra.mxu0 %v108
  %1108 = vmatprep.subr.mxu0 %v115
  %1109 = vmatpush1.msra.mxu0 %v114
  %1110 = vmatprep.subr.mxu0 %v121
  %1111 = vmatpush1.msra.mxu0 %v120
  %1112 = vmatprep.subr.mxu0 %v127
  %1113 = vmatpush1.msra.mxu0 %v126
  %1114 = vmatprep.subr.mxu0 %v133
  %1115 = vmatpush1.msra.mxu0 %v132
  %1116 = vmatprep.subr.mxu0 %v139
  %1117 = vmatpush1.msra.mxu0 %v138
  %1118 = vmatprep.subr.mxu0 %v145
  %1119 = vmatpush1.msra.mxu0 %v144
  %1120 = vmatprep.subr.mxu0 %v151
  %1121 = vmatpush1.msra.mxu0 %v150
  %1122 = vmatprep.subr.mxu0 %v157
  %1123 = vmatpush1.msra.mxu0 %v156
  %1124 = vmatprep.subr.mxu0 %v163
  %1125 = vmatpush1.msra.mxu0 %v162
  %1126 = vmatprep.subr.mxu0 %v169
  %1127 = vmatpush1.msra.mxu0 %v168
  %1128 = vmatprep.subr.mxu0 %v175
  %1129 = vmatpush1.msra.mxu0 %v174
  %1130 = vmatprep.subr.mxu0 %v181
  %1131 = vmatpush1.msra.mxu0 %v180
  %1132 = vmatprep.subr.mxu0 %v187
  %1133 = vmatpush1.msra.mxu0 %v186
  %1134 = vmatprep.subr.mxu0 %v193
  %1135 = vmatpush1.msra.mxu0 %v192
  %1136 = vmatprep.subr.mxu0 %v199
  %1137 = vmatpush1.msra.mxu0 %v198
  %1138 = vmatprep.subr.mxu0 %v205
  %1139 = vmatpush1.msra.mxu0 %v204
  %1140 = vmatprep.subr.mxu0 %v211
  %1141 = vmatpush1.msra.mxu0 %v210
  %1142 = vmatprep.subr.mxu0 %v217
  %1143 = vmatpush1.msra.mxu0 %v216
  %1144 = vmatprep.subr.mxu0 %v223
  %1145 = vmatpush1.msra.mxu0 %v222
  %1146 = vmatprep.subr.mxu0 %v229
  %1147 = vmatpush1.msra.mxu0 %v228
  %1148 = vmatprep.mubr.f32.mxu0 %v908
  %1149 = vmatmul.mubr.f32.gmra.mrb[0].mxu0 %v907
  %v1150 = vpop.f32.mrb[0].mxu0
  %v1151 = vadd.f32 0.0, %v1150
  %v1152 = vpop.f32.mrb[0].mxu0
  %v1153 = vadd.f32 0.0, %v1152
  %1154 = vmatprep.mubr.f32.mxu0 %v910
  %1155 = vmatmul.mubr.f32.gmra.mrb[0].mxu0 %v909
  %v1156 = vpop.f32.mrb[0].mxu0
  %v1157 = vadd.f32 0.0, %v1156
  %v1158 = vpop.f32.mrb[0].mxu0
  %v1159 = vadd.f32 0.0, %v1158
  %1160 = vdwg.mxu0
  %v1161 = vadd.f32 %v918, %v997
  %v1162 = vadd.f32 %v919, %v999
  %v1163 = vadd.f32 %v924, %v1003
  %v1164 = vadd.f32 %v925, %v1005
  %v1165 = vmul.f32 %v1161, 0.5
  %v1166 = vmul.f32 %v1162, 0.5
  %v1167 = vmul.f32 %v1163, 0.5
  %v1168 = vmul.f32 %v1164, 0.5
  %v1169 = vtanh.pop %v1165
  %v1170 = vtanh.pop %v1166
  %v1171 = vtanh.pop %v1167
  %v1172 = vtanh.pop %v1168
  %v1173 = vmul.f32 %v1169, 0.5
  %v1174 = vmul.f32 %v1170, 0.5
  %v1175 = vmul.f32 %v1171, 0.5
  %v1176 = vmul.f32 %v1172, 0.5
  %v1177 = vadd.f32 %v1173, 0.5
  %v1178 = vadd.f32 %v1174, 0.5
  %v1179 = vadd.f32 %v1175, 0.5
  %v1180 = vadd.f32 %v1176, 0.5
  %v1181 = vadd.f32 %v920, %v1074
  %v1182 = vadd.f32 %v921, %v1076
  %v1183 = vadd.f32 %v926, %v1080
  %v1184 = vadd.f32 %v927, %v1082
  %v1185 = vmul.f32 %v1181, 0.5
  %v1186 = vmul.f32 %v1182, 0.5
  %v1187 = vmul.f32 %v1183, 0.5
  %v1188 = vmul.f32 %v1184, 0.5
  %v1189 = vtanh.pop %v1185
  %v1190 = vtanh.pop %v1186
  %v1191 = vtanh.pop %v1187
  %v1192 = vtanh.pop %v1188
  %v1193 = vmul.f32 %v1189, 0.5
  %v1194 = vmul.f32 %v1190, 0.5
  %v1195 = vmul.f32 %v1191, 0.5
  %v1196 = vmul.f32 %v1192, 0.5
  %v1197 = vadd.f32 %v1193, 0.5
  %v1198 = vadd.f32 %v1194, 0.5
  %v1199 = vadd.f32 %v1195, 0.5
  %v1200 = vadd.f32 %v1196, 0.5
  %v1201 = vadd.f32 %v1151, %v526
  %v1202 = vadd.f32 %v1153, %v530
  %v1203 = vadd.f32 %v1157, %v526
  %v1204 = vadd.f32 %v1159, %v530
  %v1205 = vmul.f32 %v1177, %v1201
  %v1206 = vmul.f32 %v1178, %v1202
  %v1207 = vmul.f32 %v1179, %v1203
  %v1208 = vmul.f32 %v1180, %v1204
  %v1209 = vadd.f32 %v922, %v1205
  %v1210 = vadd.f32 %v923, %v1206
  %v1211 = vadd.f32 %v928, %v1207
  %v1212 = vadd.f32 %v929, %v1208
  %v1213 = vtanh.pop %v1209
  %v1214 = vtanh.pop %v1210
  %v1215 = vtanh.pop %v1211
  %v1216 = vtanh.pop %v1212
  %v1217 = vsub.f32 %v907, %v1213
  %v1218 = vsub.f32 %v908, %v1214
  %v1219 = vsub.f32 %v909, %v1215
  %v1220 = vsub.f32 %v910, %v1216
  %v1221 = vmul.f32 %v1197, %v1217
  %v1222 = vmul.f32 %v1198, %v1218
  %v1223 = vmul.f32 %v1199, %v1219
  %v1224 = vmul.f32 %v1200, %v1220
  %v1225 = vadd.f32 %v1213, %v1221
  %v1226 = vadd.f32 %v1214, %v1222
  %v1227 = vadd.f32 %v1215, %v1223
  %v1228 = vadd.f32 %v1216, %v1224
  %vm1229 = vcmp.gt.s32.totalorder %v231, 2
  %vm1230 = vcmp.gt.s32.totalorder %v232, 2
  %v1231 = vsel %vm1229, 1, 0
  %v1232 = vsel %vm1230, 1, 0
  %1233 = vset.pattern.permute.xlu0 0
  %1234 = vperm.xlu0 %1233, %v1231
  %v1235 = vpop.permute.xlu0 %1234
  %1236 = vset.pattern.permute.xlu0 0
  %1237 = vperm.xlu0 %1236, %v1232
  %v1238 = vpop.permute.xlu0 %1237
  %vm1239 = vcmp.eq.s32.totalorder %v1235, 1
  %vm1240 = vcmp.eq.s32.totalorder %v1238, 1
  %v1241 = vsel %vm1239, %v1225, %v907
  %v1242 = vsel %vm1239, %v1226, %v908
  %v1243 = vsel %vm1240, %v1227, %v909
  %v1244 = vsel %vm1240, %v1228, %v910
  %s1245 = scalar_lea.vmem %s0, 144
  %v1246 = vld [vmem:[%s1245] sm:$0xff]
  %v1247 = vld [vmem:[%s1245 + $0x8] sm:$0xff]
  %v1248 = vld [vmem:[%s1245 + $0x10] sm:$0xff]
  %v1249 = vld [vmem:[%s1245 + $0x18] sm:$0xff]
  %v1250 = vld [vmem:[%s1245 + $0x20] sm:$0xff]
  %v1251 = vld [vmem:[%s1245 + $0x28] sm:$0xff]
  %v1252 = vunpack.c.l.bf16 %v1246
  %v1253 = vunpack.c.h.bf16 %v1246
  %v1254 = vunpack.c.l.bf16 %v1247
  %v1255 = vunpack.c.h.bf16 %v1247
  %v1256 = vunpack.c.l.bf16 %v1248
  %v1257 = vunpack.c.h.bf16 %v1248
  %v1258 = vunpack.c.l.bf16 %v1249
  %v1259 = vunpack.c.h.bf16 %v1249
  %v1260 = vunpack.c.l.bf16 %v1250
  %v1261 = vunpack.c.h.bf16 %v1250
  %v1262 = vunpack.c.l.bf16 %v1251
  %v1263 = vunpack.c.h.bf16 %v1251
  %1264 = vmatprep.subr.mxu0 %v39
  %1265 = vmatpush1.msra.mxu0 %v38
  %1266 = vmatprep.subr.mxu0 %v45
  %1267 = vmatpush1.msra.mxu0 %v44
  %1268 = vmatprep.subr.mxu0 %v51
  %1269 = vmatpush1.msra.mxu0 %v50
  %1270 = vmatprep.subr.mxu0 %v57
  %1271 = vmatpush1.msra.mxu0 %v56
  %1272 = vmatprep.subr.mxu0 %v63
  %1273 = vmatpush1.msra.mxu0 %v62
  %1274 = vmatprep.subr.mxu0 %v69
  %1275 = vmatpush1.msra.mxu0 %v68
  %1276 = vmatprep.subr.mxu0 %v75
  %1277 = vmatpush1.msra.mxu0 %v74
  %1278 = vmatprep.subr.mxu0 %v81
  %1279 = vmatpush1.msra.mxu0 %v80
  %1280 = vmatprep.subr.mxu0 %v87
  %1281 = vmatpush1.msra.mxu0 %v86
  %1282 = vmatprep.subr.mxu0 %v93
  %1283 = vmatpush1.msra.mxu0 %v92
  %1284 = vmatprep.subr.mxu0 %v99
  %1285 = vmatpush1.msra.mxu0 %v98
  %1286 = vmatprep.subr.mxu0 %v105
  %1287 = vmatpush1.msra.mxu0 %v104
  %1288 = vmatprep.subr.mxu0 %v111
  %1289 = vmatpush1.msra.mxu0 %v110
  %1290 = vmatprep.subr.mxu0 %v117
  %1291 = vmatpush1.msra.mxu0 %v116
  %1292 = vmatprep.subr.mxu0 %v123
  %1293 = vmatpush1.msra.mxu0 %v122
  %1294 = vmatprep.subr.mxu0 %v129
  %1295 = vmatpush1.msra.mxu0 %v128
  %1296 = vmatprep.subr.mxu0 %v135
  %1297 = vmatpush1.msra.mxu0 %v134
  %1298 = vmatprep.subr.mxu0 %v141
  %1299 = vmatpush1.msra.mxu0 %v140
  %1300 = vmatprep.subr.mxu0 %v147
  %1301 = vmatpush1.msra.mxu0 %v146
  %1302 = vmatprep.subr.mxu0 %v153
  %1303 = vmatpush1.msra.mxu0 %v152
  %1304 = vmatprep.subr.mxu0 %v159
  %1305 = vmatpush1.msra.mxu0 %v158
  %1306 = vmatprep.subr.mxu0 %v165
  %1307 = vmatpush1.msra.mxu0 %v164
  %1308 = vmatprep.subr.mxu0 %v171
  %1309 = vmatpush1.msra.mxu0 %v170
  %1310 = vmatprep.subr.mxu0 %v177
  %1311 = vmatpush1.msra.mxu0 %v176
  %1312 = vmatprep.subr.mxu0 %v183
  %1313 = vmatpush1.msra.mxu0 %v182
  %1314 = vmatprep.subr.mxu0 %v189
  %1315 = vmatpush1.msra.mxu0 %v188
  %1316 = vmatprep.subr.mxu0 %v195
  %1317 = vmatpush1.msra.mxu0 %v194
  %1318 = vmatprep.subr.mxu0 %v201
  %1319 = vmatpush1.msra.mxu0 %v200
  %1320 = vmatprep.subr.mxu0 %v207
  %1321 = vmatpush1.msra.mxu0 %v206
  %1322 = vmatprep.subr.mxu0 %v213
  %1323 = vmatpush1.msra.mxu0 %v212
  %1324 = vmatprep.subr.mxu0 %v219
  %1325 = vmatpush1.msra.mxu0 %v218
  %1326 = vmatprep.subr.mxu0 %v225
  %1327 = vmatpush1.msra.mxu0 %v224
  %1328 = vmatprep.mubr.f32.mxu0 %v1242
  %1329 = vmatmul.mubr.f32.gmra.mrb[0].mxu0 %v1241
  %v1330 = vpop.f32.mrb[0].mxu0
  %v1331 = vadd.f32 0.0, %v1330
  %v1332 = vpop.f32.mrb[0].mxu0
  %v1333 = vadd.f32 0.0, %v1332
  %1334 = vmatprep.mubr.f32.mxu0 %v1244
  %1335 = vmatmul.mubr.f32.gmra.mrb[0].mxu0 %v1243
  %v1336 = vpop.f32.mrb[0].mxu0
  %v1337 = vadd.f32 0.0, %v1336
  %v1338 = vpop.f32.mrb[0].mxu0
  %v1339 = vadd.f32 0.0, %v1338
  %1340 = vdwg.mxu0
  %1341 = vmatprep.subr.mxu0 %v41
  %1342 = vmatpush1.msra.mxu0 %v40
  %1343 = vmatprep.subr.mxu0 %v47
  %1344 = vmatpush1.msra.mxu0 %v46
  %1345 = vmatprep.subr.mxu0 %v53
  %1346 = vmatpush1.msra.mxu0 %v52
  %1347 = vmatprep.subr.mxu0 %v59
  %1348 = vmatpush1.msra.mxu0 %v58
  %1349 = vmatprep.subr.mxu0 %v65
  %1350 = vmatpush1.msra.mxu0 %v64
  %1351 = vmatprep.subr.mxu0 %v71
  %1352 = vmatpush1.msra.mxu0 %v70
  %1353 = vmatprep.subr.mxu0 %v77
  %1354 = vmatpush1.msra.mxu0 %v76
  %1355 = vmatprep.subr.mxu0 %v83
  %1356 = vmatpush1.msra.mxu0 %v82
  %1357 = vmatprep.subr.mxu0 %v89
  %1358 = vmatpush1.msra.mxu0 %v88
  %1359 = vmatprep.subr.mxu0 %v95
  %1360 = vmatpush1.msra.mxu0 %v94
  %1361 = vmatprep.subr.mxu0 %v101
  %1362 = vmatpush1.msra.mxu0 %v100
  %1363 = vmatprep.subr.mxu0 %v107
  %1364 = vmatpush1.msra.mxu0 %v106
  %1365 = vmatprep.subr.mxu0 %v113
  %1366 = vmatpush1.msra.mxu0 %v112
  %1367 = vmatprep.subr.mxu0 %v119
  %1368 = vmatpush1.msra.mxu0 %v118
  %1369 = vmatprep.subr.mxu0 %v125
  %1370 = vmatpush1.msra.mxu0 %v124
  %1371 = vmatprep.subr.mxu0 %v131
  %1372 = vmatpush1.msra.mxu0 %v130
  %1373 = vmatprep.subr.mxu0 %v137
  %1374 = vmatpush1.msra.mxu0 %v136
  %1375 = vmatprep.subr.mxu0 %v143
  %1376 = vmatpush1.msra.mxu0 %v142
  %1377 = vmatprep.subr.mxu0 %v149
  %1378 = vmatpush1.msra.mxu0 %v148
  %1379 = vmatprep.subr.mxu0 %v155
  %1380 = vmatpush1.msra.mxu0 %v154
  %1381 = vmatprep.subr.mxu0 %v161
  %1382 = vmatpush1.msra.mxu0 %v160
  %1383 = vmatprep.subr.mxu0 %v167
  %1384 = vmatpush1.msra.mxu0 %v166
  %1385 = vmatprep.subr.mxu0 %v173
  %1386 = vmatpush1.msra.mxu0 %v172
  %1387 = vmatprep.subr.mxu0 %v179
  %1388 = vmatpush1.msra.mxu0 %v178
  %1389 = vmatprep.subr.mxu0 %v185
  %1390 = vmatpush1.msra.mxu0 %v184
  %1391 = vmatprep.subr.mxu0 %v191
  %1392 = vmatpush1.msra.mxu0 %v190
  %1393 = vmatprep.subr.mxu0 %v197
  %1394 = vmatpush1.msra.mxu0 %v196
  %1395 = vmatprep.subr.mxu0 %v203
  %1396 = vmatpush1.msra.mxu0 %v202
  %1397 = vmatprep.subr.mxu0 %v209
  %1398 = vmatpush1.msra.mxu0 %v208
  %1399 = vmatprep.subr.mxu0 %v215
  %1400 = vmatpush1.msra.mxu0 %v214
  %1401 = vmatprep.subr.mxu0 %v221
  %1402 = vmatpush1.msra.mxu0 %v220
  %1403 = vmatprep.subr.mxu0 %v227
  %1404 = vmatpush1.msra.mxu0 %v226
  %1405 = vmatprep.mubr.f32.mxu0 %v1242
  %1406 = vmatmul.mubr.f32.gmra.mrb[0].mxu0 %v1241
  %v1407 = vpop.f32.mrb[0].mxu0
  %v1408 = vadd.f32 0.0, %v1407
  %v1409 = vpop.f32.mrb[0].mxu0
  %v1410 = vadd.f32 0.0, %v1409
  %1411 = vmatprep.mubr.f32.mxu0 %v1244
  %1412 = vmatmul.mubr.f32.gmra.mrb[0].mxu0 %v1243
  %v1413 = vpop.f32.mrb[0].mxu0
  %v1414 = vadd.f32 0.0, %v1413
  %v1415 = vpop.f32.mrb[0].mxu0
  %v1416 = vadd.f32 0.0, %v1415
  %1417 = vdwg.mxu0
  %1418 = vmatprep.subr.mxu0 %v43
  %1419 = vmatpush1.msra.mxu0 %v42
  %1420 = vmatprep.subr.mxu0 %v49
  %1421 = vmatpush1.msra.mxu0 %v48
  %1422 = vmatprep.subr.mxu0 %v55
  %1423 = vmatpush1.msra.mxu0 %v54
  %1424 = vmatprep.subr.mxu0 %v61
  %1425 = vmatpush1.msra.mxu0 %v60
  %1426 = vmatprep.subr.mxu0 %v67
  %1427 = vmatpush1.msra.mxu0 %v66
  %1428 = vmatprep.subr.mxu0 %v73
  %1429 = vmatpush1.msra.mxu0 %v72
  %1430 = vmatprep.subr.mxu0 %v79
  %1431 = vmatpush1.msra.mxu0 %v78
  %1432 = vmatprep.subr.mxu0 %v85
  %1433 = vmatpush1.msra.mxu0 %v84
  %1434 = vmatprep.subr.mxu0 %v91
  %1435 = vmatpush1.msra.mxu0 %v90
  %1436 = vmatprep.subr.mxu0 %v97
  %1437 = vmatpush1.msra.mxu0 %v96
  %1438 = vmatprep.subr.mxu0 %v103
  %1439 = vmatpush1.msra.mxu0 %v102
  %1440 = vmatprep.subr.mxu0 %v109
  %1441 = vmatpush1.msra.mxu0 %v108
  %1442 = vmatprep.subr.mxu0 %v115
  %1443 = vmatpush1.msra.mxu0 %v114
  %1444 = vmatprep.subr.mxu0 %v121
  %1445 = vmatpush1.msra.mxu0 %v120
  %1446 = vmatprep.subr.mxu0 %v127
  %1447 = vmatpush1.msra.mxu0 %v126
  %1448 = vmatprep.subr.mxu0 %v133
  %1449 = vmatpush1.msra.mxu0 %v132
  %1450 = vmatprep.subr.mxu0 %v139
  %1451 = vmatpush1.msra.mxu0 %v138
  %1452 = vmatprep.subr.mxu0 %v145
  %1453 = vmatpush1.msra.mxu0 %v144
  %1454 = vmatprep.subr.mxu0 %v151
  %1455 = vmatpush1.msra.mxu0 %v150
  %1456 = vmatprep.subr.mxu0 %v157
  %1457 = vmatpush1.msra.mxu0 %v156
  %1458 = vmatprep.subr.mxu0 %v163
  %1459 = vmatpush1.msra.mxu0 %v162
  %1460 = vmatprep.subr.mxu0 %v169
  %1461 = vmatpush1.msra.mxu0 %v168
  %1462 = vmatprep.subr.mxu0 %v175
  %1463 = vmatpush1.msra.mxu0 %v174
  %1464 = vmatprep.subr.mxu0 %v181
  %1465 = vmatpush1.msra.mxu0 %v180
  %1466 = vmatprep.subr.mxu0 %v187
  %1467 = vmatpush1.msra.mxu0 %v186
  %1468 = vmatprep.subr.mxu0 %v193
  %1469 = vmatpush1.msra.mxu0 %v192
  %1470 = vmatprep.subr.mxu0 %v199
  %1471 = vmatpush1.msra.mxu0 %v198
  %1472 = vmatprep.subr.mxu0 %v205
  %1473 = vmatpush1.msra.mxu0 %v204
  %1474 = vmatprep.subr.mxu0 %v211
  %1475 = vmatpush1.msra.mxu0 %v210
  %1476 = vmatprep.subr.mxu0 %v217
  %1477 = vmatpush1.msra.mxu0 %v216
  %1478 = vmatprep.subr.mxu0 %v223
  %1479 = vmatpush1.msra.mxu0 %v222
  %1480 = vmatprep.subr.mxu0 %v229
  %1481 = vmatpush1.msra.mxu0 %v228
  %1482 = vmatprep.mubr.f32.mxu0 %v1242
  %1483 = vmatmul.mubr.f32.gmra.mrb[0].mxu0 %v1241
  %v1484 = vpop.f32.mrb[0].mxu0
  %v1485 = vadd.f32 0.0, %v1484
  %v1486 = vpop.f32.mrb[0].mxu0
  %v1487 = vadd.f32 0.0, %v1486
  %1488 = vmatprep.mubr.f32.mxu0 %v1244
  %1489 = vmatmul.mubr.f32.gmra.mrb[0].mxu0 %v1243
  %v1490 = vpop.f32.mrb[0].mxu0
  %v1491 = vadd.f32 0.0, %v1490
  %v1492 = vpop.f32.mrb[0].mxu0
  %v1493 = vadd.f32 0.0, %v1492
  %1494 = vdwg.mxu0
  %v1495 = vadd.f32 %v1252, %v1331
  %v1496 = vadd.f32 %v1253, %v1333
  %v1497 = vadd.f32 %v1258, %v1337
  %v1498 = vadd.f32 %v1259, %v1339
  %v1499 = vmul.f32 %v1495, 0.5
  %v1500 = vmul.f32 %v1496, 0.5
  %v1501 = vmul.f32 %v1497, 0.5
  %v1502 = vmul.f32 %v1498, 0.5
  %v1503 = vtanh.pop %v1499
  %v1504 = vtanh.pop %v1500
  %v1505 = vtanh.pop %v1501
  %v1506 = vtanh.pop %v1502
  %v1507 = vmul.f32 %v1503, 0.5
  %v1508 = vmul.f32 %v1504, 0.5
  %v1509 = vmul.f32 %v1505, 0.5
  %v1510 = vmul.f32 %v1506, 0.5
  %v1511 = vadd.f32 %v1507, 0.5
  %v1512 = vadd.f32 %v1508, 0.5
  %v1513 = vadd.f32 %v1509, 0.5
  %v1514 = vadd.f32 %v1510, 0.5
  %v1515 = vadd.f32 %v1254, %v1408
  %v1516 = vadd.f32 %v1255, %v1410
  %v1517 = vadd.f32 %v1260, %v1414
  %v1518 = vadd.f32 %v1261, %v1416
  %v1519 = vmul.f32 %v1515, 0.5
  %v1520 = vmul.f32 %v1516, 0.5
  %v1521 = vmul.f32 %v1517, 0.5
  %v1522 = vmul.f32 %v1518, 0.5
  %v1523 = vtanh.pop %v1519
  %v1524 = vtanh.pop %v1520
  %v1525 = vtanh.pop %v1521
  %v1526 = vtanh.pop %v1522
  %v1527 = vmul.f32 %v1523, 0.5
  %v1528 = vmul.f32 %v1524, 0.5
  %v1529 = vmul.f32 %v1525, 0.5
  %v1530 = vmul.f32 %v1526, 0.5
  %v1531 = vadd.f32 %v1527, 0.5
  %v1532 = vadd.f32 %v1528, 0.5
  %v1533 = vadd.f32 %v1529, 0.5
  %v1534 = vadd.f32 %v1530, 0.5
  %v1535 = vadd.f32 %v1485, %v526
  %v1536 = vadd.f32 %v1487, %v530
  %v1537 = vadd.f32 %v1491, %v526
  %v1538 = vadd.f32 %v1493, %v530
  %v1539 = vmul.f32 %v1511, %v1535
  %v1540 = vmul.f32 %v1512, %v1536
  %v1541 = vmul.f32 %v1513, %v1537
  %v1542 = vmul.f32 %v1514, %v1538
  %v1543 = vadd.f32 %v1256, %v1539
  %v1544 = vadd.f32 %v1257, %v1540
  %v1545 = vadd.f32 %v1262, %v1541
  %v1546 = vadd.f32 %v1263, %v1542
  %v1547 = vtanh.pop %v1543
  %v1548 = vtanh.pop %v1544
  %v1549 = vtanh.pop %v1545
  %v1550 = vtanh.pop %v1546
  %v1551 = vsub.f32 %v1241, %v1547
  %v1552 = vsub.f32 %v1242, %v1548
  %v1553 = vsub.f32 %v1243, %v1549
  %v1554 = vsub.f32 %v1244, %v1550
  %v1555 = vmul.f32 %v1531, %v1551
  %v1556 = vmul.f32 %v1532, %v1552
  %v1557 = vmul.f32 %v1533, %v1553
  %v1558 = vmul.f32 %v1534, %v1554
  %v1559 = vadd.f32 %v1547, %v1555
  %v1560 = vadd.f32 %v1548, %v1556
  %v1561 = vadd.f32 %v1549, %v1557
  %v1562 = vadd.f32 %v1550, %v1558
  %vm1563 = vcmp.gt.s32.totalorder %v231, 3
  %vm1564 = vcmp.gt.s32.totalorder %v232, 3
  %v1565 = vsel %vm1563, 1, 0
  %v1566 = vsel %vm1564, 1, 0
  %1567 = vset.pattern.permute.xlu0 0
  %1568 = vperm.xlu0 %1567, %v1565
  %v1569 = vpop.permute.xlu0 %1568
  %1570 = vset.pattern.permute.xlu0 0
  %1571 = vperm.xlu0 %1570, %v1566
  %v1572 = vpop.permute.xlu0 %1571
  %vm1573 = vcmp.eq.s32.totalorder %v1569, 1
  %vm1574 = vcmp.eq.s32.totalorder %v1572, 1
  %v1575 = vsel %vm1573, %v1559, %v1241
  %v1576 = vsel %vm1573, %v1560, %v1242
  %v1577 = vsel %vm1574, %v1561, %v1243
  %v1578 = vsel %vm1574, %v1562, %v1244
  %s1579 = scalar_lea.vmem %s0, 192
  %v1580 = vld [vmem:[%s1579] sm:$0xff]
  %v1581 = vld [vmem:[%s1579 + $0x8] sm:$0xff]
  %v1582 = vld [vmem:[%s1579 + $0x10] sm:$0xff]
  %v1583 = vld [vmem:[%s1579 + $0x18] sm:$0xff]
  %v1584 = vld [vmem:[%s1579 + $0x20] sm:$0xff]
  %v1585 = vld [vmem:[%s1579 + $0x28] sm:$0xff]
  %v1586 = vunpack.c.l.bf16 %v1580
  %v1587 = vunpack.c.h.bf16 %v1580
  %v1588 = vunpack.c.l.bf16 %v1581
  %v1589 = vunpack.c.h.bf16 %v1581
  %v1590 = vunpack.c.l.bf16 %v1582
  %v1591 = vunpack.c.h.bf16 %v1582
  %v1592 = vunpack.c.l.bf16 %v1583
  %v1593 = vunpack.c.h.bf16 %v1583
  %v1594 = vunpack.c.l.bf16 %v1584
  %v1595 = vunpack.c.h.bf16 %v1584
  %v1596 = vunpack.c.l.bf16 %v1585
  %v1597 = vunpack.c.h.bf16 %v1585
  %1598 = vmatprep.subr.mxu0 %v39
  %1599 = vmatpush1.msra.mxu0 %v38
  %1600 = vmatprep.subr.mxu0 %v45
  %1601 = vmatpush1.msra.mxu0 %v44
  %1602 = vmatprep.subr.mxu0 %v51
  %1603 = vmatpush1.msra.mxu0 %v50
  %1604 = vmatprep.subr.mxu0 %v57
  %1605 = vmatpush1.msra.mxu0 %v56
  %1606 = vmatprep.subr.mxu0 %v63
  %1607 = vmatpush1.msra.mxu0 %v62
  %1608 = vmatprep.subr.mxu0 %v69
  %1609 = vmatpush1.msra.mxu0 %v68
  %1610 = vmatprep.subr.mxu0 %v75
  %1611 = vmatpush1.msra.mxu0 %v74
  %1612 = vmatprep.subr.mxu0 %v81
  %1613 = vmatpush1.msra.mxu0 %v80
  %1614 = vmatprep.subr.mxu0 %v87
  %1615 = vmatpush1.msra.mxu0 %v86
  %1616 = vmatprep.subr.mxu0 %v93
  %1617 = vmatpush1.msra.mxu0 %v92
  %1618 = vmatprep.subr.mxu0 %v99
  %1619 = vmatpush1.msra.mxu0 %v98
  %1620 = vmatprep.subr.mxu0 %v105
  %1621 = vmatpush1.msra.mxu0 %v104
  %1622 = vmatprep.subr.mxu0 %v111
  %1623 = vmatpush1.msra.mxu0 %v110
  %1624 = vmatprep.subr.mxu0 %v117
  %1625 = vmatpush1.msra.mxu0 %v116
  %1626 = vmatprep.subr.mxu0 %v123
  %1627 = vmatpush1.msra.mxu0 %v122
  %1628 = vmatprep.subr.mxu0 %v129
  %1629 = vmatpush1.msra.mxu0 %v128
  %1630 = vmatprep.subr.mxu0 %v135
  %1631 = vmatpush1.msra.mxu0 %v134
  %1632 = vmatprep.subr.mxu0 %v141
  %1633 = vmatpush1.msra.mxu0 %v140
  %1634 = vmatprep.subr.mxu0 %v147
  %1635 = vmatpush1.msra.mxu0 %v146
  %1636 = vmatprep.subr.mxu0 %v153
  %1637 = vmatpush1.msra.mxu0 %v152
  %1638 = vmatprep.subr.mxu0 %v159
  %1639 = vmatpush1.msra.mxu0 %v158
  %1640 = vmatprep.subr.mxu0 %v165
  %1641 = vmatpush1.msra.mxu0 %v164
  %1642 = vmatprep.subr.mxu0 %v171
  %1643 = vmatpush1.msra.mxu0 %v170
  %1644 = vmatprep.subr.mxu0 %v177
  %1645 = vmatpush1.msra.mxu0 %v176
  %1646 = vmatprep.subr.mxu0 %v183
  %1647 = vmatpush1.msra.mxu0 %v182
  %1648 = vmatprep.subr.mxu0 %v189
  %1649 = vmatpush1.msra.mxu0 %v188
  %1650 = vmatprep.subr.mxu0 %v195
  %1651 = vmatpush1.msra.mxu0 %v194
  %1652 = vmatprep.subr.mxu0 %v201
  %1653 = vmatpush1.msra.mxu0 %v200
  %1654 = vmatprep.subr.mxu0 %v207
  %1655 = vmatpush1.msra.mxu0 %v206
  %1656 = vmatprep.subr.mxu0 %v213
  %1657 = vmatpush1.msra.mxu0 %v212
  %1658 = vmatprep.subr.mxu0 %v219
  %1659 = vmatpush1.msra.mxu0 %v218
  %1660 = vmatprep.subr.mxu0 %v225
  %1661 = vmatpush1.msra.mxu0 %v224
  %1662 = vmatprep.mubr.f32.mxu0 %v1576
  %1663 = vmatmul.mubr.f32.gmra.mrb[0].mxu0 %v1575
  %v1664 = vpop.f32.mrb[0].mxu0
  %v1665 = vadd.f32 0.0, %v1664
  %v1666 = vpop.f32.mrb[0].mxu0
  %v1667 = vadd.f32 0.0, %v1666
  %1668 = vmatprep.mubr.f32.mxu0 %v1578
  %1669 = vmatmul.mubr.f32.gmra.mrb[0].mxu0 %v1577
  %v1670 = vpop.f32.mrb[0].mxu0
  %v1671 = vadd.f32 0.0, %v1670
  %v1672 = vpop.f32.mrb[0].mxu0
  %v1673 = vadd.f32 0.0, %v1672
  %1674 = vdwg.mxu0
  %1675 = vmatprep.subr.mxu0 %v41
  %1676 = vmatpush1.msra.mxu0 %v40
  %1677 = vmatprep.subr.mxu0 %v47
  %1678 = vmatpush1.msra.mxu0 %v46
  %1679 = vmatprep.subr.mxu0 %v53
  %1680 = vmatpush1.msra.mxu0 %v52
  %1681 = vmatprep.subr.mxu0 %v59
  %1682 = vmatpush1.msra.mxu0 %v58
  %1683 = vmatprep.subr.mxu0 %v65
  %1684 = vmatpush1.msra.mxu0 %v64
  %1685 = vmatprep.subr.mxu0 %v71
  %1686 = vmatpush1.msra.mxu0 %v70
  %1687 = vmatprep.subr.mxu0 %v77
  %1688 = vmatpush1.msra.mxu0 %v76
  %1689 = vmatprep.subr.mxu0 %v83
  %1690 = vmatpush1.msra.mxu0 %v82
  %1691 = vmatprep.subr.mxu0 %v89
  %1692 = vmatpush1.msra.mxu0 %v88
  %1693 = vmatprep.subr.mxu0 %v95
  %1694 = vmatpush1.msra.mxu0 %v94
  %1695 = vmatprep.subr.mxu0 %v101
  %1696 = vmatpush1.msra.mxu0 %v100
  %1697 = vmatprep.subr.mxu0 %v107
  %1698 = vmatpush1.msra.mxu0 %v106
  %1699 = vmatprep.subr.mxu0 %v113
  %1700 = vmatpush1.msra.mxu0 %v112
  %1701 = vmatprep.subr.mxu0 %v119
  %1702 = vmatpush1.msra.mxu0 %v118
  %1703 = vmatprep.subr.mxu0 %v125
  %1704 = vmatpush1.msra.mxu0 %v124
  %1705 = vmatprep.subr.mxu0 %v131
  %1706 = vmatpush1.msra.mxu0 %v130
  %1707 = vmatprep.subr.mxu0 %v137
  %1708 = vmatpush1.msra.mxu0 %v136
  %1709 = vmatprep.subr.mxu0 %v143
  %1710 = vmatpush1.msra.mxu0 %v142
  %1711 = vmatprep.subr.mxu0 %v149
  %1712 = vmatpush1.msra.mxu0 %v148
  %1713 = vmatprep.subr.mxu0 %v155
  %1714 = vmatpush1.msra.mxu0 %v154
  %1715 = vmatprep.subr.mxu0 %v161
  %1716 = vmatpush1.msra.mxu0 %v160
  %1717 = vmatprep.subr.mxu0 %v167
  %1718 = vmatpush1.msra.mxu0 %v166
  %1719 = vmatprep.subr.mxu0 %v173
  %1720 = vmatpush1.msra.mxu0 %v172
  %1721 = vmatprep.subr.mxu0 %v179
  %1722 = vmatpush1.msra.mxu0 %v178
  %1723 = vmatprep.subr.mxu0 %v185
  %1724 = vmatpush1.msra.mxu0 %v184
  %1725 = vmatprep.subr.mxu0 %v191
  %1726 = vmatpush1.msra.mxu0 %v190
  %1727 = vmatprep.subr.mxu0 %v197
  %1728 = vmatpush1.msra.mxu0 %v196
  %1729 = vmatprep.subr.mxu0 %v203
  %1730 = vmatpush1.msra.mxu0 %v202
  %1731 = vmatprep.subr.mxu0 %v209
  %1732 = vmatpush1.msra.mxu0 %v208
  %1733 = vmatprep.subr.mxu0 %v215
  %1734 = vmatpush1.msra.mxu0 %v214
  %1735 = vmatprep.subr.mxu0 %v221
  %1736 = vmatpush1.msra.mxu0 %v220
  %1737 = vmatprep.subr.mxu0 %v227
  %1738 = vmatpush1.msra.mxu0 %v226
  %1739 = vmatprep.mubr.f32.mxu0 %v1576
  %1740 = vmatmul.mubr.f32.gmra.mrb[0].mxu0 %v1575
  %v1741 = vpop.f32.mrb[0].mxu0
  %v1742 = vadd.f32 0.0, %v1741
  %v1743 = vpop.f32.mrb[0].mxu0
  %v1744 = vadd.f32 0.0, %v1743
  %1745 = vmatprep.mubr.f32.mxu0 %v1578
  %1746 = vmatmul.mubr.f32.gmra.mrb[0].mxu0 %v1577
  %v1747 = vpop.f32.mrb[0].mxu0
  %v1748 = vadd.f32 0.0, %v1747
  %v1749 = vpop.f32.mrb[0].mxu0
  %v1750 = vadd.f32 0.0, %v1749
  %1751 = vdwg.mxu0
  %1752 = vmatprep.subr.mxu0 %v43
  %1753 = vmatpush1.msra.mxu0 %v42
  %1754 = vmatprep.subr.mxu0 %v49
  %1755 = vmatpush1.msra.mxu0 %v48
  %1756 = vmatprep.subr.mxu0 %v55
  %1757 = vmatpush1.msra.mxu0 %v54
  %1758 = vmatprep.subr.mxu0 %v61
  %1759 = vmatpush1.msra.mxu0 %v60
  %1760 = vmatprep.subr.mxu0 %v67
  %1761 = vmatpush1.msra.mxu0 %v66
  %1762 = vmatprep.subr.mxu0 %v73
  %1763 = vmatpush1.msra.mxu0 %v72
  %1764 = vmatprep.subr.mxu0 %v79
  %1765 = vmatpush1.msra.mxu0 %v78
  %1766 = vmatprep.subr.mxu0 %v85
  %1767 = vmatpush1.msra.mxu0 %v84
  %1768 = vmatprep.subr.mxu0 %v91
  %1769 = vmatpush1.msra.mxu0 %v90
  %1770 = vmatprep.subr.mxu0 %v97
  %1771 = vmatpush1.msra.mxu0 %v96
  %1772 = vmatprep.subr.mxu0 %v103
  %1773 = vmatpush1.msra.mxu0 %v102
  %1774 = vmatprep.subr.mxu0 %v109
  %1775 = vmatpush1.msra.mxu0 %v108
  %1776 = vmatprep.subr.mxu0 %v115
  %1777 = vmatpush1.msra.mxu0 %v114
  %1778 = vmatprep.subr.mxu0 %v121
  %1779 = vmatpush1.msra.mxu0 %v120
  %1780 = vmatprep.subr.mxu0 %v127
  %1781 = vmatpush1.msra.mxu0 %v126
  %1782 = vmatprep.subr.mxu0 %v133
  %1783 = vmatpush1.msra.mxu0 %v132
  %1784 = vmatprep.subr.mxu0 %v139
  %1785 = vmatpush1.msra.mxu0 %v138
  %1786 = vmatprep.subr.mxu0 %v145
  %1787 = vmatpush1.msra.mxu0 %v144
  %1788 = vmatprep.subr.mxu0 %v151
  %1789 = vmatpush1.msra.mxu0 %v150
  %1790 = vmatprep.subr.mxu0 %v157
  %1791 = vmatpush1.msra.mxu0 %v156
  %1792 = vmatprep.subr.mxu0 %v163
  %1793 = vmatpush1.msra.mxu0 %v162
  %1794 = vmatprep.subr.mxu0 %v169
  %1795 = vmatpush1.msra.mxu0 %v168
  %1796 = vmatprep.subr.mxu0 %v175
  %1797 = vmatpush1.msra.mxu0 %v174
  %1798 = vmatprep.subr.mxu0 %v181
  %1799 = vmatpush1.msra.mxu0 %v180
  %1800 = vmatprep.subr.mxu0 %v187
  %1801 = vmatpush1.msra.mxu0 %v186
  %1802 = vmatprep.subr.mxu0 %v193
  %1803 = vmatpush1.msra.mxu0 %v192
  %1804 = vmatprep.subr.mxu0 %v199
  %1805 = vmatpush1.msra.mxu0 %v198
  %1806 = vmatprep.subr.mxu0 %v205
  %1807 = vmatpush1.msra.mxu0 %v204
  %1808 = vmatprep.subr.mxu0 %v211
  %1809 = vmatpush1.msra.mxu0 %v210
  %1810 = vmatprep.subr.mxu0 %v217
  %1811 = vmatpush1.msra.mxu0 %v216
  %1812 = vmatprep.subr.mxu0 %v223
  %1813 = vmatpush1.msra.mxu0 %v222
  %1814 = vmatprep.subr.mxu0 %v229
  %1815 = vmatpush1.msra.mxu0 %v228
  %1816 = vmatprep.mubr.f32.mxu0 %v1576
  %1817 = vmatmul.mubr.f32.gmra.mrb[0].mxu0 %v1575
  %v1818 = vpop.f32.mrb[0].mxu0
  %v1819 = vadd.f32 0.0, %v1818
  %v1820 = vpop.f32.mrb[0].mxu0
  %v1821 = vadd.f32 0.0, %v1820
  %1822 = vmatprep.mubr.f32.mxu0 %v1578
  %1823 = vmatmul.mubr.f32.gmra.mrb[0].mxu0 %v1577
  %v1824 = vpop.f32.mrb[0].mxu0
  %v1825 = vadd.f32 0.0, %v1824
  %v1826 = vpop.f32.mrb[0].mxu0
  %v1827 = vadd.f32 0.0, %v1826
  %1828 = vdwg.mxu0
  %v1829 = vadd.f32 %v1586, %v1665
  %v1830 = vadd.f32 %v1587, %v1667
  %v1831 = vadd.f32 %v1592, %v1671
  %v1832 = vadd.f32 %v1593, %v1673
  %v1833 = vmul.f32 %v1829, 0.5
  %v1834 = vmul.f32 %v1830, 0.5
  %v1835 = vmul.f32 %v1831, 0.5
  %v1836 = vmul.f32 %v1832, 0.5
  %v1837 = vtanh.pop %v1833
  %v1838 = vtanh.pop %v1834
  %v1839 = vtanh.pop %v1835
  %v1840 = vtanh.pop %v1836
  %v1841 = vmul.f32 %v1837, 0.5
  %v1842 = vmul.f32 %v1838, 0.5
  %v1843 = vmul.f32 %v1839, 0.5
  %v1844 = vmul.f32 %v1840, 0.5
  %v1845 = vadd.f32 %v1841, 0.5
  %v1846 = vadd.f32 %v1842, 0.5
  %v1847 = vadd.f32 %v1843, 0.5
  %v1848 = vadd.f32 %v1844, 0.5
  %v1849 = vadd.f32 %v1588, %v1742
  %v1850 = vadd.f32 %v1589, %v1744
  %v1851 = vadd.f32 %v1594, %v1748
  %v1852 = vadd.f32 %v1595, %v1750
  %v1853 = vmul.f32 %v1849, 0.5
  %v1854 = vmul.f32 %v1850, 0.5
  %v1855 = vmul.f32 %v1851, 0.5
  %v1856 = vmul.f32 %v1852, 0.5
  %v1857 = vtanh.pop %v1853
  %v1858 = vtanh.pop %v1854
  %v1859 = vtanh.pop %v1855
  %v1860 = vtanh.pop %v1856
  %v1861 = vmul.f32 %v1857, 0.5
  %v1862 = vmul.f32 %v1858, 0.5
  %v1863 = vmul.f32 %v1859, 0.5
  %v1864 = vmul.f32 %v1860, 0.5
  %v1865 = vadd.f32 %v1861, 0.5
  %v1866 = vadd.f32 %v1862, 0.5
  %v1867 = vadd.f32 %v1863, 0.5
  %v1868 = vadd.f32 %v1864, 0.5
  %v1869 = vadd.f32 %v1819, %v526
  %v1870 = vadd.f32 %v1821, %v530
  %v1871 = vadd.f32 %v1825, %v526
  %v1872 = vadd.f32 %v1827, %v530
  %v1873 = vmul.f32 %v1845, %v1869
  %v1874 = vmul.f32 %v1846, %v1870
  %v1875 = vmul.f32 %v1847, %v1871
  %v1876 = vmul.f32 %v1848, %v1872
  %v1877 = vadd.f32 %v1590, %v1873
  %v1878 = vadd.f32 %v1591, %v1874
  %v1879 = vadd.f32 %v1596, %v1875
  %v1880 = vadd.f32 %v1597, %v1876
  %v1881 = vtanh.pop %v1877
  %v1882 = vtanh.pop %v1878
  %v1883 = vtanh.pop %v1879
  %v1884 = vtanh.pop %v1880
  %v1885 = vsub.f32 %v1575, %v1881
  %v1886 = vsub.f32 %v1576, %v1882
  %v1887 = vsub.f32 %v1577, %v1883
  %v1888 = vsub.f32 %v1578, %v1884
  %v1889 = vmul.f32 %v1865, %v1885
  %v1890 = vmul.f32 %v1866, %v1886
  %v1891 = vmul.f32 %v1867, %v1887
  %v1892 = vmul.f32 %v1868, %v1888
  %v1893 = vadd.f32 %v1881, %v1889
  %v1894 = vadd.f32 %v1882, %v1890
  %v1895 = vadd.f32 %v1883, %v1891
  %v1896 = vadd.f32 %v1884, %v1892
  %vm1897 = vcmp.gt.s32.totalorder %v231, 4
  %vm1898 = vcmp.gt.s32.totalorder %v232, 4
  %v1899 = vsel %vm1897, 1, 0
  %v1900 = vsel %vm1898, 1, 0
  %1901 = vset.pattern.permute.xlu0 0
  %1902 = vperm.xlu0 %1901, %v1899
  %v1903 = vpop.permute.xlu0 %1902
  %1904 = vset.pattern.permute.xlu0 0
  %1905 = vperm.xlu0 %1904, %v1900
  %v1906 = vpop.permute.xlu0 %1905
  %vm1907 = vcmp.eq.s32.totalorder %v1903, 1
  %vm1908 = vcmp.eq.s32.totalorder %v1906, 1
  %v1909 = vsel %vm1907, %v1893, %v1575
  %v1910 = vsel %vm1907, %v1894, %v1576
  %v1911 = vsel %vm1908, %v1895, %v1577
  %v1912 = vsel %vm1908, %v1896, %v1578
  %s1913 = scalar_lea.vmem %s0, 240
  %v1914 = vld [vmem:[%s1913] sm:$0xff]
  %v1915 = vld [vmem:[%s1913 + $0x8] sm:$0xff]
  %v1916 = vld [vmem:[%s1913 + $0x10] sm:$0xff]
  %v1917 = vld [vmem:[%s1913 + $0x18] sm:$0xff]
  %v1918 = vld [vmem:[%s1913 + $0x20] sm:$0xff]
  %v1919 = vld [vmem:[%s1913 + $0x28] sm:$0xff]
  %v1920 = vunpack.c.l.bf16 %v1914
  %v1921 = vunpack.c.h.bf16 %v1914
  %v1922 = vunpack.c.l.bf16 %v1915
  %v1923 = vunpack.c.h.bf16 %v1915
  %v1924 = vunpack.c.l.bf16 %v1916
  %v1925 = vunpack.c.h.bf16 %v1916
  %v1926 = vunpack.c.l.bf16 %v1917
  %v1927 = vunpack.c.h.bf16 %v1917
  %v1928 = vunpack.c.l.bf16 %v1918
  %v1929 = vunpack.c.h.bf16 %v1918
  %v1930 = vunpack.c.l.bf16 %v1919
  %v1931 = vunpack.c.h.bf16 %v1919
  %1932 = vmatprep.subr.mxu0 %v39
  %1933 = vmatpush1.msra.mxu0 %v38
  %1934 = vmatprep.subr.mxu0 %v45
  %1935 = vmatpush1.msra.mxu0 %v44
  %1936 = vmatprep.subr.mxu0 %v51
  %1937 = vmatpush1.msra.mxu0 %v50
  %1938 = vmatprep.subr.mxu0 %v57
  %1939 = vmatpush1.msra.mxu0 %v56
  %1940 = vmatprep.subr.mxu0 %v63
  %1941 = vmatpush1.msra.mxu0 %v62
  %1942 = vmatprep.subr.mxu0 %v69
  %1943 = vmatpush1.msra.mxu0 %v68
  %1944 = vmatprep.subr.mxu0 %v75
  %1945 = vmatpush1.msra.mxu0 %v74
  %1946 = vmatprep.subr.mxu0 %v81
  %1947 = vmatpush1.msra.mxu0 %v80
  %1948 = vmatprep.subr.mxu0 %v87
  %1949 = vmatpush1.msra.mxu0 %v86
  %1950 = vmatprep.subr.mxu0 %v93
  %1951 = vmatpush1.msra.mxu0 %v92
  %1952 = vmatprep.subr.mxu0 %v99
  %1953 = vmatpush1.msra.mxu0 %v98
  %1954 = vmatprep.subr.mxu0 %v105
  %1955 = vmatpush1.msra.mxu0 %v104
  %1956 = vmatprep.subr.mxu0 %v111
  %1957 = vmatpush1.msra.mxu0 %v110
  %1958 = vmatprep.subr.mxu0 %v117
  %1959 = vmatpush1.msra.mxu0 %v116
  %1960 = vmatprep.subr.mxu0 %v123
  %1961 = vmatpush1.msra.mxu0 %v122
  %1962 = vmatprep.subr.mxu0 %v129
  %1963 = vmatpush1.msra.mxu0 %v128
  %1964 = vmatprep.subr.mxu0 %v135
  %1965 = vmatpush1.msra.mxu0 %v134
  %1966 = vmatprep.subr.mxu0 %v141
  %1967 = vmatpush1.msra.mxu0 %v140
  %1968 = vmatprep.subr.mxu0 %v147
  %1969 = vmatpush1.msra.mxu0 %v146
  %1970 = vmatprep.subr.mxu0 %v153
  %1971 = vmatpush1.msra.mxu0 %v152
  %1972 = vmatprep.subr.mxu0 %v159
  %1973 = vmatpush1.msra.mxu0 %v158
  %1974 = vmatprep.subr.mxu0 %v165
  %1975 = vmatpush1.msra.mxu0 %v164
  %1976 = vmatprep.subr.mxu0 %v171
  %1977 = vmatpush1.msra.mxu0 %v170
  %1978 = vmatprep.subr.mxu0 %v177
  %1979 = vmatpush1.msra.mxu0 %v176
  %1980 = vmatprep.subr.mxu0 %v183
  %1981 = vmatpush1.msra.mxu0 %v182
  %1982 = vmatprep.subr.mxu0 %v189
  %1983 = vmatpush1.msra.mxu0 %v188
  %1984 = vmatprep.subr.mxu0 %v195
  %1985 = vmatpush1.msra.mxu0 %v194
  %1986 = vmatprep.subr.mxu0 %v201
  %1987 = vmatpush1.msra.mxu0 %v200
  %1988 = vmatprep.subr.mxu0 %v207
  %1989 = vmatpush1.msra.mxu0 %v206
  %1990 = vmatprep.subr.mxu0 %v213
  %1991 = vmatpush1.msra.mxu0 %v212
  %1992 = vmatprep.subr.mxu0 %v219
  %1993 = vmatpush1.msra.mxu0 %v218
  %1994 = vmatprep.subr.mxu0 %v225
  %1995 = vmatpush1.msra.mxu0 %v224
  %1996 = vmatprep.mubr.f32.mxu0 %v1910
  %1997 = vmatmul.mubr.f32.gmra.mrb[0].mxu0 %v1909
  %v1998 = vpop.f32.mrb[0].mxu0
  %v1999 = vadd.f32 0.0, %v1998
  %v2000 = vpop.f32.mrb[0].mxu0
  %v2001 = vadd.f32 0.0, %v2000
  %2002 = vmatprep.mubr.f32.mxu0 %v1912
  %2003 = vmatmul.mubr.f32.gmra.mrb[0].mxu0 %v1911
  %v2004 = vpop.f32.mrb[0].mxu0
  %v2005 = vadd.f32 0.0, %v2004
  %v2006 = vpop.f32.mrb[0].mxu0
  %v2007 = vadd.f32 0.0, %v2006
  %2008 = vdwg.mxu0
  %2009 = vmatprep.subr.mxu0 %v41
  %2010 = vmatpush1.msra.mxu0 %v40
  %2011 = vmatprep.subr.mxu0 %v47
  %2012 = vmatpush1.msra.mxu0 %v46
  %2013 = vmatprep.subr.mxu0 %v53
  %2014 = vmatpush1.msra.mxu0 %v52
  %2015 = vmatprep.subr.mxu0 %v59
  %2016 = vmatpush1.msra.mxu0 %v58
  %2017 = vmatprep.subr.mxu0 %v65
  %2018 = vmatpush1.msra.mxu0 %v64
  %2019 = vmatprep.subr.mxu0 %v71
  %2020 = vmatpush1.msra.mxu0 %v70
  %2021 = vmatprep.subr.mxu0 %v77
  %2022 = vmatpush1.msra.mxu0 %v76
  %2023 = vmatprep.subr.mxu0 %v83
  %2024 = vmatpush1.msra.mxu0 %v82
  %2025 = vmatprep.subr.mxu0 %v89
  %2026 = vmatpush1.msra.mxu0 %v88
  %2027 = vmatprep.subr.mxu0 %v95
  %2028 = vmatpush1.msra.mxu0 %v94
  %2029 = vmatprep.subr.mxu0 %v101
  %2030 = vmatpush1.msra.mxu0 %v100
  %2031 = vmatprep.subr.mxu0 %v107
  %2032 = vmatpush1.msra.mxu0 %v106
  %2033 = vmatprep.subr.mxu0 %v113
  %2034 = vmatpush1.msra.mxu0 %v112
  %2035 = vmatprep.subr.mxu0 %v119
  %2036 = vmatpush1.msra.mxu0 %v118
  %2037 = vmatprep.subr.mxu0 %v125
  %2038 = vmatpush1.msra.mxu0 %v124
  %2039 = vmatprep.subr.mxu0 %v131
  %2040 = vmatpush1.msra.mxu0 %v130
  %2041 = vmatprep.subr.mxu0 %v137
  %2042 = vmatpush1.msra.mxu0 %v136
  %2043 = vmatprep.subr.mxu0 %v143
  %2044 = vmatpush1.msra.mxu0 %v142
  %2045 = vmatprep.subr.mxu0 %v149
  %2046 = vmatpush1.msra.mxu0 %v148
  %2047 = vmatprep.subr.mxu0 %v155
  %2048 = vmatpush1.msra.mxu0 %v154
  %2049 = vmatprep.subr.mxu0 %v161
  %2050 = vmatpush1.msra.mxu0 %v160
  %2051 = vmatprep.subr.mxu0 %v167
  %2052 = vmatpush1.msra.mxu0 %v166
  %2053 = vmatprep.subr.mxu0 %v173
  %2054 = vmatpush1.msra.mxu0 %v172
  %2055 = vmatprep.subr.mxu0 %v179
  %2056 = vmatpush1.msra.mxu0 %v178
  %2057 = vmatprep.subr.mxu0 %v185
  %2058 = vmatpush1.msra.mxu0 %v184
  %2059 = vmatprep.subr.mxu0 %v191
  %2060 = vmatpush1.msra.mxu0 %v190
  %2061 = vmatprep.subr.mxu0 %v197
  %2062 = vmatpush1.msra.mxu0 %v196
  %2063 = vmatprep.subr.mxu0 %v203
  %2064 = vmatpush1.msra.mxu0 %v202
  %2065 = vmatprep.subr.mxu0 %v209
  %2066 = vmatpush1.msra.mxu0 %v208
  %2067 = vmatprep.subr.mxu0 %v215
  %2068 = vmatpush1.msra.mxu0 %v214
  %2069 = vmatprep.subr.mxu0 %v221
  %2070 = vmatpush1.msra.mxu0 %v220
  %2071 = vmatprep.subr.mxu0 %v227
  %2072 = vmatpush1.msra.mxu0 %v226
  %2073 = vmatprep.mubr.f32.mxu0 %v1910
  %2074 = vmatmul.mubr.f32.gmra.mrb[0].mxu0 %v1909
  %v2075 = vpop.f32.mrb[0].mxu0
  %v2076 = vadd.f32 0.0, %v2075
  %v2077 = vpop.f32.mrb[0].mxu0
  %v2078 = vadd.f32 0.0, %v2077
  %2079 = vmatprep.mubr.f32.mxu0 %v1912
  %2080 = vmatmul.mubr.f32.gmra.mrb[0].mxu0 %v1911
  %v2081 = vpop.f32.mrb[0].mxu0
  %v2082 = vadd.f32 0.0, %v2081
  %v2083 = vpop.f32.mrb[0].mxu0
  %v2084 = vadd.f32 0.0, %v2083
  %2085 = vdwg.mxu0
  %2086 = vmatprep.subr.mxu0 %v43
  %2087 = vmatpush1.msra.mxu0 %v42
  %2088 = vmatprep.subr.mxu0 %v49
  %2089 = vmatpush1.msra.mxu0 %v48
  %2090 = vmatprep.subr.mxu0 %v55
  %2091 = vmatpush1.msra.mxu0 %v54
  %2092 = vmatprep.subr.mxu0 %v61
  %2093 = vmatpush1.msra.mxu0 %v60
  %2094 = vmatprep.subr.mxu0 %v67
  %2095 = vmatpush1.msra.mxu0 %v66
  %2096 = vmatprep.subr.mxu0 %v73
  %2097 = vmatpush1.msra.mxu0 %v72
  %2098 = vmatprep.subr.mxu0 %v79
  %2099 = vmatpush1.msra.mxu0 %v78
  %2100 = vmatprep.subr.mxu0 %v85
  %2101 = vmatpush1.msra.mxu0 %v84
  %2102 = vmatprep.subr.mxu0 %v91
  %2103 = vmatpush1.msra.mxu0 %v90
  %2104 = vmatprep.subr.mxu0 %v97
  %2105 = vmatpush1.msra.mxu0 %v96
  %2106 = vmatprep.subr.mxu0 %v103
  %2107 = vmatpush1.msra.mxu0 %v102
  %2108 = vmatprep.subr.mxu0 %v109
  %2109 = vmatpush1.msra.mxu0 %v108
  %2110 = vmatprep.subr.mxu0 %v115
  %2111 = vmatpush1.msra.mxu0 %v114
  %2112 = vmatprep.subr.mxu0 %v121
  %2113 = vmatpush1.msra.mxu0 %v120
  %2114 = vmatprep.subr.mxu0 %v127
  %2115 = vmatpush1.msra.mxu0 %v126
  %2116 = vmatprep.subr.mxu0 %v133
  %2117 = vmatpush1.msra.mxu0 %v132
  %2118 = vmatprep.subr.mxu0 %v139
  %2119 = vmatpush1.msra.mxu0 %v138
  %2120 = vmatprep.subr.mxu0 %v145
  %2121 = vmatpush1.msra.mxu0 %v144
  %2122 = vmatprep.subr.mxu0 %v151
  %2123 = vmatpush1.msra.mxu0 %v150
  %2124 = vmatprep.subr.mxu0 %v157
  %2125 = vmatpush1.msra.mxu0 %v156
  %2126 = vmatprep.subr.mxu0 %v163
  %2127 = vmatpush1.msra.mxu0 %v162
  %2128 = vmatprep.subr.mxu0 %v169
  %2129 = vmatpush1.msra.mxu0 %v168
  %2130 = vmatprep.subr.mxu0 %v175
  %2131 = vmatpush1.msra.mxu0 %v174
  %2132 = vmatprep.subr.mxu0 %v181
  %2133 = vmatpush1.msra.mxu0 %v180
  %2134 = vmatprep.subr.mxu0 %v187
  %2135 = vmatpush1.msra.mxu0 %v186
  %2136 = vmatprep.subr.mxu0 %v193
  %2137 = vmatpush1.msra.mxu0 %v192
  %2138 = vmatprep.subr.mxu0 %v199
  %2139 = vmatpush1.msra.mxu0 %v198
  %2140 = vmatprep.subr.mxu0 %v205
  %2141 = vmatpush1.msra.mxu0 %v204
  %2142 = vmatprep.subr.mxu0 %v211
  %2143 = vmatpush1.msra.mxu0 %v210
  %2144 = vmatprep.subr.mxu0 %v217
  %2145 = vmatpush1.msra.mxu0 %v216
  %2146 = vmatprep.subr.mxu0 %v223
  %2147 = vmatpush1.msra.mxu0 %v222
  %2148 = vmatprep.subr.mxu0 %v229
  %2149 = vmatpush1.msra.mxu0 %v228
  %2150 = vmatprep.mubr.f32.mxu0 %v1910
  %2151 = vmatmul.mubr.f32.gmra.mrb[0].mxu0 %v1909
  %v2152 = vpop.f32.mrb[0].mxu0
  %v2153 = vadd.f32 0.0, %v2152
  %v2154 = vpop.f32.mrb[0].mxu0
  %v2155 = vadd.f32 0.0, %v2154
  %2156 = vmatprep.mubr.f32.mxu0 %v1912
  %2157 = vmatmul.mubr.f32.gmra.mrb[0].mxu0 %v1911
  %v2158 = vpop.f32.mrb[0].mxu0
  %v2159 = vadd.f32 0.0, %v2158
  %v2160 = vpop.f32.mrb[0].mxu0
  %v2161 = vadd.f32 0.0, %v2160
  %2162 = vdwg.mxu0
  %v2163 = vadd.f32 %v1920, %v1999
  %v2164 = vadd.f32 %v1921, %v2001
  %v2165 = vadd.f32 %v1926, %v2005
  %v2166 = vadd.f32 %v1927, %v2007
  %v2167 = vmul.f32 %v2163, 0.5
  %v2168 = vmul.f32 %v2164, 0.5
  %v2169 = vmul.f32 %v2165, 0.5
  %v2170 = vmul.f32 %v2166, 0.5
  %v2171 = vtanh.pop %v2167
  %v2172 = vtanh.pop %v2168
  %v2173 = vtanh.pop %v2169
  %v2174 = vtanh.pop %v2170
  %v2175 = vmul.f32 %v2171, 0.5
  %v2176 = vmul.f32 %v2172, 0.5
  %v2177 = vmul.f32 %v2173, 0.5
  %v2178 = vmul.f32 %v2174, 0.5
  %v2179 = vadd.f32 %v2175, 0.5
  %v2180 = vadd.f32 %v2176, 0.5
  %v2181 = vadd.f32 %v2177, 0.5
  %v2182 = vadd.f32 %v2178, 0.5
  %v2183 = vadd.f32 %v1922, %v2076
  %v2184 = vadd.f32 %v1923, %v2078
  %v2185 = vadd.f32 %v1928, %v2082
  %v2186 = vadd.f32 %v1929, %v2084
  %v2187 = vmul.f32 %v2183, 0.5
  %v2188 = vmul.f32 %v2184, 0.5
  %v2189 = vmul.f32 %v2185, 0.5
  %v2190 = vmul.f32 %v2186, 0.5
  %v2191 = vtanh.pop %v2187
  %v2192 = vtanh.pop %v2188
  %v2193 = vtanh.pop %v2189
  %v2194 = vtanh.pop %v2190
  %v2195 = vmul.f32 %v2191, 0.5
  %v2196 = vmul.f32 %v2192, 0.5
  %v2197 = vmul.f32 %v2193, 0.5
  %v2198 = vmul.f32 %v2194, 0.5
  %v2199 = vadd.f32 %v2195, 0.5
  %v2200 = vadd.f32 %v2196, 0.5
  %v2201 = vadd.f32 %v2197, 0.5
  %v2202 = vadd.f32 %v2198, 0.5
  %v2203 = vadd.f32 %v2153, %v526
  %v2204 = vadd.f32 %v2155, %v530
  %v2205 = vadd.f32 %v2159, %v526
  %v2206 = vadd.f32 %v2161, %v530
  %v2207 = vmul.f32 %v2179, %v2203
  %v2208 = vmul.f32 %v2180, %v2204
  %v2209 = vmul.f32 %v2181, %v2205
  %v2210 = vmul.f32 %v2182, %v2206
  %v2211 = vadd.f32 %v1924, %v2207
  %v2212 = vadd.f32 %v1925, %v2208
  %v2213 = vadd.f32 %v1930, %v2209
  %v2214 = vadd.f32 %v1931, %v2210
  %v2215 = vtanh.pop %v2211
  %v2216 = vtanh.pop %v2212
  %v2217 = vtanh.pop %v2213
  %v2218 = vtanh.pop %v2214
  %v2219 = vsub.f32 %v1909, %v2215
  %v2220 = vsub.f32 %v1910, %v2216
  %v2221 = vsub.f32 %v1911, %v2217
  %v2222 = vsub.f32 %v1912, %v2218
  %v2223 = vmul.f32 %v2199, %v2219
  %v2224 = vmul.f32 %v2200, %v2220
  %v2225 = vmul.f32 %v2201, %v2221
  %v2226 = vmul.f32 %v2202, %v2222
  %v2227 = vadd.f32 %v2215, %v2223
  %v2228 = vadd.f32 %v2216, %v2224
  %v2229 = vadd.f32 %v2217, %v2225
  %v2230 = vadd.f32 %v2218, %v2226
  %vm2231 = vcmp.gt.s32.totalorder %v231, 5
  %vm2232 = vcmp.gt.s32.totalorder %v232, 5
  %v2233 = vsel %vm2231, 1, 0
  %v2234 = vsel %vm2232, 1, 0
  %2235 = vset.pattern.permute.xlu0 0
  %2236 = vperm.xlu0 %2235, %v2233
  %v2237 = vpop.permute.xlu0 %2236
  %2238 = vset.pattern.permute.xlu0 0
  %2239 = vperm.xlu0 %2238, %v2234
  %v2240 = vpop.permute.xlu0 %2239
  %vm2241 = vcmp.eq.s32.totalorder %v2237, 1
  %vm2242 = vcmp.eq.s32.totalorder %v2240, 1
  %v2243 = vsel %vm2241, %v2227, %v1909
  %v2244 = vsel %vm2241, %v2228, %v1910
  %v2245 = vsel %vm2242, %v2229, %v1911
  %v2246 = vsel %vm2242, %v2230, %v1912
  %s2247 = scalar_lea.vmem %s0, 288
  %v2248 = vld [vmem:[%s2247] sm:$0xff]
  %v2249 = vld [vmem:[%s2247 + $0x8] sm:$0xff]
  %v2250 = vld [vmem:[%s2247 + $0x10] sm:$0xff]
  %v2251 = vld [vmem:[%s2247 + $0x18] sm:$0xff]
  %v2252 = vld [vmem:[%s2247 + $0x20] sm:$0xff]
  %v2253 = vld [vmem:[%s2247 + $0x28] sm:$0xff]
  %v2254 = vunpack.c.l.bf16 %v2248
  %v2255 = vunpack.c.h.bf16 %v2248
  %v2256 = vunpack.c.l.bf16 %v2249
  %v2257 = vunpack.c.h.bf16 %v2249
  %v2258 = vunpack.c.l.bf16 %v2250
  %v2259 = vunpack.c.h.bf16 %v2250
  %v2260 = vunpack.c.l.bf16 %v2251
  %v2261 = vunpack.c.h.bf16 %v2251
  %v2262 = vunpack.c.l.bf16 %v2252
  %v2263 = vunpack.c.h.bf16 %v2252
  %v2264 = vunpack.c.l.bf16 %v2253
  %v2265 = vunpack.c.h.bf16 %v2253
  %2266 = vmatprep.subr.mxu0 %v39
  %2267 = vmatpush1.msra.mxu0 %v38
  %2268 = vmatprep.subr.mxu0 %v45
  %2269 = vmatpush1.msra.mxu0 %v44
  %2270 = vmatprep.subr.mxu0 %v51
  %2271 = vmatpush1.msra.mxu0 %v50
  %2272 = vmatprep.subr.mxu0 %v57
  %2273 = vmatpush1.msra.mxu0 %v56
  %2274 = vmatprep.subr.mxu0 %v63
  %2275 = vmatpush1.msra.mxu0 %v62
  %2276 = vmatprep.subr.mxu0 %v69
  %2277 = vmatpush1.msra.mxu0 %v68
  %2278 = vmatprep.subr.mxu0 %v75
  %2279 = vmatpush1.msra.mxu0 %v74
  %2280 = vmatprep.subr.mxu0 %v81
  %2281 = vmatpush1.msra.mxu0 %v80
  %2282 = vmatprep.subr.mxu0 %v87
  %2283 = vmatpush1.msra.mxu0 %v86
  %2284 = vmatprep.subr.mxu0 %v93
  %2285 = vmatpush1.msra.mxu0 %v92
  %2286 = vmatprep.subr.mxu0 %v99
  %2287 = vmatpush1.msra.mxu0 %v98
  %2288 = vmatprep.subr.mxu0 %v105
  %2289 = vmatpush1.msra.mxu0 %v104
  %2290 = vmatprep.subr.mxu0 %v111
  %2291 = vmatpush1.msra.mxu0 %v110
  %2292 = vmatprep.subr.mxu0 %v117
  %2293 = vmatpush1.msra.mxu0 %v116
  %2294 = vmatprep.subr.mxu0 %v123
  %2295 = vmatpush1.msra.mxu0 %v122
  %2296 = vmatprep.subr.mxu0 %v129
  %2297 = vmatpush1.msra.mxu0 %v128
  %2298 = vmatprep.subr.mxu0 %v135
  %2299 = vmatpush1.msra.mxu0 %v134
  %2300 = vmatprep.subr.mxu0 %v141
  %2301 = vmatpush1.msra.mxu0 %v140
  %2302 = vmatprep.subr.mxu0 %v147
  %2303 = vmatpush1.msra.mxu0 %v146
  %2304 = vmatprep.subr.mxu0 %v153
  %2305 = vmatpush1.msra.mxu0 %v152
  %2306 = vmatprep.subr.mxu0 %v159
  %2307 = vmatpush1.msra.mxu0 %v158
  %2308 = vmatprep.subr.mxu0 %v165
  %2309 = vmatpush1.msra.mxu0 %v164
  %2310 = vmatprep.subr.mxu0 %v171
  %2311 = vmatpush1.msra.mxu0 %v170
  %2312 = vmatprep.subr.mxu0 %v177
  %2313 = vmatpush1.msra.mxu0 %v176
  %2314 = vmatprep.subr.mxu0 %v183
  %2315 = vmatpush1.msra.mxu0 %v182
  %2316 = vmatprep.subr.mxu0 %v189
  %2317 = vmatpush1.msra.mxu0 %v188
  %2318 = vmatprep.subr.mxu0 %v195
  %2319 = vmatpush1.msra.mxu0 %v194
  %2320 = vmatprep.subr.mxu0 %v201
  %2321 = vmatpush1.msra.mxu0 %v200
  %2322 = vmatprep.subr.mxu0 %v207
  %2323 = vmatpush1.msra.mxu0 %v206
  %2324 = vmatprep.subr.mxu0 %v213
  %2325 = vmatpush1.msra.mxu0 %v212
  %2326 = vmatprep.subr.mxu0 %v219
  %2327 = vmatpush1.msra.mxu0 %v218
  %2328 = vmatprep.subr.mxu0 %v225
  %2329 = vmatpush1.msra.mxu0 %v224
  %2330 = vmatprep.mubr.f32.mxu0 %v2244
  %2331 = vmatmul.mubr.f32.gmra.mrb[0].mxu0 %v2243
  %v2332 = vpop.f32.mrb[0].mxu0
  %v2333 = vadd.f32 0.0, %v2332
  %v2334 = vpop.f32.mrb[0].mxu0
  %v2335 = vadd.f32 0.0, %v2334
  %2336 = vmatprep.mubr.f32.mxu0 %v2246
  %2337 = vmatmul.mubr.f32.gmra.mrb[0].mxu0 %v2245
  %v2338 = vpop.f32.mrb[0].mxu0
  %v2339 = vadd.f32 0.0, %v2338
  %v2340 = vpop.f32.mrb[0].mxu0
  %v2341 = vadd.f32 0.0, %v2340
  %2342 = vdwg.mxu0
  %2343 = vmatprep.subr.mxu0 %v41
  %2344 = vmatpush1.msra.mxu0 %v40
  %2345 = vmatprep.subr.mxu0 %v47
  %2346 = vmatpush1.msra.mxu0 %v46
  %2347 = vmatprep.subr.mxu0 %v53
  %2348 = vmatpush1.msra.mxu0 %v52
  %2349 = vmatprep.subr.mxu0 %v59
  %2350 = vmatpush1.msra.mxu0 %v58
  %2351 = vmatprep.subr.mxu0 %v65
  %2352 = vmatpush1.msra.mxu0 %v64
  %2353 = vmatprep.subr.mxu0 %v71
  %2354 = vmatpush1.msra.mxu0 %v70
  %2355 = vmatprep.subr.mxu0 %v77
  %2356 = vmatpush1.msra.mxu0 %v76
  %2357 = vmatprep.subr.mxu0 %v83
  %2358 = vmatpush1.msra.mxu0 %v82
  %2359 = vmatprep.subr.mxu0 %v89
  %2360 = vmatpush1.msra.mxu0 %v88
  %2361 = vmatprep.subr.mxu0 %v95
  %2362 = vmatpush1.msra.mxu0 %v94
  %2363 = vmatprep.subr.mxu0 %v101
  %2364 = vmatpush1.msra.mxu0 %v100
  %2365 = vmatprep.subr.mxu0 %v107
  %2366 = vmatpush1.msra.mxu0 %v106
  %2367 = vmatprep.subr.mxu0 %v113
  %2368 = vmatpush1.msra.mxu0 %v112
  %2369 = vmatprep.subr.mxu0 %v119
  %2370 = vmatpush1.msra.mxu0 %v118
  %2371 = vmatprep.subr.mxu0 %v125
  %2372 = vmatpush1.msra.mxu0 %v124
  %2373 = vmatprep.subr.mxu0 %v131
  %2374 = vmatpush1.msra.mxu0 %v130
  %2375 = vmatprep.subr.mxu0 %v137
  %2376 = vmatpush1.msra.mxu0 %v136
  %2377 = vmatprep.subr.mxu0 %v143
  %2378 = vmatpush1.msra.mxu0 %v142
  %2379 = vmatprep.subr.mxu0 %v149
  %2380 = vmatpush1.msra.mxu0 %v148
  %2381 = vmatprep.subr.mxu0 %v155
  %2382 = vmatpush1.msra.mxu0 %v154
  %2383 = vmatprep.subr.mxu0 %v161
  %2384 = vmatpush1.msra.mxu0 %v160
  %2385 = vmatprep.subr.mxu0 %v167
  %2386 = vmatpush1.msra.mxu0 %v166
  %2387 = vmatprep.subr.mxu0 %v173
  %2388 = vmatpush1.msra.mxu0 %v172
  %2389 = vmatprep.subr.mxu0 %v179
  %2390 = vmatpush1.msra.mxu0 %v178
  %2391 = vmatprep.subr.mxu0 %v185
  %2392 = vmatpush1.msra.mxu0 %v184
  %2393 = vmatprep.subr.mxu0 %v191
  %2394 = vmatpush1.msra.mxu0 %v190
  %2395 = vmatprep.subr.mxu0 %v197
  %2396 = vmatpush1.msra.mxu0 %v196
  %2397 = vmatprep.subr.mxu0 %v203
  %2398 = vmatpush1.msra.mxu0 %v202
  %2399 = vmatprep.subr.mxu0 %v209
  %2400 = vmatpush1.msra.mxu0 %v208
  %2401 = vmatprep.subr.mxu0 %v215
  %2402 = vmatpush1.msra.mxu0 %v214
  %2403 = vmatprep.subr.mxu0 %v221
  %2404 = vmatpush1.msra.mxu0 %v220
  %2405 = vmatprep.subr.mxu0 %v227
  %2406 = vmatpush1.msra.mxu0 %v226
  %2407 = vmatprep.mubr.f32.mxu0 %v2244
  %2408 = vmatmul.mubr.f32.gmra.mrb[0].mxu0 %v2243
  %v2409 = vpop.f32.mrb[0].mxu0
  %v2410 = vadd.f32 0.0, %v2409
  %v2411 = vpop.f32.mrb[0].mxu0
  %v2412 = vadd.f32 0.0, %v2411
  %2413 = vmatprep.mubr.f32.mxu0 %v2246
  %2414 = vmatmul.mubr.f32.gmra.mrb[0].mxu0 %v2245
  %v2415 = vpop.f32.mrb[0].mxu0
  %v2416 = vadd.f32 0.0, %v2415
  %v2417 = vpop.f32.mrb[0].mxu0
  %v2418 = vadd.f32 0.0, %v2417
  %2419 = vdwg.mxu0
  %2420 = vmatprep.subr.mxu0 %v43
  %2421 = vmatpush1.msra.mxu0 %v42
  %2422 = vmatprep.subr.mxu0 %v49
  %2423 = vmatpush1.msra.mxu0 %v48
  %2424 = vmatprep.subr.mxu0 %v55
  %2425 = vmatpush1.msra.mxu0 %v54
  %2426 = vmatprep.subr.mxu0 %v61
  %2427 = vmatpush1.msra.mxu0 %v60
  %2428 = vmatprep.subr.mxu0 %v67
  %2429 = vmatpush1.msra.mxu0 %v66
  %2430 = vmatprep.subr.mxu0 %v73
  %2431 = vmatpush1.msra.mxu0 %v72
  %2432 = vmatprep.subr.mxu0 %v79
  %2433 = vmatpush1.msra.mxu0 %v78
  %2434 = vmatprep.subr.mxu0 %v85
  %2435 = vmatpush1.msra.mxu0 %v84
  %2436 = vmatprep.subr.mxu0 %v91
  %2437 = vmatpush1.msra.mxu0 %v90
  %2438 = vmatprep.subr.mxu0 %v97
  %2439 = vmatpush1.msra.mxu0 %v96
  %2440 = vmatprep.subr.mxu0 %v103
  %2441 = vmatpush1.msra.mxu0 %v102
  %2442 = vmatprep.subr.mxu0 %v109
  %2443 = vmatpush1.msra.mxu0 %v108
  %2444 = vmatprep.subr.mxu0 %v115
  %2445 = vmatpush1.msra.mxu0 %v114
  %2446 = vmatprep.subr.mxu0 %v121
  %2447 = vmatpush1.msra.mxu0 %v120
  %2448 = vmatprep.subr.mxu0 %v127
  %2449 = vmatpush1.msra.mxu0 %v126
  %2450 = vmatprep.subr.mxu0 %v133
  %2451 = vmatpush1.msra.mxu0 %v132
  %2452 = vmatprep.subr.mxu0 %v139
  %2453 = vmatpush1.msra.mxu0 %v138
  %2454 = vmatprep.subr.mxu0 %v145
  %2455 = vmatpush1.msra.mxu0 %v144
  %2456 = vmatprep.subr.mxu0 %v151
  %2457 = vmatpush1.msra.mxu0 %v150
  %2458 = vmatprep.subr.mxu0 %v157
  %2459 = vmatpush1.msra.mxu0 %v156
  %2460 = vmatprep.subr.mxu0 %v163
  %2461 = vmatpush1.msra.mxu0 %v162
  %2462 = vmatprep.subr.mxu0 %v169
  %2463 = vmatpush1.msra.mxu0 %v168
  %2464 = vmatprep.subr.mxu0 %v175
  %2465 = vmatpush1.msra.mxu0 %v174
  %2466 = vmatprep.subr.mxu0 %v181
  %2467 = vmatpush1.msra.mxu0 %v180
  %2468 = vmatprep.subr.mxu0 %v187
  %2469 = vmatpush1.msra.mxu0 %v186
  %2470 = vmatprep.subr.mxu0 %v193
  %2471 = vmatpush1.msra.mxu0 %v192
  %2472 = vmatprep.subr.mxu0 %v199
  %2473 = vmatpush1.msra.mxu0 %v198
  %2474 = vmatprep.subr.mxu0 %v205
  %2475 = vmatpush1.msra.mxu0 %v204
  %2476 = vmatprep.subr.mxu0 %v211
  %2477 = vmatpush1.msra.mxu0 %v210
  %2478 = vmatprep.subr.mxu0 %v217
  %2479 = vmatpush1.msra.mxu0 %v216
  %2480 = vmatprep.subr.mxu0 %v223
  %2481 = vmatpush1.msra.mxu0 %v222
  %2482 = vmatprep.subr.mxu0 %v229
  %2483 = vmatpush1.msra.mxu0 %v228
  %2484 = vmatprep.mubr.f32.mxu0 %v2244
  %2485 = vmatmul.mubr.f32.gmra.mrb[0].mxu0 %v2243
  %v2486 = vpop.f32.mrb[0].mxu0
  %v2487 = vadd.f32 0.0, %v2486
  %v2488 = vpop.f32.mrb[0].mxu0
  %v2489 = vadd.f32 0.0, %v2488
  %2490 = vmatprep.mubr.f32.mxu0 %v2246
  %2491 = vmatmul.mubr.f32.gmra.mrb[0].mxu0 %v2245
  %v2492 = vpop.f32.mrb[0].mxu0
  %v2493 = vadd.f32 0.0, %v2492
  %v2494 = vpop.f32.mrb[0].mxu0
  %v2495 = vadd.f32 0.0, %v2494
  %2496 = vdwg.mxu0
  %v2497 = vadd.f32 %v2254, %v2333
  %v2498 = vadd.f32 %v2255, %v2335
  %v2499 = vadd.f32 %v2260, %v2339
  %v2500 = vadd.f32 %v2261, %v2341
  %v2501 = vmul.f32 %v2497, 0.5
  %v2502 = vmul.f32 %v2498, 0.5
  %v2503 = vmul.f32 %v2499, 0.5
  %v2504 = vmul.f32 %v2500, 0.5
  %v2505 = vtanh.pop %v2501
  %v2506 = vtanh.pop %v2502
  %v2507 = vtanh.pop %v2503
  %v2508 = vtanh.pop %v2504
  %v2509 = vmul.f32 %v2505, 0.5
  %v2510 = vmul.f32 %v2506, 0.5
  %v2511 = vmul.f32 %v2507, 0.5
  %v2512 = vmul.f32 %v2508, 0.5
  %v2513 = vadd.f32 %v2509, 0.5
  %v2514 = vadd.f32 %v2510, 0.5
  %v2515 = vadd.f32 %v2511, 0.5
  %v2516 = vadd.f32 %v2512, 0.5
  %v2517 = vadd.f32 %v2256, %v2410
  %v2518 = vadd.f32 %v2257, %v2412
  %v2519 = vadd.f32 %v2262, %v2416
  %v2520 = vadd.f32 %v2263, %v2418
  %v2521 = vmul.f32 %v2517, 0.5
  %v2522 = vmul.f32 %v2518, 0.5
  %v2523 = vmul.f32 %v2519, 0.5
  %v2524 = vmul.f32 %v2520, 0.5
  %v2525 = vtanh.pop %v2521
  %v2526 = vtanh.pop %v2522
  %v2527 = vtanh.pop %v2523
  %v2528 = vtanh.pop %v2524
  %v2529 = vmul.f32 %v2525, 0.5
  %v2530 = vmul.f32 %v2526, 0.5
  %v2531 = vmul.f32 %v2527, 0.5
  %v2532 = vmul.f32 %v2528, 0.5
  %v2533 = vadd.f32 %v2529, 0.5
  %v2534 = vadd.f32 %v2530, 0.5
  %v2535 = vadd.f32 %v2531, 0.5
  %v2536 = vadd.f32 %v2532, 0.5
  %v2537 = vadd.f32 %v2487, %v526
  %v2538 = vadd.f32 %v2489, %v530
  %v2539 = vadd.f32 %v2493, %v526
  %v2540 = vadd.f32 %v2495, %v530
  %v2541 = vmul.f32 %v2513, %v2537
  %v2542 = vmul.f32 %v2514, %v2538
  %v2543 = vmul.f32 %v2515, %v2539
  %v2544 = vmul.f32 %v2516, %v2540
  %v2545 = vadd.f32 %v2258, %v2541
  %v2546 = vadd.f32 %v2259, %v2542
  %v2547 = vadd.f32 %v2264, %v2543
  %v2548 = vadd.f32 %v2265, %v2544
  %v2549 = vtanh.pop %v2545
  %v2550 = vtanh.pop %v2546
  %v2551 = vtanh.pop %v2547
  %v2552 = vtanh.pop %v2548
  %v2553 = vsub.f32 %v2243, %v2549
  %v2554 = vsub.f32 %v2244, %v2550
  %v2555 = vsub.f32 %v2245, %v2551
  %v2556 = vsub.f32 %v2246, %v2552
  %v2557 = vmul.f32 %v2533, %v2553
  %v2558 = vmul.f32 %v2534, %v2554
  %v2559 = vmul.f32 %v2535, %v2555
  %v2560 = vmul.f32 %v2536, %v2556
  %v2561 = vadd.f32 %v2549, %v2557
  %v2562 = vadd.f32 %v2550, %v2558
  %v2563 = vadd.f32 %v2551, %v2559
  %v2564 = vadd.f32 %v2552, %v2560
  %vm2565 = vcmp.gt.s32.totalorder %v231, 6
  %vm2566 = vcmp.gt.s32.totalorder %v232, 6
  %v2567 = vsel %vm2565, 1, 0
  %v2568 = vsel %vm2566, 1, 0
  %2569 = vset.pattern.permute.xlu0 0
  %2570 = vperm.xlu0 %2569, %v2567
  %v2571 = vpop.permute.xlu0 %2570
  %2572 = vset.pattern.permute.xlu0 0
  %2573 = vperm.xlu0 %2572, %v2568
  %v2574 = vpop.permute.xlu0 %2573
  %vm2575 = vcmp.eq.s32.totalorder %v2571, 1
  %vm2576 = vcmp.eq.s32.totalorder %v2574, 1
  %v2577 = vsel %vm2575, %v2561, %v2243
  %v2578 = vsel %vm2575, %v2562, %v2244
  %v2579 = vsel %vm2576, %v2563, %v2245
  %v2580 = vsel %vm2576, %v2564, %v2246
  %s2581 = scalar_lea.vmem %s0, 336
  %v2582 = vld [vmem:[%s2581] sm:$0xff]
  %v2583 = vld [vmem:[%s2581 + $0x8] sm:$0xff]
  %v2584 = vld [vmem:[%s2581 + $0x10] sm:$0xff]
  %v2585 = vld [vmem:[%s2581 + $0x18] sm:$0xff]
  %v2586 = vld [vmem:[%s2581 + $0x20] sm:$0xff]
  %v2587 = vld [vmem:[%s2581 + $0x28] sm:$0xff]
  %v2588 = vunpack.c.l.bf16 %v2582
  %v2589 = vunpack.c.h.bf16 %v2582
  %v2590 = vunpack.c.l.bf16 %v2583
  %v2591 = vunpack.c.h.bf16 %v2583
  %v2592 = vunpack.c.l.bf16 %v2584
  %v2593 = vunpack.c.h.bf16 %v2584
  %v2594 = vunpack.c.l.bf16 %v2585
  %v2595 = vunpack.c.h.bf16 %v2585
  %v2596 = vunpack.c.l.bf16 %v2586
  %v2597 = vunpack.c.h.bf16 %v2586
  %v2598 = vunpack.c.l.bf16 %v2587
  %v2599 = vunpack.c.h.bf16 %v2587
  %2600 = vmatprep.subr.mxu0 %v39
  %2601 = vmatpush1.msra.mxu0 %v38
  %2602 = vmatprep.subr.mxu0 %v45
  %2603 = vmatpush1.msra.mxu0 %v44
  %2604 = vmatprep.subr.mxu0 %v51
  %2605 = vmatpush1.msra.mxu0 %v50
  %2606 = vmatprep.subr.mxu0 %v57
  %2607 = vmatpush1.msra.mxu0 %v56
  %2608 = vmatprep.subr.mxu0 %v63
  %2609 = vmatpush1.msra.mxu0 %v62
  %2610 = vmatprep.subr.mxu0 %v69
  %2611 = vmatpush1.msra.mxu0 %v68
  %2612 = vmatprep.subr.mxu0 %v75
  %2613 = vmatpush1.msra.mxu0 %v74
  %2614 = vmatprep.subr.mxu0 %v81
  %2615 = vmatpush1.msra.mxu0 %v80
  %2616 = vmatprep.subr.mxu0 %v87
  %2617 = vmatpush1.msra.mxu0 %v86
  %2618 = vmatprep.subr.mxu0 %v93
  %2619 = vmatpush1.msra.mxu0 %v92
  %2620 = vmatprep.subr.mxu0 %v99
  %2621 = vmatpush1.msra.mxu0 %v98
  %2622 = vmatprep.subr.mxu0 %v105
  %2623 = vmatpush1.msra.mxu0 %v104
  %2624 = vmatprep.subr.mxu0 %v111
  %2625 = vmatpush1.msra.mxu0 %v110
  %2626 = vmatprep.subr.mxu0 %v117
  %2627 = vmatpush1.msra.mxu0 %v116
  %2628 = vmatprep.subr.mxu0 %v123
  %2629 = vmatpush1.msra.mxu0 %v122
  %2630 = vmatprep.subr.mxu0 %v129
  %2631 = vmatpush1.msra.mxu0 %v128
  %2632 = vmatprep.subr.mxu0 %v135
  %2633 = vmatpush1.msra.mxu0 %v134
  %2634 = vmatprep.subr.mxu0 %v141
  %2635 = vmatpush1.msra.mxu0 %v140
  %2636 = vmatprep.subr.mxu0 %v147
  %2637 = vmatpush1.msra.mxu0 %v146
  %2638 = vmatprep.subr.mxu0 %v153
  %2639 = vmatpush1.msra.mxu0 %v152
  %2640 = vmatprep.subr.mxu0 %v159
  %2641 = vmatpush1.msra.mxu0 %v158
  %2642 = vmatprep.subr.mxu0 %v165
  %2643 = vmatpush1.msra.mxu0 %v164
  %2644 = vmatprep.subr.mxu0 %v171
  %2645 = vmatpush1.msra.mxu0 %v170
  %2646 = vmatprep.subr.mxu0 %v177
  %2647 = vmatpush1.msra.mxu0 %v176
  %2648 = vmatprep.subr.mxu0 %v183
  %2649 = vmatpush1.msra.mxu0 %v182
  %2650 = vmatprep.subr.mxu0 %v189
  %2651 = vmatpush1.msra.mxu0 %v188
  %2652 = vmatprep.subr.mxu0 %v195
  %2653 = vmatpush1.msra.mxu0 %v194
  %2654 = vmatprep.subr.mxu0 %v201
  %2655 = vmatpush1.msra.mxu0 %v200
  %2656 = vmatprep.subr.mxu0 %v207
  %2657 = vmatpush1.msra.mxu0 %v206
  %2658 = vmatprep.subr.mxu0 %v213
  %2659 = vmatpush1.msra.mxu0 %v212
  %2660 = vmatprep.subr.mxu0 %v219
  %2661 = vmatpush1.msra.mxu0 %v218
  %2662 = vmatprep.subr.mxu0 %v225
  %2663 = vmatpush1.msra.mxu0 %v224
  %2664 = vmatprep.mubr.f32.mxu0 %v2578
  %2665 = vmatmul.mubr.f32.gmra.mrb[0].mxu0 %v2577
  %v2666 = vpop.f32.mrb[0].mxu0
  %v2667 = vadd.f32 0.0, %v2666
  %v2668 = vpop.f32.mrb[0].mxu0
  %v2669 = vadd.f32 0.0, %v2668
  %2670 = vmatprep.mubr.f32.mxu0 %v2580
  %2671 = vmatmul.mubr.f32.gmra.mrb[0].mxu0 %v2579
  %v2672 = vpop.f32.mrb[0].mxu0
  %v2673 = vadd.f32 0.0, %v2672
  %v2674 = vpop.f32.mrb[0].mxu0
  %v2675 = vadd.f32 0.0, %v2674
  %2676 = vdwg.mxu0
  %2677 = vmatprep.subr.mxu0 %v41
  %2678 = vmatpush1.msra.mxu0 %v40
  %2679 = vmatprep.subr.mxu0 %v47
  %2680 = vmatpush1.msra.mxu0 %v46
  %2681 = vmatprep.subr.mxu0 %v53
  %2682 = vmatpush1.msra.mxu0 %v52
  %2683 = vmatprep.subr.mxu0 %v59
  %2684 = vmatpush1.msra.mxu0 %v58
  %2685 = vmatprep.subr.mxu0 %v65
  %2686 = vmatpush1.msra.mxu0 %v64
  %2687 = vmatprep.subr.mxu0 %v71
  %2688 = vmatpush1.msra.mxu0 %v70
  %2689 = vmatprep.subr.mxu0 %v77
  %2690 = vmatpush1.msra.mxu0 %v76
  %2691 = vmatprep.subr.mxu0 %v83
  %2692 = vmatpush1.msra.mxu0 %v82
  %2693 = vmatprep.subr.mxu0 %v89
  %2694 = vmatpush1.msra.mxu0 %v88
  %2695 = vmatprep.subr.mxu0 %v95
  %2696 = vmatpush1.msra.mxu0 %v94
  %2697 = vmatprep.subr.mxu0 %v101
  %2698 = vmatpush1.msra.mxu0 %v100
  %2699 = vmatprep.subr.mxu0 %v107
  %2700 = vmatpush1.msra.mxu0 %v106
  %2701 = vmatprep.subr.mxu0 %v113
  %2702 = vmatpush1.msra.mxu0 %v112
  %2703 = vmatprep.subr.mxu0 %v119
  %2704 = vmatpush1.msra.mxu0 %v118
  %2705 = vmatprep.subr.mxu0 %v125
  %2706 = vmatpush1.msra.mxu0 %v124
  %2707 = vmatprep.subr.mxu0 %v131
  %2708 = vmatpush1.msra.mxu0 %v130
  %2709 = vmatprep.subr.mxu0 %v137
  %2710 = vmatpush1.msra.mxu0 %v136
  %2711 = vmatprep.subr.mxu0 %v143
  %2712 = vmatpush1.msra.mxu0 %v142
  %2713 = vmatprep.subr.mxu0 %v149
  %2714 = vmatpush1.msra.mxu0 %v148
  %2715 = vmatprep.subr.mxu0 %v155
  %2716 = vmatpush1.msra.mxu0 %v154
  %2717 = vmatprep.subr.mxu0 %v161
  %2718 = vmatpush1.msra.mxu0 %v160
  %2719 = vmatprep.subr.mxu0 %v167
  %2720 = vmatpush1.msra.mxu0 %v166
  %2721 = vmatprep.subr.mxu0 %v173
  %2722 = vmatpush1.msra.mxu0 %v172
  %2723 = vmatprep.subr.mxu0 %v179
  %2724 = vmatpush1.msra.mxu0 %v178
  %2725 = vmatprep.subr.mxu0 %v185
  %2726 = vmatpush1.msra.mxu0 %v184
  %2727 = vmatprep.subr.mxu0 %v191
  %2728 = vmatpush1.msra.mxu0 %v190
  %2729 = vmatprep.subr.mxu0 %v197
  %2730 = vmatpush1.msra.mxu0 %v196
  %2731 = vmatprep.subr.mxu0 %v203
  %2732 = vmatpush1.msra.mxu0 %v202
  %2733 = vmatprep.subr.mxu0 %v209
  %2734 = vmatpush1.msra.mxu0 %v208
  %2735 = vmatprep.subr.mxu0 %v215
  %2736 = vmatpush1.msra.mxu0 %v214
  %2737 = vmatprep.subr.mxu0 %v221
  %2738 = vmatpush1.msra.mxu0 %v220
  %2739 = vmatprep.subr.mxu0 %v227
  %2740 = vmatpush1.msra.mxu0 %v226
  %2741 = vmatprep.mubr.f32.mxu0 %v2578
  %2742 = vmatmul.mubr.f32.gmra.mrb[0].mxu0 %v2577
  %v2743 = vpop.f32.mrb[0].mxu0
  %v2744 = vadd.f32 0.0, %v2743
  %v2745 = vpop.f32.mrb[0].mxu0
  %v2746 = vadd.f32 0.0, %v2745
  %2747 = vmatprep.mubr.f32.mxu0 %v2580
  %2748 = vmatmul.mubr.f32.gmra.mrb[0].mxu0 %v2579
  %v2749 = vpop.f32.mrb[0].mxu0
  %v2750 = vadd.f32 0.0, %v2749
  %v2751 = vpop.f32.mrb[0].mxu0
  %v2752 = vadd.f32 0.0, %v2751
  %2753 = vdwg.mxu0
  %2754 = vmatprep.subr.mxu0 %v43
  %2755 = vmatpush1.msra.mxu0 %v42
  %2756 = vmatprep.subr.mxu0 %v49
  %2757 = vmatpush1.msra.mxu0 %v48
  %2758 = vmatprep.subr.mxu0 %v55
  %2759 = vmatpush1.msra.mxu0 %v54
  %2760 = vmatprep.subr.mxu0 %v61
  %2761 = vmatpush1.msra.mxu0 %v60
  %2762 = vmatprep.subr.mxu0 %v67
  %2763 = vmatpush1.msra.mxu0 %v66
  %2764 = vmatprep.subr.mxu0 %v73
  %2765 = vmatpush1.msra.mxu0 %v72
  %2766 = vmatprep.subr.mxu0 %v79
  %2767 = vmatpush1.msra.mxu0 %v78
  %2768 = vmatprep.subr.mxu0 %v85
  %2769 = vmatpush1.msra.mxu0 %v84
  %2770 = vmatprep.subr.mxu0 %v91
  %2771 = vmatpush1.msra.mxu0 %v90
  %2772 = vmatprep.subr.mxu0 %v97
  %2773 = vmatpush1.msra.mxu0 %v96
  %2774 = vmatprep.subr.mxu0 %v103
  %2775 = vmatpush1.msra.mxu0 %v102
  %2776 = vmatprep.subr.mxu0 %v109
  %2777 = vmatpush1.msra.mxu0 %v108
  %2778 = vmatprep.subr.mxu0 %v115
  %2779 = vmatpush1.msra.mxu0 %v114
  %2780 = vmatprep.subr.mxu0 %v121
  %2781 = vmatpush1.msra.mxu0 %v120
  %2782 = vmatprep.subr.mxu0 %v127
  %2783 = vmatpush1.msra.mxu0 %v126
  %2784 = vmatprep.subr.mxu0 %v133
  %2785 = vmatpush1.msra.mxu0 %v132
  %2786 = vmatprep.subr.mxu0 %v139
  %2787 = vmatpush1.msra.mxu0 %v138
  %2788 = vmatprep.subr.mxu0 %v145
  %2789 = vmatpush1.msra.mxu0 %v144
  %2790 = vmatprep.subr.mxu0 %v151
  %2791 = vmatpush1.msra.mxu0 %v150
  %2792 = vmatprep.subr.mxu0 %v157
  %2793 = vmatpush1.msra.mxu0 %v156
  %2794 = vmatprep.subr.mxu0 %v163
  %2795 = vmatpush1.msra.mxu0 %v162
  %2796 = vmatprep.subr.mxu0 %v169
  %2797 = vmatpush1.msra.mxu0 %v168
  %2798 = vmatprep.subr.mxu0 %v175
  %2799 = vmatpush1.msra.mxu0 %v174
  %2800 = vmatprep.subr.mxu0 %v181
  %2801 = vmatpush1.msra.mxu0 %v180
  %2802 = vmatprep.subr.mxu0 %v187
  %2803 = vmatpush1.msra.mxu0 %v186
  %2804 = vmatprep.subr.mxu0 %v193
  %2805 = vmatpush1.msra.mxu0 %v192
  %2806 = vmatprep.subr.mxu0 %v199
  %2807 = vmatpush1.msra.mxu0 %v198
  %2808 = vmatprep.subr.mxu0 %v205
  %2809 = vmatpush1.msra.mxu0 %v204
  %2810 = vmatprep.subr.mxu0 %v211
  %2811 = vmatpush1.msra.mxu0 %v210
  %2812 = vmatprep.subr.mxu0 %v217
  %2813 = vmatpush1.msra.mxu0 %v216
  %2814 = vmatprep.subr.mxu0 %v223
  %2815 = vmatpush1.msra.mxu0 %v222
  %2816 = vmatprep.subr.mxu0 %v229
  %2817 = vmatpush1.msra.mxu0 %v228
  %2818 = vmatprep.mubr.f32.mxu0 %v2578
  %2819 = vmatmul.mubr.f32.gmra.mrb[0].mxu0 %v2577
  %v2820 = vpop.f32.mrb[0].mxu0
  %v2821 = vadd.f32 0.0, %v2820
  %v2822 = vpop.f32.mrb[0].mxu0
  %v2823 = vadd.f32 0.0, %v2822
  %2824 = vmatprep.mubr.f32.mxu0 %v2580
  %2825 = vmatmul.mubr.f32.gmra.mrb[0].mxu0 %v2579
  %v2826 = vpop.f32.mrb[0].mxu0
  %v2827 = vadd.f32 0.0, %v2826
  %v2828 = vpop.f32.mrb[0].mxu0
  %v2829 = vadd.f32 0.0, %v2828
  %2830 = vdwg.mxu0
  %v2831 = vadd.f32 %v2588, %v2667
  %v2832 = vadd.f32 %v2589, %v2669
  %v2833 = vadd.f32 %v2594, %v2673
  %v2834 = vadd.f32 %v2595, %v2675
  %v2835 = vmul.f32 %v2831, 0.5
  %v2836 = vmul.f32 %v2832, 0.5
  %v2837 = vmul.f32 %v2833, 0.5
  %v2838 = vmul.f32 %v2834, 0.5
  %v2839 = vtanh.pop %v2835
  %v2840 = vtanh.pop %v2836
  %v2841 = vtanh.pop %v2837
  %v2842 = vtanh.pop %v2838
  %v2843 = vmul.f32 %v2839, 0.5
  %v2844 = vmul.f32 %v2840, 0.5
  %v2845 = vmul.f32 %v2841, 0.5
  %v2846 = vmul.f32 %v2842, 0.5
  %v2847 = vadd.f32 %v2843, 0.5
  %v2848 = vadd.f32 %v2844, 0.5
  %v2849 = vadd.f32 %v2845, 0.5
  %v2850 = vadd.f32 %v2846, 0.5
  %v2851 = vadd.f32 %v2590, %v2744
  %v2852 = vadd.f32 %v2591, %v2746
  %v2853 = vadd.f32 %v2596, %v2750
  %v2854 = vadd.f32 %v2597, %v2752
  %v2855 = vmul.f32 %v2851, 0.5
  %v2856 = vmul.f32 %v2852, 0.5
  %v2857 = vmul.f32 %v2853, 0.5
  %v2858 = vmul.f32 %v2854, 0.5
  %v2859 = vtanh.pop %v2855
  %v2860 = vtanh.pop %v2856
  %v2861 = vtanh.pop %v2857
  %v2862 = vtanh.pop %v2858
  %v2863 = vmul.f32 %v2859, 0.5
  %v2864 = vmul.f32 %v2860, 0.5
  %v2865 = vmul.f32 %v2861, 0.5
  %v2866 = vmul.f32 %v2862, 0.5
  %v2867 = vadd.f32 %v2863, 0.5
  %v2868 = vadd.f32 %v2864, 0.5
  %v2869 = vadd.f32 %v2865, 0.5
  %v2870 = vadd.f32 %v2866, 0.5
  %v2871 = vadd.f32 %v2821, %v526
  %v2872 = vadd.f32 %v2823, %v530
  %v2873 = vadd.f32 %v2827, %v526
  %v2874 = vadd.f32 %v2829, %v530
  %v2875 = vmul.f32 %v2847, %v2871
  %v2876 = vmul.f32 %v2848, %v2872
  %v2877 = vmul.f32 %v2849, %v2873
  %v2878 = vmul.f32 %v2850, %v2874
  %v2879 = vadd.f32 %v2592, %v2875
  %v2880 = vadd.f32 %v2593, %v2876
  %v2881 = vadd.f32 %v2598, %v2877
  %v2882 = vadd.f32 %v2599, %v2878
  %v2883 = vtanh.pop %v2879
  %v2884 = vtanh.pop %v2880
  %v2885 = vtanh.pop %v2881
  %v2886 = vtanh.pop %v2882
  %v2887 = vsub.f32 %v2577, %v2883
  %v2888 = vsub.f32 %v2578, %v2884
  %v2889 = vsub.f32 %v2579, %v2885
  %v2890 = vsub.f32 %v2580, %v2886
  %v2891 = vmul.f32 %v2867, %v2887
  %v2892 = vmul.f32 %v2868, %v2888
  %v2893 = vmul.f32 %v2869, %v2889
  %v2894 = vmul.f32 %v2870, %v2890
  %v2895 = vadd.f32 %v2883, %v2891
  %v2896 = vadd.f32 %v2884, %v2892
  %v2897 = vadd.f32 %v2885, %v2893
  %v2898 = vadd.f32 %v2886, %v2894
  %vm2899 = vcmp.gt.s32.totalorder %v231, 7
  %vm2900 = vcmp.gt.s32.totalorder %v232, 7
  %v2901 = vsel %vm2899, 1, 0
  %v2902 = vsel %vm2900, 1, 0
  %2903 = vset.pattern.permute.xlu0 0
  %2904 = vperm.xlu0 %2903, %v2901
  %v2905 = vpop.permute.xlu0 %2904
  %2906 = vset.pattern.permute.xlu0 0
  %2907 = vperm.xlu0 %2906, %v2902
  %v2908 = vpop.permute.xlu0 %2907
  %vm2909 = vcmp.eq.s32.totalorder %v2905, 1
  %vm2910 = vcmp.eq.s32.totalorder %v2908, 1
  %v2911 = vsel %vm2909, %v2895, %v2577
  %v2912 = vsel %vm2909, %v2896, %v2578
  %v2913 = vsel %vm2910, %v2897, %v2579
  %v2914 = vsel %vm2910, %v2898, %v2580
  %v2915 = vld [vmem:[%s4] sm:$0xff]
  %v2916 = vld [vmem:[%s4 + $0x8] sm:$0xff]
  %v2917 = vld [vmem:[%s4 + $0x10] sm:$0xff]
  %v2918 = vld [vmem:[%s4 + $0x18] sm:$0xff]
  %v2919 = vld [vmem:[%s4 + $0x20] sm:$0xff]
  %v2920 = vld [vmem:[%s4 + $0x28] sm:$0xff]
  %v2921 = vld [vmem:[%s4 + $0x30] sm:$0xff]
  %v2922 = vld [vmem:[%s4 + $0x38] sm:$0xff]
  %v2923 = vld [vmem:[%s4 + $0x40] sm:$0xff]
  %v2924 = vld [vmem:[%s4 + $0x48] sm:$0xff]
  %v2925 = vld [vmem:[%s4 + $0x50] sm:$0xff]
  %v2926 = vld [vmem:[%s4 + $0x58] sm:$0xff]
  %v2927 = vld [vmem:[%s4 + $0x60] sm:$0xff]
  %v2928 = vld [vmem:[%s4 + $0x68] sm:$0xff]
  %v2929 = vld [vmem:[%s4 + $0x70] sm:$0xff]
  %v2930 = vld [vmem:[%s4 + $0x78] sm:$0xff]
  %v2931 = vld [vmem:[%s4 + $0x80] sm:$0xff]
  %v2932 = vld [vmem:[%s4 + $0x88] sm:$0xff]
  %v2933 = vld [vmem:[%s4 + $0x90] sm:$0xff]
  %v2934 = vld [vmem:[%s4 + $0x98] sm:$0xff]
  %v2935 = vld [vmem:[%s4 + $0xa0] sm:$0xff]
  %v2936 = vld [vmem:[%s4 + $0xa8] sm:$0xff]
  %v2937 = vld [vmem:[%s4 + $0xb0] sm:$0xff]
  %v2938 = vld [vmem:[%s4 + $0xb8] sm:$0xff]
  %v2939 = vld [vmem:[%s4 + $0xc0] sm:$0xff]
  %v2940 = vld [vmem:[%s4 + $0xc8] sm:$0xff]
  %v2941 = vld [vmem:[%s4 + $0xd0] sm:$0xff]
  %v2942 = vld [vmem:[%s4 + $0xd8] sm:$0xff]
  %v2943 = vld [vmem:[%s4 + $0xe0] sm:$0xff]
  %v2944 = vld [vmem:[%s4 + $0xe8] sm:$0xff]
  %v2945 = vld [vmem:[%s4 + $0xf0] sm:$0xff]
  %v2946 = vld [vmem:[%s4 + $0xf8] sm:$0xff]
  %v2947 = vld [vmem:[%s4 + $0x100] sm:$0xff]
  %v2948 = vld [vmem:[%s4 + $0x108] sm:$0xff]
  %v2949 = vld [vmem:[%s4 + $0x110] sm:$0xff]
  %v2950 = vld [vmem:[%s4 + $0x118] sm:$0xff]
  %v2951 = vld [vmem:[%s4 + $0x120] sm:$0xff]
  %v2952 = vld [vmem:[%s4 + $0x128] sm:$0xff]
  %v2953 = vld [vmem:[%s4 + $0x130] sm:$0xff]
  %v2954 = vld [vmem:[%s4 + $0x138] sm:$0xff]
  %v2955 = vld [vmem:[%s4 + $0x140] sm:$0xff]
  %v2956 = vld [vmem:[%s4 + $0x148] sm:$0xff]
  %v2957 = vld [vmem:[%s4 + $0x150] sm:$0xff]
  %v2958 = vld [vmem:[%s4 + $0x158] sm:$0xff]
  %v2959 = vld [vmem:[%s4 + $0x160] sm:$0xff]
  %v2960 = vld [vmem:[%s4 + $0x168] sm:$0xff]
  %v2961 = vld [vmem:[%s4 + $0x170] sm:$0xff]
  %v2962 = vld [vmem:[%s4 + $0x178] sm:$0xff]
  %v2963 = vld [vmem:[%s4 + $0x180] sm:$0xff]
  %v2964 = vld [vmem:[%s4 + $0x188] sm:$0xff]
  %v2965 = vld [vmem:[%s4 + $0x190] sm:$0xff]
  %v2966 = vld [vmem:[%s4 + $0x198] sm:$0xff]
  %v2967 = vld [vmem:[%s4 + $0x1a0] sm:$0xff]
  %v2968 = vld [vmem:[%s4 + $0x1a8] sm:$0xff]
  %v2969 = vld [vmem:[%s4 + $0x1b0] sm:$0xff]
  %v2970 = vld [vmem:[%s4 + $0x1b8] sm:$0xff]
  %v2971 = vld [vmem:[%s4 + $0x1c0] sm:$0xff]
  %v2972 = vld [vmem:[%s4 + $0x1c8] sm:$0xff]
  %v2973 = vld [vmem:[%s4 + $0x1d0] sm:$0xff]
  %v2974 = vld [vmem:[%s4 + $0x1d8] sm:$0xff]
  %v2975 = vld [vmem:[%s4 + $0x1e0] sm:$0xff]
  %v2976 = vld [vmem:[%s4 + $0x1e8] sm:$0xff]
  %v2977 = vld [vmem:[%s4 + $0x1f0] sm:$0xff]
  %v2978 = vld [vmem:[%s4 + $0x1f8] sm:$0xff]
  %v2979 = vld [vmem:[%s4 + $0x200] sm:$0xff]
  %v2980 = vld [vmem:[%s4 + $0x208] sm:$0xff]
  %v2981 = vld [vmem:[%s4 + $0x210] sm:$0xff]
  %v2982 = vld [vmem:[%s4 + $0x218] sm:$0xff]
  %v2983 = vld [vmem:[%s4 + $0x220] sm:$0xff]
  %v2984 = vld [vmem:[%s4 + $0x228] sm:$0xff]
  %v2985 = vld [vmem:[%s4 + $0x230] sm:$0xff]
  %v2986 = vld [vmem:[%s4 + $0x238] sm:$0xff]
  %v2987 = vld [vmem:[%s4 + $0x240] sm:$0xff]
  %v2988 = vld [vmem:[%s4 + $0x248] sm:$0xff]
  %v2989 = vld [vmem:[%s4 + $0x250] sm:$0xff]
  %v2990 = vld [vmem:[%s4 + $0x258] sm:$0xff]
  %v2991 = vld [vmem:[%s4 + $0x260] sm:$0xff]
  %v2992 = vld [vmem:[%s4 + $0x268] sm:$0xff]
  %v2993 = vld [vmem:[%s4 + $0x270] sm:$0xff]
  %v2994 = vld [vmem:[%s4 + $0x278] sm:$0xff]
  %v2995 = vld [vmem:[%s4 + $0x280] sm:$0xff]
  %v2996 = vld [vmem:[%s4 + $0x288] sm:$0xff]
  %v2997 = vld [vmem:[%s4 + $0x290] sm:$0xff]
  %v2998 = vld [vmem:[%s4 + $0x298] sm:$0xff]
  %v2999 = vld [vmem:[%s4 + $0x2a0] sm:$0xff]
  %v3000 = vld [vmem:[%s4 + $0x2a8] sm:$0xff]
  %v3001 = vld [vmem:[%s4 + $0x2b0] sm:$0xff]
  %v3002 = vld [vmem:[%s4 + $0x2b8] sm:$0xff]
  %v3003 = vld [vmem:[%s4 + $0x2c0] sm:$0xff]
  %v3004 = vld [vmem:[%s4 + $0x2c8] sm:$0xff]
  %v3005 = vld [vmem:[%s4 + $0x2d0] sm:$0xff]
  %v3006 = vld [vmem:[%s4 + $0x2d8] sm:$0xff]
  %v3007 = vld [vmem:[%s4 + $0x2e0] sm:$0xff]
  %v3008 = vld [vmem:[%s4 + $0x2e8] sm:$0xff]
  %v3009 = vld [vmem:[%s4 + $0x2f0] sm:$0xff]
  %v3010 = vld [vmem:[%s4 + $0x2f8] sm:$0xff]
  %v3011 = vld [vmem:[%s4 + $0x300] sm:$0xff]
  %v3012 = vld [vmem:[%s4 + $0x308] sm:$0xff]
  %v3013 = vld [vmem:[%s4 + $0x310] sm:$0xff]
  %v3014 = vld [vmem:[%s4 + $0x318] sm:$0xff]
  %v3015 = vld [vmem:[%s4 + $0x320] sm:$0xff]
  %v3016 = vld [vmem:[%s4 + $0x328] sm:$0xff]
  %v3017 = vld [vmem:[%s4 + $0x330] sm:$0xff]
  %v3018 = vld [vmem:[%s4 + $0x338] sm:$0xff]
  %v3019 = vld [vmem:[%s4 + $0x340] sm:$0xff]
  %v3020 = vld [vmem:[%s4 + $0x348] sm:$0xff]
  %v3021 = vld [vmem:[%s4 + $0x350] sm:$0xff]
  %v3022 = vld [vmem:[%s4 + $0x358] sm:$0xff]
  %v3023 = vld [vmem:[%s4 + $0x360] sm:$0xff]
  %v3024 = vld [vmem:[%s4 + $0x368] sm:$0xff]
  %v3025 = vld [vmem:[%s4 + $0x370] sm:$0xff]
  %v3026 = vld [vmem:[%s4 + $0x378] sm:$0xff]
  %v3027 = vld [vmem:[%s4 + $0x380] sm:$0xff]
  %v3028 = vld [vmem:[%s4 + $0x388] sm:$0xff]
  %v3029 = vld [vmem:[%s4 + $0x390] sm:$0xff]
  %v3030 = vld [vmem:[%s4 + $0x398] sm:$0xff]
  %v3031 = vld [vmem:[%s4 + $0x3a0] sm:$0xff]
  %v3032 = vld [vmem:[%s4 + $0x3a8] sm:$0xff]
  %v3033 = vld [vmem:[%s4 + $0x3b0] sm:$0xff]
  %v3034 = vld [vmem:[%s4 + $0x3b8] sm:$0xff]
  %v3035 = vld [vmem:[%s4 + $0x3c0] sm:$0xff]
  %v3036 = vld [vmem:[%s4 + $0x3c8] sm:$0xff]
  %v3037 = vld [vmem:[%s4 + $0x3d0] sm:$0xff]
  %v3038 = vld [vmem:[%s4 + $0x3d8] sm:$0xff]
  %v3039 = vld [vmem:[%s4 + $0x3e0] sm:$0xff]
  %v3040 = vld [vmem:[%s4 + $0x3e8] sm:$0xff]
  %v3041 = vld [vmem:[%s4 + $0x3f0] sm:$0xff]
  %v3042 = vld [vmem:[%s4 + $0x3f8] sm:$0xff]
  %v3043 = vld [vmem:[%s4 + $0x400] sm:$0xff]
  %v3044 = vld [vmem:[%s4 + $0x408] sm:$0xff]
  %v3045 = vld [vmem:[%s4 + $0x410] sm:$0xff]
  %v3046 = vld [vmem:[%s4 + $0x418] sm:$0xff]
  %v3047 = vld [vmem:[%s4 + $0x420] sm:$0xff]
  %v3048 = vld [vmem:[%s4 + $0x428] sm:$0xff]
  %v3049 = vld [vmem:[%s4 + $0x430] sm:$0xff]
  %v3050 = vld [vmem:[%s4 + $0x438] sm:$0xff]
  %v3051 = vld [vmem:[%s4 + $0x440] sm:$0xff]
  %v3052 = vld [vmem:[%s4 + $0x448] sm:$0xff]
  %v3053 = vld [vmem:[%s4 + $0x450] sm:$0xff]
  %v3054 = vld [vmem:[%s4 + $0x458] sm:$0xff]
  %v3055 = vld [vmem:[%s4 + $0x460] sm:$0xff]
  %v3056 = vld [vmem:[%s4 + $0x468] sm:$0xff]
  %v3057 = vld [vmem:[%s4 + $0x470] sm:$0xff]
  %v3058 = vld [vmem:[%s4 + $0x478] sm:$0xff]
  %v3059 = vld [vmem:[%s4 + $0x480] sm:$0xff]
  %v3060 = vld [vmem:[%s4 + $0x488] sm:$0xff]
  %v3061 = vld [vmem:[%s4 + $0x490] sm:$0xff]
  %v3062 = vld [vmem:[%s4 + $0x498] sm:$0xff]
  %v3063 = vld [vmem:[%s4 + $0x4a0] sm:$0xff]
  %v3064 = vld [vmem:[%s4 + $0x4a8] sm:$0xff]
  %v3065 = vld [vmem:[%s4 + $0x4b0] sm:$0xff]
  %v3066 = vld [vmem:[%s4 + $0x4b8] sm:$0xff]
  %v3067 = vld [vmem:[%s4 + $0x4c0] sm:$0xff]
  %v3068 = vld [vmem:[%s4 + $0x4c8] sm:$0xff]
  %v3069 = vld [vmem:[%s4 + $0x4d0] sm:$0xff]
  %v3070 = vld [vmem:[%s4 + $0x4d8] sm:$0xff]
  %v3071 = vld [vmem:[%s4 + $0x4e0] sm:$0xff]
  %v3072 = vld [vmem:[%s4 + $0x4e8] sm:$0xff]
  %v3073 = vld [vmem:[%s4 + $0x4f0] sm:$0xff]
  %v3074 = vld [vmem:[%s4 + $0x4f8] sm:$0xff]
  %v3075 = vld [vmem:[%s4 + $0x500] sm:$0xff]
  %v3076 = vld [vmem:[%s4 + $0x508] sm:$0xff]
  %v3077 = vld [vmem:[%s4 + $0x510] sm:$0xff]
  %v3078 = vld [vmem:[%s4 + $0x518] sm:$0xff]
  %v3079 = vld [vmem:[%s4 + $0x520] sm:$0xff]
  %v3080 = vld [vmem:[%s4 + $0x528] sm:$0xff]
  %v3081 = vld [vmem:[%s4 + $0x530] sm:$0xff]
  %v3082 = vld [vmem:[%s4 + $0x538] sm:$0xff]
  %v3083 = vld [vmem:[%s4 + $0x540] sm:$0xff]
  %v3084 = vld [vmem:[%s4 + $0x548] sm:$0xff]
  %v3085 = vld [vmem:[%s4 + $0x550] sm:$0xff]
  %v3086 = vld [vmem:[%s4 + $0x558] sm:$0xff]
  %v3087 = vld [vmem:[%s4 + $0x560] sm:$0xff]
  %v3088 = vld [vmem:[%s4 + $0x568] sm:$0xff]
  %v3089 = vld [vmem:[%s4 + $0x570] sm:$0xff]
  %v3090 = vld [vmem:[%s4 + $0x578] sm:$0xff]
  %v3091 = vld [vmem:[%s4 + $0x580] sm:$0xff]
  %v3092 = vld [vmem:[%s4 + $0x588] sm:$0xff]
  %v3093 = vld [vmem:[%s4 + $0x590] sm:$0xff]
  %v3094 = vld [vmem:[%s4 + $0x598] sm:$0xff]
  %v3095 = vld [vmem:[%s4 + $0x5a0] sm:$0xff]
  %v3096 = vld [vmem:[%s4 + $0x5a8] sm:$0xff]
  %v3097 = vld [vmem:[%s4 + $0x5b0] sm:$0xff]
  %v3098 = vld [vmem:[%s4 + $0x5b8] sm:$0xff]
  %v3099 = vld [vmem:[%s4 + $0x5c0] sm:$0xff]
  %v3100 = vld [vmem:[%s4 + $0x5c8] sm:$0xff]
  %v3101 = vld [vmem:[%s4 + $0x5d0] sm:$0xff]
  %v3102 = vld [vmem:[%s4 + $0x5d8] sm:$0xff]
  %v3103 = vld [vmem:[%s4 + $0x5e0] sm:$0xff]
  %v3104 = vld [vmem:[%s4 + $0x5e8] sm:$0xff]
  %v3105 = vld [vmem:[%s4 + $0x5f0] sm:$0xff]
  %v3106 = vld [vmem:[%s4 + $0x5f8] sm:$0xff]
  %v3107 = vld [vmem:[%s4 + $0x600] sm:$0xff]
  %v3108 = vld [vmem:[%s4 + $0x608] sm:$0xff]
  %v3109 = vld [vmem:[%s4 + $0x610] sm:$0xff]
  %v3110 = vld [vmem:[%s4 + $0x618] sm:$0xff]
  %v3111 = vld [vmem:[%s4 + $0x620] sm:$0xff]
  %v3112 = vld [vmem:[%s4 + $0x628] sm:$0xff]
  %v3113 = vld [vmem:[%s4 + $0x630] sm:$0xff]
  %v3114 = vld [vmem:[%s4 + $0x638] sm:$0xff]
  %v3115 = vld [vmem:[%s4 + $0x640] sm:$0xff]
  %v3116 = vld [vmem:[%s4 + $0x648] sm:$0xff]
  %v3117 = vld [vmem:[%s4 + $0x650] sm:$0xff]
  %v3118 = vld [vmem:[%s4 + $0x658] sm:$0xff]
  %v3119 = vld [vmem:[%s4 + $0x660] sm:$0xff]
  %v3120 = vld [vmem:[%s4 + $0x668] sm:$0xff]
  %v3121 = vld [vmem:[%s4 + $0x670] sm:$0xff]
  %v3122 = vld [vmem:[%s4 + $0x678] sm:$0xff]
  %v3123 = vld [vmem:[%s4 + $0x680] sm:$0xff]
  %v3124 = vld [vmem:[%s4 + $0x688] sm:$0xff]
  %v3125 = vld [vmem:[%s4 + $0x690] sm:$0xff]
  %v3126 = vld [vmem:[%s4 + $0x698] sm:$0xff]
  %v3127 = vld [vmem:[%s4 + $0x6a0] sm:$0xff]
  %v3128 = vld [vmem:[%s4 + $0x6a8] sm:$0xff]
  %v3129 = vld [vmem:[%s4 + $0x6b0] sm:$0xff]
  %v3130 = vld [vmem:[%s4 + $0x6b8] sm:$0xff]
  %v3131 = vld [vmem:[%s4 + $0x6c0] sm:$0xff]
  %v3132 = vld [vmem:[%s4 + $0x6c8] sm:$0xff]
  %v3133 = vld [vmem:[%s4 + $0x6d0] sm:$0xff]
  %v3134 = vld [vmem:[%s4 + $0x6d8] sm:$0xff]
  %v3135 = vld [vmem:[%s4 + $0x6e0] sm:$0xff]
  %v3136 = vld [vmem:[%s4 + $0x6e8] sm:$0xff]
  %v3137 = vld [vmem:[%s4 + $0x6f0] sm:$0xff]
  %v3138 = vld [vmem:[%s4 + $0x6f8] sm:$0xff]
  %v3139 = vld [vmem:[%s4 + $0x700] sm:$0xff]
  %v3140 = vld [vmem:[%s4 + $0x708] sm:$0xff]
  %v3141 = vld [vmem:[%s4 + $0x710] sm:$0xff]
  %v3142 = vld [vmem:[%s4 + $0x718] sm:$0xff]
  %v3143 = vld [vmem:[%s4 + $0x720] sm:$0xff]
  %v3144 = vld [vmem:[%s4 + $0x728] sm:$0xff]
  %v3145 = vld [vmem:[%s4 + $0x730] sm:$0xff]
  %v3146 = vld [vmem:[%s4 + $0x738] sm:$0xff]
  %v3147 = vld [vmem:[%s4 + $0x740] sm:$0xff]
  %v3148 = vld [vmem:[%s4 + $0x748] sm:$0xff]
  %v3149 = vld [vmem:[%s4 + $0x750] sm:$0xff]
  %v3150 = vld [vmem:[%s4 + $0x758] sm:$0xff]
  %v3151 = vld [vmem:[%s4 + $0x760] sm:$0xff]
  %v3152 = vld [vmem:[%s4 + $0x768] sm:$0xff]
  %v3153 = vld [vmem:[%s4 + $0x770] sm:$0xff]
  %v3154 = vld [vmem:[%s4 + $0x778] sm:$0xff]
  %v3155 = vld [vmem:[%s4 + $0x780] sm:$0xff]
  %v3156 = vld [vmem:[%s4 + $0x788] sm:$0xff]
  %v3157 = vld [vmem:[%s4 + $0x790] sm:$0xff]
  %v3158 = vld [vmem:[%s4 + $0x798] sm:$0xff]
  %v3159 = vld [vmem:[%s4 + $0x7a0] sm:$0xff]
  %v3160 = vld [vmem:[%s4 + $0x7a8] sm:$0xff]
  %v3161 = vld [vmem:[%s4 + $0x7b0] sm:$0xff]
  %v3162 = vld [vmem:[%s4 + $0x7b8] sm:$0xff]
  %v3163 = vld [vmem:[%s4 + $0x7c0] sm:$0xff]
  %v3164 = vld [vmem:[%s4 + $0x7c8] sm:$0xff]
  %v3165 = vld [vmem:[%s4 + $0x7d0] sm:$0xff]
  %v3166 = vld [vmem:[%s4 + $0x7d8] sm:$0xff]
  %v3167 = vld [vmem:[%s4 + $0x7e0] sm:$0xff]
  %v3168 = vld [vmem:[%s4 + $0x7e8] sm:$0xff]
  %v3169 = vld [vmem:[%s4 + $0x7f0] sm:$0xff]
  %v3170 = vld [vmem:[%s4 + $0x7f8] sm:$0xff]
  %v3171 = vld [vmem:[%s5] sm:$0xff]
  %v3172 = vld [vmem:[%s5 + $0x8] sm:$0xff]
  %v3173 = vld [vmem:[%s5 + $0x10] sm:$0xff]
  %v3174 = vld [vmem:[%s5 + $0x18] sm:$0xff]
  %v3175 = vld [vmem:[%s5 + $0x20] sm:$0xff]
  %v3176 = vld [vmem:[%s5 + $0x28] sm:$0xff]
  %v3177 = vld [vmem:[%s5 + $0x30] sm:$0xff]
  %v3178 = vld [vmem:[%s5 + $0x38] sm:$0xff]
  %v3179 = vld [vmem:[%s5 + $0x40] sm:$0xff]
  %v3180 = vld [vmem:[%s5 + $0x48] sm:$0xff]
  %v3181 = vld [vmem:[%s5 + $0x50] sm:$0xff]
  %v3182 = vld [vmem:[%s5 + $0x58] sm:$0xff]
  %v3183 = vld [vmem:[%s5 + $0x60] sm:$0xff]
  %v3184 = vld [vmem:[%s5 + $0x68] sm:$0xff]
  %v3185 = vld [vmem:[%s5 + $0x70] sm:$0xff]
  %v3186 = vld [vmem:[%s5 + $0x78] sm:$0xff]
  %v3187 = vld [vmem:[%s5 + $0x80] sm:$0xff]
  %v3188 = vld [vmem:[%s5 + $0x88] sm:$0xff]
  %v3189 = vld [vmem:[%s5 + $0x90] sm:$0xff]
  %v3190 = vld [vmem:[%s5 + $0x98] sm:$0xff]
  %v3191 = vld [vmem:[%s5 + $0xa0] sm:$0xff]
  %v3192 = vld [vmem:[%s5 + $0xa8] sm:$0xff]
  %v3193 = vld [vmem:[%s5 + $0xb0] sm:$0xff]
  %v3194 = vld [vmem:[%s5 + $0xb8] sm:$0xff]
  %v3195 = vld [vmem:[%s5 + $0xc0] sm:$0xff]
  %v3196 = vld [vmem:[%s5 + $0xc8] sm:$0xff]
  %v3197 = vld [vmem:[%s5 + $0xd0] sm:$0xff]
  %v3198 = vld [vmem:[%s5 + $0xd8] sm:$0xff]
  %v3199 = vld [vmem:[%s5 + $0xe0] sm:$0xff]
  %v3200 = vld [vmem:[%s5 + $0xe8] sm:$0xff]
  %v3201 = vld [vmem:[%s5 + $0xf0] sm:$0xff]
  %v3202 = vld [vmem:[%s5 + $0xf8] sm:$0xff]
  %v3203 = vld [vmem:[%s5 + $0x100] sm:$0xff]
  %v3204 = vld [vmem:[%s5 + $0x108] sm:$0xff]
  %v3205 = vld [vmem:[%s5 + $0x110] sm:$0xff]
  %v3206 = vld [vmem:[%s5 + $0x118] sm:$0xff]
  %v3207 = vld [vmem:[%s5 + $0x120] sm:$0xff]
  %v3208 = vld [vmem:[%s5 + $0x128] sm:$0xff]
  %v3209 = vld [vmem:[%s5 + $0x130] sm:$0xff]
  %v3210 = vld [vmem:[%s5 + $0x138] sm:$0xff]
  %v3211 = vld [vmem:[%s5 + $0x140] sm:$0xff]
  %v3212 = vld [vmem:[%s5 + $0x148] sm:$0xff]
  %v3213 = vld [vmem:[%s5 + $0x150] sm:$0xff]
  %v3214 = vld [vmem:[%s5 + $0x158] sm:$0xff]
  %v3215 = vld [vmem:[%s5 + $0x160] sm:$0xff]
  %v3216 = vld [vmem:[%s5 + $0x168] sm:$0xff]
  %v3217 = vld [vmem:[%s5 + $0x170] sm:$0xff]
  %v3218 = vld [vmem:[%s5 + $0x178] sm:$0xff]
  %v3219 = vld [vmem:[%s5 + $0x180] sm:$0xff]
  %v3220 = vld [vmem:[%s5 + $0x188] sm:$0xff]
  %v3221 = vld [vmem:[%s5 + $0x190] sm:$0xff]
  %v3222 = vld [vmem:[%s5 + $0x198] sm:$0xff]
  %v3223 = vld [vmem:[%s5 + $0x1a0] sm:$0xff]
  %v3224 = vld [vmem:[%s5 + $0x1a8] sm:$0xff]
  %v3225 = vld [vmem:[%s5 + $0x1b0] sm:$0xff]
  %v3226 = vld [vmem:[%s5 + $0x1b8] sm:$0xff]
  %v3227 = vld [vmem:[%s5 + $0x1c0] sm:$0xff]
  %v3228 = vld [vmem:[%s5 + $0x1c8] sm:$0xff]
  %v3229 = vld [vmem:[%s5 + $0x1d0] sm:$0xff]
  %v3230 = vld [vmem:[%s5 + $0x1d8] sm:$0xff]
  %v3231 = vld [vmem:[%s5 + $0x1e0] sm:$0xff]
  %v3232 = vld [vmem:[%s5 + $0x1e8] sm:$0xff]
  %v3233 = vld [vmem:[%s5 + $0x1f0] sm:$0xff]
  %v3234 = vld [vmem:[%s5 + $0x1f8] sm:$0xff]
  %v3235 = vld [vmem:[%s5 + $0x200] sm:$0xff]
  %v3236 = vld [vmem:[%s5 + $0x208] sm:$0xff]
  %v3237 = vld [vmem:[%s5 + $0x210] sm:$0xff]
  %v3238 = vld [vmem:[%s5 + $0x218] sm:$0xff]
  %v3239 = vld [vmem:[%s5 + $0x220] sm:$0xff]
  %v3240 = vld [vmem:[%s5 + $0x228] sm:$0xff]
  %v3241 = vld [vmem:[%s5 + $0x230] sm:$0xff]
  %v3242 = vld [vmem:[%s5 + $0x238] sm:$0xff]
  %v3243 = vld [vmem:[%s5 + $0x240] sm:$0xff]
  %v3244 = vld [vmem:[%s5 + $0x248] sm:$0xff]
  %v3245 = vld [vmem:[%s5 + $0x250] sm:$0xff]
  %v3246 = vld [vmem:[%s5 + $0x258] sm:$0xff]
  %v3247 = vld [vmem:[%s5 + $0x260] sm:$0xff]
  %v3248 = vld [vmem:[%s5 + $0x268] sm:$0xff]
  %v3249 = vld [vmem:[%s5 + $0x270] sm:$0xff]
  %v3250 = vld [vmem:[%s5 + $0x278] sm:$0xff]
  %v3251 = vld [vmem:[%s5 + $0x280] sm:$0xff]
  %v3252 = vld [vmem:[%s5 + $0x288] sm:$0xff]
  %v3253 = vld [vmem:[%s5 + $0x290] sm:$0xff]
  %v3254 = vld [vmem:[%s5 + $0x298] sm:$0xff]
  %v3255 = vld [vmem:[%s5 + $0x2a0] sm:$0xff]
  %v3256 = vld [vmem:[%s5 + $0x2a8] sm:$0xff]
  %v3257 = vld [vmem:[%s5 + $0x2b0] sm:$0xff]
  %v3258 = vld [vmem:[%s5 + $0x2b8] sm:$0xff]
  %v3259 = vld [vmem:[%s5 + $0x2c0] sm:$0xff]
  %v3260 = vld [vmem:[%s5 + $0x2c8] sm:$0xff]
  %v3261 = vld [vmem:[%s5 + $0x2d0] sm:$0xff]
  %v3262 = vld [vmem:[%s5 + $0x2d8] sm:$0xff]
  %v3263 = vld [vmem:[%s5 + $0x2e0] sm:$0xff]
  %v3264 = vld [vmem:[%s5 + $0x2e8] sm:$0xff]
  %v3265 = vld [vmem:[%s5 + $0x2f0] sm:$0xff]
  %v3266 = vld [vmem:[%s5 + $0x2f8] sm:$0xff]
  %v3267 = vld [vmem:[%s5 + $0x300] sm:$0xff]
  %v3268 = vld [vmem:[%s5 + $0x308] sm:$0xff]
  %v3269 = vld [vmem:[%s5 + $0x310] sm:$0xff]
  %v3270 = vld [vmem:[%s5 + $0x318] sm:$0xff]
  %v3271 = vld [vmem:[%s5 + $0x320] sm:$0xff]
  %v3272 = vld [vmem:[%s5 + $0x328] sm:$0xff]
  %v3273 = vld [vmem:[%s5 + $0x330] sm:$0xff]
  %v3274 = vld [vmem:[%s5 + $0x338] sm:$0xff]
  %v3275 = vld [vmem:[%s5 + $0x340] sm:$0xff]
  %v3276 = vld [vmem:[%s5 + $0x348] sm:$0xff]
  %v3277 = vld [vmem:[%s5 + $0x350] sm:$0xff]
  %v3278 = vld [vmem:[%s5 + $0x358] sm:$0xff]
  %v3279 = vld [vmem:[%s5 + $0x360] sm:$0xff]
  %v3280 = vld [vmem:[%s5 + $0x368] sm:$0xff]
  %v3281 = vld [vmem:[%s5 + $0x370] sm:$0xff]
  %v3282 = vld [vmem:[%s5 + $0x378] sm:$0xff]
  %v3283 = vld [vmem:[%s5 + $0x380] sm:$0xff]
  %v3284 = vld [vmem:[%s5 + $0x388] sm:$0xff]
  %v3285 = vld [vmem:[%s5 + $0x390] sm:$0xff]
  %v3286 = vld [vmem:[%s5 + $0x398] sm:$0xff]
  %v3287 = vld [vmem:[%s5 + $0x3a0] sm:$0xff]
  %v3288 = vld [vmem:[%s5 + $0x3a8] sm:$0xff]
  %v3289 = vld [vmem:[%s5 + $0x3b0] sm:$0xff]
  %v3290 = vld [vmem:[%s5 + $0x3b8] sm:$0xff]
  %v3291 = vld [vmem:[%s5 + $0x3c0] sm:$0xff]
  %v3292 = vld [vmem:[%s5 + $0x3c8] sm:$0xff]
  %v3293 = vld [vmem:[%s5 + $0x3d0] sm:$0xff]
  %v3294 = vld [vmem:[%s5 + $0x3d8] sm:$0xff]
  %v3295 = vld [vmem:[%s5 + $0x3e0] sm:$0xff]
  %v3296 = vld [vmem:[%s5 + $0x3e8] sm:$0xff]
  %v3297 = vld [vmem:[%s5 + $0x3f0] sm:$0xff]
  %v3298 = vld [vmem:[%s5 + $0x3f8] sm:$0xff]
  %v3299 = vld [vmem:[%s5 + $0x400] sm:$0xff]
  %v3300 = vld [vmem:[%s5 + $0x408] sm:$0xff]
  %v3301 = vld [vmem:[%s5 + $0x410] sm:$0xff]
  %v3302 = vld [vmem:[%s5 + $0x418] sm:$0xff]
  %v3303 = vld [vmem:[%s5 + $0x420] sm:$0xff]
  %v3304 = vld [vmem:[%s5 + $0x428] sm:$0xff]
  %v3305 = vld [vmem:[%s5 + $0x430] sm:$0xff]
  %v3306 = vld [vmem:[%s5 + $0x438] sm:$0xff]
  %v3307 = vld [vmem:[%s5 + $0x440] sm:$0xff]
  %v3308 = vld [vmem:[%s5 + $0x448] sm:$0xff]
  %v3309 = vld [vmem:[%s5 + $0x450] sm:$0xff]
  %v3310 = vld [vmem:[%s5 + $0x458] sm:$0xff]
  %v3311 = vld [vmem:[%s5 + $0x460] sm:$0xff]
  %v3312 = vld [vmem:[%s5 + $0x468] sm:$0xff]
  %v3313 = vld [vmem:[%s5 + $0x470] sm:$0xff]
  %v3314 = vld [vmem:[%s5 + $0x478] sm:$0xff]
  %v3315 = vld [vmem:[%s5 + $0x480] sm:$0xff]
  %v3316 = vld [vmem:[%s5 + $0x488] sm:$0xff]
  %v3317 = vld [vmem:[%s5 + $0x490] sm:$0xff]
  %v3318 = vld [vmem:[%s5 + $0x498] sm:$0xff]
  %v3319 = vld [vmem:[%s5 + $0x4a0] sm:$0xff]
  %v3320 = vld [vmem:[%s5 + $0x4a8] sm:$0xff]
  %v3321 = vld [vmem:[%s5 + $0x4b0] sm:$0xff]
  %v3322 = vld [vmem:[%s5 + $0x4b8] sm:$0xff]
  %v3323 = vld [vmem:[%s5 + $0x4c0] sm:$0xff]
  %v3324 = vld [vmem:[%s5 + $0x4c8] sm:$0xff]
  %v3325 = vld [vmem:[%s5 + $0x4d0] sm:$0xff]
  %v3326 = vld [vmem:[%s5 + $0x4d8] sm:$0xff]
  %v3327 = vld [vmem:[%s5 + $0x4e0] sm:$0xff]
  %v3328 = vld [vmem:[%s5 + $0x4e8] sm:$0xff]
  %v3329 = vld [vmem:[%s5 + $0x4f0] sm:$0xff]
  %v3330 = vld [vmem:[%s5 + $0x4f8] sm:$0xff]
  %v3331 = vld [vmem:[%s5 + $0x500] sm:$0xff]
  %v3332 = vld [vmem:[%s5 + $0x508] sm:$0xff]
  %v3333 = vld [vmem:[%s5 + $0x510] sm:$0xff]
  %v3334 = vld [vmem:[%s5 + $0x518] sm:$0xff]
  %v3335 = vld [vmem:[%s5 + $0x520] sm:$0xff]
  %v3336 = vld [vmem:[%s5 + $0x528] sm:$0xff]
  %v3337 = vld [vmem:[%s5 + $0x530] sm:$0xff]
  %v3338 = vld [vmem:[%s5 + $0x538] sm:$0xff]
  %v3339 = vld [vmem:[%s5 + $0x540] sm:$0xff]
  %v3340 = vld [vmem:[%s5 + $0x548] sm:$0xff]
  %v3341 = vld [vmem:[%s5 + $0x550] sm:$0xff]
  %v3342 = vld [vmem:[%s5 + $0x558] sm:$0xff]
  %v3343 = vld [vmem:[%s5 + $0x560] sm:$0xff]
  %v3344 = vld [vmem:[%s5 + $0x568] sm:$0xff]
  %v3345 = vld [vmem:[%s5 + $0x570] sm:$0xff]
  %v3346 = vld [vmem:[%s5 + $0x578] sm:$0xff]
  %v3347 = vld [vmem:[%s5 + $0x580] sm:$0xff]
  %v3348 = vld [vmem:[%s5 + $0x588] sm:$0xff]
  %v3349 = vld [vmem:[%s5 + $0x590] sm:$0xff]
  %v3350 = vld [vmem:[%s5 + $0x598] sm:$0xff]
  %v3351 = vld [vmem:[%s5 + $0x5a0] sm:$0xff]
  %v3352 = vld [vmem:[%s5 + $0x5a8] sm:$0xff]
  %v3353 = vld [vmem:[%s5 + $0x5b0] sm:$0xff]
  %v3354 = vld [vmem:[%s5 + $0x5b8] sm:$0xff]
  %v3355 = vld [vmem:[%s5 + $0x5c0] sm:$0xff]
  %v3356 = vld [vmem:[%s5 + $0x5c8] sm:$0xff]
  %v3357 = vld [vmem:[%s5 + $0x5d0] sm:$0xff]
  %v3358 = vld [vmem:[%s5 + $0x5d8] sm:$0xff]
  %v3359 = vld [vmem:[%s5 + $0x5e0] sm:$0xff]
  %v3360 = vld [vmem:[%s5 + $0x5e8] sm:$0xff]
  %v3361 = vld [vmem:[%s5 + $0x5f0] sm:$0xff]
  %v3362 = vld [vmem:[%s5 + $0x5f8] sm:$0xff]
  %v3363 = vld [vmem:[%s5 + $0x600] sm:$0xff]
  %v3364 = vld [vmem:[%s5 + $0x608] sm:$0xff]
  %v3365 = vld [vmem:[%s5 + $0x610] sm:$0xff]
  %v3366 = vld [vmem:[%s5 + $0x618] sm:$0xff]
  %v3367 = vld [vmem:[%s5 + $0x620] sm:$0xff]
  %v3368 = vld [vmem:[%s5 + $0x628] sm:$0xff]
  %v3369 = vld [vmem:[%s5 + $0x630] sm:$0xff]
  %v3370 = vld [vmem:[%s5 + $0x638] sm:$0xff]
  %v3371 = vld [vmem:[%s5 + $0x640] sm:$0xff]
  %v3372 = vld [vmem:[%s5 + $0x648] sm:$0xff]
  %v3373 = vld [vmem:[%s5 + $0x650] sm:$0xff]
  %v3374 = vld [vmem:[%s5 + $0x658] sm:$0xff]
  %v3375 = vld [vmem:[%s5 + $0x660] sm:$0xff]
  %v3376 = vld [vmem:[%s5 + $0x668] sm:$0xff]
  %v3377 = vld [vmem:[%s5 + $0x670] sm:$0xff]
  %v3378 = vld [vmem:[%s5 + $0x678] sm:$0xff]
  %v3379 = vld [vmem:[%s5 + $0x680] sm:$0xff]
  %v3380 = vld [vmem:[%s5 + $0x688] sm:$0xff]
  %v3381 = vld [vmem:[%s5 + $0x690] sm:$0xff]
  %v3382 = vld [vmem:[%s5 + $0x698] sm:$0xff]
  %v3383 = vld [vmem:[%s5 + $0x6a0] sm:$0xff]
  %v3384 = vld [vmem:[%s5 + $0x6a8] sm:$0xff]
  %v3385 = vld [vmem:[%s5 + $0x6b0] sm:$0xff]
  %v3386 = vld [vmem:[%s5 + $0x6b8] sm:$0xff]
  %v3387 = vld [vmem:[%s5 + $0x6c0] sm:$0xff]
  %v3388 = vld [vmem:[%s5 + $0x6c8] sm:$0xff]
  %v3389 = vld [vmem:[%s5 + $0x6d0] sm:$0xff]
  %v3390 = vld [vmem:[%s5 + $0x6d8] sm:$0xff]
  %v3391 = vld [vmem:[%s5 + $0x6e0] sm:$0xff]
  %v3392 = vld [vmem:[%s5 + $0x6e8] sm:$0xff]
  %v3393 = vld [vmem:[%s5 + $0x6f0] sm:$0xff]
  %v3394 = vld [vmem:[%s5 + $0x6f8] sm:$0xff]
  %v3395 = vld [vmem:[%s5 + $0x700] sm:$0xff]
  %v3396 = vld [vmem:[%s5 + $0x708] sm:$0xff]
  %v3397 = vld [vmem:[%s5 + $0x710] sm:$0xff]
  %v3398 = vld [vmem:[%s5 + $0x718] sm:$0xff]
  %v3399 = vld [vmem:[%s5 + $0x720] sm:$0xff]
  %v3400 = vld [vmem:[%s5 + $0x728] sm:$0xff]
  %v3401 = vld [vmem:[%s5 + $0x730] sm:$0xff]
  %v3402 = vld [vmem:[%s5 + $0x738] sm:$0xff]
  %v3403 = vld [vmem:[%s5 + $0x740] sm:$0xff]
  %v3404 = vld [vmem:[%s5 + $0x748] sm:$0xff]
  %v3405 = vld [vmem:[%s5 + $0x750] sm:$0xff]
  %v3406 = vld [vmem:[%s5 + $0x758] sm:$0xff]
  %v3407 = vld [vmem:[%s5 + $0x760] sm:$0xff]
  %v3408 = vld [vmem:[%s5 + $0x768] sm:$0xff]
  %v3409 = vld [vmem:[%s5 + $0x770] sm:$0xff]
  %v3410 = vld [vmem:[%s5 + $0x778] sm:$0xff]
  %v3411 = vld [vmem:[%s5 + $0x780] sm:$0xff]
  %v3412 = vld [vmem:[%s5 + $0x788] sm:$0xff]
  %v3413 = vld [vmem:[%s5 + $0x790] sm:$0xff]
  %v3414 = vld [vmem:[%s5 + $0x798] sm:$0xff]
  %v3415 = vld [vmem:[%s5 + $0x7a0] sm:$0xff]
  %v3416 = vld [vmem:[%s5 + $0x7a8] sm:$0xff]
  %v3417 = vld [vmem:[%s5 + $0x7b0] sm:$0xff]
  %v3418 = vld [vmem:[%s5 + $0x7b8] sm:$0xff]
  %v3419 = vld [vmem:[%s5 + $0x7c0] sm:$0xff]
  %v3420 = vld [vmem:[%s5 + $0x7c8] sm:$0xff]
  %v3421 = vld [vmem:[%s5 + $0x7d0] sm:$0xff]
  %v3422 = vld [vmem:[%s5 + $0x7d8] sm:$0xff]
  %v3423 = vld [vmem:[%s5 + $0x7e0] sm:$0xff]
  %v3424 = vld [vmem:[%s5 + $0x7e8] sm:$0xff]
  %v3425 = vld [vmem:[%s5 + $0x7f0] sm:$0xff]
  %v3426 = vld [vmem:[%s5 + $0x7f8] sm:$0xff]
  %3427 = vmatprep.subr.mxu0 %v3172
  %3428 = vmatpush1.msra.mxu0 %v3171
  %3429 = vmatprep.subr.mxu0 %v3180
  %3430 = vmatpush1.msra.mxu0 %v3179
  %3431 = vmatprep.subr.mxu0 %v3188
  %3432 = vmatpush1.msra.mxu0 %v3187
  %3433 = vmatprep.subr.mxu0 %v3196
  %3434 = vmatpush1.msra.mxu0 %v3195
  %3435 = vmatprep.subr.mxu0 %v3204
  %3436 = vmatpush1.msra.mxu0 %v3203
  %3437 = vmatprep.subr.mxu0 %v3212
  %3438 = vmatpush1.msra.mxu0 %v3211
  %3439 = vmatprep.subr.mxu0 %v3220
  %3440 = vmatpush1.msra.mxu0 %v3219
  %3441 = vmatprep.subr.mxu0 %v3228
  %3442 = vmatpush1.msra.mxu0 %v3227
  %3443 = vmatprep.subr.mxu0 %v3236
  %3444 = vmatpush1.msra.mxu0 %v3235
  %3445 = vmatprep.subr.mxu0 %v3244
  %3446 = vmatpush1.msra.mxu0 %v3243
  %3447 = vmatprep.subr.mxu0 %v3252
  %3448 = vmatpush1.msra.mxu0 %v3251
  %3449 = vmatprep.subr.mxu0 %v3260
  %3450 = vmatpush1.msra.mxu0 %v3259
  %3451 = vmatprep.subr.mxu0 %v3268
  %3452 = vmatpush1.msra.mxu0 %v3267
  %3453 = vmatprep.subr.mxu0 %v3276
  %3454 = vmatpush1.msra.mxu0 %v3275
  %3455 = vmatprep.subr.mxu0 %v3284
  %3456 = vmatpush1.msra.mxu0 %v3283
  %3457 = vmatprep.subr.mxu0 %v3292
  %3458 = vmatpush1.msra.mxu0 %v3291
  %3459 = vmatprep.subr.mxu0 %v3300
  %3460 = vmatpush1.msra.mxu0 %v3299
  %3461 = vmatprep.subr.mxu0 %v3308
  %3462 = vmatpush1.msra.mxu0 %v3307
  %3463 = vmatprep.subr.mxu0 %v3316
  %3464 = vmatpush1.msra.mxu0 %v3315
  %3465 = vmatprep.subr.mxu0 %v3324
  %3466 = vmatpush1.msra.mxu0 %v3323
  %3467 = vmatprep.subr.mxu0 %v3332
  %3468 = vmatpush1.msra.mxu0 %v3331
  %3469 = vmatprep.subr.mxu0 %v3340
  %3470 = vmatpush1.msra.mxu0 %v3339
  %3471 = vmatprep.subr.mxu0 %v3348
  %3472 = vmatpush1.msra.mxu0 %v3347
  %3473 = vmatprep.subr.mxu0 %v3356
  %3474 = vmatpush1.msra.mxu0 %v3355
  %3475 = vmatprep.subr.mxu0 %v3364
  %3476 = vmatpush1.msra.mxu0 %v3363
  %3477 = vmatprep.subr.mxu0 %v3372
  %3478 = vmatpush1.msra.mxu0 %v3371
  %3479 = vmatprep.subr.mxu0 %v3380
  %3480 = vmatpush1.msra.mxu0 %v3379
  %3481 = vmatprep.subr.mxu0 %v3388
  %3482 = vmatpush1.msra.mxu0 %v3387
  %3483 = vmatprep.subr.mxu0 %v3396
  %3484 = vmatpush1.msra.mxu0 %v3395
  %3485 = vmatprep.subr.mxu0 %v3404
  %3486 = vmatpush1.msra.mxu0 %v3403
  %3487 = vmatprep.subr.mxu0 %v3412
  %3488 = vmatpush1.msra.mxu0 %v3411
  %3489 = vmatprep.subr.mxu0 %v3420
  %3490 = vmatpush1.msra.mxu0 %v3419
  %3491 = vmatprep.mubr.f32.mxu0 %v2914
  %3492 = vmatmul.mubr.f32.gmra.mrb[0].mxu0 %v2913
  %v3493 = vpop.f32.mrb[0].mxu0
  %v3494 = vadd.f32 0.0, %v3493
  %v3495 = vpop.f32.mrb[0].mxu0
  %v3496 = vadd.f32 0.0, %v3495
  %3497 = vdwg.mxu0
  %3498 = vmatprep.subr.mxu0 %v3174
  %3499 = vmatpush1.msra.mxu0 %v3173
  %3500 = vmatprep.subr.mxu0 %v3182
  %3501 = vmatpush1.msra.mxu0 %v3181
  %3502 = vmatprep.subr.mxu0 %v3190
  %3503 = vmatpush1.msra.mxu0 %v3189
  %3504 = vmatprep.subr.mxu0 %v3198
  %3505 = vmatpush1.msra.mxu0 %v3197
  %3506 = vmatprep.subr.mxu0 %v3206
  %3507 = vmatpush1.msra.mxu0 %v3205
  %3508 = vmatprep.subr.mxu0 %v3214
  %3509 = vmatpush1.msra.mxu0 %v3213
  %3510 = vmatprep.subr.mxu0 %v3222
  %3511 = vmatpush1.msra.mxu0 %v3221
  %3512 = vmatprep.subr.mxu0 %v3230
  %3513 = vmatpush1.msra.mxu0 %v3229
  %3514 = vmatprep.subr.mxu0 %v3238
  %3515 = vmatpush1.msra.mxu0 %v3237
  %3516 = vmatprep.subr.mxu0 %v3246
  %3517 = vmatpush1.msra.mxu0 %v3245
  %3518 = vmatprep.subr.mxu0 %v3254
  %3519 = vmatpush1.msra.mxu0 %v3253
  %3520 = vmatprep.subr.mxu0 %v3262
  %3521 = vmatpush1.msra.mxu0 %v3261
  %3522 = vmatprep.subr.mxu0 %v3270
  %3523 = vmatpush1.msra.mxu0 %v3269
  %3524 = vmatprep.subr.mxu0 %v3278
  %3525 = vmatpush1.msra.mxu0 %v3277
  %3526 = vmatprep.subr.mxu0 %v3286
  %3527 = vmatpush1.msra.mxu0 %v3285
  %3528 = vmatprep.subr.mxu0 %v3294
  %3529 = vmatpush1.msra.mxu0 %v3293
  %3530 = vmatprep.subr.mxu0 %v3302
  %3531 = vmatpush1.msra.mxu0 %v3301
  %3532 = vmatprep.subr.mxu0 %v3310
  %3533 = vmatpush1.msra.mxu0 %v3309
  %3534 = vmatprep.subr.mxu0 %v3318
  %3535 = vmatpush1.msra.mxu0 %v3317
  %3536 = vmatprep.subr.mxu0 %v3326
  %3537 = vmatpush1.msra.mxu0 %v3325
  %3538 = vmatprep.subr.mxu0 %v3334
  %3539 = vmatpush1.msra.mxu0 %v3333
  %3540 = vmatprep.subr.mxu0 %v3342
  %3541 = vmatpush1.msra.mxu0 %v3341
  %3542 = vmatprep.subr.mxu0 %v3350
  %3543 = vmatpush1.msra.mxu0 %v3349
  %3544 = vmatprep.subr.mxu0 %v3358
  %3545 = vmatpush1.msra.mxu0 %v3357
  %3546 = vmatprep.subr.mxu0 %v3366
  %3547 = vmatpush1.msra.mxu0 %v3365
  %3548 = vmatprep.subr.mxu0 %v3374
  %3549 = vmatpush1.msra.mxu0 %v3373
  %3550 = vmatprep.subr.mxu0 %v3382
  %3551 = vmatpush1.msra.mxu0 %v3381
  %3552 = vmatprep.subr.mxu0 %v3390
  %3553 = vmatpush1.msra.mxu0 %v3389
  %3554 = vmatprep.subr.mxu0 %v3398
  %3555 = vmatpush1.msra.mxu0 %v3397
  %3556 = vmatprep.subr.mxu0 %v3406
  %3557 = vmatpush1.msra.mxu0 %v3405
  %3558 = vmatprep.subr.mxu0 %v3414
  %3559 = vmatpush1.msra.mxu0 %v3413
  %3560 = vmatprep.subr.mxu0 %v3422
  %3561 = vmatpush1.msra.mxu0 %v3421
  %3562 = vmatprep.mubr.f32.mxu0 %v2914
  %3563 = vmatmul.mubr.f32.gmra.mrb[0].mxu0 %v2913
  %v3564 = vpop.f32.mrb[0].mxu0
  %v3565 = vadd.f32 0.0, %v3564
  %v3566 = vpop.f32.mrb[0].mxu0
  %v3567 = vadd.f32 0.0, %v3566
  %3568 = vdwg.mxu0
  %3569 = vmatprep.subr.mxu0 %v3176
  %3570 = vmatpush1.msra.mxu0 %v3175
  %3571 = vmatprep.subr.mxu0 %v3184
  %3572 = vmatpush1.msra.mxu0 %v3183
  %3573 = vmatprep.subr.mxu0 %v3192
  %3574 = vmatpush1.msra.mxu0 %v3191
  %3575 = vmatprep.subr.mxu0 %v3200
  %3576 = vmatpush1.msra.mxu0 %v3199
  %3577 = vmatprep.subr.mxu0 %v3208
  %3578 = vmatpush1.msra.mxu0 %v3207
  %3579 = vmatprep.subr.mxu0 %v3216
  %3580 = vmatpush1.msra.mxu0 %v3215
  %3581 = vmatprep.subr.mxu0 %v3224
  %3582 = vmatpush1.msra.mxu0 %v3223
  %3583 = vmatprep.subr.mxu0 %v3232
  %3584 = vmatpush1.msra.mxu0 %v3231
  %3585 = vmatprep.subr.mxu0 %v3240
  %3586 = vmatpush1.msra.mxu0 %v3239
  %3587 = vmatprep.subr.mxu0 %v3248
  %3588 = vmatpush1.msra.mxu0 %v3247
  %3589 = vmatprep.subr.mxu0 %v3256
  %3590 = vmatpush1.msra.mxu0 %v3255
  %3591 = vmatprep.subr.mxu0 %v3264
  %3592 = vmatpush1.msra.mxu0 %v3263
  %3593 = vmatprep.subr.mxu0 %v3272
  %3594 = vmatpush1.msra.mxu0 %v3271
  %3595 = vmatprep.subr.mxu0 %v3280
  %3596 = vmatpush1.msra.mxu0 %v3279
  %3597 = vmatprep.subr.mxu0 %v3288
  %3598 = vmatpush1.msra.mxu0 %v3287
  %3599 = vmatprep.subr.mxu0 %v3296
  %3600 = vmatpush1.msra.mxu0 %v3295
  %3601 = vmatprep.subr.mxu0 %v3304
  %3602 = vmatpush1.msra.mxu0 %v3303
  %3603 = vmatprep.subr.mxu0 %v3312
  %3604 = vmatpush1.msra.mxu0 %v3311
  %3605 = vmatprep.subr.mxu0 %v3320
  %3606 = vmatpush1.msra.mxu0 %v3319
  %3607 = vmatprep.subr.mxu0 %v3328
  %3608 = vmatpush1.msra.mxu0 %v3327
  %3609 = vmatprep.subr.mxu0 %v3336
  %3610 = vmatpush1.msra.mxu0 %v3335
  %3611 = vmatprep.subr.mxu0 %v3344
  %3612 = vmatpush1.msra.mxu0 %v3343
  %3613 = vmatprep.subr.mxu0 %v3352
  %3614 = vmatpush1.msra.mxu0 %v3351
  %3615 = vmatprep.subr.mxu0 %v3360
  %3616 = vmatpush1.msra.mxu0 %v3359
  %3617 = vmatprep.subr.mxu0 %v3368
  %3618 = vmatpush1.msra.mxu0 %v3367
  %3619 = vmatprep.subr.mxu0 %v3376
  %3620 = vmatpush1.msra.mxu0 %v3375
  %3621 = vmatprep.subr.mxu0 %v3384
  %3622 = vmatpush1.msra.mxu0 %v3383
  %3623 = vmatprep.subr.mxu0 %v3392
  %3624 = vmatpush1.msra.mxu0 %v3391
  %3625 = vmatprep.subr.mxu0 %v3400
  %3626 = vmatpush1.msra.mxu0 %v3399
  %3627 = vmatprep.subr.mxu0 %v3408
  %3628 = vmatpush1.msra.mxu0 %v3407
  %3629 = vmatprep.subr.mxu0 %v3416
  %3630 = vmatpush1.msra.mxu0 %v3415
  %3631 = vmatprep.subr.mxu0 %v3424
  %3632 = vmatpush1.msra.mxu0 %v3423
  %3633 = vmatprep.mubr.f32.mxu0 %v2914
  %3634 = vmatmul.mubr.f32.gmra.mrb[0].mxu0 %v2913
  %v3635 = vpop.f32.mrb[0].mxu0
  %v3636 = vadd.f32 0.0, %v3635
  %v3637 = vpop.f32.mrb[0].mxu0
  %v3638 = vadd.f32 0.0, %v3637
  %3639 = vdwg.mxu0
  %3640 = vmatprep.subr.mxu0 %v3178
  %3641 = vmatpush1.msra.mxu0 %v3177
  %3642 = vmatprep.subr.mxu0 %v3186
  %3643 = vmatpush1.msra.mxu0 %v3185
  %3644 = vmatprep.subr.mxu0 %v3194
  %3645 = vmatpush1.msra.mxu0 %v3193
  %3646 = vmatprep.subr.mxu0 %v3202
  %3647 = vmatpush1.msra.mxu0 %v3201
  %3648 = vmatprep.subr.mxu0 %v3210
  %3649 = vmatpush1.msra.mxu0 %v3209
  %3650 = vmatprep.subr.mxu0 %v3218
  %3651 = vmatpush1.msra.mxu0 %v3217
  %3652 = vmatprep.subr.mxu0 %v3226
  %3653 = vmatpush1.msra.mxu0 %v3225
  %3654 = vmatprep.subr.mxu0 %v3234
  %3655 = vmatpush1.msra.mxu0 %v3233
  %3656 = vmatprep.subr.mxu0 %v3242
  %3657 = vmatpush1.msra.mxu0 %v3241
  %3658 = vmatprep.subr.mxu0 %v3250
  %3659 = vmatpush1.msra.mxu0 %v3249
  %3660 = vmatprep.subr.mxu0 %v3258
  %3661 = vmatpush1.msra.mxu0 %v3257
  %3662 = vmatprep.subr.mxu0 %v3266
  %3663 = vmatpush1.msra.mxu0 %v3265
  %3664 = vmatprep.subr.mxu0 %v3274
  %3665 = vmatpush1.msra.mxu0 %v3273
  %3666 = vmatprep.subr.mxu0 %v3282
  %3667 = vmatpush1.msra.mxu0 %v3281
  %3668 = vmatprep.subr.mxu0 %v3290
  %3669 = vmatpush1.msra.mxu0 %v3289
  %3670 = vmatprep.subr.mxu0 %v3298
  %3671 = vmatpush1.msra.mxu0 %v3297
  %3672 = vmatprep.subr.mxu0 %v3306
  %3673 = vmatpush1.msra.mxu0 %v3305
  %3674 = vmatprep.subr.mxu0 %v3314
  %3675 = vmatpush1.msra.mxu0 %v3313
  %3676 = vmatprep.subr.mxu0 %v3322
  %3677 = vmatpush1.msra.mxu0 %v3321
  %3678 = vmatprep.subr.mxu0 %v3330
  %3679 = vmatpush1.msra.mxu0 %v3329
  %3680 = vmatprep.subr.mxu0 %v3338
  %3681 = vmatpush1.msra.mxu0 %v3337
  %3682 = vmatprep.subr.mxu0 %v3346
  %3683 = vmatpush1.msra.mxu0 %v3345
  %3684 = vmatprep.subr.mxu0 %v3354
  %3685 = vmatpush1.msra.mxu0 %v3353
  %3686 = vmatprep.subr.mxu0 %v3362
  %3687 = vmatpush1.msra.mxu0 %v3361
  %3688 = vmatprep.subr.mxu0 %v3370
  %3689 = vmatpush1.msra.mxu0 %v3369
  %3690 = vmatprep.subr.mxu0 %v3378
  %3691 = vmatpush1.msra.mxu0 %v3377
  %3692 = vmatprep.subr.mxu0 %v3386
  %3693 = vmatpush1.msra.mxu0 %v3385
  %3694 = vmatprep.subr.mxu0 %v3394
  %3695 = vmatpush1.msra.mxu0 %v3393
  %3696 = vmatprep.subr.mxu0 %v3402
  %3697 = vmatpush1.msra.mxu0 %v3401
  %3698 = vmatprep.subr.mxu0 %v3410
  %3699 = vmatpush1.msra.mxu0 %v3409
  %3700 = vmatprep.subr.mxu0 %v3418
  %3701 = vmatpush1.msra.mxu0 %v3417
  %3702 = vmatprep.subr.mxu0 %v3426
  %3703 = vmatpush1.msra.mxu0 %v3425
  %3704 = vmatprep.mubr.f32.mxu0 %v2914
  %3705 = vmatmul.mubr.f32.gmra.mrb[0].mxu0 %v2913
  %v3706 = vpop.f32.mrb[0].mxu0
  %v3707 = vadd.f32 0.0, %v3706
  %v3708 = vpop.f32.mrb[0].mxu0
  %v3709 = vadd.f32 0.0, %v3708
  %3710 = vdwg.mxu0
  %3711 = vmatprep.subr.mxu0 %v2916
  %3712 = vmatpush1.msra.mxu0 %v2915
  %3713 = vmatprep.subr.mxu0 %v2924
  %3714 = vmatpush1.msra.mxu0 %v2923
  %3715 = vmatprep.subr.mxu0 %v2932
  %3716 = vmatpush1.msra.mxu0 %v2931
  %3717 = vmatprep.subr.mxu0 %v2940
  %3718 = vmatpush1.msra.mxu0 %v2939
  %3719 = vmatprep.subr.mxu0 %v2948
  %3720 = vmatpush1.msra.mxu0 %v2947
  %3721 = vmatprep.subr.mxu0 %v2956
  %3722 = vmatpush1.msra.mxu0 %v2955
  %3723 = vmatprep.subr.mxu0 %v2964
  %3724 = vmatpush1.msra.mxu0 %v2963
  %3725 = vmatprep.subr.mxu0 %v2972
  %3726 = vmatpush1.msra.mxu0 %v2971
  %3727 = vmatprep.subr.mxu0 %v2980
  %3728 = vmatpush1.msra.mxu0 %v2979
  %3729 = vmatprep.subr.mxu0 %v2988
  %3730 = vmatpush1.msra.mxu0 %v2987
  %3731 = vmatprep.subr.mxu0 %v2996
  %3732 = vmatpush1.msra.mxu0 %v2995
  %3733 = vmatprep.subr.mxu0 %v3004
  %3734 = vmatpush1.msra.mxu0 %v3003
  %3735 = vmatprep.subr.mxu0 %v3012
  %3736 = vmatpush1.msra.mxu0 %v3011
  %3737 = vmatprep.subr.mxu0 %v3020
  %3738 = vmatpush1.msra.mxu0 %v3019
  %3739 = vmatprep.subr.mxu0 %v3028
  %3740 = vmatpush1.msra.mxu0 %v3027
  %3741 = vmatprep.subr.mxu0 %v3036
  %3742 = vmatpush1.msra.mxu0 %v3035
  %3743 = vmatprep.subr.mxu0 %v3044
  %3744 = vmatpush1.msra.mxu0 %v3043
  %3745 = vmatprep.subr.mxu0 %v3052
  %3746 = vmatpush1.msra.mxu0 %v3051
  %3747 = vmatprep.subr.mxu0 %v3060
  %3748 = vmatpush1.msra.mxu0 %v3059
  %3749 = vmatprep.subr.mxu0 %v3068
  %3750 = vmatpush1.msra.mxu0 %v3067
  %3751 = vmatprep.subr.mxu0 %v3076
  %3752 = vmatpush1.msra.mxu0 %v3075
  %3753 = vmatprep.subr.mxu0 %v3084
  %3754 = vmatpush1.msra.mxu0 %v3083
  %3755 = vmatprep.subr.mxu0 %v3092
  %3756 = vmatpush1.msra.mxu0 %v3091
  %3757 = vmatprep.subr.mxu0 %v3100
  %3758 = vmatpush1.msra.mxu0 %v3099
  %3759 = vmatprep.subr.mxu0 %v3108
  %3760 = vmatpush1.msra.mxu0 %v3107
  %3761 = vmatprep.subr.mxu0 %v3116
  %3762 = vmatpush1.msra.mxu0 %v3115
  %3763 = vmatprep.subr.mxu0 %v3124
  %3764 = vmatpush1.msra.mxu0 %v3123
  %3765 = vmatprep.subr.mxu0 %v3132
  %3766 = vmatpush1.msra.mxu0 %v3131
  %3767 = vmatprep.subr.mxu0 %v3140
  %3768 = vmatpush1.msra.mxu0 %v3139
  %3769 = vmatprep.subr.mxu0 %v3148
  %3770 = vmatpush1.msra.mxu0 %v3147
  %3771 = vmatprep.subr.mxu0 %v3156
  %3772 = vmatpush1.msra.mxu0 %v3155
  %3773 = vmatprep.subr.mxu0 %v3164
  %3774 = vmatpush1.msra.mxu0 %v3163
  %3775 = vmatprep.mubr.f32.mxu0 %v2912
  %3776 = vmatmul.mubr.f32.gmra.mrb[0].mxu0 %v2911
  %v3777 = vpop.f32.mrb[0].mxu0
  %v3778 = vadd.f32 %v3494, %v3777
  %v3779 = vpop.f32.mrb[0].mxu0
  %v3780 = vadd.f32 %v3496, %v3779
  %3781 = vdwg.mxu0
  %3782 = vmatprep.subr.mxu0 %v2918
  %3783 = vmatpush1.msra.mxu0 %v2917
  %3784 = vmatprep.subr.mxu0 %v2926
  %3785 = vmatpush1.msra.mxu0 %v2925
  %3786 = vmatprep.subr.mxu0 %v2934
  %3787 = vmatpush1.msra.mxu0 %v2933
  %3788 = vmatprep.subr.mxu0 %v2942
  %3789 = vmatpush1.msra.mxu0 %v2941
  %3790 = vmatprep.subr.mxu0 %v2950
  %3791 = vmatpush1.msra.mxu0 %v2949
  %3792 = vmatprep.subr.mxu0 %v2958
  %3793 = vmatpush1.msra.mxu0 %v2957
  %3794 = vmatprep.subr.mxu0 %v2966
  %3795 = vmatpush1.msra.mxu0 %v2965
  %3796 = vmatprep.subr.mxu0 %v2974
  %3797 = vmatpush1.msra.mxu0 %v2973
  %3798 = vmatprep.subr.mxu0 %v2982
  %3799 = vmatpush1.msra.mxu0 %v2981
  %3800 = vmatprep.subr.mxu0 %v2990
  %3801 = vmatpush1.msra.mxu0 %v2989
  %3802 = vmatprep.subr.mxu0 %v2998
  %3803 = vmatpush1.msra.mxu0 %v2997
  %3804 = vmatprep.subr.mxu0 %v3006
  %3805 = vmatpush1.msra.mxu0 %v3005
  %3806 = vmatprep.subr.mxu0 %v3014
  %3807 = vmatpush1.msra.mxu0 %v3013
  %3808 = vmatprep.subr.mxu0 %v3022
  %3809 = vmatpush1.msra.mxu0 %v3021
  %3810 = vmatprep.subr.mxu0 %v3030
  %3811 = vmatpush1.msra.mxu0 %v3029
  %3812 = vmatprep.subr.mxu0 %v3038
  %3813 = vmatpush1.msra.mxu0 %v3037
  %3814 = vmatprep.subr.mxu0 %v3046
  %3815 = vmatpush1.msra.mxu0 %v3045
  %3816 = vmatprep.subr.mxu0 %v3054
  %3817 = vmatpush1.msra.mxu0 %v3053
  %3818 = vmatprep.subr.mxu0 %v3062
  %3819 = vmatpush1.msra.mxu0 %v3061
  %3820 = vmatprep.subr.mxu0 %v3070
  %3821 = vmatpush1.msra.mxu0 %v3069
  %3822 = vmatprep.subr.mxu0 %v3078
  %3823 = vmatpush1.msra.mxu0 %v3077
  %3824 = vmatprep.subr.mxu0 %v3086
  %3825 = vmatpush1.msra.mxu0 %v3085
  %3826 = vmatprep.subr.mxu0 %v3094
  %3827 = vmatpush1.msra.mxu0 %v3093
  %3828 = vmatprep.subr.mxu0 %v3102
  %3829 = vmatpush1.msra.mxu0 %v3101
  %3830 = vmatprep.subr.mxu0 %v3110
  %3831 = vmatpush1.msra.mxu0 %v3109
  %3832 = vmatprep.subr.mxu0 %v3118
  %3833 = vmatpush1.msra.mxu0 %v3117
  %3834 = vmatprep.subr.mxu0 %v3126
  %3835 = vmatpush1.msra.mxu0 %v3125
  %3836 = vmatprep.subr.mxu0 %v3134
  %3837 = vmatpush1.msra.mxu0 %v3133
  %3838 = vmatprep.subr.mxu0 %v3142
  %3839 = vmatpush1.msra.mxu0 %v3141
  %3840 = vmatprep.subr.mxu0 %v3150
  %3841 = vmatpush1.msra.mxu0 %v3149
  %3842 = vmatprep.subr.mxu0 %v3158
  %3843 = vmatpush1.msra.mxu0 %v3157
  %3844 = vmatprep.subr.mxu0 %v3166
  %3845 = vmatpush1.msra.mxu0 %v3165
  %3846 = vmatprep.mubr.f32.mxu0 %v2912
  %3847 = vmatmul.mubr.f32.gmra.mrb[0].mxu0 %v2911
  %v3848 = vpop.f32.mrb[0].mxu0
  %v3849 = vadd.f32 %v3565, %v3848
  %v3850 = vpop.f32.mrb[0].mxu0
  %v3851 = vadd.f32 %v3567, %v3850
  %3852 = vdwg.mxu0
  %3853 = vmatprep.subr.mxu0 %v2920
  %3854 = vmatpush1.msra.mxu0 %v2919
  %3855 = vmatprep.subr.mxu0 %v2928
  %3856 = vmatpush1.msra.mxu0 %v2927
  %3857 = vmatprep.subr.mxu0 %v2936
  %3858 = vmatpush1.msra.mxu0 %v2935
  %3859 = vmatprep.subr.mxu0 %v2944
  %3860 = vmatpush1.msra.mxu0 %v2943
  %3861 = vmatprep.subr.mxu0 %v2952
  %3862 = vmatpush1.msra.mxu0 %v2951
  %3863 = vmatprep.subr.mxu0 %v2960
  %3864 = vmatpush1.msra.mxu0 %v2959
  %3865 = vmatprep.subr.mxu0 %v2968
  %3866 = vmatpush1.msra.mxu0 %v2967
  %3867 = vmatprep.subr.mxu0 %v2976
  %3868 = vmatpush1.msra.mxu0 %v2975
  %3869 = vmatprep.subr.mxu0 %v2984
  %3870 = vmatpush1.msra.mxu0 %v2983
  %3871 = vmatprep.subr.mxu0 %v2992
  %3872 = vmatpush1.msra.mxu0 %v2991
  %3873 = vmatprep.subr.mxu0 %v3000
  %3874 = vmatpush1.msra.mxu0 %v2999
  %3875 = vmatprep.subr.mxu0 %v3008
  %3876 = vmatpush1.msra.mxu0 %v3007
  %3877 = vmatprep.subr.mxu0 %v3016
  %3878 = vmatpush1.msra.mxu0 %v3015
  %3879 = vmatprep.subr.mxu0 %v3024
  %3880 = vmatpush1.msra.mxu0 %v3023
  %3881 = vmatprep.subr.mxu0 %v3032
  %3882 = vmatpush1.msra.mxu0 %v3031
  %3883 = vmatprep.subr.mxu0 %v3040
  %3884 = vmatpush1.msra.mxu0 %v3039
  %3885 = vmatprep.subr.mxu0 %v3048
  %3886 = vmatpush1.msra.mxu0 %v3047
  %3887 = vmatprep.subr.mxu0 %v3056
  %3888 = vmatpush1.msra.mxu0 %v3055
  %3889 = vmatprep.subr.mxu0 %v3064
  %3890 = vmatpush1.msra.mxu0 %v3063
  %3891 = vmatprep.subr.mxu0 %v3072
  %3892 = vmatpush1.msra.mxu0 %v3071
  %3893 = vmatprep.subr.mxu0 %v3080
  %3894 = vmatpush1.msra.mxu0 %v3079
  %3895 = vmatprep.subr.mxu0 %v3088
  %3896 = vmatpush1.msra.mxu0 %v3087
  %3897 = vmatprep.subr.mxu0 %v3096
  %3898 = vmatpush1.msra.mxu0 %v3095
  %3899 = vmatprep.subr.mxu0 %v3104
  %3900 = vmatpush1.msra.mxu0 %v3103
  %3901 = vmatprep.subr.mxu0 %v3112
  %3902 = vmatpush1.msra.mxu0 %v3111
  %3903 = vmatprep.subr.mxu0 %v3120
  %3904 = vmatpush1.msra.mxu0 %v3119
  %3905 = vmatprep.subr.mxu0 %v3128
  %3906 = vmatpush1.msra.mxu0 %v3127
  %3907 = vmatprep.subr.mxu0 %v3136
  %3908 = vmatpush1.msra.mxu0 %v3135
  %3909 = vmatprep.subr.mxu0 %v3144
  %3910 = vmatpush1.msra.mxu0 %v3143
  %3911 = vmatprep.subr.mxu0 %v3152
  %3912 = vmatpush1.msra.mxu0 %v3151
  %3913 = vmatprep.subr.mxu0 %v3160
  %3914 = vmatpush1.msra.mxu0 %v3159
  %3915 = vmatprep.subr.mxu0 %v3168
  %3916 = vmatpush1.msra.mxu0 %v3167
  %3917 = vmatprep.mubr.f32.mxu0 %v2912
  %3918 = vmatmul.mubr.f32.gmra.mrb[0].mxu0 %v2911
  %v3919 = vpop.f32.mrb[0].mxu0
  %v3920 = vadd.f32 %v3636, %v3919
  %v3921 = vpop.f32.mrb[0].mxu0
  %v3922 = vadd.f32 %v3638, %v3921
  %3923 = vdwg.mxu0
  %3924 = vmatprep.subr.mxu0 %v2922
  %3925 = vmatpush1.msra.mxu0 %v2921
  %3926 = vmatprep.subr.mxu0 %v2930
  %3927 = vmatpush1.msra.mxu0 %v2929
  %3928 = vmatprep.subr.mxu0 %v2938
  %3929 = vmatpush1.msra.mxu0 %v2937
  %3930 = vmatprep.subr.mxu0 %v2946
  %3931 = vmatpush1.msra.mxu0 %v2945
  %3932 = vmatprep.subr.mxu0 %v2954
  %3933 = vmatpush1.msra.mxu0 %v2953
  %3934 = vmatprep.subr.mxu0 %v2962
  %3935 = vmatpush1.msra.mxu0 %v2961
  %3936 = vmatprep.subr.mxu0 %v2970
  %3937 = vmatpush1.msra.mxu0 %v2969
  %3938 = vmatprep.subr.mxu0 %v2978
  %3939 = vmatpush1.msra.mxu0 %v2977
  %3940 = vmatprep.subr.mxu0 %v2986
  %3941 = vmatpush1.msra.mxu0 %v2985
  %3942 = vmatprep.subr.mxu0 %v2994
  %3943 = vmatpush1.msra.mxu0 %v2993
  %3944 = vmatprep.subr.mxu0 %v3002
  %3945 = vmatpush1.msra.mxu0 %v3001
  %3946 = vmatprep.subr.mxu0 %v3010
  %3947 = vmatpush1.msra.mxu0 %v3009
  %3948 = vmatprep.subr.mxu0 %v3018
  %3949 = vmatpush1.msra.mxu0 %v3017
  %3950 = vmatprep.subr.mxu0 %v3026
  %3951 = vmatpush1.msra.mxu0 %v3025
  %3952 = vmatprep.subr.mxu0 %v3034
  %3953 = vmatpush1.msra.mxu0 %v3033
  %3954 = vmatprep.subr.mxu0 %v3042
  %3955 = vmatpush1.msra.mxu0 %v3041
  %3956 = vmatprep.subr.mxu0 %v3050
  %3957 = vmatpush1.msra.mxu0 %v3049
  %3958 = vmatprep.subr.mxu0 %v3058
  %3959 = vmatpush1.msra.mxu0 %v3057
  %3960 = vmatprep.subr.mxu0 %v3066
  %3961 = vmatpush1.msra.mxu0 %v3065
  %3962 = vmatprep.subr.mxu0 %v3074
  %3963 = vmatpush1.msra.mxu0 %v3073
  %3964 = vmatprep.subr.mxu0 %v3082
  %3965 = vmatpush1.msra.mxu0 %v3081
  %3966 = vmatprep.subr.mxu0 %v3090
  %3967 = vmatpush1.msra.mxu0 %v3089
  %3968 = vmatprep.subr.mxu0 %v3098
  %3969 = vmatpush1.msra.mxu0 %v3097
  %3970 = vmatprep.subr.mxu0 %v3106
  %3971 = vmatpush1.msra.mxu0 %v3105
  %3972 = vmatprep.subr.mxu0 %v3114
  %3973 = vmatpush1.msra.mxu0 %v3113
  %3974 = vmatprep.subr.mxu0 %v3122
  %3975 = vmatpush1.msra.mxu0 %v3121
  %3976 = vmatprep.subr.mxu0 %v3130
  %3977 = vmatpush1.msra.mxu0 %v3129
  %3978 = vmatprep.subr.mxu0 %v3138
  %3979 = vmatpush1.msra.mxu0 %v3137
  %3980 = vmatprep.subr.mxu0 %v3146
  %3981 = vmatpush1.msra.mxu0 %v3145
  %3982 = vmatprep.subr.mxu0 %v3154
  %3983 = vmatpush1.msra.mxu0 %v3153
  %3984 = vmatprep.subr.mxu0 %v3162
  %3985 = vmatpush1.msra.mxu0 %v3161
  %3986 = vmatprep.subr.mxu0 %v3170
  %3987 = vmatpush1.msra.mxu0 %v3169
  %3988 = vmatprep.mubr.f32.mxu0 %v2912
  %3989 = vmatmul.mubr.f32.gmra.mrb[0].mxu0 %v2911
  %v3990 = vpop.f32.mrb[0].mxu0
  %v3991 = vadd.f32 %v3707, %v3990
  %v3992 = vpop.f32.mrb[0].mxu0
  %v3993 = vadd.f32 %v3709, %v3992
  %3994 = vdwg.mxu0
  %v3995 = vld [vmem:[%s6] sm:$0xff]
  %v3997 = vlaneseq
  %v3998 = vshrl.u32 %v3997, 7
  %v3999 = vsub.s32 0, %v3998
  %v4000 = vrot.slane %v3995, %v3999
  %v4001 = vlaneseq
  %v4002 = vshrl.u32 %v4001, 7
  %v4003 = vsub.s32 1, %v4002
  %v4004 = vrot.slane %v3995, %v4003
  %v4005 = vlaneseq
  %v4006 = vshrl.u32 %v4005, 7
  %v4007 = vsub.s32 2, %v4006
  %v4008 = vrot.slane %v3995, %v4007
  %v4009 = vlaneseq
  %v4010 = vshrl.u32 %v4009, 7
  %v4011 = vsub.s32 3, %v4010
  %v4012 = vrot.slane %v3995, %v4011
  %v4013 = vlaneseq
  %v4014 = vshrl.u32 %v4013, 7
  %v4015 = vsub.s32 4, %v4014
  %v4016 = vrot.slane %v3995, %v4015
  %v4017 = vlaneseq
  %v4018 = vshrl.u32 %v4017, 7
  %v4019 = vsub.s32 5, %v4018
  %v4020 = vrot.slane %v3995, %v4019
  %v4021 = vlaneseq
  %v4022 = vshrl.u32 %v4021, 7
  %v4023 = vsub.s32 6, %v4022
  %v4024 = vrot.slane %v3995, %v4023
  %v4025 = vlaneseq
  %v4026 = vshrl.u32 %v4025, 7
  %v4027 = vsub.s32 7, %v4026
  %v4028 = vrot.slane %v3995, %v4027
  %v4037 = vadd.f32 %v3778, %v4000
  %v4038 = vadd.f32 %v3780, %v4004
  %v4039 = vadd.f32 %v3849, %v4008
  %v4040 = vadd.f32 %v3851, %v4012
  %v4041 = vadd.f32 %v3920, %v4016
  %v4042 = vadd.f32 %v3922, %v4020
  %v4043 = vadd.f32 %v3991, %v4024
  %v4044 = vadd.f32 %v3993, %v4028
  %v4045 = vmax.f32 %v4037, 0.0
  %v4046 = vmax.f32 %v4038, 0.0
  %v4047 = vmax.f32 %v4039, 0.0
  %v4048 = vmax.f32 %v4040, 0.0
  %v4049 = vmax.f32 %v4041, 0.0
  %v4050 = vmax.f32 %v4042, 0.0
  %v4051 = vmax.f32 %v4043, 0.0
  %v4052 = vmax.f32 %v4044, 0.0
  %v4053 = vld [vmem:[%s7] sm:$0xff]
  %v4054 = vld [vmem:[%s7 + $0x8] sm:$0xff]
  %v4055 = vld [vmem:[%s7 + $0x10] sm:$0xff]
  %v4056 = vld [vmem:[%s7 + $0x18] sm:$0xff]
  %v4057 = vld [vmem:[%s7 + $0x20] sm:$0xff]
  %v4058 = vld [vmem:[%s7 + $0x28] sm:$0xff]
  %v4059 = vld [vmem:[%s7 + $0x30] sm:$0xff]
  %v4060 = vld [vmem:[%s7 + $0x38] sm:$0xff]
  %v4061 = vld [vmem:[%s7 + $0x40] sm:$0xff]
  %v4062 = vld [vmem:[%s7 + $0x48] sm:$0xff]
  %v4063 = vld [vmem:[%s7 + $0x50] sm:$0xff]
  %v4064 = vld [vmem:[%s7 + $0x58] sm:$0xff]
  %v4065 = vld [vmem:[%s7 + $0x60] sm:$0xff]
  %v4066 = vld [vmem:[%s7 + $0x68] sm:$0xff]
  %v4067 = vld [vmem:[%s7 + $0x70] sm:$0xff]
  %v4068 = vld [vmem:[%s7 + $0x78] sm:$0xff]
  %v4069 = vld [vmem:[%s7 + $0x80] sm:$0xff]
  %v4070 = vld [vmem:[%s7 + $0x88] sm:$0xff]
  %v4071 = vld [vmem:[%s7 + $0x90] sm:$0xff]
  %v4072 = vld [vmem:[%s7 + $0x98] sm:$0xff]
  %v4073 = vld [vmem:[%s7 + $0xa0] sm:$0xff]
  %v4074 = vld [vmem:[%s7 + $0xa8] sm:$0xff]
  %v4075 = vld [vmem:[%s7 + $0xb0] sm:$0xff]
  %v4076 = vld [vmem:[%s7 + $0xb8] sm:$0xff]
  %v4077 = vld [vmem:[%s7 + $0xc0] sm:$0xff]
  %v4078 = vld [vmem:[%s7 + $0xc8] sm:$0xff]
  %v4079 = vld [vmem:[%s7 + $0xd0] sm:$0xff]
  %v4080 = vld [vmem:[%s7 + $0xd8] sm:$0xff]
  %v4081 = vld [vmem:[%s7 + $0xe0] sm:$0xff]
  %v4082 = vld [vmem:[%s7 + $0xe8] sm:$0xff]
  %v4083 = vld [vmem:[%s7 + $0xf0] sm:$0xff]
  %v4084 = vld [vmem:[%s7 + $0xf8] sm:$0xff]
  %v4085 = vld [vmem:[%s7 + $0x100] sm:$0xff]
  %v4086 = vld [vmem:[%s7 + $0x108] sm:$0xff]
  %v4087 = vld [vmem:[%s7 + $0x110] sm:$0xff]
  %v4088 = vld [vmem:[%s7 + $0x118] sm:$0xff]
  %v4089 = vld [vmem:[%s7 + $0x120] sm:$0xff]
  %v4090 = vld [vmem:[%s7 + $0x128] sm:$0xff]
  %v4091 = vld [vmem:[%s7 + $0x130] sm:$0xff]
  %v4092 = vld [vmem:[%s7 + $0x138] sm:$0xff]
  %v4093 = vld [vmem:[%s7 + $0x140] sm:$0xff]
  %v4094 = vld [vmem:[%s7 + $0x148] sm:$0xff]
  %v4095 = vld [vmem:[%s7 + $0x150] sm:$0xff]
  %v4096 = vld [vmem:[%s7 + $0x158] sm:$0xff]
  %v4097 = vld [vmem:[%s7 + $0x160] sm:$0xff]
  %v4098 = vld [vmem:[%s7 + $0x168] sm:$0xff]
  %v4099 = vld [vmem:[%s7 + $0x170] sm:$0xff]
  %v4100 = vld [vmem:[%s7 + $0x178] sm:$0xff]
  %v4101 = vld [vmem:[%s7 + $0x180] sm:$0xff]
  %v4102 = vld [vmem:[%s7 + $0x188] sm:$0xff]
  %v4103 = vld [vmem:[%s7 + $0x190] sm:$0xff]
  %v4104 = vld [vmem:[%s7 + $0x198] sm:$0xff]
  %v4105 = vld [vmem:[%s7 + $0x1a0] sm:$0xff]
  %v4106 = vld [vmem:[%s7 + $0x1a8] sm:$0xff]
  %v4107 = vld [vmem:[%s7 + $0x1b0] sm:$0xff]
  %v4108 = vld [vmem:[%s7 + $0x1b8] sm:$0xff]
  %v4109 = vld [vmem:[%s7 + $0x1c0] sm:$0xff]
  %v4110 = vld [vmem:[%s7 + $0x1c8] sm:$0xff]
  %v4111 = vld [vmem:[%s7 + $0x1d0] sm:$0xff]
  %v4112 = vld [vmem:[%s7 + $0x1d8] sm:$0xff]
  %v4113 = vld [vmem:[%s7 + $0x1e0] sm:$0xff]
  %v4114 = vld [vmem:[%s7 + $0x1e8] sm:$0xff]
  %v4115 = vld [vmem:[%s7 + $0x1f0] sm:$0xff]
  %v4116 = vld [vmem:[%s7 + $0x1f8] sm:$0xff]
  %v4117 = vld [vmem:[%s7 + $0x200] sm:$0xff]
  %v4118 = vld [vmem:[%s7 + $0x208] sm:$0xff]
  %v4119 = vld [vmem:[%s7 + $0x210] sm:$0xff]
  %v4120 = vld [vmem:[%s7 + $0x218] sm:$0xff]
  %v4121 = vld [vmem:[%s7 + $0x220] sm:$0xff]
  %v4122 = vld [vmem:[%s7 + $0x228] sm:$0xff]
  %v4123 = vld [vmem:[%s7 + $0x230] sm:$0xff]
  %v4124 = vld [vmem:[%s7 + $0x238] sm:$0xff]
  %v4125 = vld [vmem:[%s7 + $0x240] sm:$0xff]
  %v4126 = vld [vmem:[%s7 + $0x248] sm:$0xff]
  %v4127 = vld [vmem:[%s7 + $0x250] sm:$0xff]
  %v4128 = vld [vmem:[%s7 + $0x258] sm:$0xff]
  %v4129 = vld [vmem:[%s7 + $0x260] sm:$0xff]
  %v4130 = vld [vmem:[%s7 + $0x268] sm:$0xff]
  %v4131 = vld [vmem:[%s7 + $0x270] sm:$0xff]
  %v4132 = vld [vmem:[%s7 + $0x278] sm:$0xff]
  %v4133 = vld [vmem:[%s7 + $0x280] sm:$0xff]
  %v4134 = vld [vmem:[%s7 + $0x288] sm:$0xff]
  %v4135 = vld [vmem:[%s7 + $0x290] sm:$0xff]
  %v4136 = vld [vmem:[%s7 + $0x298] sm:$0xff]
  %v4137 = vld [vmem:[%s7 + $0x2a0] sm:$0xff]
  %v4138 = vld [vmem:[%s7 + $0x2a8] sm:$0xff]
  %v4139 = vld [vmem:[%s7 + $0x2b0] sm:$0xff]
  %v4140 = vld [vmem:[%s7 + $0x2b8] sm:$0xff]
  %v4141 = vld [vmem:[%s7 + $0x2c0] sm:$0xff]
  %v4142 = vld [vmem:[%s7 + $0x2c8] sm:$0xff]
  %v4143 = vld [vmem:[%s7 + $0x2d0] sm:$0xff]
  %v4144 = vld [vmem:[%s7 + $0x2d8] sm:$0xff]
  %v4145 = vld [vmem:[%s7 + $0x2e0] sm:$0xff]
  %v4146 = vld [vmem:[%s7 + $0x2e8] sm:$0xff]
  %v4147 = vld [vmem:[%s7 + $0x2f0] sm:$0xff]
  %v4148 = vld [vmem:[%s7 + $0x2f8] sm:$0xff]
  %v4149 = vld [vmem:[%s7 + $0x300] sm:$0xff]
  %v4150 = vld [vmem:[%s7 + $0x308] sm:$0xff]
  %v4151 = vld [vmem:[%s7 + $0x310] sm:$0xff]
  %v4152 = vld [vmem:[%s7 + $0x318] sm:$0xff]
  %v4153 = vld [vmem:[%s7 + $0x320] sm:$0xff]
  %v4154 = vld [vmem:[%s7 + $0x328] sm:$0xff]
  %v4155 = vld [vmem:[%s7 + $0x330] sm:$0xff]
  %v4156 = vld [vmem:[%s7 + $0x338] sm:$0xff]
  %v4157 = vld [vmem:[%s7 + $0x340] sm:$0xff]
  %v4158 = vld [vmem:[%s7 + $0x348] sm:$0xff]
  %v4159 = vld [vmem:[%s7 + $0x350] sm:$0xff]
  %v4160 = vld [vmem:[%s7 + $0x358] sm:$0xff]
  %v4161 = vld [vmem:[%s7 + $0x360] sm:$0xff]
  %v4162 = vld [vmem:[%s7 + $0x368] sm:$0xff]
  %v4163 = vld [vmem:[%s7 + $0x370] sm:$0xff]
  %v4164 = vld [vmem:[%s7 + $0x378] sm:$0xff]
  %v4165 = vld [vmem:[%s7 + $0x380] sm:$0xff]
  %v4166 = vld [vmem:[%s7 + $0x388] sm:$0xff]
  %v4167 = vld [vmem:[%s7 + $0x390] sm:$0xff]
  %v4168 = vld [vmem:[%s7 + $0x398] sm:$0xff]
  %v4169 = vld [vmem:[%s7 + $0x3a0] sm:$0xff]
  %v4170 = vld [vmem:[%s7 + $0x3a8] sm:$0xff]
  %v4171 = vld [vmem:[%s7 + $0x3b0] sm:$0xff]
  %v4172 = vld [vmem:[%s7 + $0x3b8] sm:$0xff]
  %v4173 = vld [vmem:[%s7 + $0x3c0] sm:$0xff]
  %v4174 = vld [vmem:[%s7 + $0x3c8] sm:$0xff]
  %v4175 = vld [vmem:[%s7 + $0x3d0] sm:$0xff]
  %v4176 = vld [vmem:[%s7 + $0x3d8] sm:$0xff]
  %v4177 = vld [vmem:[%s7 + $0x3e0] sm:$0xff]
  %v4178 = vld [vmem:[%s7 + $0x3e8] sm:$0xff]
  %v4179 = vld [vmem:[%s7 + $0x3f0] sm:$0xff]
  %v4180 = vld [vmem:[%s7 + $0x3f8] sm:$0xff]
  %v4181 = vld [vmem:[%s7 + $0x400] sm:$0xff]
  %v4182 = vld [vmem:[%s7 + $0x408] sm:$0xff]
  %v4183 = vld [vmem:[%s7 + $0x410] sm:$0xff]
  %v4184 = vld [vmem:[%s7 + $0x418] sm:$0xff]
  %v4185 = vld [vmem:[%s7 + $0x420] sm:$0xff]
  %v4186 = vld [vmem:[%s7 + $0x428] sm:$0xff]
  %v4187 = vld [vmem:[%s7 + $0x430] sm:$0xff]
  %v4188 = vld [vmem:[%s7 + $0x438] sm:$0xff]
  %v4189 = vld [vmem:[%s7 + $0x440] sm:$0xff]
  %v4190 = vld [vmem:[%s7 + $0x448] sm:$0xff]
  %v4191 = vld [vmem:[%s7 + $0x450] sm:$0xff]
  %v4192 = vld [vmem:[%s7 + $0x458] sm:$0xff]
  %v4193 = vld [vmem:[%s7 + $0x460] sm:$0xff]
  %v4194 = vld [vmem:[%s7 + $0x468] sm:$0xff]
  %v4195 = vld [vmem:[%s7 + $0x470] sm:$0xff]
  %v4196 = vld [vmem:[%s7 + $0x478] sm:$0xff]
  %v4197 = vld [vmem:[%s7 + $0x480] sm:$0xff]
  %v4198 = vld [vmem:[%s7 + $0x488] sm:$0xff]
  %v4199 = vld [vmem:[%s7 + $0x490] sm:$0xff]
  %v4200 = vld [vmem:[%s7 + $0x498] sm:$0xff]
  %v4201 = vld [vmem:[%s7 + $0x4a0] sm:$0xff]
  %v4202 = vld [vmem:[%s7 + $0x4a8] sm:$0xff]
  %v4203 = vld [vmem:[%s7 + $0x4b0] sm:$0xff]
  %v4204 = vld [vmem:[%s7 + $0x4b8] sm:$0xff]
  %v4205 = vld [vmem:[%s7 + $0x4c0] sm:$0xff]
  %v4206 = vld [vmem:[%s7 + $0x4c8] sm:$0xff]
  %v4207 = vld [vmem:[%s7 + $0x4d0] sm:$0xff]
  %v4208 = vld [vmem:[%s7 + $0x4d8] sm:$0xff]
  %v4209 = vld [vmem:[%s7 + $0x4e0] sm:$0xff]
  %v4210 = vld [vmem:[%s7 + $0x4e8] sm:$0xff]
  %v4211 = vld [vmem:[%s7 + $0x4f0] sm:$0xff]
  %v4212 = vld [vmem:[%s7 + $0x4f8] sm:$0xff]
  %v4213 = vld [vmem:[%s7 + $0x500] sm:$0xff]
  %v4214 = vld [vmem:[%s7 + $0x508] sm:$0xff]
  %v4215 = vld [vmem:[%s7 + $0x510] sm:$0xff]
  %v4216 = vld [vmem:[%s7 + $0x518] sm:$0xff]
  %v4217 = vld [vmem:[%s7 + $0x520] sm:$0xff]
  %v4218 = vld [vmem:[%s7 + $0x528] sm:$0xff]
  %v4219 = vld [vmem:[%s7 + $0x530] sm:$0xff]
  %v4220 = vld [vmem:[%s7 + $0x538] sm:$0xff]
  %v4221 = vld [vmem:[%s7 + $0x540] sm:$0xff]
  %v4222 = vld [vmem:[%s7 + $0x548] sm:$0xff]
  %v4223 = vld [vmem:[%s7 + $0x550] sm:$0xff]
  %v4224 = vld [vmem:[%s7 + $0x558] sm:$0xff]
  %v4225 = vld [vmem:[%s7 + $0x560] sm:$0xff]
  %v4226 = vld [vmem:[%s7 + $0x568] sm:$0xff]
  %v4227 = vld [vmem:[%s7 + $0x570] sm:$0xff]
  %v4228 = vld [vmem:[%s7 + $0x578] sm:$0xff]
  %v4229 = vld [vmem:[%s7 + $0x580] sm:$0xff]
  %v4230 = vld [vmem:[%s7 + $0x588] sm:$0xff]
  %v4231 = vld [vmem:[%s7 + $0x590] sm:$0xff]
  %v4232 = vld [vmem:[%s7 + $0x598] sm:$0xff]
  %v4233 = vld [vmem:[%s7 + $0x5a0] sm:$0xff]
  %v4234 = vld [vmem:[%s7 + $0x5a8] sm:$0xff]
  %v4235 = vld [vmem:[%s7 + $0x5b0] sm:$0xff]
  %v4236 = vld [vmem:[%s7 + $0x5b8] sm:$0xff]
  %v4237 = vld [vmem:[%s7 + $0x5c0] sm:$0xff]
  %v4238 = vld [vmem:[%s7 + $0x5c8] sm:$0xff]
  %v4239 = vld [vmem:[%s7 + $0x5d0] sm:$0xff]
  %v4240 = vld [vmem:[%s7 + $0x5d8] sm:$0xff]
  %v4241 = vld [vmem:[%s7 + $0x5e0] sm:$0xff]
  %v4242 = vld [vmem:[%s7 + $0x5e8] sm:$0xff]
  %v4243 = vld [vmem:[%s7 + $0x5f0] sm:$0xff]
  %v4244 = vld [vmem:[%s7 + $0x5f8] sm:$0xff]
  %v4245 = vld [vmem:[%s7 + $0x600] sm:$0xff]
  %v4246 = vld [vmem:[%s7 + $0x608] sm:$0xff]
  %v4247 = vld [vmem:[%s7 + $0x610] sm:$0xff]
  %v4248 = vld [vmem:[%s7 + $0x618] sm:$0xff]
  %v4249 = vld [vmem:[%s7 + $0x620] sm:$0xff]
  %v4250 = vld [vmem:[%s7 + $0x628] sm:$0xff]
  %v4251 = vld [vmem:[%s7 + $0x630] sm:$0xff]
  %v4252 = vld [vmem:[%s7 + $0x638] sm:$0xff]
  %v4253 = vld [vmem:[%s7 + $0x640] sm:$0xff]
  %v4254 = vld [vmem:[%s7 + $0x648] sm:$0xff]
  %v4255 = vld [vmem:[%s7 + $0x650] sm:$0xff]
  %v4256 = vld [vmem:[%s7 + $0x658] sm:$0xff]
  %v4257 = vld [vmem:[%s7 + $0x660] sm:$0xff]
  %v4258 = vld [vmem:[%s7 + $0x668] sm:$0xff]
  %v4259 = vld [vmem:[%s7 + $0x670] sm:$0xff]
  %v4260 = vld [vmem:[%s7 + $0x678] sm:$0xff]
  %v4261 = vld [vmem:[%s7 + $0x680] sm:$0xff]
  %v4262 = vld [vmem:[%s7 + $0x688] sm:$0xff]
  %v4263 = vld [vmem:[%s7 + $0x690] sm:$0xff]
  %v4264 = vld [vmem:[%s7 + $0x698] sm:$0xff]
  %v4265 = vld [vmem:[%s7 + $0x6a0] sm:$0xff]
  %v4266 = vld [vmem:[%s7 + $0x6a8] sm:$0xff]
  %v4267 = vld [vmem:[%s7 + $0x6b0] sm:$0xff]
  %v4268 = vld [vmem:[%s7 + $0x6b8] sm:$0xff]
  %v4269 = vld [vmem:[%s7 + $0x6c0] sm:$0xff]
  %v4270 = vld [vmem:[%s7 + $0x6c8] sm:$0xff]
  %v4271 = vld [vmem:[%s7 + $0x6d0] sm:$0xff]
  %v4272 = vld [vmem:[%s7 + $0x6d8] sm:$0xff]
  %v4273 = vld [vmem:[%s7 + $0x6e0] sm:$0xff]
  %v4274 = vld [vmem:[%s7 + $0x6e8] sm:$0xff]
  %v4275 = vld [vmem:[%s7 + $0x6f0] sm:$0xff]
  %v4276 = vld [vmem:[%s7 + $0x6f8] sm:$0xff]
  %v4277 = vld [vmem:[%s7 + $0x700] sm:$0xff]
  %v4278 = vld [vmem:[%s7 + $0x708] sm:$0xff]
  %v4279 = vld [vmem:[%s7 + $0x710] sm:$0xff]
  %v4280 = vld [vmem:[%s7 + $0x718] sm:$0xff]
  %v4281 = vld [vmem:[%s7 + $0x720] sm:$0xff]
  %v4282 = vld [vmem:[%s7 + $0x728] sm:$0xff]
  %v4283 = vld [vmem:[%s7 + $0x730] sm:$0xff]
  %v4284 = vld [vmem:[%s7 + $0x738] sm:$0xff]
  %v4285 = vld [vmem:[%s7 + $0x740] sm:$0xff]
  %v4286 = vld [vmem:[%s7 + $0x748] sm:$0xff]
  %v4287 = vld [vmem:[%s7 + $0x750] sm:$0xff]
  %v4288 = vld [vmem:[%s7 + $0x758] sm:$0xff]
  %v4289 = vld [vmem:[%s7 + $0x760] sm:$0xff]
  %v4290 = vld [vmem:[%s7 + $0x768] sm:$0xff]
  %v4291 = vld [vmem:[%s7 + $0x770] sm:$0xff]
  %v4292 = vld [vmem:[%s7 + $0x778] sm:$0xff]
  %v4293 = vld [vmem:[%s7 + $0x780] sm:$0xff]
  %v4294 = vld [vmem:[%s7 + $0x788] sm:$0xff]
  %v4295 = vld [vmem:[%s7 + $0x790] sm:$0xff]
  %v4296 = vld [vmem:[%s7 + $0x798] sm:$0xff]
  %v4297 = vld [vmem:[%s7 + $0x7a0] sm:$0xff]
  %v4298 = vld [vmem:[%s7 + $0x7a8] sm:$0xff]
  %v4299 = vld [vmem:[%s7 + $0x7b0] sm:$0xff]
  %v4300 = vld [vmem:[%s7 + $0x7b8] sm:$0xff]
  %v4301 = vld [vmem:[%s7 + $0x7c0] sm:$0xff]
  %v4302 = vld [vmem:[%s7 + $0x7c8] sm:$0xff]
  %v4303 = vld [vmem:[%s7 + $0x7d0] sm:$0xff]
  %v4304 = vld [vmem:[%s7 + $0x7d8] sm:$0xff]
  %v4305 = vld [vmem:[%s7 + $0x7e0] sm:$0xff]
  %v4306 = vld [vmem:[%s7 + $0x7e8] sm:$0xff]
  %v4307 = vld [vmem:[%s7 + $0x7f0] sm:$0xff]
  %v4308 = vld [vmem:[%s7 + $0x7f8] sm:$0xff]
  %v4309 = vld [vmem:[%s7 + $0x800] sm:$0xff]
  %v4310 = vld [vmem:[%s7 + $0x808] sm:$0xff]
  %v4311 = vld [vmem:[%s7 + $0x810] sm:$0xff]
  %v4312 = vld [vmem:[%s7 + $0x818] sm:$0xff]
  %v4313 = vld [vmem:[%s7 + $0x820] sm:$0xff]
  %v4314 = vld [vmem:[%s7 + $0x828] sm:$0xff]
  %v4315 = vld [vmem:[%s7 + $0x830] sm:$0xff]
  %v4316 = vld [vmem:[%s7 + $0x838] sm:$0xff]
  %v4317 = vld [vmem:[%s7 + $0x840] sm:$0xff]
  %v4318 = vld [vmem:[%s7 + $0x848] sm:$0xff]
  %v4319 = vld [vmem:[%s7 + $0x850] sm:$0xff]
  %v4320 = vld [vmem:[%s7 + $0x858] sm:$0xff]
  %v4321 = vld [vmem:[%s7 + $0x860] sm:$0xff]
  %v4322 = vld [vmem:[%s7 + $0x868] sm:$0xff]
  %v4323 = vld [vmem:[%s7 + $0x870] sm:$0xff]
  %v4324 = vld [vmem:[%s7 + $0x878] sm:$0xff]
  %v4325 = vld [vmem:[%s7 + $0x880] sm:$0xff]
  %v4326 = vld [vmem:[%s7 + $0x888] sm:$0xff]
  %v4327 = vld [vmem:[%s7 + $0x890] sm:$0xff]
  %v4328 = vld [vmem:[%s7 + $0x898] sm:$0xff]
  %v4329 = vld [vmem:[%s7 + $0x8a0] sm:$0xff]
  %v4330 = vld [vmem:[%s7 + $0x8a8] sm:$0xff]
  %v4331 = vld [vmem:[%s7 + $0x8b0] sm:$0xff]
  %v4332 = vld [vmem:[%s7 + $0x8b8] sm:$0xff]
  %v4333 = vld [vmem:[%s7 + $0x8c0] sm:$0xff]
  %v4334 = vld [vmem:[%s7 + $0x8c8] sm:$0xff]
  %v4335 = vld [vmem:[%s7 + $0x8d0] sm:$0xff]
  %v4336 = vld [vmem:[%s7 + $0x8d8] sm:$0xff]
  %v4337 = vld [vmem:[%s7 + $0x8e0] sm:$0xff]
  %v4338 = vld [vmem:[%s7 + $0x8e8] sm:$0xff]
  %v4339 = vld [vmem:[%s7 + $0x8f0] sm:$0xff]
  %v4340 = vld [vmem:[%s7 + $0x8f8] sm:$0xff]
  %v4341 = vld [vmem:[%s7 + $0x900] sm:$0xff]
  %v4342 = vld [vmem:[%s7 + $0x908] sm:$0xff]
  %v4343 = vld [vmem:[%s7 + $0x910] sm:$0xff]
  %v4344 = vld [vmem:[%s7 + $0x918] sm:$0xff]
  %v4345 = vld [vmem:[%s7 + $0x920] sm:$0xff]
  %v4346 = vld [vmem:[%s7 + $0x928] sm:$0xff]
  %v4347 = vld [vmem:[%s7 + $0x930] sm:$0xff]
  %v4348 = vld [vmem:[%s7 + $0x938] sm:$0xff]
  %v4349 = vld [vmem:[%s7 + $0x940] sm:$0xff]
  %v4350 = vld [vmem:[%s7 + $0x948] sm:$0xff]
  %v4351 = vld [vmem:[%s7 + $0x950] sm:$0xff]
  %v4352 = vld [vmem:[%s7 + $0x958] sm:$0xff]
  %v4353 = vld [vmem:[%s7 + $0x960] sm:$0xff]
  %v4354 = vld [vmem:[%s7 + $0x968] sm:$0xff]
  %v4355 = vld [vmem:[%s7 + $0x970] sm:$0xff]
  %v4356 = vld [vmem:[%s7 + $0x978] sm:$0xff]
  %v4357 = vld [vmem:[%s7 + $0x980] sm:$0xff]
  %v4358 = vld [vmem:[%s7 + $0x988] sm:$0xff]
  %v4359 = vld [vmem:[%s7 + $0x990] sm:$0xff]
  %v4360 = vld [vmem:[%s7 + $0x998] sm:$0xff]
  %v4361 = vld [vmem:[%s7 + $0x9a0] sm:$0xff]
  %v4362 = vld [vmem:[%s7 + $0x9a8] sm:$0xff]
  %v4363 = vld [vmem:[%s7 + $0x9b0] sm:$0xff]
  %v4364 = vld [vmem:[%s7 + $0x9b8] sm:$0xff]
  %v4365 = vld [vmem:[%s7 + $0x9c0] sm:$0xff]
  %v4366 = vld [vmem:[%s7 + $0x9c8] sm:$0xff]
  %v4367 = vld [vmem:[%s7 + $0x9d0] sm:$0xff]
  %v4368 = vld [vmem:[%s7 + $0x9d8] sm:$0xff]
  %v4369 = vld [vmem:[%s7 + $0x9e0] sm:$0xff]
  %v4370 = vld [vmem:[%s7 + $0x9e8] sm:$0xff]
  %v4371 = vld [vmem:[%s7 + $0x9f0] sm:$0xff]
  %v4372 = vld [vmem:[%s7 + $0x9f8] sm:$0xff]
  %v4373 = vld [vmem:[%s7 + $0xa00] sm:$0xff]
  %v4374 = vld [vmem:[%s7 + $0xa08] sm:$0xff]
  %v4375 = vld [vmem:[%s7 + $0xa10] sm:$0xff]
  %v4376 = vld [vmem:[%s7 + $0xa18] sm:$0xff]
  %v4377 = vld [vmem:[%s7 + $0xa20] sm:$0xff]
  %v4378 = vld [vmem:[%s7 + $0xa28] sm:$0xff]
  %v4379 = vld [vmem:[%s7 + $0xa30] sm:$0xff]
  %v4380 = vld [vmem:[%s7 + $0xa38] sm:$0xff]
  %v4381 = vld [vmem:[%s7 + $0xa40] sm:$0xff]
  %v4382 = vld [vmem:[%s7 + $0xa48] sm:$0xff]
  %v4383 = vld [vmem:[%s7 + $0xa50] sm:$0xff]
  %v4384 = vld [vmem:[%s7 + $0xa58] sm:$0xff]
  %v4385 = vld [vmem:[%s7 + $0xa60] sm:$0xff]
  %v4386 = vld [vmem:[%s7 + $0xa68] sm:$0xff]
  %v4387 = vld [vmem:[%s7 + $0xa70] sm:$0xff]
  %v4388 = vld [vmem:[%s7 + $0xa78] sm:$0xff]
  %v4389 = vld [vmem:[%s7 + $0xa80] sm:$0xff]
  %v4390 = vld [vmem:[%s7 + $0xa88] sm:$0xff]
  %v4391 = vld [vmem:[%s7 + $0xa90] sm:$0xff]
  %v4392 = vld [vmem:[%s7 + $0xa98] sm:$0xff]
  %v4393 = vld [vmem:[%s7 + $0xaa0] sm:$0xff]
  %v4394 = vld [vmem:[%s7 + $0xaa8] sm:$0xff]
  %v4395 = vld [vmem:[%s7 + $0xab0] sm:$0xff]
  %v4396 = vld [vmem:[%s7 + $0xab8] sm:$0xff]
  %v4397 = vld [vmem:[%s7 + $0xac0] sm:$0xff]
  %v4398 = vld [vmem:[%s7 + $0xac8] sm:$0xff]
  %v4399 = vld [vmem:[%s7 + $0xad0] sm:$0xff]
  %v4400 = vld [vmem:[%s7 + $0xad8] sm:$0xff]
  %v4401 = vld [vmem:[%s7 + $0xae0] sm:$0xff]
  %v4402 = vld [vmem:[%s7 + $0xae8] sm:$0xff]
  %v4403 = vld [vmem:[%s7 + $0xaf0] sm:$0xff]
  %v4404 = vld [vmem:[%s7 + $0xaf8] sm:$0xff]
  %v4405 = vld [vmem:[%s7 + $0xb00] sm:$0xff]
  %v4406 = vld [vmem:[%s7 + $0xb08] sm:$0xff]
  %v4407 = vld [vmem:[%s7 + $0xb10] sm:$0xff]
  %v4408 = vld [vmem:[%s7 + $0xb18] sm:$0xff]
  %v4409 = vld [vmem:[%s7 + $0xb20] sm:$0xff]
  %v4410 = vld [vmem:[%s7 + $0xb28] sm:$0xff]
  %v4411 = vld [vmem:[%s7 + $0xb30] sm:$0xff]
  %v4412 = vld [vmem:[%s7 + $0xb38] sm:$0xff]
  %v4413 = vld [vmem:[%s7 + $0xb40] sm:$0xff]
  %v4414 = vld [vmem:[%s7 + $0xb48] sm:$0xff]
  %v4415 = vld [vmem:[%s7 + $0xb50] sm:$0xff]
  %v4416 = vld [vmem:[%s7 + $0xb58] sm:$0xff]
  %v4417 = vld [vmem:[%s7 + $0xb60] sm:$0xff]
  %v4418 = vld [vmem:[%s7 + $0xb68] sm:$0xff]
  %v4419 = vld [vmem:[%s7 + $0xb70] sm:$0xff]
  %v4420 = vld [vmem:[%s7 + $0xb78] sm:$0xff]
  %v4421 = vld [vmem:[%s7 + $0xb80] sm:$0xff]
  %v4422 = vld [vmem:[%s7 + $0xb88] sm:$0xff]
  %v4423 = vld [vmem:[%s7 + $0xb90] sm:$0xff]
  %v4424 = vld [vmem:[%s7 + $0xb98] sm:$0xff]
  %v4425 = vld [vmem:[%s7 + $0xba0] sm:$0xff]
  %v4426 = vld [vmem:[%s7 + $0xba8] sm:$0xff]
  %v4427 = vld [vmem:[%s7 + $0xbb0] sm:$0xff]
  %v4428 = vld [vmem:[%s7 + $0xbb8] sm:$0xff]
  %v4429 = vld [vmem:[%s7 + $0xbc0] sm:$0xff]
  %v4430 = vld [vmem:[%s7 + $0xbc8] sm:$0xff]
  %v4431 = vld [vmem:[%s7 + $0xbd0] sm:$0xff]
  %v4432 = vld [vmem:[%s7 + $0xbd8] sm:$0xff]
  %v4433 = vld [vmem:[%s7 + $0xbe0] sm:$0xff]
  %v4434 = vld [vmem:[%s7 + $0xbe8] sm:$0xff]
  %v4435 = vld [vmem:[%s7 + $0xbf0] sm:$0xff]
  %v4436 = vld [vmem:[%s7 + $0xbf8] sm:$0xff]
  %v4437 = vld [vmem:[%s7 + $0xc00] sm:$0xff]
  %v4438 = vld [vmem:[%s7 + $0xc08] sm:$0xff]
  %v4439 = vld [vmem:[%s7 + $0xc10] sm:$0xff]
  %v4440 = vld [vmem:[%s7 + $0xc18] sm:$0xff]
  %v4441 = vld [vmem:[%s7 + $0xc20] sm:$0xff]
  %v4442 = vld [vmem:[%s7 + $0xc28] sm:$0xff]
  %v4443 = vld [vmem:[%s7 + $0xc30] sm:$0xff]
  %v4444 = vld [vmem:[%s7 + $0xc38] sm:$0xff]
  %v4445 = vld [vmem:[%s7 + $0xc40] sm:$0xff]
  %v4446 = vld [vmem:[%s7 + $0xc48] sm:$0xff]
  %v4447 = vld [vmem:[%s7 + $0xc50] sm:$0xff]
  %v4448 = vld [vmem:[%s7 + $0xc58] sm:$0xff]
  %v4449 = vld [vmem:[%s7 + $0xc60] sm:$0xff]
  %v4450 = vld [vmem:[%s7 + $0xc68] sm:$0xff]
  %v4451 = vld [vmem:[%s7 + $0xc70] sm:$0xff]
  %v4452 = vld [vmem:[%s7 + $0xc78] sm:$0xff]
  %v4453 = vld [vmem:[%s7 + $0xc80] sm:$0xff]
  %v4454 = vld [vmem:[%s7 + $0xc88] sm:$0xff]
  %v4455 = vld [vmem:[%s7 + $0xc90] sm:$0xff]
  %v4456 = vld [vmem:[%s7 + $0xc98] sm:$0xff]
  %v4457 = vld [vmem:[%s7 + $0xca0] sm:$0xff]
  %v4458 = vld [vmem:[%s7 + $0xca8] sm:$0xff]
  %v4459 = vld [vmem:[%s7 + $0xcb0] sm:$0xff]
  %v4460 = vld [vmem:[%s7 + $0xcb8] sm:$0xff]
  %v4461 = vld [vmem:[%s7 + $0xcc0] sm:$0xff]
  %v4462 = vld [vmem:[%s7 + $0xcc8] sm:$0xff]
  %v4463 = vld [vmem:[%s7 + $0xcd0] sm:$0xff]
  %v4464 = vld [vmem:[%s7 + $0xcd8] sm:$0xff]
  %v4465 = vld [vmem:[%s7 + $0xce0] sm:$0xff]
  %v4466 = vld [vmem:[%s7 + $0xce8] sm:$0xff]
  %v4467 = vld [vmem:[%s7 + $0xcf0] sm:$0xff]
  %v4468 = vld [vmem:[%s7 + $0xcf8] sm:$0xff]
  %v4469 = vld [vmem:[%s7 + $0xd00] sm:$0xff]
  %v4470 = vld [vmem:[%s7 + $0xd08] sm:$0xff]
  %v4471 = vld [vmem:[%s7 + $0xd10] sm:$0xff]
  %v4472 = vld [vmem:[%s7 + $0xd18] sm:$0xff]
  %v4473 = vld [vmem:[%s7 + $0xd20] sm:$0xff]
  %v4474 = vld [vmem:[%s7 + $0xd28] sm:$0xff]
  %v4475 = vld [vmem:[%s7 + $0xd30] sm:$0xff]
  %v4476 = vld [vmem:[%s7 + $0xd38] sm:$0xff]
  %v4477 = vld [vmem:[%s7 + $0xd40] sm:$0xff]
  %v4478 = vld [vmem:[%s7 + $0xd48] sm:$0xff]
  %v4479 = vld [vmem:[%s7 + $0xd50] sm:$0xff]
  %v4480 = vld [vmem:[%s7 + $0xd58] sm:$0xff]
  %v4481 = vld [vmem:[%s7 + $0xd60] sm:$0xff]
  %v4482 = vld [vmem:[%s7 + $0xd68] sm:$0xff]
  %v4483 = vld [vmem:[%s7 + $0xd70] sm:$0xff]
  %v4484 = vld [vmem:[%s7 + $0xd78] sm:$0xff]
  %v4485 = vld [vmem:[%s7 + $0xd80] sm:$0xff]
  %v4486 = vld [vmem:[%s7 + $0xd88] sm:$0xff]
  %v4487 = vld [vmem:[%s7 + $0xd90] sm:$0xff]
  %v4488 = vld [vmem:[%s7 + $0xd98] sm:$0xff]
  %v4489 = vld [vmem:[%s7 + $0xda0] sm:$0xff]
  %v4490 = vld [vmem:[%s7 + $0xda8] sm:$0xff]
  %v4491 = vld [vmem:[%s7 + $0xdb0] sm:$0xff]
  %v4492 = vld [vmem:[%s7 + $0xdb8] sm:$0xff]
  %v4493 = vld [vmem:[%s7 + $0xdc0] sm:$0xff]
  %v4494 = vld [vmem:[%s7 + $0xdc8] sm:$0xff]
  %v4495 = vld [vmem:[%s7 + $0xdd0] sm:$0xff]
  %v4496 = vld [vmem:[%s7 + $0xdd8] sm:$0xff]
  %v4497 = vld [vmem:[%s7 + $0xde0] sm:$0xff]
  %v4498 = vld [vmem:[%s7 + $0xde8] sm:$0xff]
  %v4499 = vld [vmem:[%s7 + $0xdf0] sm:$0xff]
  %v4500 = vld [vmem:[%s7 + $0xdf8] sm:$0xff]
  %v4501 = vld [vmem:[%s7 + $0xe00] sm:$0xff]
  %v4502 = vld [vmem:[%s7 + $0xe08] sm:$0xff]
  %v4503 = vld [vmem:[%s7 + $0xe10] sm:$0xff]
  %v4504 = vld [vmem:[%s7 + $0xe18] sm:$0xff]
  %v4505 = vld [vmem:[%s7 + $0xe20] sm:$0xff]
  %v4506 = vld [vmem:[%s7 + $0xe28] sm:$0xff]
  %v4507 = vld [vmem:[%s7 + $0xe30] sm:$0xff]
  %v4508 = vld [vmem:[%s7 + $0xe38] sm:$0xff]
  %v4509 = vld [vmem:[%s7 + $0xe40] sm:$0xff]
  %v4510 = vld [vmem:[%s7 + $0xe48] sm:$0xff]
  %v4511 = vld [vmem:[%s7 + $0xe50] sm:$0xff]
  %v4512 = vld [vmem:[%s7 + $0xe58] sm:$0xff]
  %v4513 = vld [vmem:[%s7 + $0xe60] sm:$0xff]
  %v4514 = vld [vmem:[%s7 + $0xe68] sm:$0xff]
  %v4515 = vld [vmem:[%s7 + $0xe70] sm:$0xff]
  %v4516 = vld [vmem:[%s7 + $0xe78] sm:$0xff]
  %v4517 = vld [vmem:[%s7 + $0xe80] sm:$0xff]
  %v4518 = vld [vmem:[%s7 + $0xe88] sm:$0xff]
  %v4519 = vld [vmem:[%s7 + $0xe90] sm:$0xff]
  %v4520 = vld [vmem:[%s7 + $0xe98] sm:$0xff]
  %v4521 = vld [vmem:[%s7 + $0xea0] sm:$0xff]
  %v4522 = vld [vmem:[%s7 + $0xea8] sm:$0xff]
  %v4523 = vld [vmem:[%s7 + $0xeb0] sm:$0xff]
  %v4524 = vld [vmem:[%s7 + $0xeb8] sm:$0xff]
  %v4525 = vld [vmem:[%s7 + $0xec0] sm:$0xff]
  %v4526 = vld [vmem:[%s7 + $0xec8] sm:$0xff]
  %v4527 = vld [vmem:[%s7 + $0xed0] sm:$0xff]
  %v4528 = vld [vmem:[%s7 + $0xed8] sm:$0xff]
  %v4529 = vld [vmem:[%s7 + $0xee0] sm:$0xff]
  %v4530 = vld [vmem:[%s7 + $0xee8] sm:$0xff]
  %v4531 = vld [vmem:[%s7 + $0xef0] sm:$0xff]
  %v4532 = vld [vmem:[%s7 + $0xef8] sm:$0xff]
  %v4533 = vld [vmem:[%s7 + $0xf00] sm:$0xff]
  %v4534 = vld [vmem:[%s7 + $0xf08] sm:$0xff]
  %v4535 = vld [vmem:[%s7 + $0xf10] sm:$0xff]
  %v4536 = vld [vmem:[%s7 + $0xf18] sm:$0xff]
  %v4537 = vld [vmem:[%s7 + $0xf20] sm:$0xff]
  %v4538 = vld [vmem:[%s7 + $0xf28] sm:$0xff]
  %v4539 = vld [vmem:[%s7 + $0xf30] sm:$0xff]
  %v4540 = vld [vmem:[%s7 + $0xf38] sm:$0xff]
  %v4541 = vld [vmem:[%s7 + $0xf40] sm:$0xff]
  %v4542 = vld [vmem:[%s7 + $0xf48] sm:$0xff]
  %v4543 = vld [vmem:[%s7 + $0xf50] sm:$0xff]
  %v4544 = vld [vmem:[%s7 + $0xf58] sm:$0xff]
  %v4545 = vld [vmem:[%s7 + $0xf60] sm:$0xff]
  %v4546 = vld [vmem:[%s7 + $0xf68] sm:$0xff]
  %v4547 = vld [vmem:[%s7 + $0xf70] sm:$0xff]
  %v4548 = vld [vmem:[%s7 + $0xf78] sm:$0xff]
  %v4549 = vld [vmem:[%s7 + $0xf80] sm:$0xff]
  %v4550 = vld [vmem:[%s7 + $0xf88] sm:$0xff]
  %v4551 = vld [vmem:[%s7 + $0xf90] sm:$0xff]
  %v4552 = vld [vmem:[%s7 + $0xf98] sm:$0xff]
  %v4553 = vld [vmem:[%s7 + $0xfa0] sm:$0xff]
  %v4554 = vld [vmem:[%s7 + $0xfa8] sm:$0xff]
  %v4555 = vld [vmem:[%s7 + $0xfb0] sm:$0xff]
  %v4556 = vld [vmem:[%s7 + $0xfb8] sm:$0xff]
  %v4557 = vld [vmem:[%s7 + $0xfc0] sm:$0xff]
  %v4558 = vld [vmem:[%s7 + $0xfc8] sm:$0xff]
  %v4559 = vld [vmem:[%s7 + $0xfd0] sm:$0xff]
  %v4560 = vld [vmem:[%s7 + $0xfd8] sm:$0xff]
  %v4561 = vld [vmem:[%s7 + $0xfe0] sm:$0xff]
  %v4562 = vld [vmem:[%s7 + $0xfe8] sm:$0xff]
  %v4563 = vld [vmem:[%s7 + $0xff0] sm:$0xff]
  %v4564 = vld [vmem:[%s7 + $0xff8] sm:$0xff]
  %v4565 = vld [vmem:[%s7 + $0x1000] sm:$0xff]
  %v4566 = vld [vmem:[%s7 + $0x1008] sm:$0xff]
  %v4567 = vld [vmem:[%s7 + $0x1010] sm:$0xff]
  %v4568 = vld [vmem:[%s7 + $0x1018] sm:$0xff]
  %v4569 = vld [vmem:[%s7 + $0x1020] sm:$0xff]
  %v4570 = vld [vmem:[%s7 + $0x1028] sm:$0xff]
  %v4571 = vld [vmem:[%s7 + $0x1030] sm:$0xff]
  %v4572 = vld [vmem:[%s7 + $0x1038] sm:$0xff]
  %v4573 = vld [vmem:[%s7 + $0x1040] sm:$0xff]
  %v4574 = vld [vmem:[%s7 + $0x1048] sm:$0xff]
  %v4575 = vld [vmem:[%s7 + $0x1050] sm:$0xff]
  %v4576 = vld [vmem:[%s7 + $0x1058] sm:$0xff]
  %v4577 = vld [vmem:[%s7 + $0x1060] sm:$0xff]
  %v4578 = vld [vmem:[%s7 + $0x1068] sm:$0xff]
  %v4579 = vld [vmem:[%s7 + $0x1070] sm:$0xff]
  %v4580 = vld [vmem:[%s7 + $0x1078] sm:$0xff]
  %v4581 = vld [vmem:[%s7 + $0x1080] sm:$0xff]
  %v4582 = vld [vmem:[%s7 + $0x1088] sm:$0xff]
  %v4583 = vld [vmem:[%s7 + $0x1090] sm:$0xff]
  %v4584 = vld [vmem:[%s7 + $0x1098] sm:$0xff]
  %v4585 = vld [vmem:[%s7 + $0x10a0] sm:$0xff]
  %v4586 = vld [vmem:[%s7 + $0x10a8] sm:$0xff]
  %v4587 = vld [vmem:[%s7 + $0x10b0] sm:$0xff]
  %v4588 = vld [vmem:[%s7 + $0x10b8] sm:$0xff]
  %v4589 = vld [vmem:[%s7 + $0x10c0] sm:$0xff]
  %v4590 = vld [vmem:[%s7 + $0x10c8] sm:$0xff]
  %v4591 = vld [vmem:[%s7 + $0x10d0] sm:$0xff]
  %v4592 = vld [vmem:[%s7 + $0x10d8] sm:$0xff]
  %v4593 = vld [vmem:[%s7 + $0x10e0] sm:$0xff]
  %v4594 = vld [vmem:[%s7 + $0x10e8] sm:$0xff]
  %v4595 = vld [vmem:[%s7 + $0x10f0] sm:$0xff]
  %v4596 = vld [vmem:[%s7 + $0x10f8] sm:$0xff]
  %v4597 = vld [vmem:[%s7 + $0x1100] sm:$0xff]
  %v4598 = vld [vmem:[%s7 + $0x1108] sm:$0xff]
  %v4599 = vld [vmem:[%s7 + $0x1110] sm:$0xff]
  %v4600 = vld [vmem:[%s7 + $0x1118] sm:$0xff]
  %v4601 = vld [vmem:[%s7 + $0x1120] sm:$0xff]
  %v4602 = vld [vmem:[%s7 + $0x1128] sm:$0xff]
  %v4603 = vld [vmem:[%s7 + $0x1130] sm:$0xff]
  %v4604 = vld [vmem:[%s7 + $0x1138] sm:$0xff]
  %v4605 = vld [vmem:[%s7 + $0x1140] sm:$0xff]
  %v4606 = vld [vmem:[%s7 + $0x1148] sm:$0xff]
  %v4607 = vld [vmem:[%s7 + $0x1150] sm:$0xff]
  %v4608 = vld [vmem:[%s7 + $0x1158] sm:$0xff]
  %v4609 = vld [vmem:[%s7 + $0x1160] sm:$0xff]
  %v4610 = vld [vmem:[%s7 + $0x1168] sm:$0xff]
  %v4611 = vld [vmem:[%s7 + $0x1170] sm:$0xff]
  %v4612 = vld [vmem:[%s7 + $0x1178] sm:$0xff]
  %v4613 = vld [vmem:[%s7 + $0x1180] sm:$0xff]
  %v4614 = vld [vmem:[%s7 + $0x1188] sm:$0xff]
  %v4615 = vld [vmem:[%s7 + $0x1190] sm:$0xff]
  %v4616 = vld [vmem:[%s7 + $0x1198] sm:$0xff]
  %v4617 = vld [vmem:[%s7 + $0x11a0] sm:$0xff]
  %v4618 = vld [vmem:[%s7 + $0x11a8] sm:$0xff]
  %v4619 = vld [vmem:[%s7 + $0x11b0] sm:$0xff]
  %v4620 = vld [vmem:[%s7 + $0x11b8] sm:$0xff]
  %v4621 = vld [vmem:[%s7 + $0x11c0] sm:$0xff]
  %v4622 = vld [vmem:[%s7 + $0x11c8] sm:$0xff]
  %v4623 = vld [vmem:[%s7 + $0x11d0] sm:$0xff]
  %v4624 = vld [vmem:[%s7 + $0x11d8] sm:$0xff]
  %v4625 = vld [vmem:[%s7 + $0x11e0] sm:$0xff]
  %v4626 = vld [vmem:[%s7 + $0x11e8] sm:$0xff]
  %v4627 = vld [vmem:[%s7 + $0x11f0] sm:$0xff]
  %v4628 = vld [vmem:[%s7 + $0x11f8] sm:$0xff]
  %v4629 = vld [vmem:[%s7 + $0x1200] sm:$0xff]
  %v4630 = vld [vmem:[%s7 + $0x1208] sm:$0xff]
  %v4631 = vld [vmem:[%s7 + $0x1210] sm:$0xff]
  %v4632 = vld [vmem:[%s7 + $0x1218] sm:$0xff]
  %v4633 = vld [vmem:[%s7 + $0x1220] sm:$0xff]
  %v4634 = vld [vmem:[%s7 + $0x1228] sm:$0xff]
  %v4635 = vld [vmem:[%s7 + $0x1230] sm:$0xff]
  %v4636 = vld [vmem:[%s7 + $0x1238] sm:$0xff]
  %v4637 = vld [vmem:[%s7 + $0x1240] sm:$0xff]
  %v4638 = vld [vmem:[%s7 + $0x1248] sm:$0xff]
  %v4639 = vld [vmem:[%s7 + $0x1250] sm:$0xff]
  %v4640 = vld [vmem:[%s7 + $0x1258] sm:$0xff]
  %v4641 = vld [vmem:[%s7 + $0x1260] sm:$0xff]
  %v4642 = vld [vmem:[%s7 + $0x1268] sm:$0xff]
  %v4643 = vld [vmem:[%s7 + $0x1270] sm:$0xff]
  %v4644 = vld [vmem:[%s7 + $0x1278] sm:$0xff]
  %v4645 = vld [vmem:[%s7 + $0x1280] sm:$0xff]
  %v4646 = vld [vmem:[%s7 + $0x1288] sm:$0xff]
  %v4647 = vld [vmem:[%s7 + $0x1290] sm:$0xff]
  %v4648 = vld [vmem:[%s7 + $0x1298] sm:$0xff]
  %v4649 = vld [vmem:[%s7 + $0x12a0] sm:$0xff]
  %v4650 = vld [vmem:[%s7 + $0x12a8] sm:$0xff]
  %v4651 = vld [vmem:[%s7 + $0x12b0] sm:$0xff]
  %v4652 = vld [vmem:[%s7 + $0x12b8] sm:$0xff]
  %v4653 = vld [vmem:[%s7 + $0x12c0] sm:$0xff]
  %v4654 = vld [vmem:[%s7 + $0x12c8] sm:$0xff]
  %v4655 = vld [vmem:[%s7 + $0x12d0] sm:$0xff]
  %v4656 = vld [vmem:[%s7 + $0x12d8] sm:$0xff]
  %v4657 = vld [vmem:[%s7 + $0x12e0] sm:$0xff]
  %v4658 = vld [vmem:[%s7 + $0x12e8] sm:$0xff]
  %v4659 = vld [vmem:[%s7 + $0x12f0] sm:$0xff]
  %v4660 = vld [vmem:[%s7 + $0x12f8] sm:$0xff]
  %v4661 = vld [vmem:[%s7 + $0x1300] sm:$0xff]
  %v4662 = vld [vmem:[%s7 + $0x1308] sm:$0xff]
  %v4663 = vld [vmem:[%s7 + $0x1310] sm:$0xff]
  %v4664 = vld [vmem:[%s7 + $0x1318] sm:$0xff]
  %v4665 = vld [vmem:[%s7 + $0x1320] sm:$0xff]
  %v4666 = vld [vmem:[%s7 + $0x1328] sm:$0xff]
  %v4667 = vld [vmem:[%s7 + $0x1330] sm:$0xff]
  %v4668 = vld [vmem:[%s7 + $0x1338] sm:$0xff]
  %v4669 = vld [vmem:[%s7 + $0x1340] sm:$0xff]
  %v4670 = vld [vmem:[%s7 + $0x1348] sm:$0xff]
  %v4671 = vld [vmem:[%s7 + $0x1350] sm:$0xff]
  %v4672 = vld [vmem:[%s7 + $0x1358] sm:$0xff]
  %v4673 = vld [vmem:[%s7 + $0x1360] sm:$0xff]
  %v4674 = vld [vmem:[%s7 + $0x1368] sm:$0xff]
  %v4675 = vld [vmem:[%s7 + $0x1370] sm:$0xff]
  %v4676 = vld [vmem:[%s7 + $0x1378] sm:$0xff]
  %v4677 = vld [vmem:[%s7 + $0x1380] sm:$0xff]
  %v4678 = vld [vmem:[%s7 + $0x1388] sm:$0xff]
  %v4679 = vld [vmem:[%s7 + $0x1390] sm:$0xff]
  %v4680 = vld [vmem:[%s7 + $0x1398] sm:$0xff]
  %v4681 = vld [vmem:[%s7 + $0x13a0] sm:$0xff]
  %v4682 = vld [vmem:[%s7 + $0x13a8] sm:$0xff]
  %v4683 = vld [vmem:[%s7 + $0x13b0] sm:$0xff]
  %v4684 = vld [vmem:[%s7 + $0x13b8] sm:$0xff]
  %v4685 = vld [vmem:[%s7 + $0x13c0] sm:$0xff]
  %v4686 = vld [vmem:[%s7 + $0x13c8] sm:$0xff]
  %v4687 = vld [vmem:[%s7 + $0x13d0] sm:$0xff]
  %v4688 = vld [vmem:[%s7 + $0x13d8] sm:$0xff]
  %v4689 = vld [vmem:[%s7 + $0x13e0] sm:$0xff]
  %v4690 = vld [vmem:[%s7 + $0x13e8] sm:$0xff]
  %v4691 = vld [vmem:[%s7 + $0x13f0] sm:$0xff]
  %v4692 = vld [vmem:[%s7 + $0x13f8] sm:$0xff]
  %v4693 = vld [vmem:[%s7 + $0x1400] sm:$0xff]
  %v4694 = vld [vmem:[%s7 + $0x1408] sm:$0xff]
  %v4695 = vld [vmem:[%s7 + $0x1410] sm:$0xff]
  %v4696 = vld [vmem:[%s7 + $0x1418] sm:$0xff]
  %v4697 = vld [vmem:[%s7 + $0x1420] sm:$0xff]
  %v4698 = vld [vmem:[%s7 + $0x1428] sm:$0xff]
  %v4699 = vld [vmem:[%s7 + $0x1430] sm:$0xff]
  %v4700 = vld [vmem:[%s7 + $0x1438] sm:$0xff]
  %v4701 = vld [vmem:[%s7 + $0x1440] sm:$0xff]
  %v4702 = vld [vmem:[%s7 + $0x1448] sm:$0xff]
  %v4703 = vld [vmem:[%s7 + $0x1450] sm:$0xff]
  %v4704 = vld [vmem:[%s7 + $0x1458] sm:$0xff]
  %v4705 = vld [vmem:[%s7 + $0x1460] sm:$0xff]
  %v4706 = vld [vmem:[%s7 + $0x1468] sm:$0xff]
  %v4707 = vld [vmem:[%s7 + $0x1470] sm:$0xff]
  %v4708 = vld [vmem:[%s7 + $0x1478] sm:$0xff]
  %v4709 = vld [vmem:[%s7 + $0x1480] sm:$0xff]
  %v4710 = vld [vmem:[%s7 + $0x1488] sm:$0xff]
  %v4711 = vld [vmem:[%s7 + $0x1490] sm:$0xff]
  %v4712 = vld [vmem:[%s7 + $0x1498] sm:$0xff]
  %v4713 = vld [vmem:[%s7 + $0x14a0] sm:$0xff]
  %v4714 = vld [vmem:[%s7 + $0x14a8] sm:$0xff]
  %v4715 = vld [vmem:[%s7 + $0x14b0] sm:$0xff]
  %v4716 = vld [vmem:[%s7 + $0x14b8] sm:$0xff]
  %v4717 = vld [vmem:[%s7 + $0x14c0] sm:$0xff]
  %v4718 = vld [vmem:[%s7 + $0x14c8] sm:$0xff]
  %v4719 = vld [vmem:[%s7 + $0x14d0] sm:$0xff]
  %v4720 = vld [vmem:[%s7 + $0x14d8] sm:$0xff]
  %v4721 = vld [vmem:[%s7 + $0x14e0] sm:$0xff]
  %v4722 = vld [vmem:[%s7 + $0x14e8] sm:$0xff]
  %v4723 = vld [vmem:[%s7 + $0x14f0] sm:$0xff]
  %v4724 = vld [vmem:[%s7 + $0x14f8] sm:$0xff]
  %v4725 = vld [vmem:[%s7 + $0x1500] sm:$0xff]
  %v4726 = vld [vmem:[%s7 + $0x1508] sm:$0xff]
  %v4727 = vld [vmem:[%s7 + $0x1510] sm:$0xff]
  %v4728 = vld [vmem:[%s7 + $0x1518] sm:$0xff]
  %v4729 = vld [vmem:[%s7 + $0x1520] sm:$0xff]
  %v4730 = vld [vmem:[%s7 + $0x1528] sm:$0xff]
  %v4731 = vld [vmem:[%s7 + $0x1530] sm:$0xff]
  %v4732 = vld [vmem:[%s7 + $0x1538] sm:$0xff]
  %v4733 = vld [vmem:[%s7 + $0x1540] sm:$0xff]
  %v4734 = vld [vmem:[%s7 + $0x1548] sm:$0xff]
  %v4735 = vld [vmem:[%s7 + $0x1550] sm:$0xff]
  %v4736 = vld [vmem:[%s7 + $0x1558] sm:$0xff]
  %v4737 = vld [vmem:[%s7 + $0x1560] sm:$0xff]
  %v4738 = vld [vmem:[%s7 + $0x1568] sm:$0xff]
  %v4739 = vld [vmem:[%s7 + $0x1570] sm:$0xff]
  %v4740 = vld [vmem:[%s7 + $0x1578] sm:$0xff]
  %v4741 = vld [vmem:[%s7 + $0x1580] sm:$0xff]
  %v4742 = vld [vmem:[%s7 + $0x1588] sm:$0xff]
  %v4743 = vld [vmem:[%s7 + $0x1590] sm:$0xff]
  %v4744 = vld [vmem:[%s7 + $0x1598] sm:$0xff]
  %v4745 = vld [vmem:[%s7 + $0x15a0] sm:$0xff]
  %v4746 = vld [vmem:[%s7 + $0x15a8] sm:$0xff]
  %v4747 = vld [vmem:[%s7 + $0x15b0] sm:$0xff]
  %v4748 = vld [vmem:[%s7 + $0x15b8] sm:$0xff]
  %v4749 = vld [vmem:[%s7 + $0x15c0] sm:$0xff]
  %v4750 = vld [vmem:[%s7 + $0x15c8] sm:$0xff]
  %v4751 = vld [vmem:[%s7 + $0x15d0] sm:$0xff]
  %v4752 = vld [vmem:[%s7 + $0x15d8] sm:$0xff]
  %v4753 = vld [vmem:[%s7 + $0x15e0] sm:$0xff]
  %v4754 = vld [vmem:[%s7 + $0x15e8] sm:$0xff]
  %v4755 = vld [vmem:[%s7 + $0x15f0] sm:$0xff]
  %v4756 = vld [vmem:[%s7 + $0x15f8] sm:$0xff]
  %v4757 = vld [vmem:[%s7 + $0x1600] sm:$0xff]
  %v4758 = vld [vmem:[%s7 + $0x1608] sm:$0xff]
  %v4759 = vld [vmem:[%s7 + $0x1610] sm:$0xff]
  %v4760 = vld [vmem:[%s7 + $0x1618] sm:$0xff]
  %v4761 = vld [vmem:[%s7 + $0x1620] sm:$0xff]
  %v4762 = vld [vmem:[%s7 + $0x1628] sm:$0xff]
  %v4763 = vld [vmem:[%s7 + $0x1630] sm:$0xff]
  %v4764 = vld [vmem:[%s7 + $0x1638] sm:$0xff]
  %v4765 = vld [vmem:[%s7 + $0x1640] sm:$0xff]
  %v4766 = vld [vmem:[%s7 + $0x1648] sm:$0xff]
  %v4767 = vld [vmem:[%s7 + $0x1650] sm:$0xff]
  %v4768 = vld [vmem:[%s7 + $0x1658] sm:$0xff]
  %v4769 = vld [vmem:[%s7 + $0x1660] sm:$0xff]
  %v4770 = vld [vmem:[%s7 + $0x1668] sm:$0xff]
  %v4771 = vld [vmem:[%s7 + $0x1670] sm:$0xff]
  %v4772 = vld [vmem:[%s7 + $0x1678] sm:$0xff]
  %v4773 = vld [vmem:[%s7 + $0x1680] sm:$0xff]
  %v4774 = vld [vmem:[%s7 + $0x1688] sm:$0xff]
  %v4775 = vld [vmem:[%s7 + $0x1690] sm:$0xff]
  %v4776 = vld [vmem:[%s7 + $0x1698] sm:$0xff]
  %v4777 = vld [vmem:[%s7 + $0x16a0] sm:$0xff]
  %v4778 = vld [vmem:[%s7 + $0x16a8] sm:$0xff]
  %v4779 = vld [vmem:[%s7 + $0x16b0] sm:$0xff]
  %v4780 = vld [vmem:[%s7 + $0x16b8] sm:$0xff]
  %v4781 = vld [vmem:[%s7 + $0x16c0] sm:$0xff]
  %v4782 = vld [vmem:[%s7 + $0x16c8] sm:$0xff]
  %v4783 = vld [vmem:[%s7 + $0x16d0] sm:$0xff]
  %v4784 = vld [vmem:[%s7 + $0x16d8] sm:$0xff]
  %v4785 = vld [vmem:[%s7 + $0x16e0] sm:$0xff]
  %v4786 = vld [vmem:[%s7 + $0x16e8] sm:$0xff]
  %v4787 = vld [vmem:[%s7 + $0x16f0] sm:$0xff]
  %v4788 = vld [vmem:[%s7 + $0x16f8] sm:$0xff]
  %v4789 = vld [vmem:[%s7 + $0x1700] sm:$0xff]
  %v4790 = vld [vmem:[%s7 + $0x1708] sm:$0xff]
  %v4791 = vld [vmem:[%s7 + $0x1710] sm:$0xff]
  %v4792 = vld [vmem:[%s7 + $0x1718] sm:$0xff]
  %v4793 = vld [vmem:[%s7 + $0x1720] sm:$0xff]
  %v4794 = vld [vmem:[%s7 + $0x1728] sm:$0xff]
  %v4795 = vld [vmem:[%s7 + $0x1730] sm:$0xff]
  %v4796 = vld [vmem:[%s7 + $0x1738] sm:$0xff]
  %v4797 = vld [vmem:[%s7 + $0x1740] sm:$0xff]
  %v4798 = vld [vmem:[%s7 + $0x1748] sm:$0xff]
  %v4799 = vld [vmem:[%s7 + $0x1750] sm:$0xff]
  %v4800 = vld [vmem:[%s7 + $0x1758] sm:$0xff]
  %v4801 = vld [vmem:[%s7 + $0x1760] sm:$0xff]
  %v4802 = vld [vmem:[%s7 + $0x1768] sm:$0xff]
  %v4803 = vld [vmem:[%s7 + $0x1770] sm:$0xff]
  %v4804 = vld [vmem:[%s7 + $0x1778] sm:$0xff]
  %v4805 = vld [vmem:[%s7 + $0x1780] sm:$0xff]
  %v4806 = vld [vmem:[%s7 + $0x1788] sm:$0xff]
  %v4807 = vld [vmem:[%s7 + $0x1790] sm:$0xff]
  %v4808 = vld [vmem:[%s7 + $0x1798] sm:$0xff]
  %v4809 = vld [vmem:[%s7 + $0x17a0] sm:$0xff]
  %v4810 = vld [vmem:[%s7 + $0x17a8] sm:$0xff]
  %v4811 = vld [vmem:[%s7 + $0x17b0] sm:$0xff]
  %v4812 = vld [vmem:[%s7 + $0x17b8] sm:$0xff]
  %v4813 = vld [vmem:[%s7 + $0x17c0] sm:$0xff]
  %v4814 = vld [vmem:[%s7 + $0x17c8] sm:$0xff]
  %v4815 = vld [vmem:[%s7 + $0x17d0] sm:$0xff]
  %v4816 = vld [vmem:[%s7 + $0x17d8] sm:$0xff]
  %v4817 = vld [vmem:[%s7 + $0x17e0] sm:$0xff]
  %v4818 = vld [vmem:[%s7 + $0x17e8] sm:$0xff]
  %v4819 = vld [vmem:[%s7 + $0x17f0] sm:$0xff]
  %v4820 = vld [vmem:[%s7 + $0x17f8] sm:$0xff]
  %v4821 = vld [vmem:[%s7 + $0x1800] sm:$0xff]
  %v4822 = vld [vmem:[%s7 + $0x1808] sm:$0xff]
  %v4823 = vld [vmem:[%s7 + $0x1810] sm:$0xff]
  %v4824 = vld [vmem:[%s7 + $0x1818] sm:$0xff]
  %v4825 = vld [vmem:[%s7 + $0x1820] sm:$0xff]
  %v4826 = vld [vmem:[%s7 + $0x1828] sm:$0xff]
  %v4827 = vld [vmem:[%s7 + $0x1830] sm:$0xff]
  %v4828 = vld [vmem:[%s7 + $0x1838] sm:$0xff]
  %v4829 = vld [vmem:[%s7 + $0x1840] sm:$0xff]
  %v4830 = vld [vmem:[%s7 + $0x1848] sm:$0xff]
  %v4831 = vld [vmem:[%s7 + $0x1850] sm:$0xff]
  %v4832 = vld [vmem:[%s7 + $0x1858] sm:$0xff]
  %v4833 = vld [vmem:[%s7 + $0x1860] sm:$0xff]
  %v4834 = vld [vmem:[%s7 + $0x1868] sm:$0xff]
  %v4835 = vld [vmem:[%s7 + $0x1870] sm:$0xff]
  %v4836 = vld [vmem:[%s7 + $0x1878] sm:$0xff]
  %v4837 = vld [vmem:[%s7 + $0x1880] sm:$0xff]
  %v4838 = vld [vmem:[%s7 + $0x1888] sm:$0xff]
  %v4839 = vld [vmem:[%s7 + $0x1890] sm:$0xff]
  %v4840 = vld [vmem:[%s7 + $0x1898] sm:$0xff]
  %v4841 = vld [vmem:[%s7 + $0x18a0] sm:$0xff]
  %v4842 = vld [vmem:[%s7 + $0x18a8] sm:$0xff]
  %v4843 = vld [vmem:[%s7 + $0x18b0] sm:$0xff]
  %v4844 = vld [vmem:[%s7 + $0x18b8] sm:$0xff]
  %v4845 = vld [vmem:[%s7 + $0x18c0] sm:$0xff]
  %v4846 = vld [vmem:[%s7 + $0x18c8] sm:$0xff]
  %v4847 = vld [vmem:[%s7 + $0x18d0] sm:$0xff]
  %v4848 = vld [vmem:[%s7 + $0x18d8] sm:$0xff]
  %v4849 = vld [vmem:[%s7 + $0x18e0] sm:$0xff]
  %v4850 = vld [vmem:[%s7 + $0x18e8] sm:$0xff]
  %v4851 = vld [vmem:[%s7 + $0x18f0] sm:$0xff]
  %v4852 = vld [vmem:[%s7 + $0x18f8] sm:$0xff]
  %v4853 = vld [vmem:[%s7 + $0x1900] sm:$0xff]
  %v4854 = vld [vmem:[%s7 + $0x1908] sm:$0xff]
  %v4855 = vld [vmem:[%s7 + $0x1910] sm:$0xff]
  %v4856 = vld [vmem:[%s7 + $0x1918] sm:$0xff]
  %v4857 = vld [vmem:[%s7 + $0x1920] sm:$0xff]
  %v4858 = vld [vmem:[%s7 + $0x1928] sm:$0xff]
  %v4859 = vld [vmem:[%s7 + $0x1930] sm:$0xff]
  %v4860 = vld [vmem:[%s7 + $0x1938] sm:$0xff]
  %v4861 = vld [vmem:[%s7 + $0x1940] sm:$0xff]
  %v4862 = vld [vmem:[%s7 + $0x1948] sm:$0xff]
  %v4863 = vld [vmem:[%s7 + $0x1950] sm:$0xff]
  %v4864 = vld [vmem:[%s7 + $0x1958] sm:$0xff]
  %v4865 = vld [vmem:[%s7 + $0x1960] sm:$0xff]
  %v4866 = vld [vmem:[%s7 + $0x1968] sm:$0xff]
  %v4867 = vld [vmem:[%s7 + $0x1970] sm:$0xff]
  %v4868 = vld [vmem:[%s7 + $0x1978] sm:$0xff]
  %v4869 = vld [vmem:[%s7 + $0x1980] sm:$0xff]
  %v4870 = vld [vmem:[%s7 + $0x1988] sm:$0xff]
  %v4871 = vld [vmem:[%s7 + $0x1990] sm:$0xff]
  %v4872 = vld [vmem:[%s7 + $0x1998] sm:$0xff]
  %v4873 = vld [vmem:[%s7 + $0x19a0] sm:$0xff]
  %v4874 = vld [vmem:[%s7 + $0x19a8] sm:$0xff]
  %v4875 = vld [vmem:[%s7 + $0x19b0] sm:$0xff]
  %v4876 = vld [vmem:[%s7 + $0x19b8] sm:$0xff]
  %v4877 = vld [vmem:[%s7 + $0x19c0] sm:$0xff]
  %v4878 = vld [vmem:[%s7 + $0x19c8] sm:$0xff]
  %v4879 = vld [vmem:[%s7 + $0x19d0] sm:$0xff]
  %v4880 = vld [vmem:[%s7 + $0x19d8] sm:$0xff]
  %v4881 = vld [vmem:[%s7 + $0x19e0] sm:$0xff]
  %v4882 = vld [vmem:[%s7 + $0x19e8] sm:$0xff]
  %v4883 = vld [vmem:[%s7 + $0x19f0] sm:$0xff]
  %v4884 = vld [vmem:[%s7 + $0x19f8] sm:$0xff]
  %v4885 = vld [vmem:[%s7 + $0x1a00] sm:$0xff]
  %v4886 = vld [vmem:[%s7 + $0x1a08] sm:$0xff]
  %v4887 = vld [vmem:[%s7 + $0x1a10] sm:$0xff]
  %v4888 = vld [vmem:[%s7 + $0x1a18] sm:$0xff]
  %v4889 = vld [vmem:[%s7 + $0x1a20] sm:$0xff]
  %v4890 = vld [vmem:[%s7 + $0x1a28] sm:$0xff]
  %v4891 = vld [vmem:[%s7 + $0x1a30] sm:$0xff]
  %v4892 = vld [vmem:[%s7 + $0x1a38] sm:$0xff]
  %v4893 = vld [vmem:[%s7 + $0x1a40] sm:$0xff]
  %v4894 = vld [vmem:[%s7 + $0x1a48] sm:$0xff]
  %v4895 = vld [vmem:[%s7 + $0x1a50] sm:$0xff]
  %v4896 = vld [vmem:[%s7 + $0x1a58] sm:$0xff]
  %v4897 = vld [vmem:[%s7 + $0x1a60] sm:$0xff]
  %v4898 = vld [vmem:[%s7 + $0x1a68] sm:$0xff]
  %v4899 = vld [vmem:[%s7 + $0x1a70] sm:$0xff]
  %v4900 = vld [vmem:[%s7 + $0x1a78] sm:$0xff]
  %v4901 = vld [vmem:[%s7 + $0x1a80] sm:$0xff]
  %v4902 = vld [vmem:[%s7 + $0x1a88] sm:$0xff]
  %v4903 = vld [vmem:[%s7 + $0x1a90] sm:$0xff]
  %v4904 = vld [vmem:[%s7 + $0x1a98] sm:$0xff]
  %v4905 = vld [vmem:[%s7 + $0x1aa0] sm:$0xff]
  %v4906 = vld [vmem:[%s7 + $0x1aa8] sm:$0xff]
  %v4907 = vld [vmem:[%s7 + $0x1ab0] sm:$0xff]
  %v4908 = vld [vmem:[%s7 + $0x1ab8] sm:$0xff]
  %v4909 = vld [vmem:[%s7 + $0x1ac0] sm:$0xff]
  %v4910 = vld [vmem:[%s7 + $0x1ac8] sm:$0xff]
  %v4911 = vld [vmem:[%s7 + $0x1ad0] sm:$0xff]
  %v4912 = vld [vmem:[%s7 + $0x1ad8] sm:$0xff]
  %v4913 = vld [vmem:[%s7 + $0x1ae0] sm:$0xff]
  %v4914 = vld [vmem:[%s7 + $0x1ae8] sm:$0xff]
  %v4915 = vld [vmem:[%s7 + $0x1af0] sm:$0xff]
  %v4916 = vld [vmem:[%s7 + $0x1af8] sm:$0xff]
  %v4917 = vld [vmem:[%s7 + $0x1b00] sm:$0xff]
  %v4918 = vld [vmem:[%s7 + $0x1b08] sm:$0xff]
  %v4919 = vld [vmem:[%s7 + $0x1b10] sm:$0xff]
  %v4920 = vld [vmem:[%s7 + $0x1b18] sm:$0xff]
  %v4921 = vld [vmem:[%s7 + $0x1b20] sm:$0xff]
  %v4922 = vld [vmem:[%s7 + $0x1b28] sm:$0xff]
  %v4923 = vld [vmem:[%s7 + $0x1b30] sm:$0xff]
  %v4924 = vld [vmem:[%s7 + $0x1b38] sm:$0xff]
  %v4925 = vld [vmem:[%s7 + $0x1b40] sm:$0xff]
  %v4926 = vld [vmem:[%s7 + $0x1b48] sm:$0xff]
  %v4927 = vld [vmem:[%s7 + $0x1b50] sm:$0xff]
  %v4928 = vld [vmem:[%s7 + $0x1b58] sm:$0xff]
  %v4929 = vld [vmem:[%s7 + $0x1b60] sm:$0xff]
  %v4930 = vld [vmem:[%s7 + $0x1b68] sm:$0xff]
  %v4931 = vld [vmem:[%s7 + $0x1b70] sm:$0xff]
  %v4932 = vld [vmem:[%s7 + $0x1b78] sm:$0xff]
  %v4933 = vld [vmem:[%s7 + $0x1b80] sm:$0xff]
  %v4934 = vld [vmem:[%s7 + $0x1b88] sm:$0xff]
  %v4935 = vld [vmem:[%s7 + $0x1b90] sm:$0xff]
  %v4936 = vld [vmem:[%s7 + $0x1b98] sm:$0xff]
  %v4937 = vld [vmem:[%s7 + $0x1ba0] sm:$0xff]
  %v4938 = vld [vmem:[%s7 + $0x1ba8] sm:$0xff]
  %v4939 = vld [vmem:[%s7 + $0x1bb0] sm:$0xff]
  %v4940 = vld [vmem:[%s7 + $0x1bb8] sm:$0xff]
  %v4941 = vld [vmem:[%s7 + $0x1bc0] sm:$0xff]
  %v4942 = vld [vmem:[%s7 + $0x1bc8] sm:$0xff]
  %v4943 = vld [vmem:[%s7 + $0x1bd0] sm:$0xff]
  %v4944 = vld [vmem:[%s7 + $0x1bd8] sm:$0xff]
  %v4945 = vld [vmem:[%s7 + $0x1be0] sm:$0xff]
  %v4946 = vld [vmem:[%s7 + $0x1be8] sm:$0xff]
  %v4947 = vld [vmem:[%s7 + $0x1bf0] sm:$0xff]
  %v4948 = vld [vmem:[%s7 + $0x1bf8] sm:$0xff]
  %v4949 = vld [vmem:[%s7 + $0x1c00] sm:$0xff]
  %v4950 = vld [vmem:[%s7 + $0x1c08] sm:$0xff]
  %v4951 = vld [vmem:[%s7 + $0x1c10] sm:$0xff]
  %v4952 = vld [vmem:[%s7 + $0x1c18] sm:$0xff]
  %v4953 = vld [vmem:[%s7 + $0x1c20] sm:$0xff]
  %v4954 = vld [vmem:[%s7 + $0x1c28] sm:$0xff]
  %v4955 = vld [vmem:[%s7 + $0x1c30] sm:$0xff]
  %v4956 = vld [vmem:[%s7 + $0x1c38] sm:$0xff]
  %v4957 = vld [vmem:[%s7 + $0x1c40] sm:$0xff]
  %v4958 = vld [vmem:[%s7 + $0x1c48] sm:$0xff]
  %v4959 = vld [vmem:[%s7 + $0x1c50] sm:$0xff]
  %v4960 = vld [vmem:[%s7 + $0x1c58] sm:$0xff]
  %v4961 = vld [vmem:[%s7 + $0x1c60] sm:$0xff]
  %v4962 = vld [vmem:[%s7 + $0x1c68] sm:$0xff]
  %v4963 = vld [vmem:[%s7 + $0x1c70] sm:$0xff]
  %v4964 = vld [vmem:[%s7 + $0x1c78] sm:$0xff]
  %v4965 = vld [vmem:[%s7 + $0x1c80] sm:$0xff]
  %v4966 = vld [vmem:[%s7 + $0x1c88] sm:$0xff]
  %v4967 = vld [vmem:[%s7 + $0x1c90] sm:$0xff]
  %v4968 = vld [vmem:[%s7 + $0x1c98] sm:$0xff]
  %v4969 = vld [vmem:[%s7 + $0x1ca0] sm:$0xff]
  %v4970 = vld [vmem:[%s7 + $0x1ca8] sm:$0xff]
  %v4971 = vld [vmem:[%s7 + $0x1cb0] sm:$0xff]
  %v4972 = vld [vmem:[%s7 + $0x1cb8] sm:$0xff]
  %v4973 = vld [vmem:[%s7 + $0x1cc0] sm:$0xff]
  %v4974 = vld [vmem:[%s7 + $0x1cc8] sm:$0xff]
  %v4975 = vld [vmem:[%s7 + $0x1cd0] sm:$0xff]
  %v4976 = vld [vmem:[%s7 + $0x1cd8] sm:$0xff]
  %v4977 = vld [vmem:[%s7 + $0x1ce0] sm:$0xff]
  %v4978 = vld [vmem:[%s7 + $0x1ce8] sm:$0xff]
  %v4979 = vld [vmem:[%s7 + $0x1cf0] sm:$0xff]
  %v4980 = vld [vmem:[%s7 + $0x1cf8] sm:$0xff]
  %v4981 = vld [vmem:[%s7 + $0x1d00] sm:$0xff]
  %v4982 = vld [vmem:[%s7 + $0x1d08] sm:$0xff]
  %v4983 = vld [vmem:[%s7 + $0x1d10] sm:$0xff]
  %v4984 = vld [vmem:[%s7 + $0x1d18] sm:$0xff]
  %v4985 = vld [vmem:[%s7 + $0x1d20] sm:$0xff]
  %v4986 = vld [vmem:[%s7 + $0x1d28] sm:$0xff]
  %v4987 = vld [vmem:[%s7 + $0x1d30] sm:$0xff]
  %v4988 = vld [vmem:[%s7 + $0x1d38] sm:$0xff]
  %v4989 = vld [vmem:[%s7 + $0x1d40] sm:$0xff]
  %v4990 = vld [vmem:[%s7 + $0x1d48] sm:$0xff]
  %v4991 = vld [vmem:[%s7 + $0x1d50] sm:$0xff]
  %v4992 = vld [vmem:[%s7 + $0x1d58] sm:$0xff]
  %v4993 = vld [vmem:[%s7 + $0x1d60] sm:$0xff]
  %v4994 = vld [vmem:[%s7 + $0x1d68] sm:$0xff]
  %v4995 = vld [vmem:[%s7 + $0x1d70] sm:$0xff]
  %v4996 = vld [vmem:[%s7 + $0x1d78] sm:$0xff]
  %v4997 = vld [vmem:[%s7 + $0x1d80] sm:$0xff]
  %v4998 = vld [vmem:[%s7 + $0x1d88] sm:$0xff]
  %v4999 = vld [vmem:[%s7 + $0x1d90] sm:$0xff]
  %v5000 = vld [vmem:[%s7 + $0x1d98] sm:$0xff]
  %v5001 = vld [vmem:[%s7 + $0x1da0] sm:$0xff]
  %v5002 = vld [vmem:[%s7 + $0x1da8] sm:$0xff]
  %v5003 = vld [vmem:[%s7 + $0x1db0] sm:$0xff]
  %v5004 = vld [vmem:[%s7 + $0x1db8] sm:$0xff]
  %v5005 = vld [vmem:[%s7 + $0x1dc0] sm:$0xff]
  %v5006 = vld [vmem:[%s7 + $0x1dc8] sm:$0xff]
  %v5007 = vld [vmem:[%s7 + $0x1dd0] sm:$0xff]
  %v5008 = vld [vmem:[%s7 + $0x1dd8] sm:$0xff]
  %v5009 = vld [vmem:[%s7 + $0x1de0] sm:$0xff]
  %v5010 = vld [vmem:[%s7 + $0x1de8] sm:$0xff]
  %v5011 = vld [vmem:[%s7 + $0x1df0] sm:$0xff]
  %v5012 = vld [vmem:[%s7 + $0x1df8] sm:$0xff]
  %v5013 = vld [vmem:[%s7 + $0x1e00] sm:$0xff]
  %v5014 = vld [vmem:[%s7 + $0x1e08] sm:$0xff]
  %v5015 = vld [vmem:[%s7 + $0x1e10] sm:$0xff]
  %v5016 = vld [vmem:[%s7 + $0x1e18] sm:$0xff]
  %v5017 = vld [vmem:[%s7 + $0x1e20] sm:$0xff]
  %v5018 = vld [vmem:[%s7 + $0x1e28] sm:$0xff]
  %v5019 = vld [vmem:[%s7 + $0x1e30] sm:$0xff]
  %v5020 = vld [vmem:[%s7 + $0x1e38] sm:$0xff]
  %v5021 = vld [vmem:[%s7 + $0x1e40] sm:$0xff]
  %v5022 = vld [vmem:[%s7 + $0x1e48] sm:$0xff]
  %v5023 = vld [vmem:[%s7 + $0x1e50] sm:$0xff]
  %v5024 = vld [vmem:[%s7 + $0x1e58] sm:$0xff]
  %v5025 = vld [vmem:[%s7 + $0x1e60] sm:$0xff]
  %v5026 = vld [vmem:[%s7 + $0x1e68] sm:$0xff]
  %v5027 = vld [vmem:[%s7 + $0x1e70] sm:$0xff]
  %v5028 = vld [vmem:[%s7 + $0x1e78] sm:$0xff]
  %v5029 = vld [vmem:[%s7 + $0x1e80] sm:$0xff]
  %v5030 = vld [vmem:[%s7 + $0x1e88] sm:$0xff]
  %v5031 = vld [vmem:[%s7 + $0x1e90] sm:$0xff]
  %v5032 = vld [vmem:[%s7 + $0x1e98] sm:$0xff]
  %v5033 = vld [vmem:[%s7 + $0x1ea0] sm:$0xff]
  %v5034 = vld [vmem:[%s7 + $0x1ea8] sm:$0xff]
  %v5035 = vld [vmem:[%s7 + $0x1eb0] sm:$0xff]
  %v5036 = vld [vmem:[%s7 + $0x1eb8] sm:$0xff]
  %v5037 = vld [vmem:[%s7 + $0x1ec0] sm:$0xff]
  %v5038 = vld [vmem:[%s7 + $0x1ec8] sm:$0xff]
  %v5039 = vld [vmem:[%s7 + $0x1ed0] sm:$0xff]
  %v5040 = vld [vmem:[%s7 + $0x1ed8] sm:$0xff]
  %v5041 = vld [vmem:[%s7 + $0x1ee0] sm:$0xff]
  %v5042 = vld [vmem:[%s7 + $0x1ee8] sm:$0xff]
  %v5043 = vld [vmem:[%s7 + $0x1ef0] sm:$0xff]
  %v5044 = vld [vmem:[%s7 + $0x1ef8] sm:$0xff]
  %v5045 = vld [vmem:[%s7 + $0x1f00] sm:$0xff]
  %v5046 = vld [vmem:[%s7 + $0x1f08] sm:$0xff]
  %v5047 = vld [vmem:[%s7 + $0x1f10] sm:$0xff]
  %v5048 = vld [vmem:[%s7 + $0x1f18] sm:$0xff]
  %v5049 = vld [vmem:[%s7 + $0x1f20] sm:$0xff]
  %v5050 = vld [vmem:[%s7 + $0x1f28] sm:$0xff]
  %v5051 = vld [vmem:[%s7 + $0x1f30] sm:$0xff]
  %v5052 = vld [vmem:[%s7 + $0x1f38] sm:$0xff]
  %v5053 = vld [vmem:[%s7 + $0x1f40] sm:$0xff]
  %v5054 = vld [vmem:[%s7 + $0x1f48] sm:$0xff]
  %v5055 = vld [vmem:[%s7 + $0x1f50] sm:$0xff]
  %v5056 = vld [vmem:[%s7 + $0x1f58] sm:$0xff]
  %v5057 = vld [vmem:[%s7 + $0x1f60] sm:$0xff]
  %v5058 = vld [vmem:[%s7 + $0x1f68] sm:$0xff]
  %v5059 = vld [vmem:[%s7 + $0x1f70] sm:$0xff]
  %v5060 = vld [vmem:[%s7 + $0x1f78] sm:$0xff]
  %v5061 = vld [vmem:[%s7 + $0x1f80] sm:$0xff]
  %v5062 = vld [vmem:[%s7 + $0x1f88] sm:$0xff]
  %v5063 = vld [vmem:[%s7 + $0x1f90] sm:$0xff]
  %v5064 = vld [vmem:[%s7 + $0x1f98] sm:$0xff]
  %v5065 = vld [vmem:[%s7 + $0x1fa0] sm:$0xff]
  %v5066 = vld [vmem:[%s7 + $0x1fa8] sm:$0xff]
  %v5067 = vld [vmem:[%s7 + $0x1fb0] sm:$0xff]
  %v5068 = vld [vmem:[%s7 + $0x1fb8] sm:$0xff]
  %v5069 = vld [vmem:[%s7 + $0x1fc0] sm:$0xff]
  %v5070 = vld [vmem:[%s7 + $0x1fc8] sm:$0xff]
  %v5071 = vld [vmem:[%s7 + $0x1fd0] sm:$0xff]
  %v5072 = vld [vmem:[%s7 + $0x1fd8] sm:$0xff]
  %v5073 = vld [vmem:[%s7 + $0x1fe0] sm:$0xff]
  %v5074 = vld [vmem:[%s7 + $0x1fe8] sm:$0xff]
  %v5075 = vld [vmem:[%s7 + $0x1ff0] sm:$0xff]
  %v5076 = vld [vmem:[%s7 + $0x1ff8] sm:$0xff]
  %v5077 = vld [vmem:[%s8] sm:$0xff]
  %v5079 = vlaneseq
  %v5080 = vshrl.u32 %v5079, 7
  %v5081 = vsub.s32 0, %v5080
  %v5082 = vrot.slane %v5077, %v5081
  %v5083 = vlaneseq
  %v5084 = vshrl.u32 %v5083, 7
  %v5085 = vsub.s32 1, %v5084
  %v5086 = vrot.slane %v5077, %v5085
  %v5087 = vlaneseq
  %v5088 = vshrl.u32 %v5087, 7
  %v5089 = vsub.s32 2, %v5088
  %v5090 = vrot.slane %v5077, %v5089
  %v5091 = vlaneseq
  %v5092 = vshrl.u32 %v5091, 7
  %v5093 = vsub.s32 3, %v5092
  %v5094 = vrot.slane %v5077, %v5093
  %v5095 = vlaneseq
  %v5096 = vshrl.u32 %v5095, 7
  %v5097 = vsub.s32 4, %v5096
  %v5098 = vrot.slane %v5077, %v5097
  %v5099 = vlaneseq
  %v5100 = vshrl.u32 %v5099, 7
  %v5101 = vsub.s32 5, %v5100
  %v5102 = vrot.slane %v5077, %v5101
  %v5103 = vlaneseq
  %v5104 = vshrl.u32 %v5103, 7
  %v5105 = vsub.s32 6, %v5104
  %v5106 = vrot.slane %v5077, %v5105
  %v5107 = vlaneseq
  %v5108 = vshrl.u32 %v5107, 7
  %v5109 = vsub.s32 7, %v5108
  %v5110 = vrot.slane %v5077, %v5109
  %5119 = vmatprep.subr.mxu0 %v4054
  %5120 = vmatpush1.msra.mxu0 %v4053
  %5121 = vmatprep.subr.mxu0 %v4062
  %5122 = vmatpush1.msra.mxu0 %v4061
  %5123 = vmatprep.subr.mxu0 %v4070
  %5124 = vmatpush1.msra.mxu0 %v4069
  %5125 = vmatprep.subr.mxu0 %v4078
  %5126 = vmatpush1.msra.mxu0 %v4077
  %5127 = vmatprep.subr.mxu0 %v4086
  %5128 = vmatpush1.msra.mxu0 %v4085
  %5129 = vmatprep.subr.mxu0 %v4094
  %5130 = vmatpush1.msra.mxu0 %v4093
  %5131 = vmatprep.subr.mxu0 %v4102
  %5132 = vmatpush1.msra.mxu0 %v4101
  %5133 = vmatprep.subr.mxu0 %v4110
  %5134 = vmatpush1.msra.mxu0 %v4109
  %5135 = vmatprep.subr.mxu0 %v4118
  %5136 = vmatpush1.msra.mxu0 %v4117
  %5137 = vmatprep.subr.mxu0 %v4126
  %5138 = vmatpush1.msra.mxu0 %v4125
  %5139 = vmatprep.subr.mxu0 %v4134
  %5140 = vmatpush1.msra.mxu0 %v4133
  %5141 = vmatprep.subr.mxu0 %v4142
  %5142 = vmatpush1.msra.mxu0 %v4141
  %5143 = vmatprep.subr.mxu0 %v4150
  %5144 = vmatpush1.msra.mxu0 %v4149
  %5145 = vmatprep.subr.mxu0 %v4158
  %5146 = vmatpush1.msra.mxu0 %v4157
  %5147 = vmatprep.subr.mxu0 %v4166
  %5148 = vmatpush1.msra.mxu0 %v4165
  %5149 = vmatprep.subr.mxu0 %v4174
  %5150 = vmatpush1.msra.mxu0 %v4173
  %5151 = vmatprep.subr.mxu0 %v4182
  %5152 = vmatpush1.msra.mxu0 %v4181
  %5153 = vmatprep.subr.mxu0 %v4190
  %5154 = vmatpush1.msra.mxu0 %v4189
  %5155 = vmatprep.subr.mxu0 %v4198
  %5156 = vmatpush1.msra.mxu0 %v4197
  %5157 = vmatprep.subr.mxu0 %v4206
  %5158 = vmatpush1.msra.mxu0 %v4205
  %5159 = vmatprep.subr.mxu0 %v4214
  %5160 = vmatpush1.msra.mxu0 %v4213
  %5161 = vmatprep.subr.mxu0 %v4222
  %5162 = vmatpush1.msra.mxu0 %v4221
  %5163 = vmatprep.subr.mxu0 %v4230
  %5164 = vmatpush1.msra.mxu0 %v4229
  %5165 = vmatprep.subr.mxu0 %v4238
  %5166 = vmatpush1.msra.mxu0 %v4237
  %5167 = vmatprep.subr.mxu0 %v4246
  %5168 = vmatpush1.msra.mxu0 %v4245
  %5169 = vmatprep.subr.mxu0 %v4254
  %5170 = vmatpush1.msra.mxu0 %v4253
  %5171 = vmatprep.subr.mxu0 %v4262
  %5172 = vmatpush1.msra.mxu0 %v4261
  %5173 = vmatprep.subr.mxu0 %v4270
  %5174 = vmatpush1.msra.mxu0 %v4269
  %5175 = vmatprep.subr.mxu0 %v4278
  %5176 = vmatpush1.msra.mxu0 %v4277
  %5177 = vmatprep.subr.mxu0 %v4286
  %5178 = vmatpush1.msra.mxu0 %v4285
  %5179 = vmatprep.subr.mxu0 %v4294
  %5180 = vmatpush1.msra.mxu0 %v4293
  %5181 = vmatprep.subr.mxu0 %v4302
  %5182 = vmatpush1.msra.mxu0 %v4301
  %5183 = vmatprep.mubr.f32.mxu0 %v4046
  %5184 = vmatmul.mubr.f32.gmra.mrb[0].mxu0 %v4045
  %v5185 = vpop.f32.mrb[0].mxu0
  %v5186 = vadd.f32 %v5082, %v5185
  %v5187 = vpop.f32.mrb[0].mxu0
  %v5188 = vadd.f32 %v5086, %v5187
  %5189 = vdwg.mxu0
  %5190 = vmatprep.subr.mxu0 %v4310
  %5191 = vmatpush1.msra.mxu0 %v4309
  %5192 = vmatprep.subr.mxu0 %v4318
  %5193 = vmatpush1.msra.mxu0 %v4317
  %5194 = vmatprep.subr.mxu0 %v4326
  %5195 = vmatpush1.msra.mxu0 %v4325
  %5196 = vmatprep.subr.mxu0 %v4334
  %5197 = vmatpush1.msra.mxu0 %v4333
  %5198 = vmatprep.subr.mxu0 %v4342
  %5199 = vmatpush1.msra.mxu0 %v4341
  %5200 = vmatprep.subr.mxu0 %v4350
  %5201 = vmatpush1.msra.mxu0 %v4349
  %5202 = vmatprep.subr.mxu0 %v4358
  %5203 = vmatpush1.msra.mxu0 %v4357
  %5204 = vmatprep.subr.mxu0 %v4366
  %5205 = vmatpush1.msra.mxu0 %v4365
  %5206 = vmatprep.subr.mxu0 %v4374
  %5207 = vmatpush1.msra.mxu0 %v4373
  %5208 = vmatprep.subr.mxu0 %v4382
  %5209 = vmatpush1.msra.mxu0 %v4381
  %5210 = vmatprep.subr.mxu0 %v4390
  %5211 = vmatpush1.msra.mxu0 %v4389
  %5212 = vmatprep.subr.mxu0 %v4398
  %5213 = vmatpush1.msra.mxu0 %v4397
  %5214 = vmatprep.subr.mxu0 %v4406
  %5215 = vmatpush1.msra.mxu0 %v4405
  %5216 = vmatprep.subr.mxu0 %v4414
  %5217 = vmatpush1.msra.mxu0 %v4413
  %5218 = vmatprep.subr.mxu0 %v4422
  %5219 = vmatpush1.msra.mxu0 %v4421
  %5220 = vmatprep.subr.mxu0 %v4430
  %5221 = vmatpush1.msra.mxu0 %v4429
  %5222 = vmatprep.subr.mxu0 %v4438
  %5223 = vmatpush1.msra.mxu0 %v4437
  %5224 = vmatprep.subr.mxu0 %v4446
  %5225 = vmatpush1.msra.mxu0 %v4445
  %5226 = vmatprep.subr.mxu0 %v4454
  %5227 = vmatpush1.msra.mxu0 %v4453
  %5228 = vmatprep.subr.mxu0 %v4462
  %5229 = vmatpush1.msra.mxu0 %v4461
  %5230 = vmatprep.subr.mxu0 %v4470
  %5231 = vmatpush1.msra.mxu0 %v4469
  %5232 = vmatprep.subr.mxu0 %v4478
  %5233 = vmatpush1.msra.mxu0 %v4477
  %5234 = vmatprep.subr.mxu0 %v4486
  %5235 = vmatpush1.msra.mxu0 %v4485
  %5236 = vmatprep.subr.mxu0 %v4494
  %5237 = vmatpush1.msra.mxu0 %v4493
  %5238 = vmatprep.subr.mxu0 %v4502
  %5239 = vmatpush1.msra.mxu0 %v4501
  %5240 = vmatprep.subr.mxu0 %v4510
  %5241 = vmatpush1.msra.mxu0 %v4509
  %5242 = vmatprep.subr.mxu0 %v4518
  %5243 = vmatpush1.msra.mxu0 %v4517
  %5244 = vmatprep.subr.mxu0 %v4526
  %5245 = vmatpush1.msra.mxu0 %v4525
  %5246 = vmatprep.subr.mxu0 %v4534
  %5247 = vmatpush1.msra.mxu0 %v4533
  %5248 = vmatprep.subr.mxu0 %v4542
  %5249 = vmatpush1.msra.mxu0 %v4541
  %5250 = vmatprep.subr.mxu0 %v4550
  %5251 = vmatpush1.msra.mxu0 %v4549
  %5252 = vmatprep.subr.mxu0 %v4558
  %5253 = vmatpush1.msra.mxu0 %v4557
  %5254 = vmatprep.mubr.f32.mxu0 %v4048
  %5255 = vmatmul.mubr.f32.gmra.mrb[0].mxu0 %v4047
  %v5256 = vpop.f32.mrb[0].mxu0
  %v5257 = vadd.f32 %v5186, %v5256
  %v5258 = vpop.f32.mrb[0].mxu0
  %v5259 = vadd.f32 %v5188, %v5258
  %5260 = vdwg.mxu0
  %5261 = vmatprep.subr.mxu0 %v4566
  %5262 = vmatpush1.msra.mxu0 %v4565
  %5263 = vmatprep.subr.mxu0 %v4574
  %5264 = vmatpush1.msra.mxu0 %v4573
  %5265 = vmatprep.subr.mxu0 %v4582
  %5266 = vmatpush1.msra.mxu0 %v4581
  %5267 = vmatprep.subr.mxu0 %v4590
  %5268 = vmatpush1.msra.mxu0 %v4589
  %5269 = vmatprep.subr.mxu0 %v4598
  %5270 = vmatpush1.msra.mxu0 %v4597
  %5271 = vmatprep.subr.mxu0 %v4606
  %5272 = vmatpush1.msra.mxu0 %v4605
  %5273 = vmatprep.subr.mxu0 %v4614
  %5274 = vmatpush1.msra.mxu0 %v4613
  %5275 = vmatprep.subr.mxu0 %v4622
  %5276 = vmatpush1.msra.mxu0 %v4621
  %5277 = vmatprep.subr.mxu0 %v4630
  %5278 = vmatpush1.msra.mxu0 %v4629
  %5279 = vmatprep.subr.mxu0 %v4638
  %5280 = vmatpush1.msra.mxu0 %v4637
  %5281 = vmatprep.subr.mxu0 %v4646
  %5282 = vmatpush1.msra.mxu0 %v4645
  %5283 = vmatprep.subr.mxu0 %v4654
  %5284 = vmatpush1.msra.mxu0 %v4653
  %5285 = vmatprep.subr.mxu0 %v4662
  %5286 = vmatpush1.msra.mxu0 %v4661
  %5287 = vmatprep.subr.mxu0 %v4670
  %5288 = vmatpush1.msra.mxu0 %v4669
  %5289 = vmatprep.subr.mxu0 %v4678
  %5290 = vmatpush1.msra.mxu0 %v4677
  %5291 = vmatprep.subr.mxu0 %v4686
  %5292 = vmatpush1.msra.mxu0 %v4685
  %5293 = vmatprep.subr.mxu0 %v4694
  %5294 = vmatpush1.msra.mxu0 %v4693
  %5295 = vmatprep.subr.mxu0 %v4702
  %5296 = vmatpush1.msra.mxu0 %v4701
  %5297 = vmatprep.subr.mxu0 %v4710
  %5298 = vmatpush1.msra.mxu0 %v4709
  %5299 = vmatprep.subr.mxu0 %v4718
  %5300 = vmatpush1.msra.mxu0 %v4717
  %5301 = vmatprep.subr.mxu0 %v4726
  %5302 = vmatpush1.msra.mxu0 %v4725
  %5303 = vmatprep.subr.mxu0 %v4734
  %5304 = vmatpush1.msra.mxu0 %v4733
  %5305 = vmatprep.subr.mxu0 %v4742
  %5306 = vmatpush1.msra.mxu0 %v4741
  %5307 = vmatprep.subr.mxu0 %v4750
  %5308 = vmatpush1.msra.mxu0 %v4749
  %5309 = vmatprep.subr.mxu0 %v4758
  %5310 = vmatpush1.msra.mxu0 %v4757
  %5311 = vmatprep.subr.mxu0 %v4766
  %5312 = vmatpush1.msra.mxu0 %v4765
  %5313 = vmatprep.subr.mxu0 %v4774
  %5314 = vmatpush1.msra.mxu0 %v4773
  %5315 = vmatprep.subr.mxu0 %v4782
  %5316 = vmatpush1.msra.mxu0 %v4781
  %5317 = vmatprep.subr.mxu0 %v4790
  %5318 = vmatpush1.msra.mxu0 %v4789
  %5319 = vmatprep.subr.mxu0 %v4798
  %5320 = vmatpush1.msra.mxu0 %v4797
  %5321 = vmatprep.subr.mxu0 %v4806
  %5322 = vmatpush1.msra.mxu0 %v4805
  %5323 = vmatprep.subr.mxu0 %v4814
  %5324 = vmatpush1.msra.mxu0 %v4813
  %5325 = vmatprep.mubr.f32.mxu0 %v4050
  %5326 = vmatmul.mubr.f32.gmra.mrb[0].mxu0 %v4049
  %v5327 = vpop.f32.mrb[0].mxu0
  %v5328 = vadd.f32 %v5257, %v5327
  %v5329 = vpop.f32.mrb[0].mxu0
  %v5330 = vadd.f32 %v5259, %v5329
  %5331 = vdwg.mxu0
  %5332 = vmatprep.subr.mxu0 %v4822
  %5333 = vmatpush1.msra.mxu0 %v4821
  %5334 = vmatprep.subr.mxu0 %v4830
  %5335 = vmatpush1.msra.mxu0 %v4829
  %5336 = vmatprep.subr.mxu0 %v4838
  %5337 = vmatpush1.msra.mxu0 %v4837
  %5338 = vmatprep.subr.mxu0 %v4846
  %5339 = vmatpush1.msra.mxu0 %v4845
  %5340 = vmatprep.subr.mxu0 %v4854
  %5341 = vmatpush1.msra.mxu0 %v4853
  %5342 = vmatprep.subr.mxu0 %v4862
  %5343 = vmatpush1.msra.mxu0 %v4861
  %5344 = vmatprep.subr.mxu0 %v4870
  %5345 = vmatpush1.msra.mxu0 %v4869
  %5346 = vmatprep.subr.mxu0 %v4878
  %5347 = vmatpush1.msra.mxu0 %v4877
  %5348 = vmatprep.subr.mxu0 %v4886
  %5349 = vmatpush1.msra.mxu0 %v4885
  %5350 = vmatprep.subr.mxu0 %v4894
  %5351 = vmatpush1.msra.mxu0 %v4893
  %5352 = vmatprep.subr.mxu0 %v4902
  %5353 = vmatpush1.msra.mxu0 %v4901
  %5354 = vmatprep.subr.mxu0 %v4910
  %5355 = vmatpush1.msra.mxu0 %v4909
  %5356 = vmatprep.subr.mxu0 %v4918
  %5357 = vmatpush1.msra.mxu0 %v4917
  %5358 = vmatprep.subr.mxu0 %v4926
  %5359 = vmatpush1.msra.mxu0 %v4925
  %5360 = vmatprep.subr.mxu0 %v4934
  %5361 = vmatpush1.msra.mxu0 %v4933
  %5362 = vmatprep.subr.mxu0 %v4942
  %5363 = vmatpush1.msra.mxu0 %v4941
  %5364 = vmatprep.subr.mxu0 %v4950
  %5365 = vmatpush1.msra.mxu0 %v4949
  %5366 = vmatprep.subr.mxu0 %v4958
  %5367 = vmatpush1.msra.mxu0 %v4957
  %5368 = vmatprep.subr.mxu0 %v4966
  %5369 = vmatpush1.msra.mxu0 %v4965
  %5370 = vmatprep.subr.mxu0 %v4974
  %5371 = vmatpush1.msra.mxu0 %v4973
  %5372 = vmatprep.subr.mxu0 %v4982
  %5373 = vmatpush1.msra.mxu0 %v4981
  %5374 = vmatprep.subr.mxu0 %v4990
  %5375 = vmatpush1.msra.mxu0 %v4989
  %5376 = vmatprep.subr.mxu0 %v4998
  %5377 = vmatpush1.msra.mxu0 %v4997
  %5378 = vmatprep.subr.mxu0 %v5006
  %5379 = vmatpush1.msra.mxu0 %v5005
  %5380 = vmatprep.subr.mxu0 %v5014
  %5381 = vmatpush1.msra.mxu0 %v5013
  %5382 = vmatprep.subr.mxu0 %v5022
  %5383 = vmatpush1.msra.mxu0 %v5021
  %5384 = vmatprep.subr.mxu0 %v5030
  %5385 = vmatpush1.msra.mxu0 %v5029
  %5386 = vmatprep.subr.mxu0 %v5038
  %5387 = vmatpush1.msra.mxu0 %v5037
  %5388 = vmatprep.subr.mxu0 %v5046
  %5389 = vmatpush1.msra.mxu0 %v5045
  %5390 = vmatprep.subr.mxu0 %v5054
  %5391 = vmatpush1.msra.mxu0 %v5053
  %5392 = vmatprep.subr.mxu0 %v5062
  %5393 = vmatpush1.msra.mxu0 %v5061
  %5394 = vmatprep.subr.mxu0 %v5070
  %5395 = vmatpush1.msra.mxu0 %v5069
  %5396 = vmatprep.mubr.f32.mxu0 %v4052
  %5397 = vmatmul.mubr.f32.gmra.mrb[0].mxu0 %v4051
  %v5398 = vpop.f32.mrb[0].mxu0
  %v5399 = vadd.f32 %v5328, %v5398
  %v5400 = vpop.f32.mrb[0].mxu0
  %v5401 = vadd.f32 %v5330, %v5400
  %5402 = vdwg.mxu0
  %5403 = vmatprep.subr.mxu0 %v4056
  %5404 = vmatpush1.msra.mxu0 %v4055
  %5405 = vmatprep.subr.mxu0 %v4064
  %5406 = vmatpush1.msra.mxu0 %v4063
  %5407 = vmatprep.subr.mxu0 %v4072
  %5408 = vmatpush1.msra.mxu0 %v4071
  %5409 = vmatprep.subr.mxu0 %v4080
  %5410 = vmatpush1.msra.mxu0 %v4079
  %5411 = vmatprep.subr.mxu0 %v4088
  %5412 = vmatpush1.msra.mxu0 %v4087
  %5413 = vmatprep.subr.mxu0 %v4096
  %5414 = vmatpush1.msra.mxu0 %v4095
  %5415 = vmatprep.subr.mxu0 %v4104
  %5416 = vmatpush1.msra.mxu0 %v4103
  %5417 = vmatprep.subr.mxu0 %v4112
  %5418 = vmatpush1.msra.mxu0 %v4111
  %5419 = vmatprep.subr.mxu0 %v4120
  %5420 = vmatpush1.msra.mxu0 %v4119
  %5421 = vmatprep.subr.mxu0 %v4128
  %5422 = vmatpush1.msra.mxu0 %v4127
  %5423 = vmatprep.subr.mxu0 %v4136
  %5424 = vmatpush1.msra.mxu0 %v4135
  %5425 = vmatprep.subr.mxu0 %v4144
  %5426 = vmatpush1.msra.mxu0 %v4143
  %5427 = vmatprep.subr.mxu0 %v4152
  %5428 = vmatpush1.msra.mxu0 %v4151
  %5429 = vmatprep.subr.mxu0 %v4160
  %5430 = vmatpush1.msra.mxu0 %v4159
  %5431 = vmatprep.subr.mxu0 %v4168
  %5432 = vmatpush1.msra.mxu0 %v4167
  %5433 = vmatprep.subr.mxu0 %v4176
  %5434 = vmatpush1.msra.mxu0 %v4175
  %5435 = vmatprep.subr.mxu0 %v4184
  %5436 = vmatpush1.msra.mxu0 %v4183
  %5437 = vmatprep.subr.mxu0 %v4192
  %5438 = vmatpush1.msra.mxu0 %v4191
  %5439 = vmatprep.subr.mxu0 %v4200
  %5440 = vmatpush1.msra.mxu0 %v4199
  %5441 = vmatprep.subr.mxu0 %v4208
  %5442 = vmatpush1.msra.mxu0 %v4207
  %5443 = vmatprep.subr.mxu0 %v4216
  %5444 = vmatpush1.msra.mxu0 %v4215
  %5445 = vmatprep.subr.mxu0 %v4224
  %5446 = vmatpush1.msra.mxu0 %v4223
  %5447 = vmatprep.subr.mxu0 %v4232
  %5448 = vmatpush1.msra.mxu0 %v4231
  %5449 = vmatprep.subr.mxu0 %v4240
  %5450 = vmatpush1.msra.mxu0 %v4239
  %5451 = vmatprep.subr.mxu0 %v4248
  %5452 = vmatpush1.msra.mxu0 %v4247
  %5453 = vmatprep.subr.mxu0 %v4256
  %5454 = vmatpush1.msra.mxu0 %v4255
  %5455 = vmatprep.subr.mxu0 %v4264
  %5456 = vmatpush1.msra.mxu0 %v4263
  %5457 = vmatprep.subr.mxu0 %v4272
  %5458 = vmatpush1.msra.mxu0 %v4271
  %5459 = vmatprep.subr.mxu0 %v4280
  %5460 = vmatpush1.msra.mxu0 %v4279
  %5461 = vmatprep.subr.mxu0 %v4288
  %5462 = vmatpush1.msra.mxu0 %v4287
  %5463 = vmatprep.subr.mxu0 %v4296
  %5464 = vmatpush1.msra.mxu0 %v4295
  %5465 = vmatprep.subr.mxu0 %v4304
  %5466 = vmatpush1.msra.mxu0 %v4303
  %5467 = vmatprep.mubr.f32.mxu0 %v4046
  %5468 = vmatmul.mubr.f32.gmra.mrb[0].mxu0 %v4045
  %v5469 = vpop.f32.mrb[0].mxu0
  %v5470 = vadd.f32 %v5090, %v5469
  %v5471 = vpop.f32.mrb[0].mxu0
  %v5472 = vadd.f32 %v5094, %v5471
  %5473 = vdwg.mxu0
  %5474 = vmatprep.subr.mxu0 %v4312
  %5475 = vmatpush1.msra.mxu0 %v4311
  %5476 = vmatprep.subr.mxu0 %v4320
  %5477 = vmatpush1.msra.mxu0 %v4319
  %5478 = vmatprep.subr.mxu0 %v4328
  %5479 = vmatpush1.msra.mxu0 %v4327
  %5480 = vmatprep.subr.mxu0 %v4336
  %5481 = vmatpush1.msra.mxu0 %v4335
  %5482 = vmatprep.subr.mxu0 %v4344
  %5483 = vmatpush1.msra.mxu0 %v4343
  %5484 = vmatprep.subr.mxu0 %v4352
  %5485 = vmatpush1.msra.mxu0 %v4351
  %5486 = vmatprep.subr.mxu0 %v4360
  %5487 = vmatpush1.msra.mxu0 %v4359
  %5488 = vmatprep.subr.mxu0 %v4368
  %5489 = vmatpush1.msra.mxu0 %v4367
  %5490 = vmatprep.subr.mxu0 %v4376
  %5491 = vmatpush1.msra.mxu0 %v4375
  %5492 = vmatprep.subr.mxu0 %v4384
  %5493 = vmatpush1.msra.mxu0 %v4383
  %5494 = vmatprep.subr.mxu0 %v4392
  %5495 = vmatpush1.msra.mxu0 %v4391
  %5496 = vmatprep.subr.mxu0 %v4400
  %5497 = vmatpush1.msra.mxu0 %v4399
  %5498 = vmatprep.subr.mxu0 %v4408
  %5499 = vmatpush1.msra.mxu0 %v4407
  %5500 = vmatprep.subr.mxu0 %v4416
  %5501 = vmatpush1.msra.mxu0 %v4415
  %5502 = vmatprep.subr.mxu0 %v4424
  %5503 = vmatpush1.msra.mxu0 %v4423
  %5504 = vmatprep.subr.mxu0 %v4432
  %5505 = vmatpush1.msra.mxu0 %v4431
  %5506 = vmatprep.subr.mxu0 %v4440
  %5507 = vmatpush1.msra.mxu0 %v4439
  %5508 = vmatprep.subr.mxu0 %v4448
  %5509 = vmatpush1.msra.mxu0 %v4447
  %5510 = vmatprep.subr.mxu0 %v4456
  %5511 = vmatpush1.msra.mxu0 %v4455
  %5512 = vmatprep.subr.mxu0 %v4464
  %5513 = vmatpush1.msra.mxu0 %v4463
  %5514 = vmatprep.subr.mxu0 %v4472
  %5515 = vmatpush1.msra.mxu0 %v4471
  %5516 = vmatprep.subr.mxu0 %v4480
  %5517 = vmatpush1.msra.mxu0 %v4479
  %5518 = vmatprep.subr.mxu0 %v4488
  %5519 = vmatpush1.msra.mxu0 %v4487
  %5520 = vmatprep.subr.mxu0 %v4496
  %5521 = vmatpush1.msra.mxu0 %v4495
  %5522 = vmatprep.subr.mxu0 %v4504
  %5523 = vmatpush1.msra.mxu0 %v4503
  %5524 = vmatprep.subr.mxu0 %v4512
  %5525 = vmatpush1.msra.mxu0 %v4511
  %5526 = vmatprep.subr.mxu0 %v4520
  %5527 = vmatpush1.msra.mxu0 %v4519
  %5528 = vmatprep.subr.mxu0 %v4528
  %5529 = vmatpush1.msra.mxu0 %v4527
  %5530 = vmatprep.subr.mxu0 %v4536
  %5531 = vmatpush1.msra.mxu0 %v4535
  %5532 = vmatprep.subr.mxu0 %v4544
  %5533 = vmatpush1.msra.mxu0 %v4543
  %5534 = vmatprep.subr.mxu0 %v4552
  %5535 = vmatpush1.msra.mxu0 %v4551
  %5536 = vmatprep.subr.mxu0 %v4560
  %5537 = vmatpush1.msra.mxu0 %v4559
  %5538 = vmatprep.mubr.f32.mxu0 %v4048
  %5539 = vmatmul.mubr.f32.gmra.mrb[0].mxu0 %v4047
  %v5540 = vpop.f32.mrb[0].mxu0
  %v5541 = vadd.f32 %v5470, %v5540
  %v5542 = vpop.f32.mrb[0].mxu0
  %v5543 = vadd.f32 %v5472, %v5542
  %5544 = vdwg.mxu0
  %5545 = vmatprep.subr.mxu0 %v4568
  %5546 = vmatpush1.msra.mxu0 %v4567
  %5547 = vmatprep.subr.mxu0 %v4576
  %5548 = vmatpush1.msra.mxu0 %v4575
  %5549 = vmatprep.subr.mxu0 %v4584
  %5550 = vmatpush1.msra.mxu0 %v4583
  %5551 = vmatprep.subr.mxu0 %v4592
  %5552 = vmatpush1.msra.mxu0 %v4591
  %5553 = vmatprep.subr.mxu0 %v4600
  %5554 = vmatpush1.msra.mxu0 %v4599
  %5555 = vmatprep.subr.mxu0 %v4608
  %5556 = vmatpush1.msra.mxu0 %v4607
  %5557 = vmatprep.subr.mxu0 %v4616
  %5558 = vmatpush1.msra.mxu0 %v4615
  %5559 = vmatprep.subr.mxu0 %v4624
  %5560 = vmatpush1.msra.mxu0 %v4623
  %5561 = vmatprep.subr.mxu0 %v4632
  %5562 = vmatpush1.msra.mxu0 %v4631
  %5563 = vmatprep.subr.mxu0 %v4640
  %5564 = vmatpush1.msra.mxu0 %v4639
  %5565 = vmatprep.subr.mxu0 %v4648
  %5566 = vmatpush1.msra.mxu0 %v4647
  %5567 = vmatprep.subr.mxu0 %v4656
  %5568 = vmatpush1.msra.mxu0 %v4655
  %5569 = vmatprep.subr.mxu0 %v4664
  %5570 = vmatpush1.msra.mxu0 %v4663
  %5571 = vmatprep.subr.mxu0 %v4672
  %5572 = vmatpush1.msra.mxu0 %v4671
  %5573 = vmatprep.subr.mxu0 %v4680
  %5574 = vmatpush1.msra.mxu0 %v4679
  %5575 = vmatprep.subr.mxu0 %v4688
  %5576 = vmatpush1.msra.mxu0 %v4687
  %5577 = vmatprep.subr.mxu0 %v4696
  %5578 = vmatpush1.msra.mxu0 %v4695
  %5579 = vmatprep.subr.mxu0 %v4704
  %5580 = vmatpush1.msra.mxu0 %v4703
  %5581 = vmatprep.subr.mxu0 %v4712
  %5582 = vmatpush1.msra.mxu0 %v4711
  %5583 = vmatprep.subr.mxu0 %v4720
  %5584 = vmatpush1.msra.mxu0 %v4719
  %5585 = vmatprep.subr.mxu0 %v4728
  %5586 = vmatpush1.msra.mxu0 %v4727
  %5587 = vmatprep.subr.mxu0 %v4736
  %5588 = vmatpush1.msra.mxu0 %v4735
  %5589 = vmatprep.subr.mxu0 %v4744
  %5590 = vmatpush1.msra.mxu0 %v4743
  %5591 = vmatprep.subr.mxu0 %v4752
  %5592 = vmatpush1.msra.mxu0 %v4751
  %5593 = vmatprep.subr.mxu0 %v4760
  %5594 = vmatpush1.msra.mxu0 %v4759
  %5595 = vmatprep.subr.mxu0 %v4768
  %5596 = vmatpush1.msra.mxu0 %v4767
  %5597 = vmatprep.subr.mxu0 %v4776
  %5598 = vmatpush1.msra.mxu0 %v4775
  %5599 = vmatprep.subr.mxu0 %v4784
  %5600 = vmatpush1.msra.mxu0 %v4783
  %5601 = vmatprep.subr.mxu0 %v4792
  %5602 = vmatpush1.msra.mxu0 %v4791
  %5603 = vmatprep.subr.mxu0 %v4800
  %5604 = vmatpush1.msra.mxu0 %v4799
  %5605 = vmatprep.subr.mxu0 %v4808
  %5606 = vmatpush1.msra.mxu0 %v4807
  %5607 = vmatprep.subr.mxu0 %v4816
  %5608 = vmatpush1.msra.mxu0 %v4815
  %5609 = vmatprep.mubr.f32.mxu0 %v4050
  %5610 = vmatmul.mubr.f32.gmra.mrb[0].mxu0 %v4049
  %v5611 = vpop.f32.mrb[0].mxu0
  %v5612 = vadd.f32 %v5541, %v5611
  %v5613 = vpop.f32.mrb[0].mxu0
  %v5614 = vadd.f32 %v5543, %v5613
  %5615 = vdwg.mxu0
  %5616 = vmatprep.subr.mxu0 %v4824
  %5617 = vmatpush1.msra.mxu0 %v4823
  %5618 = vmatprep.subr.mxu0 %v4832
  %5619 = vmatpush1.msra.mxu0 %v4831
  %5620 = vmatprep.subr.mxu0 %v4840
  %5621 = vmatpush1.msra.mxu0 %v4839
  %5622 = vmatprep.subr.mxu0 %v4848
  %5623 = vmatpush1.msra.mxu0 %v4847
  %5624 = vmatprep.subr.mxu0 %v4856
  %5625 = vmatpush1.msra.mxu0 %v4855
  %5626 = vmatprep.subr.mxu0 %v4864
  %5627 = vmatpush1.msra.mxu0 %v4863
  %5628 = vmatprep.subr.mxu0 %v4872
  %5629 = vmatpush1.msra.mxu0 %v4871
  %5630 = vmatprep.subr.mxu0 %v4880
  %5631 = vmatpush1.msra.mxu0 %v4879
  %5632 = vmatprep.subr.mxu0 %v4888
  %5633 = vmatpush1.msra.mxu0 %v4887
  %5634 = vmatprep.subr.mxu0 %v4896
  %5635 = vmatpush1.msra.mxu0 %v4895
  %5636 = vmatprep.subr.mxu0 %v4904
  %5637 = vmatpush1.msra.mxu0 %v4903
  %5638 = vmatprep.subr.mxu0 %v4912
  %5639 = vmatpush1.msra.mxu0 %v4911
  %5640 = vmatprep.subr.mxu0 %v4920
  %5641 = vmatpush1.msra.mxu0 %v4919
  %5642 = vmatprep.subr.mxu0 %v4928
  %5643 = vmatpush1.msra.mxu0 %v4927
  %5644 = vmatprep.subr.mxu0 %v4936
  %5645 = vmatpush1.msra.mxu0 %v4935
  %5646 = vmatprep.subr.mxu0 %v4944
  %5647 = vmatpush1.msra.mxu0 %v4943
  %5648 = vmatprep.subr.mxu0 %v4952
  %5649 = vmatpush1.msra.mxu0 %v4951
  %5650 = vmatprep.subr.mxu0 %v4960
  %5651 = vmatpush1.msra.mxu0 %v4959
  %5652 = vmatprep.subr.mxu0 %v4968
  %5653 = vmatpush1.msra.mxu0 %v4967
  %5654 = vmatprep.subr.mxu0 %v4976
  %5655 = vmatpush1.msra.mxu0 %v4975
  %5656 = vmatprep.subr.mxu0 %v4984
  %5657 = vmatpush1.msra.mxu0 %v4983
  %5658 = vmatprep.subr.mxu0 %v4992
  %5659 = vmatpush1.msra.mxu0 %v4991
  %5660 = vmatprep.subr.mxu0 %v5000
  %5661 = vmatpush1.msra.mxu0 %v4999
  %5662 = vmatprep.subr.mxu0 %v5008
  %5663 = vmatpush1.msra.mxu0 %v5007
  %5664 = vmatprep.subr.mxu0 %v5016
  %5665 = vmatpush1.msra.mxu0 %v5015
  %5666 = vmatprep.subr.mxu0 %v5024
  %5667 = vmatpush1.msra.mxu0 %v5023
  %5668 = vmatprep.subr.mxu0 %v5032
  %5669 = vmatpush1.msra.mxu0 %v5031
  %5670 = vmatprep.subr.mxu0 %v5040
  %5671 = vmatpush1.msra.mxu0 %v5039
  %5672 = vmatprep.subr.mxu0 %v5048
  %5673 = vmatpush1.msra.mxu0 %v5047
  %5674 = vmatprep.subr.mxu0 %v5056
  %5675 = vmatpush1.msra.mxu0 %v5055
  %5676 = vmatprep.subr.mxu0 %v5064
  %5677 = vmatpush1.msra.mxu0 %v5063
  %5678 = vmatprep.subr.mxu0 %v5072
  %5679 = vmatpush1.msra.mxu0 %v5071
  %5680 = vmatprep.mubr.f32.mxu0 %v4052
  %5681 = vmatmul.mubr.f32.gmra.mrb[0].mxu0 %v4051
  %v5682 = vpop.f32.mrb[0].mxu0
  %v5683 = vadd.f32 %v5612, %v5682
  %v5684 = vpop.f32.mrb[0].mxu0
  %v5685 = vadd.f32 %v5614, %v5684
  %5686 = vdwg.mxu0
  %5687 = vmatprep.subr.mxu0 %v4058
  %5688 = vmatpush1.msra.mxu0 %v4057
  %5689 = vmatprep.subr.mxu0 %v4066
  %5690 = vmatpush1.msra.mxu0 %v4065
  %5691 = vmatprep.subr.mxu0 %v4074
  %5692 = vmatpush1.msra.mxu0 %v4073
  %5693 = vmatprep.subr.mxu0 %v4082
  %5694 = vmatpush1.msra.mxu0 %v4081
  %5695 = vmatprep.subr.mxu0 %v4090
  %5696 = vmatpush1.msra.mxu0 %v4089
  %5697 = vmatprep.subr.mxu0 %v4098
  %5698 = vmatpush1.msra.mxu0 %v4097
  %5699 = vmatprep.subr.mxu0 %v4106
  %5700 = vmatpush1.msra.mxu0 %v4105
  %5701 = vmatprep.subr.mxu0 %v4114
  %5702 = vmatpush1.msra.mxu0 %v4113
  %5703 = vmatprep.subr.mxu0 %v4122
  %5704 = vmatpush1.msra.mxu0 %v4121
  %5705 = vmatprep.subr.mxu0 %v4130
  %5706 = vmatpush1.msra.mxu0 %v4129
  %5707 = vmatprep.subr.mxu0 %v4138
  %5708 = vmatpush1.msra.mxu0 %v4137
  %5709 = vmatprep.subr.mxu0 %v4146
  %5710 = vmatpush1.msra.mxu0 %v4145
  %5711 = vmatprep.subr.mxu0 %v4154
  %5712 = vmatpush1.msra.mxu0 %v4153
  %5713 = vmatprep.subr.mxu0 %v4162
  %5714 = vmatpush1.msra.mxu0 %v4161
  %5715 = vmatprep.subr.mxu0 %v4170
  %5716 = vmatpush1.msra.mxu0 %v4169
  %5717 = vmatprep.subr.mxu0 %v4178
  %5718 = vmatpush1.msra.mxu0 %v4177
  %5719 = vmatprep.subr.mxu0 %v4186
  %5720 = vmatpush1.msra.mxu0 %v4185
  %5721 = vmatprep.subr.mxu0 %v4194
  %5722 = vmatpush1.msra.mxu0 %v4193
  %5723 = vmatprep.subr.mxu0 %v4202
  %5724 = vmatpush1.msra.mxu0 %v4201
  %5725 = vmatprep.subr.mxu0 %v4210
  %5726 = vmatpush1.msra.mxu0 %v4209
  %5727 = vmatprep.subr.mxu0 %v4218
  %5728 = vmatpush1.msra.mxu0 %v4217
  %5729 = vmatprep.subr.mxu0 %v4226
  %5730 = vmatpush1.msra.mxu0 %v4225
  %5731 = vmatprep.subr.mxu0 %v4234
  %5732 = vmatpush1.msra.mxu0 %v4233
  %5733 = vmatprep.subr.mxu0 %v4242
  %5734 = vmatpush1.msra.mxu0 %v4241
  %5735 = vmatprep.subr.mxu0 %v4250
  %5736 = vmatpush1.msra.mxu0 %v4249
  %5737 = vmatprep.subr.mxu0 %v4258
  %5738 = vmatpush1.msra.mxu0 %v4257
  %5739 = vmatprep.subr.mxu0 %v4266
  %5740 = vmatpush1.msra.mxu0 %v4265
  %5741 = vmatprep.subr.mxu0 %v4274
  %5742 = vmatpush1.msra.mxu0 %v4273
  %5743 = vmatprep.subr.mxu0 %v4282
  %5744 = vmatpush1.msra.mxu0 %v4281
  %5745 = vmatprep.subr.mxu0 %v4290
  %5746 = vmatpush1.msra.mxu0 %v4289
  %5747 = vmatprep.subr.mxu0 %v4298
  %5748 = vmatpush1.msra.mxu0 %v4297
  %5749 = vmatprep.subr.mxu0 %v4306
  %5750 = vmatpush1.msra.mxu0 %v4305
  %5751 = vmatprep.mubr.f32.mxu0 %v4046
  %5752 = vmatmul.mubr.f32.gmra.mrb[0].mxu0 %v4045
  %v5753 = vpop.f32.mrb[0].mxu0
  %v5754 = vadd.f32 %v5098, %v5753
  %v5755 = vpop.f32.mrb[0].mxu0
  %v5756 = vadd.f32 %v5102, %v5755
  %5757 = vdwg.mxu0
  %5758 = vmatprep.subr.mxu0 %v4314
  %5759 = vmatpush1.msra.mxu0 %v4313
  %5760 = vmatprep.subr.mxu0 %v4322
  %5761 = vmatpush1.msra.mxu0 %v4321
  %5762 = vmatprep.subr.mxu0 %v4330
  %5763 = vmatpush1.msra.mxu0 %v4329
  %5764 = vmatprep.subr.mxu0 %v4338
  %5765 = vmatpush1.msra.mxu0 %v4337
  %5766 = vmatprep.subr.mxu0 %v4346
  %5767 = vmatpush1.msra.mxu0 %v4345
  %5768 = vmatprep.subr.mxu0 %v4354
  %5769 = vmatpush1.msra.mxu0 %v4353
  %5770 = vmatprep.subr.mxu0 %v4362
  %5771 = vmatpush1.msra.mxu0 %v4361
  %5772 = vmatprep.subr.mxu0 %v4370
  %5773 = vmatpush1.msra.mxu0 %v4369
  %5774 = vmatprep.subr.mxu0 %v4378
  %5775 = vmatpush1.msra.mxu0 %v4377
  %5776 = vmatprep.subr.mxu0 %v4386
  %5777 = vmatpush1.msra.mxu0 %v4385
  %5778 = vmatprep.subr.mxu0 %v4394
  %5779 = vmatpush1.msra.mxu0 %v4393
  %5780 = vmatprep.subr.mxu0 %v4402
  %5781 = vmatpush1.msra.mxu0 %v4401
  %5782 = vmatprep.subr.mxu0 %v4410
  %5783 = vmatpush1.msra.mxu0 %v4409
  %5784 = vmatprep.subr.mxu0 %v4418
  %5785 = vmatpush1.msra.mxu0 %v4417
  %5786 = vmatprep.subr.mxu0 %v4426
  %5787 = vmatpush1.msra.mxu0 %v4425
  %5788 = vmatprep.subr.mxu0 %v4434
  %5789 = vmatpush1.msra.mxu0 %v4433
  %5790 = vmatprep.subr.mxu0 %v4442
  %5791 = vmatpush1.msra.mxu0 %v4441
  %5792 = vmatprep.subr.mxu0 %v4450
  %5793 = vmatpush1.msra.mxu0 %v4449
  %5794 = vmatprep.subr.mxu0 %v4458
  %5795 = vmatpush1.msra.mxu0 %v4457
  %5796 = vmatprep.subr.mxu0 %v4466
  %5797 = vmatpush1.msra.mxu0 %v4465
  %5798 = vmatprep.subr.mxu0 %v4474
  %5799 = vmatpush1.msra.mxu0 %v4473
  %5800 = vmatprep.subr.mxu0 %v4482
  %5801 = vmatpush1.msra.mxu0 %v4481
  %5802 = vmatprep.subr.mxu0 %v4490
  %5803 = vmatpush1.msra.mxu0 %v4489
  %5804 = vmatprep.subr.mxu0 %v4498
  %5805 = vmatpush1.msra.mxu0 %v4497
  %5806 = vmatprep.subr.mxu0 %v4506
  %5807 = vmatpush1.msra.mxu0 %v4505
  %5808 = vmatprep.subr.mxu0 %v4514
  %5809 = vmatpush1.msra.mxu0 %v4513
  %5810 = vmatprep.subr.mxu0 %v4522
  %5811 = vmatpush1.msra.mxu0 %v4521
  %5812 = vmatprep.subr.mxu0 %v4530
  %5813 = vmatpush1.msra.mxu0 %v4529
  %5814 = vmatprep.subr.mxu0 %v4538
  %5815 = vmatpush1.msra.mxu0 %v4537
  %5816 = vmatprep.subr.mxu0 %v4546
  %5817 = vmatpush1.msra.mxu0 %v4545
  %5818 = vmatprep.subr.mxu0 %v4554
  %5819 = vmatpush1.msra.mxu0 %v4553
  %5820 = vmatprep.subr.mxu0 %v4562
  %5821 = vmatpush1.msra.mxu0 %v4561
  %5822 = vmatprep.mubr.f32.mxu0 %v4048
  %5823 = vmatmul.mubr.f32.gmra.mrb[0].mxu0 %v4047
  %v5824 = vpop.f32.mrb[0].mxu0
  %v5825 = vadd.f32 %v5754, %v5824
  %v5826 = vpop.f32.mrb[0].mxu0
  %v5827 = vadd.f32 %v5756, %v5826
  %5828 = vdwg.mxu0
  %5829 = vmatprep.subr.mxu0 %v4570
  %5830 = vmatpush1.msra.mxu0 %v4569
  %5831 = vmatprep.subr.mxu0 %v4578
  %5832 = vmatpush1.msra.mxu0 %v4577
  %5833 = vmatprep.subr.mxu0 %v4586
  %5834 = vmatpush1.msra.mxu0 %v4585
  %5835 = vmatprep.subr.mxu0 %v4594
  %5836 = vmatpush1.msra.mxu0 %v4593
  %5837 = vmatprep.subr.mxu0 %v4602
  %5838 = vmatpush1.msra.mxu0 %v4601
  %5839 = vmatprep.subr.mxu0 %v4610
  %5840 = vmatpush1.msra.mxu0 %v4609
  %5841 = vmatprep.subr.mxu0 %v4618
  %5842 = vmatpush1.msra.mxu0 %v4617
  %5843 = vmatprep.subr.mxu0 %v4626
  %5844 = vmatpush1.msra.mxu0 %v4625
  %5845 = vmatprep.subr.mxu0 %v4634
  %5846 = vmatpush1.msra.mxu0 %v4633
  %5847 = vmatprep.subr.mxu0 %v4642
  %5848 = vmatpush1.msra.mxu0 %v4641
  %5849 = vmatprep.subr.mxu0 %v4650
  %5850 = vmatpush1.msra.mxu0 %v4649
  %5851 = vmatprep.subr.mxu0 %v4658
  %5852 = vmatpush1.msra.mxu0 %v4657
  %5853 = vmatprep.subr.mxu0 %v4666
  %5854 = vmatpush1.msra.mxu0 %v4665
  %5855 = vmatprep.subr.mxu0 %v4674
  %5856 = vmatpush1.msra.mxu0 %v4673
  %5857 = vmatprep.subr.mxu0 %v4682
  %5858 = vmatpush1.msra.mxu0 %v4681
  %5859 = vmatprep.subr.mxu0 %v4690
  %5860 = vmatpush1.msra.mxu0 %v4689
  %5861 = vmatprep.subr.mxu0 %v4698
  %5862 = vmatpush1.msra.mxu0 %v4697
  %5863 = vmatprep.subr.mxu0 %v4706
  %5864 = vmatpush1.msra.mxu0 %v4705
  %5865 = vmatprep.subr.mxu0 %v4714
  %5866 = vmatpush1.msra.mxu0 %v4713
  %5867 = vmatprep.subr.mxu0 %v4722
  %5868 = vmatpush1.msra.mxu0 %v4721
  %5869 = vmatprep.subr.mxu0 %v4730
  %5870 = vmatpush1.msra.mxu0 %v4729
  %5871 = vmatprep.subr.mxu0 %v4738
  %5872 = vmatpush1.msra.mxu0 %v4737
  %5873 = vmatprep.subr.mxu0 %v4746
  %5874 = vmatpush1.msra.mxu0 %v4745
  %5875 = vmatprep.subr.mxu0 %v4754
  %5876 = vmatpush1.msra.mxu0 %v4753
  %5877 = vmatprep.subr.mxu0 %v4762
  %5878 = vmatpush1.msra.mxu0 %v4761
  %5879 = vmatprep.subr.mxu0 %v4770
  %5880 = vmatpush1.msra.mxu0 %v4769
  %5881 = vmatprep.subr.mxu0 %v4778
  %5882 = vmatpush1.msra.mxu0 %v4777
  %5883 = vmatprep.subr.mxu0 %v4786
  %5884 = vmatpush1.msra.mxu0 %v4785
  %5885 = vmatprep.subr.mxu0 %v4794
  %5886 = vmatpush1.msra.mxu0 %v4793
  %5887 = vmatprep.subr.mxu0 %v4802
  %5888 = vmatpush1.msra.mxu0 %v4801
  %5889 = vmatprep.subr.mxu0 %v4810
  %5890 = vmatpush1.msra.mxu0 %v4809
  %5891 = vmatprep.subr.mxu0 %v4818
  %5892 = vmatpush1.msra.mxu0 %v4817
  %5893 = vmatprep.mubr.f32.mxu0 %v4050
  %5894 = vmatmul.mubr.f32.gmra.mrb[0].mxu0 %v4049
  %v5895 = vpop.f32.mrb[0].mxu0
  %v5896 = vadd.f32 %v5825, %v5895
  %v5897 = vpop.f32.mrb[0].mxu0
  %v5898 = vadd.f32 %v5827, %v5897
  %5899 = vdwg.mxu0
  %5900 = vmatprep.subr.mxu0 %v4826
  %5901 = vmatpush1.msra.mxu0 %v4825
  %5902 = vmatprep.subr.mxu0 %v4834
  %5903 = vmatpush1.msra.mxu0 %v4833
  %5904 = vmatprep.subr.mxu0 %v4842
  %5905 = vmatpush1.msra.mxu0 %v4841
  %5906 = vmatprep.subr.mxu0 %v4850
  %5907 = vmatpush1.msra.mxu0 %v4849
  %5908 = vmatprep.subr.mxu0 %v4858
  %5909 = vmatpush1.msra.mxu0 %v4857
  %5910 = vmatprep.subr.mxu0 %v4866
  %5911 = vmatpush1.msra.mxu0 %v4865
  %5912 = vmatprep.subr.mxu0 %v4874
  %5913 = vmatpush1.msra.mxu0 %v4873
  %5914 = vmatprep.subr.mxu0 %v4882
  %5915 = vmatpush1.msra.mxu0 %v4881
  %5916 = vmatprep.subr.mxu0 %v4890
  %5917 = vmatpush1.msra.mxu0 %v4889
  %5918 = vmatprep.subr.mxu0 %v4898
  %5919 = vmatpush1.msra.mxu0 %v4897
  %5920 = vmatprep.subr.mxu0 %v4906
  %5921 = vmatpush1.msra.mxu0 %v4905
  %5922 = vmatprep.subr.mxu0 %v4914
  %5923 = vmatpush1.msra.mxu0 %v4913
  %5924 = vmatprep.subr.mxu0 %v4922
  %5925 = vmatpush1.msra.mxu0 %v4921
  %5926 = vmatprep.subr.mxu0 %v4930
  %5927 = vmatpush1.msra.mxu0 %v4929
  %5928 = vmatprep.subr.mxu0 %v4938
  %5929 = vmatpush1.msra.mxu0 %v4937
  %5930 = vmatprep.subr.mxu0 %v4946
  %5931 = vmatpush1.msra.mxu0 %v4945
  %5932 = vmatprep.subr.mxu0 %v4954
  %5933 = vmatpush1.msra.mxu0 %v4953
  %5934 = vmatprep.subr.mxu0 %v4962
  %5935 = vmatpush1.msra.mxu0 %v4961
  %5936 = vmatprep.subr.mxu0 %v4970
  %5937 = vmatpush1.msra.mxu0 %v4969
  %5938 = vmatprep.subr.mxu0 %v4978
  %5939 = vmatpush1.msra.mxu0 %v4977
  %5940 = vmatprep.subr.mxu0 %v4986
  %5941 = vmatpush1.msra.mxu0 %v4985
  %5942 = vmatprep.subr.mxu0 %v4994
  %5943 = vmatpush1.msra.mxu0 %v4993
  %5944 = vmatprep.subr.mxu0 %v5002
  %5945 = vmatpush1.msra.mxu0 %v5001
  %5946 = vmatprep.subr.mxu0 %v5010
  %5947 = vmatpush1.msra.mxu0 %v5009
  %5948 = vmatprep.subr.mxu0 %v5018
  %5949 = vmatpush1.msra.mxu0 %v5017
  %5950 = vmatprep.subr.mxu0 %v5026
  %5951 = vmatpush1.msra.mxu0 %v5025
  %5952 = vmatprep.subr.mxu0 %v5034
  %5953 = vmatpush1.msra.mxu0 %v5033
  %5954 = vmatprep.subr.mxu0 %v5042
  %5955 = vmatpush1.msra.mxu0 %v5041
  %5956 = vmatprep.subr.mxu0 %v5050
  %5957 = vmatpush1.msra.mxu0 %v5049
  %5958 = vmatprep.subr.mxu0 %v5058
  %5959 = vmatpush1.msra.mxu0 %v5057
  %5960 = vmatprep.subr.mxu0 %v5066
  %5961 = vmatpush1.msra.mxu0 %v5065
  %5962 = vmatprep.subr.mxu0 %v5074
  %5963 = vmatpush1.msra.mxu0 %v5073
  %5964 = vmatprep.mubr.f32.mxu0 %v4052
  %5965 = vmatmul.mubr.f32.gmra.mrb[0].mxu0 %v4051
  %v5966 = vpop.f32.mrb[0].mxu0
  %v5967 = vadd.f32 %v5896, %v5966
  %v5968 = vpop.f32.mrb[0].mxu0
  %v5969 = vadd.f32 %v5898, %v5968
  %5970 = vdwg.mxu0
  %5971 = vmatprep.subr.mxu0 %v4060
  %5972 = vmatpush1.msra.mxu0 %v4059
  %5973 = vmatprep.subr.mxu0 %v4068
  %5974 = vmatpush1.msra.mxu0 %v4067
  %5975 = vmatprep.subr.mxu0 %v4076
  %5976 = vmatpush1.msra.mxu0 %v4075
  %5977 = vmatprep.subr.mxu0 %v4084
  %5978 = vmatpush1.msra.mxu0 %v4083
  %5979 = vmatprep.subr.mxu0 %v4092
  %5980 = vmatpush1.msra.mxu0 %v4091
  %5981 = vmatprep.subr.mxu0 %v4100
  %5982 = vmatpush1.msra.mxu0 %v4099
  %5983 = vmatprep.subr.mxu0 %v4108
  %5984 = vmatpush1.msra.mxu0 %v4107
  %5985 = vmatprep.subr.mxu0 %v4116
  %5986 = vmatpush1.msra.mxu0 %v4115
  %5987 = vmatprep.subr.mxu0 %v4124
  %5988 = vmatpush1.msra.mxu0 %v4123
  %5989 = vmatprep.subr.mxu0 %v4132
  %5990 = vmatpush1.msra.mxu0 %v4131
  %5991 = vmatprep.subr.mxu0 %v4140
  %5992 = vmatpush1.msra.mxu0 %v4139
  %5993 = vmatprep.subr.mxu0 %v4148
  %5994 = vmatpush1.msra.mxu0 %v4147
  %5995 = vmatprep.subr.mxu0 %v4156
  %5996 = vmatpush1.msra.mxu0 %v4155
  %5997 = vmatprep.subr.mxu0 %v4164
  %5998 = vmatpush1.msra.mxu0 %v4163
  %5999 = vmatprep.subr.mxu0 %v4172
  %6000 = vmatpush1.msra.mxu0 %v4171
  %6001 = vmatprep.subr.mxu0 %v4180
  %6002 = vmatpush1.msra.mxu0 %v4179
  %6003 = vmatprep.subr.mxu0 %v4188
  %6004 = vmatpush1.msra.mxu0 %v4187
  %6005 = vmatprep.subr.mxu0 %v4196
  %6006 = vmatpush1.msra.mxu0 %v4195
  %6007 = vmatprep.subr.mxu0 %v4204
  %6008 = vmatpush1.msra.mxu0 %v4203
  %6009 = vmatprep.subr.mxu0 %v4212
  %6010 = vmatpush1.msra.mxu0 %v4211
  %6011 = vmatprep.subr.mxu0 %v4220
  %6012 = vmatpush1.msra.mxu0 %v4219
  %6013 = vmatprep.subr.mxu0 %v4228
  %6014 = vmatpush1.msra.mxu0 %v4227
  %6015 = vmatprep.subr.mxu0 %v4236
  %6016 = vmatpush1.msra.mxu0 %v4235
  %6017 = vmatprep.subr.mxu0 %v4244
  %6018 = vmatpush1.msra.mxu0 %v4243
  %6019 = vmatprep.subr.mxu0 %v4252
  %6020 = vmatpush1.msra.mxu0 %v4251
  %6021 = vmatprep.subr.mxu0 %v4260
  %6022 = vmatpush1.msra.mxu0 %v4259
  %6023 = vmatprep.subr.mxu0 %v4268
  %6024 = vmatpush1.msra.mxu0 %v4267
  %6025 = vmatprep.subr.mxu0 %v4276
  %6026 = vmatpush1.msra.mxu0 %v4275
  %6027 = vmatprep.subr.mxu0 %v4284
  %6028 = vmatpush1.msra.mxu0 %v4283
  %6029 = vmatprep.subr.mxu0 %v4292
  %6030 = vmatpush1.msra.mxu0 %v4291
  %6031 = vmatprep.subr.mxu0 %v4300
  %6032 = vmatpush1.msra.mxu0 %v4299
  %6033 = vmatprep.subr.mxu0 %v4308
  %6034 = vmatpush1.msra.mxu0 %v4307
  %6035 = vmatprep.mubr.f32.mxu0 %v4046
  %6036 = vmatmul.mubr.f32.gmra.mrb[0].mxu0 %v4045
  %v6037 = vpop.f32.mrb[0].mxu0
  %v6038 = vadd.f32 %v5106, %v6037
  %v6039 = vpop.f32.mrb[0].mxu0
  %v6040 = vadd.f32 %v5110, %v6039
  %6041 = vdwg.mxu0
  %6042 = vmatprep.subr.mxu0 %v4316
  %6043 = vmatpush1.msra.mxu0 %v4315
  %6044 = vmatprep.subr.mxu0 %v4324
  %6045 = vmatpush1.msra.mxu0 %v4323
  %6046 = vmatprep.subr.mxu0 %v4332
  %6047 = vmatpush1.msra.mxu0 %v4331
  %6048 = vmatprep.subr.mxu0 %v4340
  %6049 = vmatpush1.msra.mxu0 %v4339
  %6050 = vmatprep.subr.mxu0 %v4348
  %6051 = vmatpush1.msra.mxu0 %v4347
  %6052 = vmatprep.subr.mxu0 %v4356
  %6053 = vmatpush1.msra.mxu0 %v4355
  %6054 = vmatprep.subr.mxu0 %v4364
  %6055 = vmatpush1.msra.mxu0 %v4363
  %6056 = vmatprep.subr.mxu0 %v4372
  %6057 = vmatpush1.msra.mxu0 %v4371
  %6058 = vmatprep.subr.mxu0 %v4380
  %6059 = vmatpush1.msra.mxu0 %v4379
  %6060 = vmatprep.subr.mxu0 %v4388
  %6061 = vmatpush1.msra.mxu0 %v4387
  %6062 = vmatprep.subr.mxu0 %v4396
  %6063 = vmatpush1.msra.mxu0 %v4395
  %6064 = vmatprep.subr.mxu0 %v4404
  %6065 = vmatpush1.msra.mxu0 %v4403
  %6066 = vmatprep.subr.mxu0 %v4412
  %6067 = vmatpush1.msra.mxu0 %v4411
  %6068 = vmatprep.subr.mxu0 %v4420
  %6069 = vmatpush1.msra.mxu0 %v4419
  %6070 = vmatprep.subr.mxu0 %v4428
  %6071 = vmatpush1.msra.mxu0 %v4427
  %6072 = vmatprep.subr.mxu0 %v4436
  %6073 = vmatpush1.msra.mxu0 %v4435
  %6074 = vmatprep.subr.mxu0 %v4444
  %6075 = vmatpush1.msra.mxu0 %v4443
  %6076 = vmatprep.subr.mxu0 %v4452
  %6077 = vmatpush1.msra.mxu0 %v4451
  %6078 = vmatprep.subr.mxu0 %v4460
  %6079 = vmatpush1.msra.mxu0 %v4459
  %6080 = vmatprep.subr.mxu0 %v4468
  %6081 = vmatpush1.msra.mxu0 %v4467
  %6082 = vmatprep.subr.mxu0 %v4476
  %6083 = vmatpush1.msra.mxu0 %v4475
  %6084 = vmatprep.subr.mxu0 %v4484
  %6085 = vmatpush1.msra.mxu0 %v4483
  %6086 = vmatprep.subr.mxu0 %v4492
  %6087 = vmatpush1.msra.mxu0 %v4491
  %6088 = vmatprep.subr.mxu0 %v4500
  %6089 = vmatpush1.msra.mxu0 %v4499
  %6090 = vmatprep.subr.mxu0 %v4508
  %6091 = vmatpush1.msra.mxu0 %v4507
  %6092 = vmatprep.subr.mxu0 %v4516
  %6093 = vmatpush1.msra.mxu0 %v4515
  %6094 = vmatprep.subr.mxu0 %v4524
  %6095 = vmatpush1.msra.mxu0 %v4523
  %6096 = vmatprep.subr.mxu0 %v4532
  %6097 = vmatpush1.msra.mxu0 %v4531
  %6098 = vmatprep.subr.mxu0 %v4540
  %6099 = vmatpush1.msra.mxu0 %v4539
  %6100 = vmatprep.subr.mxu0 %v4548
  %6101 = vmatpush1.msra.mxu0 %v4547
  %6102 = vmatprep.subr.mxu0 %v4556
  %6103 = vmatpush1.msra.mxu0 %v4555
  %6104 = vmatprep.subr.mxu0 %v4564
  %6105 = vmatpush1.msra.mxu0 %v4563
  %6106 = vmatprep.mubr.f32.mxu0 %v4048
  %6107 = vmatmul.mubr.f32.gmra.mrb[0].mxu0 %v4047
  %v6108 = vpop.f32.mrb[0].mxu0
  %v6109 = vadd.f32 %v6038, %v6108
  %v6110 = vpop.f32.mrb[0].mxu0
  %v6111 = vadd.f32 %v6040, %v6110
  %6112 = vdwg.mxu0
  %6113 = vmatprep.subr.mxu0 %v4572
  %6114 = vmatpush1.msra.mxu0 %v4571
  %6115 = vmatprep.subr.mxu0 %v4580
  %6116 = vmatpush1.msra.mxu0 %v4579
  %6117 = vmatprep.subr.mxu0 %v4588
  %6118 = vmatpush1.msra.mxu0 %v4587
  %6119 = vmatprep.subr.mxu0 %v4596
  %6120 = vmatpush1.msra.mxu0 %v4595
  %6121 = vmatprep.subr.mxu0 %v4604
  %6122 = vmatpush1.msra.mxu0 %v4603
  %6123 = vmatprep.subr.mxu0 %v4612
  %6124 = vmatpush1.msra.mxu0 %v4611
  %6125 = vmatprep.subr.mxu0 %v4620
  %6126 = vmatpush1.msra.mxu0 %v4619
  %6127 = vmatprep.subr.mxu0 %v4628
  %6128 = vmatpush1.msra.mxu0 %v4627
  %6129 = vmatprep.subr.mxu0 %v4636
  %6130 = vmatpush1.msra.mxu0 %v4635
  %6131 = vmatprep.subr.mxu0 %v4644
  %6132 = vmatpush1.msra.mxu0 %v4643
  %6133 = vmatprep.subr.mxu0 %v4652
  %6134 = vmatpush1.msra.mxu0 %v4651
  %6135 = vmatprep.subr.mxu0 %v4660
  %6136 = vmatpush1.msra.mxu0 %v4659
  %6137 = vmatprep.subr.mxu0 %v4668
  %6138 = vmatpush1.msra.mxu0 %v4667
  %6139 = vmatprep.subr.mxu0 %v4676
  %6140 = vmatpush1.msra.mxu0 %v4675
  %6141 = vmatprep.subr.mxu0 %v4684
  %6142 = vmatpush1.msra.mxu0 %v4683
  %6143 = vmatprep.subr.mxu0 %v4692
  %6144 = vmatpush1.msra.mxu0 %v4691
  %6145 = vmatprep.subr.mxu0 %v4700
  %6146 = vmatpush1.msra.mxu0 %v4699
  %6147 = vmatprep.subr.mxu0 %v4708
  %6148 = vmatpush1.msra.mxu0 %v4707
  %6149 = vmatprep.subr.mxu0 %v4716
  %6150 = vmatpush1.msra.mxu0 %v4715
  %6151 = vmatprep.subr.mxu0 %v4724
  %6152 = vmatpush1.msra.mxu0 %v4723
  %6153 = vmatprep.subr.mxu0 %v4732
  %6154 = vmatpush1.msra.mxu0 %v4731
  %6155 = vmatprep.subr.mxu0 %v4740
  %6156 = vmatpush1.msra.mxu0 %v4739
  %6157 = vmatprep.subr.mxu0 %v4748
  %6158 = vmatpush1.msra.mxu0 %v4747
  %6159 = vmatprep.subr.mxu0 %v4756
  %6160 = vmatpush1.msra.mxu0 %v4755
  %6161 = vmatprep.subr.mxu0 %v4764
  %6162 = vmatpush1.msra.mxu0 %v4763
  %6163 = vmatprep.subr.mxu0 %v4772
  %6164 = vmatpush1.msra.mxu0 %v4771
  %6165 = vmatprep.subr.mxu0 %v4780
  %6166 = vmatpush1.msra.mxu0 %v4779
  %6167 = vmatprep.subr.mxu0 %v4788
  %6168 = vmatpush1.msra.mxu0 %v4787
  %6169 = vmatprep.subr.mxu0 %v4796
  %6170 = vmatpush1.msra.mxu0 %v4795
  %6171 = vmatprep.subr.mxu0 %v4804
  %6172 = vmatpush1.msra.mxu0 %v4803
  %6173 = vmatprep.subr.mxu0 %v4812
  %6174 = vmatpush1.msra.mxu0 %v4811
  %6175 = vmatprep.subr.mxu0 %v4820
  %6176 = vmatpush1.msra.mxu0 %v4819
  %6177 = vmatprep.mubr.f32.mxu0 %v4050
  %6178 = vmatmul.mubr.f32.gmra.mrb[0].mxu0 %v4049
  %v6179 = vpop.f32.mrb[0].mxu0
  %v6180 = vadd.f32 %v6109, %v6179
  %v6181 = vpop.f32.mrb[0].mxu0
  %v6182 = vadd.f32 %v6111, %v6181
  %6183 = vdwg.mxu0
  %6184 = vmatprep.subr.mxu0 %v4828
  %6185 = vmatpush1.msra.mxu0 %v4827
  %6186 = vmatprep.subr.mxu0 %v4836
  %6187 = vmatpush1.msra.mxu0 %v4835
  %6188 = vmatprep.subr.mxu0 %v4844
  %6189 = vmatpush1.msra.mxu0 %v4843
  %6190 = vmatprep.subr.mxu0 %v4852
  %6191 = vmatpush1.msra.mxu0 %v4851
  %6192 = vmatprep.subr.mxu0 %v4860
  %6193 = vmatpush1.msra.mxu0 %v4859
  %6194 = vmatprep.subr.mxu0 %v4868
  %6195 = vmatpush1.msra.mxu0 %v4867
  %6196 = vmatprep.subr.mxu0 %v4876
  %6197 = vmatpush1.msra.mxu0 %v4875
  %6198 = vmatprep.subr.mxu0 %v4884
  %6199 = vmatpush1.msra.mxu0 %v4883
  %6200 = vmatprep.subr.mxu0 %v4892
  %6201 = vmatpush1.msra.mxu0 %v4891
  %6202 = vmatprep.subr.mxu0 %v4900
  %6203 = vmatpush1.msra.mxu0 %v4899
  %6204 = vmatprep.subr.mxu0 %v4908
  %6205 = vmatpush1.msra.mxu0 %v4907
  %6206 = vmatprep.subr.mxu0 %v4916
  %6207 = vmatpush1.msra.mxu0 %v4915
  %6208 = vmatprep.subr.mxu0 %v4924
  %6209 = vmatpush1.msra.mxu0 %v4923
  %6210 = vmatprep.subr.mxu0 %v4932
  %6211 = vmatpush1.msra.mxu0 %v4931
  %6212 = vmatprep.subr.mxu0 %v4940
  %6213 = vmatpush1.msra.mxu0 %v4939
  %6214 = vmatprep.subr.mxu0 %v4948
  %6215 = vmatpush1.msra.mxu0 %v4947
  %6216 = vmatprep.subr.mxu0 %v4956
  %6217 = vmatpush1.msra.mxu0 %v4955
  %6218 = vmatprep.subr.mxu0 %v4964
  %6219 = vmatpush1.msra.mxu0 %v4963
  %6220 = vmatprep.subr.mxu0 %v4972
  %6221 = vmatpush1.msra.mxu0 %v4971
  %6222 = vmatprep.subr.mxu0 %v4980
  %6223 = vmatpush1.msra.mxu0 %v4979
  %6224 = vmatprep.subr.mxu0 %v4988
  %6225 = vmatpush1.msra.mxu0 %v4987
  %6226 = vmatprep.subr.mxu0 %v4996
  %6227 = vmatpush1.msra.mxu0 %v4995
  %6228 = vmatprep.subr.mxu0 %v5004
  %6229 = vmatpush1.msra.mxu0 %v5003
  %6230 = vmatprep.subr.mxu0 %v5012
  %6231 = vmatpush1.msra.mxu0 %v5011
  %6232 = vmatprep.subr.mxu0 %v5020
  %6233 = vmatpush1.msra.mxu0 %v5019
  %6234 = vmatprep.subr.mxu0 %v5028
  %6235 = vmatpush1.msra.mxu0 %v5027
  %6236 = vmatprep.subr.mxu0 %v5036
  %6237 = vmatpush1.msra.mxu0 %v5035
  %6238 = vmatprep.subr.mxu0 %v5044
  %6239 = vmatpush1.msra.mxu0 %v5043
  %6240 = vmatprep.subr.mxu0 %v5052
  %6241 = vmatpush1.msra.mxu0 %v5051
  %6242 = vmatprep.subr.mxu0 %v5060
  %6243 = vmatpush1.msra.mxu0 %v5059
  %6244 = vmatprep.subr.mxu0 %v5068
  %6245 = vmatpush1.msra.mxu0 %v5067
  %6246 = vmatprep.subr.mxu0 %v5076
  %6247 = vmatpush1.msra.mxu0 %v5075
  %6248 = vmatprep.mubr.f32.mxu0 %v4052
  %6249 = vmatmul.mubr.f32.gmra.mrb[0].mxu0 %v4051
  %v6250 = vpop.f32.mrb[0].mxu0
  %v6251 = vadd.f32 %v6180, %v6250
  %v6252 = vpop.f32.mrb[0].mxu0
  %v6253 = vadd.f32 %v6182, %v6252
  %6254 = vdwg.mxu0
  %v6255 = vmax.f32 %v5399, 0.0
  %v6256 = vmax.f32 %v5401, 0.0
  %v6257 = vmax.f32 %v5683, 0.0
  %v6258 = vmax.f32 %v5685, 0.0
  %v6259 = vmax.f32 %v5967, 0.0
  %v6260 = vmax.f32 %v5969, 0.0
  %v6261 = vmax.f32 %v6251, 0.0
  %v6262 = vmax.f32 %v6253, 0.0
  %v6263 = vld [vmem:[%s9] sm:$0xff]
  %v6264 = vld [vmem:[%s9 + $0x8] sm:$0xff]
  %v6265 = vld [vmem:[%s9 + $0x10] sm:$0xff]
  %v6266 = vld [vmem:[%s9 + $0x18] sm:$0xff]
  %v6267 = vld [vmem:[%s9 + $0x20] sm:$0xff]
  %v6268 = vld [vmem:[%s9 + $0x28] sm:$0xff]
  %v6269 = vld [vmem:[%s9 + $0x30] sm:$0xff]
  %v6270 = vld [vmem:[%s9 + $0x38] sm:$0xff]
  %v6271 = vld [vmem:[%s9 + $0x40] sm:$0xff]
  %v6272 = vld [vmem:[%s9 + $0x48] sm:$0xff]
  %v6273 = vld [vmem:[%s9 + $0x50] sm:$0xff]
  %v6274 = vld [vmem:[%s9 + $0x58] sm:$0xff]
  %v6275 = vld [vmem:[%s9 + $0x60] sm:$0xff]
  %v6276 = vld [vmem:[%s9 + $0x68] sm:$0xff]
  %v6277 = vld [vmem:[%s9 + $0x70] sm:$0xff]
  %v6278 = vld [vmem:[%s9 + $0x78] sm:$0xff]
  %v6279 = vld [vmem:[%s9 + $0x80] sm:$0xff]
  %v6280 = vld [vmem:[%s9 + $0x88] sm:$0xff]
  %v6281 = vld [vmem:[%s9 + $0x90] sm:$0xff]
  %v6282 = vld [vmem:[%s9 + $0x98] sm:$0xff]
  %v6283 = vld [vmem:[%s9 + $0xa0] sm:$0xff]
  %v6284 = vld [vmem:[%s9 + $0xa8] sm:$0xff]
  %v6285 = vld [vmem:[%s9 + $0xb0] sm:$0xff]
  %v6286 = vld [vmem:[%s9 + $0xb8] sm:$0xff]
  %v6287 = vld [vmem:[%s9 + $0xc0] sm:$0xff]
  %v6288 = vld [vmem:[%s9 + $0xc8] sm:$0xff]
  %v6289 = vld [vmem:[%s9 + $0xd0] sm:$0xff]
  %v6290 = vld [vmem:[%s9 + $0xd8] sm:$0xff]
  %v6291 = vld [vmem:[%s9 + $0xe0] sm:$0xff]
  %v6292 = vld [vmem:[%s9 + $0xe8] sm:$0xff]
  %v6293 = vld [vmem:[%s9 + $0xf0] sm:$0xff]
  %v6294 = vld [vmem:[%s9 + $0xf8] sm:$0xff]
  %v6295 = vld [vmem:[%s9 + $0x100] sm:$0xff]
  %v6296 = vld [vmem:[%s9 + $0x108] sm:$0xff]
  %v6297 = vld [vmem:[%s9 + $0x110] sm:$0xff]
  %v6298 = vld [vmem:[%s9 + $0x118] sm:$0xff]
  %v6299 = vld [vmem:[%s9 + $0x120] sm:$0xff]
  %v6300 = vld [vmem:[%s9 + $0x128] sm:$0xff]
  %v6301 = vld [vmem:[%s9 + $0x130] sm:$0xff]
  %v6302 = vld [vmem:[%s9 + $0x138] sm:$0xff]
  %v6303 = vld [vmem:[%s9 + $0x140] sm:$0xff]
  %v6304 = vld [vmem:[%s9 + $0x148] sm:$0xff]
  %v6305 = vld [vmem:[%s9 + $0x150] sm:$0xff]
  %v6306 = vld [vmem:[%s9 + $0x158] sm:$0xff]
  %v6307 = vld [vmem:[%s9 + $0x160] sm:$0xff]
  %v6308 = vld [vmem:[%s9 + $0x168] sm:$0xff]
  %v6309 = vld [vmem:[%s9 + $0x170] sm:$0xff]
  %v6310 = vld [vmem:[%s9 + $0x178] sm:$0xff]
  %v6311 = vld [vmem:[%s9 + $0x180] sm:$0xff]
  %v6312 = vld [vmem:[%s9 + $0x188] sm:$0xff]
  %v6313 = vld [vmem:[%s9 + $0x190] sm:$0xff]
  %v6314 = vld [vmem:[%s9 + $0x198] sm:$0xff]
  %v6315 = vld [vmem:[%s9 + $0x1a0] sm:$0xff]
  %v6316 = vld [vmem:[%s9 + $0x1a8] sm:$0xff]
  %v6317 = vld [vmem:[%s9 + $0x1b0] sm:$0xff]
  %v6318 = vld [vmem:[%s9 + $0x1b8] sm:$0xff]
  %v6319 = vld [vmem:[%s9 + $0x1c0] sm:$0xff]
  %v6320 = vld [vmem:[%s9 + $0x1c8] sm:$0xff]
  %v6321 = vld [vmem:[%s9 + $0x1d0] sm:$0xff]
  %v6322 = vld [vmem:[%s9 + $0x1d8] sm:$0xff]
  %v6323 = vld [vmem:[%s9 + $0x1e0] sm:$0xff]
  %v6324 = vld [vmem:[%s9 + $0x1e8] sm:$0xff]
  %v6325 = vld [vmem:[%s9 + $0x1f0] sm:$0xff]
  %v6326 = vld [vmem:[%s9 + $0x1f8] sm:$0xff]
  %v6327 = vld [vmem:[%s9 + $0x200] sm:$0xff]
  %v6328 = vld [vmem:[%s9 + $0x208] sm:$0xff]
  %v6329 = vld [vmem:[%s9 + $0x210] sm:$0xff]
  %v6330 = vld [vmem:[%s9 + $0x218] sm:$0xff]
  %v6331 = vld [vmem:[%s9 + $0x220] sm:$0xff]
  %v6332 = vld [vmem:[%s9 + $0x228] sm:$0xff]
  %v6333 = vld [vmem:[%s9 + $0x230] sm:$0xff]
  %v6334 = vld [vmem:[%s9 + $0x238] sm:$0xff]
  %v6335 = vld [vmem:[%s9 + $0x240] sm:$0xff]
  %v6336 = vld [vmem:[%s9 + $0x248] sm:$0xff]
  %v6337 = vld [vmem:[%s9 + $0x250] sm:$0xff]
  %v6338 = vld [vmem:[%s9 + $0x258] sm:$0xff]
  %v6339 = vld [vmem:[%s9 + $0x260] sm:$0xff]
  %v6340 = vld [vmem:[%s9 + $0x268] sm:$0xff]
  %v6341 = vld [vmem:[%s9 + $0x270] sm:$0xff]
  %v6342 = vld [vmem:[%s9 + $0x278] sm:$0xff]
  %v6343 = vld [vmem:[%s9 + $0x280] sm:$0xff]
  %v6344 = vld [vmem:[%s9 + $0x288] sm:$0xff]
  %v6345 = vld [vmem:[%s9 + $0x290] sm:$0xff]
  %v6346 = vld [vmem:[%s9 + $0x298] sm:$0xff]
  %v6347 = vld [vmem:[%s9 + $0x2a0] sm:$0xff]
  %v6348 = vld [vmem:[%s9 + $0x2a8] sm:$0xff]
  %v6349 = vld [vmem:[%s9 + $0x2b0] sm:$0xff]
  %v6350 = vld [vmem:[%s9 + $0x2b8] sm:$0xff]
  %v6351 = vld [vmem:[%s9 + $0x2c0] sm:$0xff]
  %v6352 = vld [vmem:[%s9 + $0x2c8] sm:$0xff]
  %v6353 = vld [vmem:[%s9 + $0x2d0] sm:$0xff]
  %v6354 = vld [vmem:[%s9 + $0x2d8] sm:$0xff]
  %v6355 = vld [vmem:[%s9 + $0x2e0] sm:$0xff]
  %v6356 = vld [vmem:[%s9 + $0x2e8] sm:$0xff]
  %v6357 = vld [vmem:[%s9 + $0x2f0] sm:$0xff]
  %v6358 = vld [vmem:[%s9 + $0x2f8] sm:$0xff]
  %v6359 = vld [vmem:[%s9 + $0x300] sm:$0xff]
  %v6360 = vld [vmem:[%s9 + $0x308] sm:$0xff]
  %v6361 = vld [vmem:[%s9 + $0x310] sm:$0xff]
  %v6362 = vld [vmem:[%s9 + $0x318] sm:$0xff]
  %v6363 = vld [vmem:[%s9 + $0x320] sm:$0xff]
  %v6364 = vld [vmem:[%s9 + $0x328] sm:$0xff]
  %v6365 = vld [vmem:[%s9 + $0x330] sm:$0xff]
  %v6366 = vld [vmem:[%s9 + $0x338] sm:$0xff]
  %v6367 = vld [vmem:[%s9 + $0x340] sm:$0xff]
  %v6368 = vld [vmem:[%s9 + $0x348] sm:$0xff]
  %v6369 = vld [vmem:[%s9 + $0x350] sm:$0xff]
  %v6370 = vld [vmem:[%s9 + $0x358] sm:$0xff]
  %v6371 = vld [vmem:[%s9 + $0x360] sm:$0xff]
  %v6372 = vld [vmem:[%s9 + $0x368] sm:$0xff]
  %v6373 = vld [vmem:[%s9 + $0x370] sm:$0xff]
  %v6374 = vld [vmem:[%s9 + $0x378] sm:$0xff]
  %v6375 = vld [vmem:[%s9 + $0x380] sm:$0xff]
  %v6376 = vld [vmem:[%s9 + $0x388] sm:$0xff]
  %v6377 = vld [vmem:[%s9 + $0x390] sm:$0xff]
  %v6378 = vld [vmem:[%s9 + $0x398] sm:$0xff]
  %v6379 = vld [vmem:[%s9 + $0x3a0] sm:$0xff]
  %v6380 = vld [vmem:[%s9 + $0x3a8] sm:$0xff]
  %v6381 = vld [vmem:[%s9 + $0x3b0] sm:$0xff]
  %v6382 = vld [vmem:[%s9 + $0x3b8] sm:$0xff]
  %v6383 = vld [vmem:[%s9 + $0x3c0] sm:$0xff]
  %v6384 = vld [vmem:[%s9 + $0x3c8] sm:$0xff]
  %v6385 = vld [vmem:[%s9 + $0x3d0] sm:$0xff]
  %v6386 = vld [vmem:[%s9 + $0x3d8] sm:$0xff]
  %v6387 = vld [vmem:[%s9 + $0x3e0] sm:$0xff]
  %v6388 = vld [vmem:[%s9 + $0x3e8] sm:$0xff]
  %v6389 = vld [vmem:[%s9 + $0x3f0] sm:$0xff]
  %v6390 = vld [vmem:[%s9 + $0x3f8] sm:$0xff]
  %v6391 = vld [vmem:[%s10] sm:$0x1]
  %v6393 = vlaneseq
  %v6394 = vshrl.u32 %v6393, 7
  %v6395 = vsub.s32 0, %v6394
  %v6396 = vrot.slane %v6391, %v6395
  %6398 = vmatprep.subr.mxu0 0.0
  %6399 = vmatpush1.msra.mxu0 %v6263
  %6400 = vmatprep.subr.mxu0 0.0
  %6401 = vmatpush1.msra.mxu0 %v6264
  %6402 = vmatprep.subr.mxu0 0.0
  %6403 = vmatpush1.msra.mxu0 %v6265
  %6404 = vmatprep.subr.mxu0 0.0
  %6405 = vmatpush1.msra.mxu0 %v6266
  %6406 = vmatprep.subr.mxu0 0.0
  %6407 = vmatpush1.msra.mxu0 %v6267
  %6408 = vmatprep.subr.mxu0 0.0
  %6409 = vmatpush1.msra.mxu0 %v6268
  %6410 = vmatprep.subr.mxu0 0.0
  %6411 = vmatpush1.msra.mxu0 %v6269
  %6412 = vmatprep.subr.mxu0 0.0
  %6413 = vmatpush1.msra.mxu0 %v6270
  %6414 = vmatprep.subr.mxu0 0.0
  %6415 = vmatpush1.msra.mxu0 %v6271
  %6416 = vmatprep.subr.mxu0 0.0
  %6417 = vmatpush1.msra.mxu0 %v6272
  %6418 = vmatprep.subr.mxu0 0.0
  %6419 = vmatpush1.msra.mxu0 %v6273
  %6420 = vmatprep.subr.mxu0 0.0
  %6421 = vmatpush1.msra.mxu0 %v6274
  %6422 = vmatprep.subr.mxu0 0.0
  %6423 = vmatpush1.msra.mxu0 %v6275
  %6424 = vmatprep.subr.mxu0 0.0
  %6425 = vmatpush1.msra.mxu0 %v6276
  %6426 = vmatprep.subr.mxu0 0.0
  %6427 = vmatpush1.msra.mxu0 %v6277
  %6428 = vmatprep.subr.mxu0 0.0
  %6429 = vmatpush1.msra.mxu0 %v6278
  %6430 = vmatprep.subr.mxu0 0.0
  %6431 = vmatpush1.msra.mxu0 %v6279
  %6432 = vmatprep.subr.mxu0 0.0
  %6433 = vmatpush1.msra.mxu0 %v6280
  %6434 = vmatprep.subr.mxu0 0.0
  %6435 = vmatpush1.msra.mxu0 %v6281
  %6436 = vmatprep.subr.mxu0 0.0
  %6437 = vmatpush1.msra.mxu0 %v6282
  %6438 = vmatprep.subr.mxu0 0.0
  %6439 = vmatpush1.msra.mxu0 %v6283
  %6440 = vmatprep.subr.mxu0 0.0
  %6441 = vmatpush1.msra.mxu0 %v6284
  %6442 = vmatprep.subr.mxu0 0.0
  %6443 = vmatpush1.msra.mxu0 %v6285
  %6444 = vmatprep.subr.mxu0 0.0
  %6445 = vmatpush1.msra.mxu0 %v6286
  %6446 = vmatprep.subr.mxu0 0.0
  %6447 = vmatpush1.msra.mxu0 %v6287
  %6448 = vmatprep.subr.mxu0 0.0
  %6449 = vmatpush1.msra.mxu0 %v6288
  %6450 = vmatprep.subr.mxu0 0.0
  %6451 = vmatpush1.msra.mxu0 %v6289
  %6452 = vmatprep.subr.mxu0 0.0
  %6453 = vmatpush1.msra.mxu0 %v6290
  %6454 = vmatprep.subr.mxu0 0.0
  %6455 = vmatpush1.msra.mxu0 %v6291
  %6456 = vmatprep.subr.mxu0 0.0
  %6457 = vmatpush1.msra.mxu0 %v6292
  %6458 = vmatprep.subr.mxu0 0.0
  %6459 = vmatpush1.msra.mxu0 %v6293
  %6460 = vmatprep.subr.mxu0 0.0
  %6461 = vmatpush1.msra.mxu0 %v6294
  %6462 = vmatprep.mubr.f32.mxu0 %v6256
  %6463 = vmatmul.mubr.f32.gmra.mrb[0].mxu0 %v6255
  %v6464 = vpop.f32.mrb[0].mxu0
  %v6465 = vadd.f32 %v6396, %v6464
  %v6466 = vpop.f32.mrb[0].mxu0
  %6467 = vdwg.mxu0
  %6468 = vmatprep.subr.mxu0 0.0
  %6469 = vmatpush1.msra.mxu0 %v6295
  %6470 = vmatprep.subr.mxu0 0.0
  %6471 = vmatpush1.msra.mxu0 %v6296
  %6472 = vmatprep.subr.mxu0 0.0
  %6473 = vmatpush1.msra.mxu0 %v6297
  %6474 = vmatprep.subr.mxu0 0.0
  %6475 = vmatpush1.msra.mxu0 %v6298
  %6476 = vmatprep.subr.mxu0 0.0
  %6477 = vmatpush1.msra.mxu0 %v6299
  %6478 = vmatprep.subr.mxu0 0.0
  %6479 = vmatpush1.msra.mxu0 %v6300
  %6480 = vmatprep.subr.mxu0 0.0
  %6481 = vmatpush1.msra.mxu0 %v6301
  %6482 = vmatprep.subr.mxu0 0.0
  %6483 = vmatpush1.msra.mxu0 %v6302
  %6484 = vmatprep.subr.mxu0 0.0
  %6485 = vmatpush1.msra.mxu0 %v6303
  %6486 = vmatprep.subr.mxu0 0.0
  %6487 = vmatpush1.msra.mxu0 %v6304
  %6488 = vmatprep.subr.mxu0 0.0
  %6489 = vmatpush1.msra.mxu0 %v6305
  %6490 = vmatprep.subr.mxu0 0.0
  %6491 = vmatpush1.msra.mxu0 %v6306
  %6492 = vmatprep.subr.mxu0 0.0
  %6493 = vmatpush1.msra.mxu0 %v6307
  %6494 = vmatprep.subr.mxu0 0.0
  %6495 = vmatpush1.msra.mxu0 %v6308
  %6496 = vmatprep.subr.mxu0 0.0
  %6497 = vmatpush1.msra.mxu0 %v6309
  %6498 = vmatprep.subr.mxu0 0.0
  %6499 = vmatpush1.msra.mxu0 %v6310
  %6500 = vmatprep.subr.mxu0 0.0
  %6501 = vmatpush1.msra.mxu0 %v6311
  %6502 = vmatprep.subr.mxu0 0.0
  %6503 = vmatpush1.msra.mxu0 %v6312
  %6504 = vmatprep.subr.mxu0 0.0
  %6505 = vmatpush1.msra.mxu0 %v6313
  %6506 = vmatprep.subr.mxu0 0.0
  %6507 = vmatpush1.msra.mxu0 %v6314
  %6508 = vmatprep.subr.mxu0 0.0
  %6509 = vmatpush1.msra.mxu0 %v6315
  %6510 = vmatprep.subr.mxu0 0.0
  %6511 = vmatpush1.msra.mxu0 %v6316
  %6512 = vmatprep.subr.mxu0 0.0
  %6513 = vmatpush1.msra.mxu0 %v6317
  %6514 = vmatprep.subr.mxu0 0.0
  %6515 = vmatpush1.msra.mxu0 %v6318
  %6516 = vmatprep.subr.mxu0 0.0
  %6517 = vmatpush1.msra.mxu0 %v6319
  %6518 = vmatprep.subr.mxu0 0.0
  %6519 = vmatpush1.msra.mxu0 %v6320
  %6520 = vmatprep.subr.mxu0 0.0
  %6521 = vmatpush1.msra.mxu0 %v6321
  %6522 = vmatprep.subr.mxu0 0.0
  %6523 = vmatpush1.msra.mxu0 %v6322
  %6524 = vmatprep.subr.mxu0 0.0
  %6525 = vmatpush1.msra.mxu0 %v6323
  %6526 = vmatprep.subr.mxu0 0.0
  %6527 = vmatpush1.msra.mxu0 %v6324
  %6528 = vmatprep.subr.mxu0 0.0
  %6529 = vmatpush1.msra.mxu0 %v6325
  %6530 = vmatprep.subr.mxu0 0.0
  %6531 = vmatpush1.msra.mxu0 %v6326
  %6532 = vmatprep.mubr.f32.mxu0 %v6258
  %6533 = vmatmul.mubr.f32.gmra.mrb[0].mxu0 %v6257
  %v6534 = vpop.f32.mrb[0].mxu0
  %v6535 = vadd.f32 %v6465, %v6534
  %v6536 = vpop.f32.mrb[0].mxu0
  %6537 = vdwg.mxu0
  %6538 = vmatprep.subr.mxu0 0.0
  %6539 = vmatpush1.msra.mxu0 %v6327
  %6540 = vmatprep.subr.mxu0 0.0
  %6541 = vmatpush1.msra.mxu0 %v6328
  %6542 = vmatprep.subr.mxu0 0.0
  %6543 = vmatpush1.msra.mxu0 %v6329
  %6544 = vmatprep.subr.mxu0 0.0
  %6545 = vmatpush1.msra.mxu0 %v6330
  %6546 = vmatprep.subr.mxu0 0.0
  %6547 = vmatpush1.msra.mxu0 %v6331
  %6548 = vmatprep.subr.mxu0 0.0
  %6549 = vmatpush1.msra.mxu0 %v6332
  %6550 = vmatprep.subr.mxu0 0.0
  %6551 = vmatpush1.msra.mxu0 %v6333
  %6552 = vmatprep.subr.mxu0 0.0
  %6553 = vmatpush1.msra.mxu0 %v6334
  %6554 = vmatprep.subr.mxu0 0.0
  %6555 = vmatpush1.msra.mxu0 %v6335
  %6556 = vmatprep.subr.mxu0 0.0
  %6557 = vmatpush1.msra.mxu0 %v6336
  %6558 = vmatprep.subr.mxu0 0.0
  %6559 = vmatpush1.msra.mxu0 %v6337
  %6560 = vmatprep.subr.mxu0 0.0
  %6561 = vmatpush1.msra.mxu0 %v6338
  %6562 = vmatprep.subr.mxu0 0.0
  %6563 = vmatpush1.msra.mxu0 %v6339
  %6564 = vmatprep.subr.mxu0 0.0
  %6565 = vmatpush1.msra.mxu0 %v6340
  %6566 = vmatprep.subr.mxu0 0.0
  %6567 = vmatpush1.msra.mxu0 %v6341
  %6568 = vmatprep.subr.mxu0 0.0
  %6569 = vmatpush1.msra.mxu0 %v6342
  %6570 = vmatprep.subr.mxu0 0.0
  %6571 = vmatpush1.msra.mxu0 %v6343
  %6572 = vmatprep.subr.mxu0 0.0
  %6573 = vmatpush1.msra.mxu0 %v6344
  %6574 = vmatprep.subr.mxu0 0.0
  %6575 = vmatpush1.msra.mxu0 %v6345
  %6576 = vmatprep.subr.mxu0 0.0
  %6577 = vmatpush1.msra.mxu0 %v6346
  %6578 = vmatprep.subr.mxu0 0.0
  %6579 = vmatpush1.msra.mxu0 %v6347
  %6580 = vmatprep.subr.mxu0 0.0
  %6581 = vmatpush1.msra.mxu0 %v6348
  %6582 = vmatprep.subr.mxu0 0.0
  %6583 = vmatpush1.msra.mxu0 %v6349
  %6584 = vmatprep.subr.mxu0 0.0
  %6585 = vmatpush1.msra.mxu0 %v6350
  %6586 = vmatprep.subr.mxu0 0.0
  %6587 = vmatpush1.msra.mxu0 %v6351
  %6588 = vmatprep.subr.mxu0 0.0
  %6589 = vmatpush1.msra.mxu0 %v6352
  %6590 = vmatprep.subr.mxu0 0.0
  %6591 = vmatpush1.msra.mxu0 %v6353
  %6592 = vmatprep.subr.mxu0 0.0
  %6593 = vmatpush1.msra.mxu0 %v6354
  %6594 = vmatprep.subr.mxu0 0.0
  %6595 = vmatpush1.msra.mxu0 %v6355
  %6596 = vmatprep.subr.mxu0 0.0
  %6597 = vmatpush1.msra.mxu0 %v6356
  %6598 = vmatprep.subr.mxu0 0.0
  %6599 = vmatpush1.msra.mxu0 %v6357
  %6600 = vmatprep.subr.mxu0 0.0
  %6601 = vmatpush1.msra.mxu0 %v6358
  %6602 = vmatprep.mubr.f32.mxu0 %v6260
  %6603 = vmatmul.mubr.f32.gmra.mrb[0].mxu0 %v6259
  %v6604 = vpop.f32.mrb[0].mxu0
  %v6605 = vadd.f32 %v6535, %v6604
  %v6606 = vpop.f32.mrb[0].mxu0
  %6607 = vdwg.mxu0
  %6608 = vmatprep.subr.mxu0 0.0
  %6609 = vmatpush1.msra.mxu0 %v6359
  %6610 = vmatprep.subr.mxu0 0.0
  %6611 = vmatpush1.msra.mxu0 %v6360
  %6612 = vmatprep.subr.mxu0 0.0
  %6613 = vmatpush1.msra.mxu0 %v6361
  %6614 = vmatprep.subr.mxu0 0.0
  %6615 = vmatpush1.msra.mxu0 %v6362
  %6616 = vmatprep.subr.mxu0 0.0
  %6617 = vmatpush1.msra.mxu0 %v6363
  %6618 = vmatprep.subr.mxu0 0.0
  %6619 = vmatpush1.msra.mxu0 %v6364
  %6620 = vmatprep.subr.mxu0 0.0
  %6621 = vmatpush1.msra.mxu0 %v6365
  %6622 = vmatprep.subr.mxu0 0.0
  %6623 = vmatpush1.msra.mxu0 %v6366
  %6624 = vmatprep.subr.mxu0 0.0
  %6625 = vmatpush1.msra.mxu0 %v6367
  %6626 = vmatprep.subr.mxu0 0.0
  %6627 = vmatpush1.msra.mxu0 %v6368
  %6628 = vmatprep.subr.mxu0 0.0
  %6629 = vmatpush1.msra.mxu0 %v6369
  %6630 = vmatprep.subr.mxu0 0.0
  %6631 = vmatpush1.msra.mxu0 %v6370
  %6632 = vmatprep.subr.mxu0 0.0
  %6633 = vmatpush1.msra.mxu0 %v6371
  %6634 = vmatprep.subr.mxu0 0.0
  %6635 = vmatpush1.msra.mxu0 %v6372
  %6636 = vmatprep.subr.mxu0 0.0
  %6637 = vmatpush1.msra.mxu0 %v6373
  %6638 = vmatprep.subr.mxu0 0.0
  %6639 = vmatpush1.msra.mxu0 %v6374
  %6640 = vmatprep.subr.mxu0 0.0
  %6641 = vmatpush1.msra.mxu0 %v6375
  %6642 = vmatprep.subr.mxu0 0.0
  %6643 = vmatpush1.msra.mxu0 %v6376
  %6644 = vmatprep.subr.mxu0 0.0
  %6645 = vmatpush1.msra.mxu0 %v6377
  %6646 = vmatprep.subr.mxu0 0.0
  %6647 = vmatpush1.msra.mxu0 %v6378
  %6648 = vmatprep.subr.mxu0 0.0
  %6649 = vmatpush1.msra.mxu0 %v6379
  %6650 = vmatprep.subr.mxu0 0.0
  %6651 = vmatpush1.msra.mxu0 %v6380
  %6652 = vmatprep.subr.mxu0 0.0
  %6653 = vmatpush1.msra.mxu0 %v6381
  %6654 = vmatprep.subr.mxu0 0.0
  %6655 = vmatpush1.msra.mxu0 %v6382
  %6656 = vmatprep.subr.mxu0 0.0
  %6657 = vmatpush1.msra.mxu0 %v6383
  %6658 = vmatprep.subr.mxu0 0.0
  %6659 = vmatpush1.msra.mxu0 %v6384
  %6660 = vmatprep.subr.mxu0 0.0
  %6661 = vmatpush1.msra.mxu0 %v6385
  %6662 = vmatprep.subr.mxu0 0.0
  %6663 = vmatpush1.msra.mxu0 %v6386
  %6664 = vmatprep.subr.mxu0 0.0
  %6665 = vmatpush1.msra.mxu0 %v6387
  %6666 = vmatprep.subr.mxu0 0.0
  %6667 = vmatpush1.msra.mxu0 %v6388
  %6668 = vmatprep.subr.mxu0 0.0
  %6669 = vmatpush1.msra.mxu0 %v6389
  %6670 = vmatprep.subr.mxu0 0.0
  %6671 = vmatpush1.msra.mxu0 %v6390
  %6672 = vmatprep.mubr.f32.mxu0 %v6262
  %6673 = vmatmul.mubr.f32.gmra.mrb[0].mxu0 %v6261
  %v6674 = vpop.f32.mrb[0].mxu0
  %v6675 = vadd.f32 %v6605, %v6674
  %v6676 = vpop.f32.mrb[0].mxu0
  %6677 = vdwg.mxu0
  %6678 = vst [vmem:[%s11] sm:$0xff] %v6675
  // Predicated region
  $region46: #{encoder_forward.1} parent=0 // pred_check
    _
  $region47: #{encoder_forward.1} parent=0 // pred_check_branch
    %6680 = sbr.rel (0) target = $region49
  $region48: #{encoder_forward.1} parent=0 // pred_region
    _
  $region49: #{encoder_forward.1} parent=0 // pred_fallthru
    _
  // Predicated region
  $region50: #{encoder_forward.1} parent=0 // pred_check
    _
  $region51: #{encoder_forward.1} parent=0 // pred_check_branch
    %6682 = sbr.rel (0) target = $region53
  $region52: #{encoder_forward.1} parent=0 // pred_region
    _
  $region53: #{encoder_forward.1} parent=0 // pred_fallthru
    _

</llo_original>
